<compile_context>
chip_gen: v5e
topology: v5e:2x2
jax: 0.10.0
libtpu: 0.0.40
codegen_flags: <defaults>
</compile_context>

<pallas_src>
import functools

import jax
import jax.numpy as jnp
from jax import lax
from jax.experimental import pallas as pl
from jax.experimental.pallas import tpu as pltpu


def _self_attn_kernel(xk_ref, xq_ref, v_ref, m_ref, kb_ref, mb_ref, gamma_ref,
                      out_ref, *, use_mask, bf16_exp):
    """One (batch, query-block) grid step.

    xk_ref   : (1, C, Np)  bf16  all pixels of this image (keys)
    xq_ref   : (1, C, tq)  bf16  this step's query pixels (same HBM array as xk)
    v_ref    : (1, C, Np)  bf16  precomputed value projection Wv@X + bv
    m_ref    : (C, C)      bf16  folded Wq^T @ Wk
    kb_ref   : (1, C)      f32   folded Wk^T @ bq (key bias, folded into g)
    mb_ref   : (1, Np)     f32   0 on real key columns, -1e30 on padded ones
    gamma_ref: (1, 1)      f32   residual gate (SMEM scalar)
    out_ref  : (1, C, tq)  f32
    """
    f32, bf16 = jnp.float32, jnp.bfloat16

    xk = xk_ref[0]                                # (C, Np) bf16 keys
    xq_f = xq_ref[0].astype(f32)                  # (C, tq) f32  queries / residual
    xq_t = xq_f.T.astype(bf16)                    # (tq, C) bf16

    # Scores: e[i,j] = x_i^T (Wq^T Wk) x_j + (Wk^T bq).x_j.  The per-query terms
    # x_i^T Wq^T bk and bq.bk are constant along j and softmax(dim=-1) is
    # shift-invariant, so they are dropped; the key bias is folded into g here.
    g = jnp.dot(xq_t, m_ref[...], preferred_element_type=f32) + kb_ref[...]    # (tq, C)
    e = jnp.dot(g.astype(bf16), xk, preferred_element_type=f32)                # (tq, Np)
    if use_mask:
        e = e + mb_ref[...]                       # kill padded key columns

    # Numerically stable softmax over keys; normalization is deferred to the
    # (C, tq) output, so there is no (tq, Np) multiply pass.
    e_max = jnp.max(e, axis=-1, keepdims=True)
    if bf16_exp:
        p = jnp.exp((e - e_max).astype(bf16))     # bf16 EUP exp (v6e / v7x)
    else:
        p = jnp.exp(e - e_max).astype(bf16)       # f32 exp (v5e), bf16 for the MXU

    # Row sums via a ones-row matvec: f32 MXU accumulation, already (1, tq)
    # oriented so the deferred 1/l broadcasts naturally onto the (C, tq) output.
    ones_row = jnp.ones((1, xk.shape[1]), bf16)
    l_row = lax.dot_general(ones_row, p,
                            dimension_numbers=(((1,), (1,)), ((), ())),
                            preferred_element_type=f32)                        # (1, tq)

    # out[:, i] = sum_j p[i, j] * V[:, j]  (contract over keys).
    o = lax.dot_general(v_ref[0], p,
                        dimension_numbers=(((1,), (1,)), ((), ())),
                        preferred_element_type=f32)                            # (C, tq)

    scale = gamma_ref[0, 0] * pl.reciprocal(l_row, approx=True)                # (1, tq)
    out_ref[0] = o * scale + xq_f


def _vmem_capacity_bytes():
    """Physical VMEM per core (v5e/v6e: 128 MiB, v7x: 64 MiB); conservative fallback."""
    try:
        return int(pltpu.get_tpu_info().vmem_capacity_bytes)
    except Exception:
        return 64 << 20


def _use_bf16_exp():
    """bf16 EUP/VPU exists on v6e/v7x; keep the softmax elementwise path f32 on v5e."""
    try:
        kind = jax.devices()[0].device_kind.lower()
    except Exception:
        return False
    return ("v6" in kind) or ("v7" in kind) or ("7x" in kind)


def _vmem_estimate(C, Np, tq, bf16_exp):
    """Rough per-step VMEM footprint (bytes) for the chosen tiling."""
    p_bytes = 2 if bf16_exp else 4
    est = 0
    est += 2 * 2 * C * Np * 2                      # keys + V bf16 blocks (double-buffered)
    est += 2 * C * tq * (2 + 4)                    # query (bf16) + output (f32) blocks
    est += 2 * (C * C * 2 + C * 4 + Np * 4 + 4)    # M, kb, mask, gamma
    est += 2 * tq * Np * 4 + tq * Np * p_bytes     # e, (e - e_max), p
    est += 8 * tq * C * 4                          # xq_f, xq_t, g, o + casts
    est += 8 * tq * 4 + (1 << 20)                  # row stats, ones row, slack
    return est


def _pick_tq(C, Np, budget, bf16_exp):
    """Largest query tile (multiple of 128 dividing Np) whose footprint fits the budget."""
    cands = [d for d in range(Np, 0, -128) if Np % d == 0] or [Np]
    for tq in cands:
        if 2 * _vmem_estimate(C, Np, tq, bf16_exp) <= budget:
            return tq
    return cands[-1]


def self_attn_pallas(x, wq, bq, wk, bk, wv, bv, gamma):
    """Self_Attn forward.  x: (B, C, W, H) float32 (NCHW, like the PyTorch module)."""
    B, C, W, H = x.shape
    N = W * H

    # (B, C, W, H) -> (B, C, N): pure reshape (same flatten order as torch .view),
    # then pad N up to a multiple of 128 so every tile is lane-dense.
    x_cn = x.reshape(B, C, N).astype(jnp.float32)
    Np = max(128, ((N + 127) // 128) * 128)
    pad = Np - N
    if pad:
        x_cn = jnp.pad(x_cn, ((0, 0), (0, 0), (0, pad)))
    use_mask = pad > 0
    if pad:
        mask_bias = jnp.concatenate(
            [jnp.zeros((1, N), jnp.float32), jnp.full((1, pad), -1e30, jnp.float32)],
            axis=1)
    else:
        mask_bias = jnp.zeros((1, Np), jnp.float32)

    # Single bf16 copy of x feeds keys, queries and the residual.
    xk_bf = x_cn.astype(jnp.bfloat16)

    # Hoisted value projection (identical for every query block of an image).
    hi = jax.lax.Precision.HIGHEST
    v_bf = (jnp.einsum('oc,bcn->bon', wv.astype(jnp.float32), x_cn, precision=hi)
            + bv.astype(jnp.float32)[None, :, None]).astype(jnp.bfloat16)

    # Fold the C//8-channel q/k projections: scores contract over C (full MXU rows).
    wq32, wk32 = wq.astype(jnp.float32), wk.astype(jnp.float32)
    m_fold = jnp.dot(wq32.T, wk32).astype(jnp.bfloat16)               # (C, C)
    kb = jnp.dot(wk32.T, bq.astype(jnp.float32)).reshape(1, C)        # (1, C) f32
    gamma_s = jnp.asarray(gamma, jnp.float32).reshape(1, 1)

    # Generation-aware tiling: big tiles on 128 MiB parts (v5e/v6e); on 64 MiB v7x
    # shrink tq instead of capping the scoped-VMEM limit below the real footprint.
    cap = _vmem_capacity_bytes()
    bf16_exp = _use_bf16_exp()
    tq = _pick_tq(C, Np, int(cap * 0.8), bf16_exp)
    nq = Np // tq
    vmem_limit = int(min(int(cap * 0.9),
                         max(32 << 20, 2 * _vmem_estimate(C, Np, tq, bf16_exp))))

    kernel = functools.partial(_self_attn_kernel, use_mask=use_mask, bf16_exp=bf16_exp)

    # NOTE: the keys/V/weight blocks are grid-invariant; pipeline_mode=pl.Buffered(1)
    # would halve their VMEM on v7x, but default buffering is kept for portability.
    out_cn = pl.pallas_call(
        kernel,
        out_shape=jax.ShapeDtypeStruct((B, C, Np), jnp.float32),
        grid=(B, nq),
        in_specs=[
            pl.BlockSpec((1, C, Np), lambda b, q: (b, 0, 0)),    # keys (resident per image)
            pl.BlockSpec((1, C, tq), lambda b, q: (b, 0, q)),    # query / residual columns
            pl.BlockSpec((1, C, Np), lambda b, q: (b, 0, 0)),    # precomputed values
            pl.BlockSpec((C, C), lambda b, q: (0, 0)),           # Wq^T Wk
            pl.BlockSpec((1, C), lambda b, q: (0, 0)),           # Wk^T bq
            pl.BlockSpec((1, Np), lambda b, q: (0, 0)),          # key-padding mask bias
            pl.BlockSpec(memory_space=pltpu.MemorySpace.SMEM),   # gamma (scalar path)
        ],
        out_specs=pl.BlockSpec((1, C, tq), lambda b, q: (b, 0, q)),
        compiler_params=pltpu.CompilerParams(
            dimension_semantics=("parallel", "parallel"),
            vmem_limit_bytes=vmem_limit),
    )(xk_bf, xk_bf, v_bf, m_fold, kb, mask_bias, gamma_s)

    if pad:
        out_cn = out_cn[:, :, :N]
    # (B, C, N) -> NCHW: pure reshape, no transpose.
    return out_cn.reshape(B, C, W, H)


def _spectral_normalize(w2d):
    # spectral_norm(nn.Conv2d(..., kernel_size=1)) divides the weight by its largest
    # singular value; exact sigma here (parameter glue, not the hot path).
    sigma = jnp.linalg.norm(w2d, ord=2)
    return w2d / sigma


def _reference(x, wq, bq, wk, bk, wv, bv, gamma):
    B, C, W, H = x.shape
    N = W * H
    xf = x.reshape(B, C, N)
    hi = jax.lax.Precision.HIGHEST
    q = jnp.einsum('oc,bcn->bon', wq, xf, precision=hi) + bq[None, :, None]   # (B, C8, N)
    k = jnp.einsum('oc,bcn->bon', wk, xf, precision=hi) + bk[None, :, None]
    v = jnp.einsum('oc,bcn->bon', wv, xf, precision=hi) + bv[None, :, None]   # (B, C, N)
    energy = jnp.einsum('bci,bcj->bij', q, k, precision=hi)                   # (B, N, N)
    attn = jax.nn.softmax(energy, axis=-1)
    out = jnp.einsum('bcj,bij->bci', v, attn, precision=hi).reshape(B, C, W, H)
    return gamma * out + x


if __name__ == "__main__":
    key = jax.random.PRNGKey(0)
    B, C, W, H = 2, 16, 32, 32        # in_dim=16 -> query/key channels = in_dim // 8 = 2
    C8 = C // 8                       # N = 1024 (multiple of 128 -> no padding path)

    k_x, k_wq, k_bq, k_wk, k_bk, k_wv, k_bv = jax.random.split(key, 7)
    x = jax.random.normal(k_x, (B, C, W, H), jnp.float32)

    # Conv2d(kernel_size=1) weights: (Cout, Cin, 1, 1) stored as (Cout, Cin).
    wq = _spectral_normalize(jax.random.normal(k_wq, (C8, C), jnp.float32) * 0.2)
    wk = _spectral_normalize(jax.random.normal(k_wk, (C8, C), jnp.float32) * 0.2)
    wv = _spectral_normalize(jax.random.normal(k_wv, (C, C), jnp.float32) * 0.2)
    bq = jax.random.normal(k_bq, (C8,), jnp.float32) * 0.1
    bk = jax.random.normal(k_bk, (C8,), jnp.float32) * 0.1
    bv = jax.random.normal(k_bv, (C,), jnp.float32) * 0.1
    # Module __init__ sets gamma = 0 (out == x); use a nonzero value so the attention
    # path is actually exercised numerically.
    gamma = jnp.float32(0.5)

    out = self_attn_pallas(x, wq, bq, wk, bk, wv, bv, gamma)
    out = jax.block_until_ready(out)

    ref = _reference(x, wq, bq, wk, bk, wv, bv, gamma)
    assert out.shape == (B, C, W, H)
    # bf16 MXU operands, bf16 x residual, bf16 exp (v6e/v7x), folded bf16 projection
    # and an approx EUP reciprocal -> compare at bf16-level tolerance.
    assert jnp.allclose(out, ref, rtol=5e-2, atol=7.5e-2), "mismatch vs pure-JAX reference"

    print("KERNEL_OK")
</pallas_src>

<mosaic_0001>
module attributes {stable_mosaic.version = 11 : i64} {
  func.func @_self_attn_kernel(%arg0: i32, %arg1: i32, %arg2: memref<1x16x1024xbf16, #tpu.memory_space<vmem>>, %arg3: memref<1x16x1024xbf16, #tpu.memory_space<vmem>>, %arg4: memref<1x16x1024xbf16, #tpu.memory_space<vmem>>, %arg5: memref<16x16xbf16, #tpu.memory_space<vmem>>, %arg6: memref<1x16xf32, #tpu.memory_space<vmem>>, %arg7: memref<1x1024xf32, #tpu.memory_space<vmem>>, %arg8: memref<1x1xf32, #tpu.memory_space<smem>>, %arg9: memref<1x16x1024xf32, #tpu.memory_space<vmem>>) attributes {dimension_semantics = [#tpu.dimension_semantics<parallel>, #tpu.dimension_semantics<parallel>], iteration_bounds = array<i64: 2, 1>, scalar_prefetch = 0 : i64, scratch_operands = 0 : i64, tpu.core_type = #tpu.core_type<tc>, window_params = [{transform_indices = @transform_0, window_bounds = array<i64: 1, 16, 1024>}, {transform_indices = @transform_1, window_bounds = array<i64: 1, 16, 1024>}, {transform_indices = @transform_2, window_bounds = array<i64: 1, 16, 1024>}, {pipeline_mode = #tpu.pipeline_mode<synchronous>, transform_indices = @transform_3, window_bounds = array<i64: 16, 16>}, {pipeline_mode = #tpu.pipeline_mode<synchronous>, transform_indices = @transform_4, window_bounds = array<i64: 1, 16>}, {pipeline_mode = #tpu.pipeline_mode<synchronous>, transform_indices = @transform_5, window_bounds = array<i64: 1, 1024>}, {transform_indices = @transform_6, window_bounds = array<i64: 1, 1>}, {transform_indices = @transform_7, window_bounds = array<i64: 1, 16, 1024>}]} {
    %c0 = arith.constant 0 : index
    %c0_0 = arith.constant 0 : index
    %c0_1 = arith.constant 0 : index
    %0 = vector.load %arg2[%c0, %c0_0, %c0_1] : memref<1x16x1024xbf16, #tpu.memory_space<vmem>>, vector<1x16x1024xbf16>
    %1 = vector.shape_cast %0 : vector<1x16x1024xbf16> to vector<16x1024xbf16>
    %c0_2 = arith.constant 0 : index
    %c0_3 = arith.constant 0 : index
    %c0_4 = arith.constant 0 : index
    %2 = vector.load %arg3[%c0_2, %c0_3, %c0_4] : memref<1x16x1024xbf16, #tpu.memory_space<vmem>>, vector<1x16x1024xbf16>
    %3 = vector.shape_cast %2 : vector<1x16x1024xbf16> to vector<16x1024xbf16>
    %4 = arith.extf %3 : vector<16x1024xbf16> to vector<16x1024xf32>
    %5 = tpu.transpose %4, [1, 0] : vector<16x1024xf32> -> vector<1024x16xf32>
    %6 = arith.truncf %5 : vector<1024x16xf32> to vector<1024x16xbf16>
    %c0_5 = arith.constant 0 : index
    %c0_6 = arith.constant 0 : index
    %7 = vector.load %arg5[%c0_5, %c0_6] : memref<16x16xbf16, #tpu.memory_space<vmem>>, vector<16x16xbf16>
    %cst = arith.constant dense<0.000000e+00> : vector<1024x16xf32>
    %8 = tpu.matmul %6, %7, %cst {dimension_numbers = #tpu.dot_dimension_numbers<[1], [0], [0], [1], [0, 0, 1, 1], [], []>} : vector<1024x16xbf16>, vector<16x16xbf16>, vector<1024x16xf32> -> vector<1024x16xf32>
    %c0_7 = arith.constant 0 : index
    %c0_8 = arith.constant 0 : index
    %9 = vector.load %arg6[%c0_7, %c0_8] : memref<1x16xf32, #tpu.memory_space<vmem>>, vector<1x16xf32>
    %10 = vector.broadcast %9 : vector<1x16xf32> to vector<1024x16xf32>
    %11 = arith.addf %8, %10 : vector<1024x16xf32>
    %12 = arith.truncf %11 : vector<1024x16xf32> to vector<1024x16xbf16>
    %cst_9 = arith.constant dense<0.000000e+00> : vector<1024x1024xf32>
    %13 = tpu.matmul %12, %1, %cst_9 {dimension_numbers = #tpu.dot_dimension_numbers<[1], [0], [0], [1], [0, 0, 1, 1], [], []>} : vector<1024x16xbf16>, vector<16x1024xbf16>, vector<1024x1024xf32> -> vector<1024x1024xf32>
    %cst_10 = arith.constant dense<0xFF800000> : vector<1024xf32>
    %14 = vector.multi_reduction <maximumf>, %13, %cst_10 [1] : vector<1024x1024xf32> to vector<1024xf32>
    %15 = vector.shape_cast %14 : vector<1024xf32> to vector<1024x1xf32>
    %16 = vector.broadcast %15 : vector<1024x1xf32> to vector<1024x1024xf32>
    %17 = arith.subf %13, %16 : vector<1024x1024xf32>
    %18 = math.exp %17 : vector<1024x1024xf32>
    %19 = arith.truncf %18 : vector<1024x1024xf32> to vector<1024x1024xbf16>
    %cst_11 = arith.constant 1.000000e+00 : bf16
    %20 = vector.broadcast %cst_11 : bf16 to vector<1x1024xbf16>
    %cst_12 = arith.constant dense<0.000000e+00> : vector<1x1024xf32>
    %21 = tpu.matmul %20, %19, %cst_12 {dimension_numbers = #tpu.dot_dimension_numbers<[1], [1], [0], [0], [0, 0, 1, 0], [], []>} : vector<1x1024xbf16>, vector<1024x1024xbf16>, vector<1x1024xf32> -> vector<1x1024xf32>
    %c0_13 = arith.constant 0 : index
    %c0_14 = arith.constant 0 : index
    %c0_15 = arith.constant 0 : index
    %22 = vector.load %arg4[%c0_13, %c0_14, %c0_15] : memref<1x16x1024xbf16, #tpu.memory_space<vmem>>, vector<1x16x1024xbf16>
    %23 = vector.shape_cast %22 : vector<1x16x1024xbf16> to vector<16x1024xbf16>
    %cst_16 = arith.constant dense<0.000000e+00> : vector<16x1024xf32>
    %24 = tpu.matmul %23, %19, %cst_16 {dimension_numbers = #tpu.dot_dimension_numbers<[1], [1], [0], [0], [0, 0, 1, 0], [], []>} : vector<16x1024xbf16>, vector<1024x1024xbf16>, vector<16x1024xf32> -> vector<16x1024xf32>
    %c0_17 = arith.constant 0 : index
    %c0_18 = arith.constant 0 : index
    %25 = memref.load %arg8[%c0_17, %c0_18] : memref<1x1xf32, #tpu.memory_space<smem>>
    %26 = tpu.reciprocal %21 {approx = true} : vector<1x1024xf32> -> vector<1x1024xf32>
    %27 = vector.broadcast %25 : f32 to vector<1x1024xf32>
    %28 = arith.mulf %27, %26 : vector<1x1024xf32>
    %29 = vector.broadcast %28 : vector<1x1024xf32> to vector<16x1024xf32>
    %30 = arith.mulf %24, %29 : vector<16x1024xf32>
    %31 = arith.addf %30, %4 : vector<16x1024xf32>
    %c0_19 = arith.constant 0 : index
    %c0_20 = arith.constant 0 : index
    %c0_21 = arith.constant 0 : index
    %32 = vector.load %arg9[%c0_19, %c0_20, %c0_21] : memref<1x16x1024xf32, #tpu.memory_space<vmem>>, vector<1x16x1024xf32>
    %33 = vector.shape_cast %32 : vector<1x16x1024xf32> to vector<16x1024xf32>
    %34 = vector.shape_cast %31 : vector<16x1024xf32> to vector<1x16x1024xf32>
    tpu.vector_store %arg9[%c0_19, %c0_20, %c0_21], %34 {strides = array<i32>} : memref<1x16x1024xf32, #tpu.memory_space<vmem>>, vector<1x16x1024xf32>,
    return
  }
  func.func @transform_0(%arg0: i32, %arg1: i32) -> (i32, i32, i32) {
    %c0_i32 = arith.constant 0 : i32
    %c0_i32_0 = arith.constant 0 : i32
    %c0_i32_1 = arith.constant 0 : i32
    return %arg0, %c0_i32, %c0_i32_0 : i32, i32, i32
  }
  func.func @transform_1(%arg0: i32, %arg1: i32) -> (i32, i32, i32) {
    %c0_i32 = arith.constant 0 : i32
    %c0_i32_0 = arith.constant 0 : i32
    return %arg0, %c0_i32, %arg1 : i32, i32, i32
  }
  func.func @transform_2(%arg0: i32, %arg1: i32) -> (i32, i32, i32) {
    %c0_i32 = arith.constant 0 : i32
    %c0_i32_0 = arith.constant 0 : i32
    %c0_i32_1 = arith.constant 0 : i32
    return %arg0, %c0_i32, %c0_i32_0 : i32, i32, i32
  }
  func.func @transform_3(%arg0: i32, %arg1: i32) -> (i32, i32) {
    %c0_i32 = arith.constant 0 : i32
    %c0_i32_0 = arith.constant 0 : i32
    %c0_i32_1 = arith.constant 0 : i32
    return %c0_i32, %c0_i32_0 : i32, i32
  }
  func.func @transform_4(%arg0: i32, %arg1: i32) -> (i32, i32) {
    %c0_i32 = arith.constant 0 : i32
    %c0_i32_0 = arith.constant 0 : i32
    %c0_i32_1 = arith.constant 0 : i32
    return %c0_i32, %c0_i32_0 : i32, i32
  }
  func.func @transform_5(%arg0: i32, %arg1: i32) -> (i32, i32) {
    %c0_i32 = arith.constant 0 : i32
    %c0_i32_0 = arith.constant 0 : i32
    %c0_i32_1 = arith.constant 0 : i32
    return %c0_i32, %c0_i32_0 : i32, i32
  }
  func.func @transform_6(%arg0: i32, %arg1: i32) -> (i32, i32) {
    %c0_i32 = arith.constant 0 : i32
    %c0_i32_0 = arith.constant 0 : i32
    %c0_i32_1 = arith.constant 0 : i32
    return %c0_i32, %c0_i32_0 : i32, i32
  }
  func.func @transform_7(%arg0: i32, %arg1: i32) -> (i32, i32, i32) {
    %c0_i32 = arith.constant 0 : i32
    %c0_i32_0 = arith.constant 0 : i32
    return %arg0, %c0_i32, %arg1 : i32, i32, i32
  }
}

</mosaic_0001>

<llo_original>
// kernel: tpu_custom_call.1
$region0: #{tpu_custom_call.1}
  #allocation0 [shape = 'u32[]', space=smem, size = 0x4, offset = 0x4, fixed_abs, tag = 'smem constant byte address 0x4 - core index']
  #allocation1 [shape = 'u32[72,128]{1,0:T(1,128)}', space=vmem, size = 0x9000, scoped, tag = 'internal scratch']
  #allocation2 [shape = 'f32[1,1]{1,0:T(1,128)S(6)}', space=smem, size = 0x200, scoped, tag = 'scoped memory for tpu_custom_call.1']
  %s0 = inlined_call_operand.hbm [shape: bf16[2,16,1024], index: 0, kind: input, shape index: {}]
  %s1 = inlined_call_operand.hbm [shape: bf16[2,16,1024], index: 1, kind: input, shape index: {}]
  %s2 = inlined_call_operand.hbm [shape: bf16[2,16,1024], index: 2, kind: input, shape index: {}]
  %s3 = inlined_call_operand.hbm [shape: bf16[16,16], index: 3, kind: input, shape index: {}]
  %s4 = inlined_call_operand.vmem [shape: f32[1,16], index: 4, kind: input, shape index: {}]
  %s5 = inlined_call_operand.hbm [shape: f32[1,1024], index: 5, kind: input, shape index: {}]
  %s6 = inlined_call_operand.<no memory space> [shape: f32[1,1], index: 6, kind: input, shape index: {}]
  %s7 = inlined_call_operand.hbm [shape: f32[2,16,1024], index: 7, kind: output, shape index: {}]
  %s8 = sld [smem:[#allocation0]]
  $region81: #{tpu_custom_call.1} parent=0
    _
  %s10 = ssub.s32 1, %s8
  %s11 = scalar_select 0, %s10, %s8
  %12 = sst [smem:[#allocation2]] %s6
  $region1: #{tpu_custom_call.1} parent=0
    #allocation3 [shape = 'u8[65536]{0}', space=vmem, size = 0x10000, scoped, tag = 'input window, operand 0']
    #allocation4 [shape = 's32[2]{0}', space=sflag, size = 0x8, scoped, tag = 'scoped memory for tpu_custom_call.1']
    #allocation5 [shape = 's32[2]{0}', space=sflag, size = 0x8, scoped, tag = 'scoped memory for tpu_custom_call.1']
    #allocation6 [shape = 'u8[65536]{0}', space=vmem, size = 0x10000, scoped, tag = 'input window, operand 1']
    #allocation7 [shape = 's32[2]{0}', space=sflag, size = 0x8, scoped, tag = 'scoped memory for tpu_custom_call.1']
    #allocation8 [shape = 'u8[65536]{0}', space=vmem, size = 0x10000, scoped, tag = 'input window, operand 2']
    #allocation9 [shape = 'u8[4096]{0}', space=vmem, size = 0x1000, scoped, tag = 'input window, operand 3, single buffered']
    #allocation10 [shape = 's32[1]{0}', space=sflag, size = 0x4, scoped, tag = 'scoped memory for tpu_custom_call.1']
    #allocation11 [shape = 'u8[4096]{0}', space=vmem, size = 0x1000, scoped, tag = 'input window, operand 5, single buffered']
    #allocation12 [shape = 'u8[131072]{0}', space=vmem, size = 0x20000, scoped, tag = 'output window, operand 0']
    %13 = vsyncpa [#allocation4], 0
    %s14 = scalar_lea.sflag [#allocation4], 1
    %15 = vsyncpa %s14, 0
    %16 = vsyncpa [#allocation7], 0
    %s17 = scalar_lea.sflag [#allocation7], 1
    %18 = vsyncpa %s17, 0
    %19 = vsyncpa [#allocation10], 0
    %20 = vsyncpa [#allocation5], 0
    %s21 = scalar_lea.sflag [#allocation5], 1
    %22 = vsyncpa %s21, 0
    loop: start=0, step=1, limit=4
    $region2: #{tpu_custom_call.1} parent=1 // loop_pre_header
      _
    $region3: #{tpu_custom_call.1} parent=1 // loop_header
      %s24 = sphi 0, %s28
      %p25 = scmp.ge.s32.totalorder %s24, 4
      %s31 = sphi 0, %s43
      %s32 = sphi 0, %s39
      %s33 = sphi 0, %s31
      %s34 = sphi 0, %s32
      %s35 = sphi 0, %s33
      %s36 = sphi 0, %s34
      %s46 = sphi 0, %s48
      %s49 = sphi 0, %s46
      %s50 = sphi 0, %s49
      %s66 = sphi 0, %s50
      %s74 = sphi 0, %s76
      %s77 = sphi 0, %s74
      %s78 = sphi 0, %s77
      %s94 = sphi 0, %s78
      %s100 = sphi 0, %s102
      %s103 = sphi 0, %s100
      %s104 = sphi 0, %s103
      %s120 = sphi 0, %s104
      %s124 = sphi 0, %s124
      %s126 = sphi 0, %s124
      %s127 = sphi 0, %s126
      %s141 = sphi 0, %s127
      %s145 = sphi 0, %s145
      %s147 = sphi 0, %s145
      %s148 = sphi 0, %s147
      %s162 = sphi 0, %s148
      %s166 = sphi 0, %s166
      %s168 = sphi 0, %s166
      %s169 = sphi 0, %s168
      %s183 = sphi 0, %s169
      %s187 = sphi 0, %s187
      %s189 = sphi 0, %s187
      %s190 = sphi 0, %s189
      %s204 = sphi 0, %s190
      %s212 = sphi 0, %s214
      %s215 = sphi 0, %s212
      %s216 = sphi 0, %s215
      %s232 = sphi 0, %s216
    $region4: #{tpu_custom_call.1} parent=1 // loop_header_branch
      %27 = sbr.rel (%p25) target = $region8
    $region5: #{tpu_custom_call.1} parent=1 // loop_body
      %s29 = ssub.s32 %s24, 1
      %s30 = ssub.s32 %s24, 2
      %s37 = sadd.s32 1, %s32
      %p38 = scmp.ge.s32.totalorder %s37, 1
      %s39 = scalar_select %p38, 0, %s37
      %s40 = sadd.s32 1, %s31
      %s41 = scalar_select %p38, %s40, %s31
      %p42 = scmp.ge.s32.totalorder %s41, 2
      %s43 = scalar_select %p42, 0, %s41
      %s44 = ssub.s32 %s31, %s43
      %p45 = scmp.eq.s32.totalorder %s44, 0
      %s47 = sadd.s32 %s46, 1
      %s48 = scalar_select %p45, %s46, %s47
      %p51 = pneg %p45
      %p52 = scmp.eq.s32.totalorder %s24, 1
      %p53 = por %p51, %p52
      %p54 = scmp.ne.s32.totalorder %s46, %s49
      %p55 = scmp.eq.s32.totalorder %s24, 0
      %p56 = por %p54, %p55
      %p57 = scmp.ne.s32.totalorder %s46, %s49
      %p58 = scmp.eq.s32.totalorder %s29, 1
      %p59 = por %p57, %p58
      %p60 = scmp.ne.s32.totalorder %s49, %s50
      %p61 = scmp.eq.s32.totalorder %s29, 0
      %p62 = por %p60, %p61
      %p63 = scmp.ne.s32.totalorder %s49, %s50
      %p64 = scmp.eq.s32.totalorder %s30, 1
      %p65 = por %p63, %p64
      %p67 = scmp.ne.s32.totalorder %s50, %s66
      %p68 = scmp.eq.s32.totalorder %s30, 0
      %p69 = por %p67, %p68
      %s70 = ssub.s32 %s31, %s43
      %s71 = ssub.s32 %s32, %s39
      %s72 = sor.u32 %s70, %s71
      %p73 = scmp.eq.s32.totalorder %s72, 0
      %s75 = sadd.s32 %s74, 1
      %s76 = scalar_select %p73, %s74, %s75
      %p79 = pneg %p73
      %p80 = scmp.eq.s32.totalorder %s24, 1
      %p81 = por %p79, %p80
      %p82 = scmp.ne.s32.totalorder %s74, %s77
      %p83 = scmp.eq.s32.totalorder %s24, 0
      %p84 = por %p82, %p83
      %p85 = scmp.ne.s32.totalorder %s74, %s77
      %p86 = scmp.eq.s32.totalorder %s29, 1
      %p87 = por %p85, %p86
      %p88 = scmp.ne.s32.totalorder %s77, %s78
      %p89 = scmp.eq.s32.totalorder %s29, 0
      %p90 = por %p88, %p89
      %p91 = scmp.ne.s32.totalorder %s77, %s78
      %p92 = scmp.eq.s32.totalorder %s30, 1
      %p93 = por %p91, %p92
      %p95 = scmp.ne.s32.totalorder %s78, %s94
      %p96 = scmp.eq.s32.totalorder %s30, 0
      %p97 = por %p95, %p96
      %s98 = ssub.s32 %s31, %s43
      %p99 = scmp.eq.s32.totalorder %s98, 0
      %s101 = sadd.s32 %s100, 1
      %s102 = scalar_select %p99, %s100, %s101
      %p105 = pneg %p99
      %p106 = scmp.eq.s32.totalorder %s24, 1
      %p107 = por %p105, %p106
      %p108 = scmp.ne.s32.totalorder %s100, %s103
      %p109 = scmp.eq.s32.totalorder %s24, 0
      %p110 = por %p108, %p109
      %p111 = scmp.ne.s32.totalorder %s100, %s103
      %p112 = scmp.eq.s32.totalorder %s29, 1
      %p113 = por %p111, %p112
      %p114 = scmp.ne.s32.totalorder %s103, %s104
      %p115 = scmp.eq.s32.totalorder %s29, 0
      %p116 = por %p114, %p115
      %p117 = scmp.ne.s32.totalorder %s103, %s104
      %p118 = scmp.eq.s32.totalorder %s30, 1
      %p119 = por %p117, %p118
      %p121 = scmp.ne.s32.totalorder %s104, %s120
      %p122 = scmp.eq.s32.totalorder %s30, 0
      %p123 = por %p121, %p122
      %s125 = sadd.s32 %s124, 1
      %p128 = scmp.eq.s32.totalorder %s24, 1
      %p129 = scmp.ne.s32.totalorder %s124, %s126
      %p130 = scmp.eq.s32.totalorder %s24, 0
      %p131 = por %p129, %p130
      %p132 = scmp.ne.s32.totalorder %s124, %s126
      %p133 = scmp.eq.s32.totalorder %s29, 1
      %p134 = por %p132, %p133
      %p135 = scmp.ne.s32.totalorder %s126, %s127
      %p136 = scmp.eq.s32.totalorder %s29, 0
      %p137 = por %p135, %p136
      %p138 = scmp.ne.s32.totalorder %s126, %s127
      %p139 = scmp.eq.s32.totalorder %s30, 1
      %p140 = por %p138, %p139
      %p142 = scmp.ne.s32.totalorder %s127, %s141
      %p143 = scmp.eq.s32.totalorder %s30, 0
      %p144 = por %p142, %p143
      %s146 = sadd.s32 %s145, 1
      %p149 = scmp.eq.s32.totalorder %s24, 1
      %p150 = scmp.ne.s32.totalorder %s145, %s147
      %p151 = scmp.eq.s32.totalorder %s24, 0
      %p152 = por %p150, %p151
      %p153 = scmp.ne.s32.totalorder %s145, %s147
      %p154 = scmp.eq.s32.totalorder %s29, 1
      %p155 = por %p153, %p154
      %p156 = scmp.ne.s32.totalorder %s147, %s148
      %p157 = scmp.eq.s32.totalorder %s29, 0
      %p158 = por %p156, %p157
      %p159 = scmp.ne.s32.totalorder %s147, %s148
      %p160 = scmp.eq.s32.totalorder %s30, 1
      %p161 = por %p159, %p160
      %p163 = scmp.ne.s32.totalorder %s148, %s162
      %p164 = scmp.eq.s32.totalorder %s30, 0
      %p165 = por %p163, %p164
      %s167 = sadd.s32 %s166, 1
      %p170 = scmp.eq.s32.totalorder %s24, 1
      %p171 = scmp.ne.s32.totalorder %s166, %s168
      %p172 = scmp.eq.s32.totalorder %s24, 0
      %p173 = por %p171, %p172
      %p174 = scmp.ne.s32.totalorder %s166, %s168
      %p175 = scmp.eq.s32.totalorder %s29, 1
      %p176 = por %p174, %p175
      %p177 = scmp.ne.s32.totalorder %s168, %s169
      %p178 = scmp.eq.s32.totalorder %s29, 0
      %p179 = por %p177, %p178
      %p180 = scmp.ne.s32.totalorder %s168, %s169
      %p181 = scmp.eq.s32.totalorder %s30, 1
      %p182 = por %p180, %p181
      %p184 = scmp.ne.s32.totalorder %s169, %s183
      %p185 = scmp.eq.s32.totalorder %s30, 0
      %p186 = por %p184, %p185
      %s188 = sadd.s32 %s187, 1
      %p191 = scmp.eq.s32.totalorder %s24, 1
      %p192 = scmp.ne.s32.totalorder %s187, %s189
      %p193 = scmp.eq.s32.totalorder %s24, 0
      %p194 = por %p192, %p193
      %p195 = scmp.ne.s32.totalorder %s187, %s189
      %p196 = scmp.eq.s32.totalorder %s29, 1
      %p197 = por %p195, %p196
      %p198 = scmp.ne.s32.totalorder %s189, %s190
      %p199 = scmp.eq.s32.totalorder %s29, 0
      %p200 = por %p198, %p199
      %p201 = scmp.ne.s32.totalorder %s189, %s190
      %p202 = scmp.eq.s32.totalorder %s30, 1
      %p203 = por %p201, %p202
      %p205 = scmp.ne.s32.totalorder %s190, %s204
      %p206 = scmp.eq.s32.totalorder %s30, 0
      %p207 = por %p205, %p206
      %s208 = ssub.s32 %s31, %s43
      %s209 = ssub.s32 %s32, %s39
      %s210 = sor.u32 %s208, %s209
      %p211 = scmp.eq.s32.totalorder %s210, 0
      %s213 = sadd.s32 %s212, 1
      %s214 = scalar_select %p211, %s212, %s213
      %p217 = pneg %p211
      %p218 = scmp.eq.s32.totalorder %s24, 1
      %p219 = por %p217, %p218
      %p220 = scmp.ne.s32.totalorder %s212, %s215
      %p221 = scmp.eq.s32.totalorder %s24, 0
      %p222 = por %p220, %p221
      %p223 = scmp.ne.s32.totalorder %s212, %s215
      %p224 = scmp.eq.s32.totalorder %s29, 1
      %p225 = por %p223, %p224
      %p226 = scmp.ne.s32.totalorder %s215, %s216
      %p227 = scmp.eq.s32.totalorder %s29, 0
      %p228 = por %p226, %p227
      %p229 = scmp.ne.s32.totalorder %s215, %s216
      %p230 = scmp.eq.s32.totalorder %s30, 1
      %p231 = por %p229, %p230
      %p233 = scmp.ne.s32.totalorder %s216, %s232
      %p234 = scmp.eq.s32.totalorder %s30, 0
      %p235 = por %p233, %p234
      %p236 = scmp.le.s32.totalorder 1, %s24
      %p237 = scmp.lt.s32.totalorder %s24, 3
      %p238 = pnand %p236, %p237
      %p239 = pneg %p238
      // Predicated region
      $region9: #{tpu_custom_call.1} parent=5 // pred_check
        _
      $region10: #{tpu_custom_call.1} parent=5 // pred_check_branch
        %241 = sbr.rel (%p238) target = $region12
      $region11: #{tpu_custom_call.1} parent=5 // pred_region
        %s242 = ssub.s32 %s24, 1
        // Predicated region
        $region13: #{tpu_custom_call.1} parent=11 // pred_check
          %p243 = pneg %p137
        $region14: #{tpu_custom_call.1} parent=11 // pred_check_branch
          %245 = sbr.rel (%p243) target = $region16
        $region15: #{tpu_custom_call.1} parent=11 // pred_region
          %247 = vsyncadd [#allocation10], 0
          %s248 = sshll.u32 %s3, 4
          %s249 = int_to_ptr.hbm [resolvable:$true] %s248
          %s250 = sshll.u32 [#allocation9], 4
          %s251 = int_to_ptr.vmem [resolvable:$true] %s250
          %256 = dma.hbm_to_vmem [thread:$0]  %s249, 128, %s251, [#allocation10], 64, 64, 4
        $region16: #{tpu_custom_call.1} parent=11 // pred_fallthru
          _
        // Predicated region
        $region17: #{tpu_custom_call.1} parent=11 // pred_check
          %p257 = pneg %p158
        $region18: #{tpu_custom_call.1} parent=11 // pred_check_branch
          %259 = sbr.rel (%p257) target = $region20
        $region19: #{tpu_custom_call.1} parent=11 // pred_region
          _
        $region20: #{tpu_custom_call.1} parent=11 // pred_fallthru
          _
        // Predicated region
        $region21: #{tpu_custom_call.1} parent=11 // pred_check
          %p260 = pneg %p179
        $region22: #{tpu_custom_call.1} parent=11 // pred_check_branch
          %262 = sbr.rel (%p260) target = $region24
        $region23: #{tpu_custom_call.1} parent=11 // pred_region
          %264 = vsyncadd [#allocation10], 0
          %s266 = sshll.u32 %s5, 4
          %s267 = int_to_ptr.hbm [resolvable:$true] %s266
          %s268 = sshll.u32 [#allocation11], 4
          %s269 = int_to_ptr.vmem [resolvable:$true] %s268
          %271 = dma.hbm_to_vmem [thread:$0]  %s267, 128, %s269, [#allocation10]
        $region24: #{tpu_custom_call.1} parent=11 // pred_fallthru
          _
        // Predicated region
        $region25: #{tpu_custom_call.1} parent=11 // pred_check
          %p272 = pneg %p200
        $region26: #{tpu_custom_call.1} parent=11 // pred_check_branch
          %274 = sbr.rel (%p272) target = $region28
        $region27: #{tpu_custom_call.1} parent=11 // pred_region
          _
        $region28: #{tpu_custom_call.1} parent=11 // pred_fallthru
          _
      $region12: #{tpu_custom_call.1} parent=5 // pred_fallthru
        _
      %p275 = scmp.lt.s32.totalorder %s24, 2
      // Predicated region
      $region29: #{tpu_custom_call.1} parent=5 // pred_check
        %p276 = pneg %p275
      $region30: #{tpu_custom_call.1} parent=5 // pred_check_branch
        %278 = sbr.rel (%p276) target = $region32
      $region31: #{tpu_custom_call.1} parent=5 // pred_region
        // Predicated region
        $region33: #{tpu_custom_call.1} parent=31 // pred_check
          %p279 = pneg %p56
        $region34: #{tpu_custom_call.1} parent=31 // pred_check_branch
          %281 = sbr.rel (%p279) target = $region36
        $region35: #{tpu_custom_call.1} parent=31 // pred_region
          %s282 = sand.u32 %s46, 1
          %s283 = scalar_lea.sflag [#allocation4], %s282
          %s284 = sand.u32 %s46, 1
          %s285 = smul.addr %s284, 64
          %s286 = scalar_lea.vmem [#allocation3], %s285
          %288 = vsyncadd %s283, 0
          %s289 = smul.addr %s31, 16
          %s290 = smul.addr %s289, 4
          %s291 = scalar_lea.hbm %s0, %s290
          %s292 = sshll.u32 %s291, 4
          %s293 = int_to_ptr.hbm [resolvable:$true] %s292
          %s294 = sshll.u32 %s286, 4
          %s295 = int_to_ptr.vmem [resolvable:$true] %s294
          %300 = dma.hbm_to_vmem [thread:$0]  %s293, 1024, %s295, %s283, 512, 512, 32
        $region36: #{tpu_custom_call.1} parent=31 // pred_fallthru
          _
        // Predicated region
        $region37: #{tpu_custom_call.1} parent=31 // pred_check
          %p301 = pneg %p84
        $region38: #{tpu_custom_call.1} parent=31 // pred_check_branch
          %303 = sbr.rel (%p301) target = $region40
        $region39: #{tpu_custom_call.1} parent=31 // pred_region
          %s304 = sand.u32 %s24, 1
          %s305 = scalar_lea.sflag [#allocation7], %s304
          %s306 = sand.u32 %s74, 1
          %s307 = smul.addr %s306, 64
          %s308 = scalar_lea.vmem [#allocation6], %s307
          %s309 = smul.u32 8, %s32
          %311 = vsyncadd %s305, 0
          %s312 = smul.addr %s31, 16
          %s313 = sadd.s32 %s309, %s312
          %s314 = smul.addr %s313, 4
          %s315 = scalar_lea.hbm %s1, %s314
          %s316 = sshll.u32 %s315, 4
          %s317 = int_to_ptr.hbm [resolvable:$true] %s316
          %s318 = sshll.u32 %s308, 4
          %s319 = int_to_ptr.vmem [resolvable:$true] %s318
          %324 = dma.hbm_to_vmem [thread:$0]  %s317, 1024, %s319, %s305, 512, 512, 32
        $region40: #{tpu_custom_call.1} parent=31 // pred_fallthru
          _
        // Predicated region
        $region41: #{tpu_custom_call.1} parent=31 // pred_check
          %p325 = pneg %p110
        $region42: #{tpu_custom_call.1} parent=31 // pred_check_branch
          %327 = sbr.rel (%p325) target = $region44
        $region43: #{tpu_custom_call.1} parent=31 // pred_region
          %s328 = sand.u32 %s24, 1
          %s329 = scalar_lea.sflag [#allocation7], %s328
          %s330 = sand.u32 %s100, 1
          %s331 = smul.addr %s330, 64
          %s332 = scalar_lea.vmem [#allocation8], %s331
          %334 = vsyncadd %s329, 0
          %s335 = smul.addr %s31, 16
          %s336 = smul.addr %s335, 4
          %s337 = scalar_lea.hbm %s2, %s336
          %s338 = sshll.u32 %s337, 4
          %s339 = int_to_ptr.hbm [resolvable:$true] %s338
          %s340 = sshll.u32 %s332, 4
          %s341 = int_to_ptr.vmem [resolvable:$true] %s340
          %346 = dma.hbm_to_vmem [thread:$0]  %s339, 1024, %s341, %s329, 512, 512, 32
        $region44: #{tpu_custom_call.1} parent=31 // pred_fallthru
          _
      $region32: #{tpu_custom_call.1} parent=5 // pred_fallthru
        _
      %p347 = scmp.le.s32.totalorder 1, %s24
      %p348 = scmp.lt.s32.totalorder %s24, 3
      %p349 = pnand %p347, %p348
      %p350 = pneg %p349
      // Predicated region
      $region45: #{tpu_custom_call.1} parent=5 // pred_check
        _
      $region46: #{tpu_custom_call.1} parent=5 // pred_check_branch
        %352 = sbr.rel (%p349) target = $region48
      $region47: #{tpu_custom_call.1} parent=5 // pred_region
        %s353 = ssub.s32 %s24, 1
        %s354 = sand.u32 %s49, 1
        %s355 = scalar_lea.sflag [#allocation4], %s354
        %s356 = sand.u32 %s49, 1
        %s357 = smul.addr %s356, 64
        %s358 = scalar_lea.vmem [#allocation3], %s357
        // Predicated region
        $region49: #{tpu_custom_call.1} parent=47 // pred_check
          %p359 = pneg %p62
        $region50: #{tpu_custom_call.1} parent=47 // pred_check_branch
          %361 = sbr.rel (%p359) target = $region52
        $region51: #{tpu_custom_call.1} parent=47 // pred_region
          %363 = dma.done %s355, 1024
        $region52: #{tpu_custom_call.1} parent=47 // pred_fallthru
          _
        %s364 = sand.u32 %s29, 1
        %s365 = scalar_lea.sflag [#allocation7], %s364
        %s366 = sand.u32 %s77, 1
        %s367 = smul.addr %s366, 64
        %s368 = scalar_lea.vmem [#allocation6], %s367
        // Predicated region
        $region53: #{tpu_custom_call.1} parent=47 // pred_check
          %p369 = pneg %p90
        $region54: #{tpu_custom_call.1} parent=47 // pred_check_branch
          %371 = sbr.rel (%p369) target = $region56
        $region55: #{tpu_custom_call.1} parent=47 // pred_region
          %373 = dma.done %s365, 1024
        $region56: #{tpu_custom_call.1} parent=47 // pred_fallthru
          _
        %s374 = sand.u32 %s29, 1
        %s375 = scalar_lea.sflag [#allocation7], %s374
        %s376 = sand.u32 %s103, 1
        %s377 = smul.addr %s376, 64
        %s378 = scalar_lea.vmem [#allocation8], %s377
        // Predicated region
        $region57: #{tpu_custom_call.1} parent=47 // pred_check
          %p379 = pneg %p116
        $region58: #{tpu_custom_call.1} parent=47 // pred_check_branch
          %381 = sbr.rel (%p379) target = $region60
        $region59: #{tpu_custom_call.1} parent=47 // pred_region
          %383 = dma.done %s375, 1024
        $region60: #{tpu_custom_call.1} parent=47 // pred_fallthru
          _
        // Predicated region
        $region61: #{tpu_custom_call.1} parent=47 // pred_check
          %p384 = pneg %p137
        $region62: #{tpu_custom_call.1} parent=47 // pred_check_branch
          %386 = sbr.rel (%p384) target = $region64
        $region63: #{tpu_custom_call.1} parent=47 // pred_region
          %388 = dma.done [#allocation10], 128
        $region64: #{tpu_custom_call.1} parent=47 // pred_fallthru
          _
        // Predicated region
        $region65: #{tpu_custom_call.1} parent=47 // pred_check
          %p389 = pneg %p179
        $region66: #{tpu_custom_call.1} parent=47 // pred_check_branch
          %391 = sbr.rel (%p389) target = $region68
        $region67: #{tpu_custom_call.1} parent=47 // pred_region
          %393 = dma.done [#allocation10], 128
        $region68: #{tpu_custom_call.1} parent=47 // pred_fallthru
          _
        %s394 = sand.u32 %s49, 1
        %s395 = scalar_lea.sflag [#allocation4], %s394
        %s396 = sand.u32 %s49, 1
        %s397 = smul.addr %s396, 64
        %s398 = scalar_lea.vmem [#allocation3], %s397
        %p399 = pneg %p62
        %p400 = pneg %p59
        %s401 = sand.u32 %s29, 1
        %s402 = scalar_lea.sflag [#allocation7], %s401
        %s403 = sand.u32 %s77, 1
        %s404 = smul.addr %s403, 64
        %s405 = scalar_lea.vmem [#allocation6], %s404
        %p406 = pneg %p90
        %p407 = pneg %p87
        %s408 = sand.u32 %s29, 1
        %s409 = scalar_lea.sflag [#allocation7], %s408
        %s410 = sand.u32 %s103, 1
        %s411 = smul.addr %s410, 64
        %s412 = scalar_lea.vmem [#allocation8], %s411
        %p413 = pneg %p116
        %p414 = pneg %p113
        %p415 = pneg %p137
        %p416 = pneg %p134
        %p417 = pneg %p158
        %p418 = pneg %p155
        %p419 = pneg %p179
        %p420 = pneg %p176
        %p421 = pneg %p200
        %p422 = pneg %p197
        %p423 = pneg %p228
        %p424 = pneg %p225
        %s425 = sand.u32 %s215, 1
        %s426 = scalar_lea.sflag [#allocation5], %s425
        %s427 = sand.u32 %s215, 1
        %s428 = smul.addr %s427, 128
        %s429 = scalar_lea.vmem [#allocation12], %s428
        %s430 = smul.u32 8, %s34
        %s431 = smul.u32 8, %s34
        %v434 = vld [vmem:[%s358] sm:$0xff]
        %v435 = vld [vmem:[%s358 + $0x8] sm:$0xff]
        %v436 = vld [vmem:[%s358 + $0x10] sm:$0xff]
        %v437 = vld [vmem:[%s358 + $0x18] sm:$0xff]
        %v438 = vld [vmem:[%s358 + $0x20] sm:$0xff]
        %v439 = vld [vmem:[%s358 + $0x28] sm:$0xff]
        %v440 = vld [vmem:[%s358 + $0x30] sm:$0xff]
        %v441 = vld [vmem:[%s358 + $0x38] sm:$0xff]
        %v442 = vld [vmem:[%s368] sm:$0xff]
        %v443 = vld [vmem:[%s368 + $0x8] sm:$0xff]
        %v444 = vld [vmem:[%s368 + $0x10] sm:$0xff]
        %v445 = vld [vmem:[%s368 + $0x18] sm:$0xff]
        %v446 = vld [vmem:[%s368 + $0x20] sm:$0xff]
        %v447 = vld [vmem:[%s368 + $0x28] sm:$0xff]
        %v448 = vld [vmem:[%s368 + $0x30] sm:$0xff]
        %v449 = vld [vmem:[%s368 + $0x38] sm:$0xff]
        %v450 = vunpack.c.l.bf16 %v442
        %v451 = vunpack.c.h.bf16 %v442
        %v452 = vunpack.c.l.bf16 %v443
        %v453 = vunpack.c.h.bf16 %v443
        %v454 = vunpack.c.l.bf16 %v444
        %v455 = vunpack.c.h.bf16 %v444
        %v456 = vunpack.c.l.bf16 %v445
        %v457 = vunpack.c.h.bf16 %v445
        %v458 = vunpack.c.l.bf16 %v446
        %v459 = vunpack.c.h.bf16 %v446
        %v460 = vunpack.c.l.bf16 %v447
        %v461 = vunpack.c.h.bf16 %v447
        %v462 = vunpack.c.l.bf16 %v448
        %v463 = vunpack.c.h.bf16 %v448
        %v464 = vunpack.c.l.bf16 %v449
        %v465 = vunpack.c.h.bf16 %v449
        %466 = vxpose.xlu0.b32.start [1/16] %v450, 128
        %467 = vxpose.xlu0.b32.cont [2/16] %v458, 128
        %468 = vxpose.xlu0.b32.cont [3/16] 0.0, 128
        %469 = vxpose.xlu0.b32.cont [4/16] 0.0, 128
        %470 = vxpose.xlu0.b32.cont [5/16] 0.0, 128
        %471 = vxpose.xlu0.b32.cont [6/16] 0.0, 128
        %472 = vxpose.xlu0.b32.cont [7/16] 0.0, 128
        %473 = vxpose.xlu0.b32.cont [8/16] 0.0, 128
        %474 = vxpose.xlu0.b32.cont [9/16] 0.0, 128
        %475 = vxpose.xlu0.b32.cont [10/16] 0.0, 128
        %476 = vxpose.xlu0.b32.cont [11/16] 0.0, 128
        %477 = vxpose.xlu0.b32.cont [12/16] 0.0, 128
        %478 = vxpose.xlu0.b32.cont [13/16] 0.0, 128
        %479 = vxpose.xlu0.b32.cont [14/16] 0.0, 128
        %480 = vxpose.xlu0.b32.cont [15/16] 0.0, 128
        %481 = vxpose.xlu0.b32.end [16/16] 0.0, 128
        %v482 = vpop.trf.xlu0
        %v483 = vpop.trf.xlu0
        %v484 = vpop.trf.xlu0
        %v485 = vpop.trf.xlu0
        %v486 = vpop.trf.xlu0
        %v487 = vpop.trf.xlu0
        %v488 = vpop.trf.xlu0
        %v489 = vpop.trf.xlu0
        %v490 = vpop.trf.xlu0
        %v491 = vpop.trf.xlu0
        %v492 = vpop.trf.xlu0
        %v493 = vpop.trf.xlu0
        %v494 = vpop.trf.xlu0
        %v495 = vpop.trf.xlu0
        %v496 = vpop.trf.xlu0
        %v497 = vpop.trf.xlu0
        %498 = vxpose.xlu0.b32.start [1/16] %v451, 128
        %499 = vxpose.xlu0.b32.cont [2/16] %v459, 128
        %500 = vxpose.xlu0.b32.cont [3/16] 0.0, 128
        %501 = vxpose.xlu0.b32.cont [4/16] 0.0, 128
        %502 = vxpose.xlu0.b32.cont [5/16] 0.0, 128
        %503 = vxpose.xlu0.b32.cont [6/16] 0.0, 128
        %504 = vxpose.xlu0.b32.cont [7/16] 0.0, 128
        %505 = vxpose.xlu0.b32.cont [8/16] 0.0, 128
        %506 = vxpose.xlu0.b32.cont [9/16] 0.0, 128
        %507 = vxpose.xlu0.b32.cont [10/16] 0.0, 128
        %508 = vxpose.xlu0.b32.cont [11/16] 0.0, 128
        %509 = vxpose.xlu0.b32.cont [12/16] 0.0, 128
        %510 = vxpose.xlu0.b32.cont [13/16] 0.0, 128
        %511 = vxpose.xlu0.b32.cont [14/16] 0.0, 128
        %512 = vxpose.xlu0.b32.cont [15/16] 0.0, 128
        %513 = vxpose.xlu0.b32.end [16/16] 0.0, 128
        %v514 = vpop.trf.xlu0
        %v515 = vpop.trf.xlu0
        %v516 = vpop.trf.xlu0
        %v517 = vpop.trf.xlu0
        %v518 = vpop.trf.xlu0
        %v519 = vpop.trf.xlu0
        %v520 = vpop.trf.xlu0
        %v521 = vpop.trf.xlu0
        %v522 = vpop.trf.xlu0
        %v523 = vpop.trf.xlu0
        %v524 = vpop.trf.xlu0
        %v525 = vpop.trf.xlu0
        %v526 = vpop.trf.xlu0
        %v527 = vpop.trf.xlu0
        %v528 = vpop.trf.xlu0
        %v529 = vpop.trf.xlu0
        %530 = vxpose.xlu0.b32.start [1/16] %v452, 128
        %531 = vxpose.xlu0.b32.cont [2/16] %v460, 128
        %532 = vxpose.xlu0.b32.cont [3/16] 0.0, 128
        %533 = vxpose.xlu0.b32.cont [4/16] 0.0, 128
        %534 = vxpose.xlu0.b32.cont [5/16] 0.0, 128
        %535 = vxpose.xlu0.b32.cont [6/16] 0.0, 128
        %536 = vxpose.xlu0.b32.cont [7/16] 0.0, 128
        %537 = vxpose.xlu0.b32.cont [8/16] 0.0, 128
        %538 = vxpose.xlu0.b32.cont [9/16] 0.0, 128
        %539 = vxpose.xlu0.b32.cont [10/16] 0.0, 128
        %540 = vxpose.xlu0.b32.cont [11/16] 0.0, 128
        %541 = vxpose.xlu0.b32.cont [12/16] 0.0, 128
        %542 = vxpose.xlu0.b32.cont [13/16] 0.0, 128
        %543 = vxpose.xlu0.b32.cont [14/16] 0.0, 128
        %544 = vxpose.xlu0.b32.cont [15/16] 0.0, 128
        %545 = vxpose.xlu0.b32.end [16/16] 0.0, 128
        %v546 = vpop.trf.xlu0
        %v547 = vpop.trf.xlu0
        %v548 = vpop.trf.xlu0
        %v549 = vpop.trf.xlu0
        %v550 = vpop.trf.xlu0
        %v551 = vpop.trf.xlu0
        %v552 = vpop.trf.xlu0
        %v553 = vpop.trf.xlu0
        %v554 = vpop.trf.xlu0
        %v555 = vpop.trf.xlu0
        %v556 = vpop.trf.xlu0
        %v557 = vpop.trf.xlu0
        %v558 = vpop.trf.xlu0
        %v559 = vpop.trf.xlu0
        %v560 = vpop.trf.xlu0
        %v561 = vpop.trf.xlu0
        %562 = vxpose.xlu0.b32.start [1/16] %v453, 128
        %563 = vxpose.xlu0.b32.cont [2/16] %v461, 128
        %564 = vxpose.xlu0.b32.cont [3/16] 0.0, 128
        %565 = vxpose.xlu0.b32.cont [4/16] 0.0, 128
        %566 = vxpose.xlu0.b32.cont [5/16] 0.0, 128
        %567 = vxpose.xlu0.b32.cont [6/16] 0.0, 128
        %568 = vxpose.xlu0.b32.cont [7/16] 0.0, 128
        %569 = vxpose.xlu0.b32.cont [8/16] 0.0, 128
        %570 = vxpose.xlu0.b32.cont [9/16] 0.0, 128
        %571 = vxpose.xlu0.b32.cont [10/16] 0.0, 128
        %572 = vxpose.xlu0.b32.cont [11/16] 0.0, 128
        %573 = vxpose.xlu0.b32.cont [12/16] 0.0, 128
        %574 = vxpose.xlu0.b32.cont [13/16] 0.0, 128
        %575 = vxpose.xlu0.b32.cont [14/16] 0.0, 128
        %576 = vxpose.xlu0.b32.cont [15/16] 0.0, 128
        %577 = vxpose.xlu0.b32.end [16/16] 0.0, 128
        %v578 = vpop.trf.xlu0
        %v579 = vpop.trf.xlu0
        %v580 = vpop.trf.xlu0
        %v581 = vpop.trf.xlu0
        %v582 = vpop.trf.xlu0
        %v583 = vpop.trf.xlu0
        %v584 = vpop.trf.xlu0
        %v585 = vpop.trf.xlu0
        %v586 = vpop.trf.xlu0
        %v587 = vpop.trf.xlu0
        %v588 = vpop.trf.xlu0
        %v589 = vpop.trf.xlu0
        %v590 = vpop.trf.xlu0
        %v591 = vpop.trf.xlu0
        %v592 = vpop.trf.xlu0
        %v593 = vpop.trf.xlu0
        %594 = vxpose.xlu0.b32.start [1/16] %v454, 128
        %595 = vxpose.xlu0.b32.cont [2/16] %v462, 128
        %596 = vxpose.xlu0.b32.cont [3/16] 0.0, 128
        %597 = vxpose.xlu0.b32.cont [4/16] 0.0, 128
        %598 = vxpose.xlu0.b32.cont [5/16] 0.0, 128
        %599 = vxpose.xlu0.b32.cont [6/16] 0.0, 128
        %600 = vxpose.xlu0.b32.cont [7/16] 0.0, 128
        %601 = vxpose.xlu0.b32.cont [8/16] 0.0, 128
        %602 = vxpose.xlu0.b32.cont [9/16] 0.0, 128
        %603 = vxpose.xlu0.b32.cont [10/16] 0.0, 128
        %604 = vxpose.xlu0.b32.cont [11/16] 0.0, 128
        %605 = vxpose.xlu0.b32.cont [12/16] 0.0, 128
        %606 = vxpose.xlu0.b32.cont [13/16] 0.0, 128
        %607 = vxpose.xlu0.b32.cont [14/16] 0.0, 128
        %608 = vxpose.xlu0.b32.cont [15/16] 0.0, 128
        %609 = vxpose.xlu0.b32.end [16/16] 0.0, 128
        %v610 = vpop.trf.xlu0
        %v611 = vpop.trf.xlu0
        %v612 = vpop.trf.xlu0
        %v613 = vpop.trf.xlu0
        %v614 = vpop.trf.xlu0
        %v615 = vpop.trf.xlu0
        %v616 = vpop.trf.xlu0
        %v617 = vpop.trf.xlu0
        %v618 = vpop.trf.xlu0
        %v619 = vpop.trf.xlu0
        %v620 = vpop.trf.xlu0
        %v621 = vpop.trf.xlu0
        %v622 = vpop.trf.xlu0
        %v623 = vpop.trf.xlu0
        %v624 = vpop.trf.xlu0
        %v625 = vpop.trf.xlu0
        %626 = vxpose.xlu0.b32.start [1/16] %v455, 128
        %627 = vxpose.xlu0.b32.cont [2/16] %v463, 128
        %628 = vxpose.xlu0.b32.cont [3/16] 0.0, 128
        %629 = vxpose.xlu0.b32.cont [4/16] 0.0, 128
        %630 = vxpose.xlu0.b32.cont [5/16] 0.0, 128
        %631 = vxpose.xlu0.b32.cont [6/16] 0.0, 128
        %632 = vxpose.xlu0.b32.cont [7/16] 0.0, 128
        %633 = vxpose.xlu0.b32.cont [8/16] 0.0, 128
        %634 = vxpose.xlu0.b32.cont [9/16] 0.0, 128
        %635 = vxpose.xlu0.b32.cont [10/16] 0.0, 128
        %636 = vxpose.xlu0.b32.cont [11/16] 0.0, 128
        %637 = vxpose.xlu0.b32.cont [12/16] 0.0, 128
        %638 = vxpose.xlu0.b32.cont [13/16] 0.0, 128
        %639 = vxpose.xlu0.b32.cont [14/16] 0.0, 128
        %640 = vxpose.xlu0.b32.cont [15/16] 0.0, 128
        %641 = vxpose.xlu0.b32.end [16/16] 0.0, 128
        %v642 = vpop.trf.xlu0
        %v643 = vpop.trf.xlu0
        %v644 = vpop.trf.xlu0
        %v645 = vpop.trf.xlu0
        %v646 = vpop.trf.xlu0
        %v647 = vpop.trf.xlu0
        %v648 = vpop.trf.xlu0
        %v649 = vpop.trf.xlu0
        %v650 = vpop.trf.xlu0
        %v651 = vpop.trf.xlu0
        %v652 = vpop.trf.xlu0
        %v653 = vpop.trf.xlu0
        %v654 = vpop.trf.xlu0
        %v655 = vpop.trf.xlu0
        %v656 = vpop.trf.xlu0
        %v657 = vpop.trf.xlu0
        %658 = vxpose.xlu0.b32.start [1/16] %v456, 128
        %659 = vxpose.xlu0.b32.cont [2/16] %v464, 128
        %660 = vxpose.xlu0.b32.cont [3/16] 0.0, 128
        %661 = vxpose.xlu0.b32.cont [4/16] 0.0, 128
        %662 = vxpose.xlu0.b32.cont [5/16] 0.0, 128
        %663 = vxpose.xlu0.b32.cont [6/16] 0.0, 128
        %664 = vxpose.xlu0.b32.cont [7/16] 0.0, 128
        %665 = vxpose.xlu0.b32.cont [8/16] 0.0, 128
        %666 = vxpose.xlu0.b32.cont [9/16] 0.0, 128
        %667 = vxpose.xlu0.b32.cont [10/16] 0.0, 128
        %668 = vxpose.xlu0.b32.cont [11/16] 0.0, 128
        %669 = vxpose.xlu0.b32.cont [12/16] 0.0, 128
        %670 = vxpose.xlu0.b32.cont [13/16] 0.0, 128
        %671 = vxpose.xlu0.b32.cont [14/16] 0.0, 128
        %672 = vxpose.xlu0.b32.cont [15/16] 0.0, 128
        %673 = vxpose.xlu0.b32.end [16/16] 0.0, 128
        %v674 = vpop.trf.xlu0
        %v675 = vpop.trf.xlu0
        %v676 = vpop.trf.xlu0
        %v677 = vpop.trf.xlu0
        %v678 = vpop.trf.xlu0
        %v679 = vpop.trf.xlu0
        %v680 = vpop.trf.xlu0
        %v681 = vpop.trf.xlu0
        %v682 = vpop.trf.xlu0
        %v683 = vpop.trf.xlu0
        %v684 = vpop.trf.xlu0
        %v685 = vpop.trf.xlu0
        %v686 = vpop.trf.xlu0
        %v687 = vpop.trf.xlu0
        %v688 = vpop.trf.xlu0
        %v689 = vpop.trf.xlu0
        %690 = vxpose.xlu0.b32.start [1/16] %v457, 128
        %691 = vxpose.xlu0.b32.cont [2/16] %v465, 128
        %692 = vxpose.xlu0.b32.cont [3/16] 0.0, 128
        %693 = vxpose.xlu0.b32.cont [4/16] 0.0, 128
        %694 = vxpose.xlu0.b32.cont [5/16] 0.0, 128
        %695 = vxpose.xlu0.b32.cont [6/16] 0.0, 128
        %696 = vxpose.xlu0.b32.cont [7/16] 0.0, 128
        %697 = vxpose.xlu0.b32.cont [8/16] 0.0, 128
        %698 = vxpose.xlu0.b32.cont [9/16] 0.0, 128
        %699 = vxpose.xlu0.b32.cont [10/16] 0.0, 128
        %700 = vxpose.xlu0.b32.cont [11/16] 0.0, 128
        %701 = vxpose.xlu0.b32.cont [12/16] 0.0, 128
        %702 = vxpose.xlu0.b32.cont [13/16] 0.0, 128
        %703 = vxpose.xlu0.b32.cont [14/16] 0.0, 128
        %704 = vxpose.xlu0.b32.cont [15/16] 0.0, 128
        %705 = vxpose.xlu0.b32.end [16/16] 0.0, 128
        %v706 = vpop.trf.xlu0
        %v707 = vpop.trf.xlu0
        %v708 = vpop.trf.xlu0
        %v709 = vpop.trf.xlu0
        %v710 = vpop.trf.xlu0
        %v711 = vpop.trf.xlu0
        %v712 = vpop.trf.xlu0
        %v713 = vpop.trf.xlu0
        %v714 = vpop.trf.xlu0
        %v715 = vpop.trf.xlu0
        %v716 = vpop.trf.xlu0
        %v717 = vpop.trf.xlu0
        %v718 = vpop.trf.xlu0
        %v719 = vpop.trf.xlu0
        %v720 = vpop.trf.xlu0
        %v721 = vpop.trf.xlu0
        %v722 = vpack.c.bf16 %v483, %v482
        %v723 = vpack.c.bf16 %v485, %v484
        %v724 = vpack.c.bf16 %v487, %v486
        %v725 = vpack.c.bf16 %v489, %v488
        %v726 = vpack.c.bf16 %v491, %v490
        %v727 = vpack.c.bf16 %v493, %v492
        %v728 = vpack.c.bf16 %v495, %v494
        %v729 = vpack.c.bf16 %v497, %v496
        %v730 = vpack.c.bf16 %v515, %v514
        %v731 = vpack.c.bf16 %v517, %v516
        %v732 = vpack.c.bf16 %v519, %v518
        %v733 = vpack.c.bf16 %v521, %v520
        %v734 = vpack.c.bf16 %v523, %v522
        %v735 = vpack.c.bf16 %v525, %v524
        %v736 = vpack.c.bf16 %v527, %v526
        %v737 = vpack.c.bf16 %v529, %v528
        %v738 = vpack.c.bf16 %v547, %v546
        %v739 = vpack.c.bf16 %v549, %v548
        %v740 = vpack.c.bf16 %v551, %v550
        %v741 = vpack.c.bf16 %v553, %v552
        %v742 = vpack.c.bf16 %v555, %v554
        %v743 = vpack.c.bf16 %v557, %v556
        %v744 = vpack.c.bf16 %v559, %v558
        %v745 = vpack.c.bf16 %v561, %v560
        %v746 = vpack.c.bf16 %v579, %v578
        %v747 = vpack.c.bf16 %v581, %v580
        %v748 = vpack.c.bf16 %v583, %v582
        %v749 = vpack.c.bf16 %v585, %v584
        %v750 = vpack.c.bf16 %v587, %v586
        %v751 = vpack.c.bf16 %v589, %v588
        %v752 = vpack.c.bf16 %v591, %v590
        %v753 = vpack.c.bf16 %v593, %v592
        %v754 = vpack.c.bf16 %v611, %v610
        %v755 = vpack.c.bf16 %v613, %v612
        %v756 = vpack.c.bf16 %v615, %v614
        %v757 = vpack.c.bf16 %v617, %v616
        %v758 = vpack.c.bf16 %v619, %v618
        %v759 = vpack.c.bf16 %v621, %v620
        %v760 = vpack.c.bf16 %v623, %v622
        %v761 = vpack.c.bf16 %v625, %v624
        %v762 = vpack.c.bf16 %v643, %v642
        %v763 = vpack.c.bf16 %v645, %v644
        %v764 = vpack.c.bf16 %v647, %v646
        %v765 = vpack.c.bf16 %v649, %v648
        %v766 = vpack.c.bf16 %v651, %v650
        %v767 = vpack.c.bf16 %v653, %v652
        %v768 = vpack.c.bf16 %v655, %v654
        %v769 = vpack.c.bf16 %v657, %v656
        %v770 = vpack.c.bf16 %v675, %v674
        %v771 = vpack.c.bf16 %v677, %v676
        %v772 = vpack.c.bf16 %v679, %v678
        %v773 = vpack.c.bf16 %v681, %v680
        %v774 = vpack.c.bf16 %v683, %v682
        %v775 = vpack.c.bf16 %v685, %v684
        %v776 = vpack.c.bf16 %v687, %v686
        %v777 = vpack.c.bf16 %v689, %v688
        %v778 = vpack.c.bf16 %v707, %v706
        %v779 = vpack.c.bf16 %v709, %v708
        %v780 = vpack.c.bf16 %v711, %v710
        %v781 = vpack.c.bf16 %v713, %v712
        %v782 = vpack.c.bf16 %v715, %v714
        %v783 = vpack.c.bf16 %v717, %v716
        %v784 = vpack.c.bf16 %v719, %v718
        %v785 = vpack.c.bf16 %v721, %v720
        %v786 = vld [vmem:[#allocation9] sm:$0xf]
        %v787 = vld [vmem:[#allocation9 + $0x4] sm:$0xf]
        %v788 = vld [vmem:[%s4] sm:$0x1]
        %v790 = vperm.slane %v788, 0
        %v794 = vunpack.c.l.b16 %v786
        %v795 = vunpack.c.l.b16 %v787
        %v796 = vpack.c.b16 %v795, %v794
        %vm798 = vcmask 130048
        %v800 = vsel %vm798, %v722, 0
        %v803 = vsel %vm798, %v723, 0
        %v806 = vsel %vm798, %v724, 0
        %v809 = vsel %vm798, %v725, 0
        %v812 = vsel %vm798, %v726, 0
        %v815 = vsel %vm798, %v727, 0
        %v818 = vsel %vm798, %v728, 0
        %v821 = vsel %vm798, %v729, 0
        %v824 = vsel %vm798, %v730, 0
        %v827 = vsel %vm798, %v731, 0
        %v830 = vsel %vm798, %v732, 0
        %v833 = vsel %vm798, %v733, 0
        %v836 = vsel %vm798, %v734, 0
        %v839 = vsel %vm798, %v735, 0
        %v842 = vsel %vm798, %v736, 0
        %v845 = vsel %vm798, %v737, 0
        %v848 = vsel %vm798, %v738, 0
        %v851 = vsel %vm798, %v739, 0
        %v854 = vsel %vm798, %v740, 0
        %v857 = vsel %vm798, %v741, 0
        %v860 = vsel %vm798, %v742, 0
        %v863 = vsel %vm798, %v743, 0
        %v866 = vsel %vm798, %v744, 0
        %v869 = vsel %vm798, %v745, 0
        %v872 = vsel %vm798, %v746, 0
        %v875 = vsel %vm798, %v747, 0
        %v878 = vsel %vm798, %v748, 0
        %v881 = vsel %vm798, %v749, 0
        %v884 = vsel %vm798, %v750, 0
        %v887 = vsel %vm798, %v751, 0
        %v890 = vsel %vm798, %v752, 0
        %v893 = vsel %vm798, %v753, 0
        %v896 = vsel %vm798, %v754, 0
        %v899 = vsel %vm798, %v755, 0
        %v902 = vsel %vm798, %v756, 0
        %v905 = vsel %vm798, %v757, 0
        %v908 = vsel %vm798, %v758, 0
        %v911 = vsel %vm798, %v759, 0
        %v914 = vsel %vm798, %v760, 0
        %v917 = vsel %vm798, %v761, 0
        %v920 = vsel %vm798, %v762, 0
        %v923 = vsel %vm798, %v763, 0
        %v926 = vsel %vm798, %v764, 0
        %v929 = vsel %vm798, %v765, 0
        %v932 = vsel %vm798, %v766, 0
        %v935 = vsel %vm798, %v767, 0
        %v938 = vsel %vm798, %v768, 0
        %v941 = vsel %vm798, %v769, 0
        %v944 = vsel %vm798, %v770, 0
        %v947 = vsel %vm798, %v771, 0
        %v950 = vsel %vm798, %v772, 0
        %v953 = vsel %vm798, %v773, 0
        %v956 = vsel %vm798, %v774, 0
        %v959 = vsel %vm798, %v775, 0
        %v962 = vsel %vm798, %v776, 0
        %v965 = vsel %vm798, %v777, 0
        %v968 = vsel %vm798, %v778, 0
        %v971 = vsel %vm798, %v779, 0
        %v974 = vsel %vm798, %v780, 0
        %v977 = vsel %vm798, %v781, 0
        %v980 = vsel %vm798, %v782, 0
        %v983 = vsel %vm798, %v783, 0
        %v986 = vsel %vm798, %v784, 0
        %v989 = vsel %vm798, %v785, 0
        %991 = vmatpush.bf16.msra.mxu0 0
        %992 = vmatpush.bf16.msra.mxu0 0
        %993 = vmatpush.bf16.msra.mxu0 0
        %994 = vmatpush.bf16.msra.mxu0 0
        %995 = vmatpush.bf16.msra.mxu0 0
        %996 = vmatpush.bf16.msra.mxu0 0
        %997 = vmatpush.bf16.msra.mxu0 0
        %998 = vmatpush.bf16.msra.mxu0 %v796
        %999 = vmatmul.bf16.gmra.mxu0 %v800
        %v1000 = vpop.f32.mrf.mxu0
        %v1001 = vadd.f32 %v790, %v1000
        %v1002 = vpop.f32.mrf.mxu0
        %v1003 = vadd.f32 %v790, %v1002
        %1004 = vmatmul.bf16.gmra.mxu0 %v803
        %v1005 = vpop.f32.mrf.mxu0
        %v1006 = vadd.f32 %v790, %v1005
        %v1007 = vpop.f32.mrf.mxu0
        %v1008 = vadd.f32 %v790, %v1007
        %1009 = vmatmul.bf16.gmra.mxu0 %v806
        %v1010 = vpop.f32.mrf.mxu0
        %v1011 = vadd.f32 %v790, %v1010
        %v1012 = vpop.f32.mrf.mxu0
        %v1013 = vadd.f32 %v790, %v1012
        %1014 = vmatmul.bf16.gmra.mxu0 %v809
        %v1015 = vpop.f32.mrf.mxu0
        %v1016 = vadd.f32 %v790, %v1015
        %v1017 = vpop.f32.mrf.mxu0
        %v1018 = vadd.f32 %v790, %v1017
        %1019 = vmatmul.bf16.gmra.mxu0 %v812
        %v1020 = vpop.f32.mrf.mxu0
        %v1021 = vadd.f32 %v790, %v1020
        %v1022 = vpop.f32.mrf.mxu0
        %v1023 = vadd.f32 %v790, %v1022
        %1024 = vmatmul.bf16.gmra.mxu0 %v815
        %v1025 = vpop.f32.mrf.mxu0
        %v1026 = vadd.f32 %v790, %v1025
        %v1027 = vpop.f32.mrf.mxu0
        %v1028 = vadd.f32 %v790, %v1027
        %1029 = vmatmul.bf16.gmra.mxu0 %v818
        %v1030 = vpop.f32.mrf.mxu0
        %v1031 = vadd.f32 %v790, %v1030
        %v1032 = vpop.f32.mrf.mxu0
        %v1033 = vadd.f32 %v790, %v1032
        %1034 = vmatmul.bf16.gmra.mxu0 %v821
        %v1035 = vpop.f32.mrf.mxu0
        %v1036 = vadd.f32 %v790, %v1035
        %v1037 = vpop.f32.mrf.mxu0
        %v1038 = vadd.f32 %v790, %v1037
        %1039 = vmatmul.bf16.gmra.mxu0 %v824
        %v1040 = vpop.f32.mrf.mxu0
        %v1041 = vadd.f32 %v790, %v1040
        %v1042 = vpop.f32.mrf.mxu0
        %v1043 = vadd.f32 %v790, %v1042
        %1044 = vmatmul.bf16.gmra.mxu0 %v827
        %v1045 = vpop.f32.mrf.mxu0
        %v1046 = vadd.f32 %v790, %v1045
        %v1047 = vpop.f32.mrf.mxu0
        %v1048 = vadd.f32 %v790, %v1047
        %1049 = vmatmul.bf16.gmra.mxu0 %v830
        %v1050 = vpop.f32.mrf.mxu0
        %v1051 = vadd.f32 %v790, %v1050
        %v1052 = vpop.f32.mrf.mxu0
        %v1053 = vadd.f32 %v790, %v1052
        %1054 = vmatmul.bf16.gmra.mxu0 %v833
        %v1055 = vpop.f32.mrf.mxu0
        %v1056 = vadd.f32 %v790, %v1055
        %v1057 = vpop.f32.mrf.mxu0
        %v1058 = vadd.f32 %v790, %v1057
        %1059 = vmatmul.bf16.gmra.mxu0 %v836
        %v1060 = vpop.f32.mrf.mxu0
        %v1061 = vadd.f32 %v790, %v1060
        %v1062 = vpop.f32.mrf.mxu0
        %v1063 = vadd.f32 %v790, %v1062
        %1064 = vmatmul.bf16.gmra.mxu0 %v839
        %v1065 = vpop.f32.mrf.mxu0
        %v1066 = vadd.f32 %v790, %v1065
        %v1067 = vpop.f32.mrf.mxu0
        %v1068 = vadd.f32 %v790, %v1067
        %1069 = vmatmul.bf16.gmra.mxu0 %v842
        %v1070 = vpop.f32.mrf.mxu0
        %v1071 = vadd.f32 %v790, %v1070
        %v1072 = vpop.f32.mrf.mxu0
        %v1073 = vadd.f32 %v790, %v1072
        %1074 = vmatmul.bf16.gmra.mxu0 %v845
        %v1075 = vpop.f32.mrf.mxu0
        %v1076 = vadd.f32 %v790, %v1075
        %v1077 = vpop.f32.mrf.mxu0
        %v1078 = vadd.f32 %v790, %v1077
        %1079 = vmatmul.bf16.gmra.mxu0 %v848
        %v1080 = vpop.f32.mrf.mxu0
        %v1081 = vadd.f32 %v790, %v1080
        %v1082 = vpop.f32.mrf.mxu0
        %v1083 = vadd.f32 %v790, %v1082
        %1084 = vmatmul.bf16.gmra.mxu0 %v851
        %v1085 = vpop.f32.mrf.mxu0
        %v1086 = vadd.f32 %v790, %v1085
        %v1087 = vpop.f32.mrf.mxu0
        %v1088 = vadd.f32 %v790, %v1087
        %1089 = vmatmul.bf16.gmra.mxu0 %v854
        %v1090 = vpop.f32.mrf.mxu0
        %v1091 = vadd.f32 %v790, %v1090
        %v1092 = vpop.f32.mrf.mxu0
        %v1093 = vadd.f32 %v790, %v1092
        %1094 = vmatmul.bf16.gmra.mxu0 %v857
        %v1095 = vpop.f32.mrf.mxu0
        %v1096 = vadd.f32 %v790, %v1095
        %v1097 = vpop.f32.mrf.mxu0
        %v1098 = vadd.f32 %v790, %v1097
        %1099 = vmatmul.bf16.gmra.mxu0 %v860
        %v1100 = vpop.f32.mrf.mxu0
        %v1101 = vadd.f32 %v790, %v1100
        %v1102 = vpop.f32.mrf.mxu0
        %v1103 = vadd.f32 %v790, %v1102
        %1104 = vmatmul.bf16.gmra.mxu0 %v863
        %v1105 = vpop.f32.mrf.mxu0
        %v1106 = vadd.f32 %v790, %v1105
        %v1107 = vpop.f32.mrf.mxu0
        %v1108 = vadd.f32 %v790, %v1107
        %1109 = vmatmul.bf16.gmra.mxu0 %v866
        %v1110 = vpop.f32.mrf.mxu0
        %v1111 = vadd.f32 %v790, %v1110
        %v1112 = vpop.f32.mrf.mxu0
        %v1113 = vadd.f32 %v790, %v1112
        %1114 = vmatmul.bf16.gmra.mxu0 %v869
        %v1115 = vpop.f32.mrf.mxu0
        %v1116 = vadd.f32 %v790, %v1115
        %v1117 = vpop.f32.mrf.mxu0
        %v1118 = vadd.f32 %v790, %v1117
        %1119 = vmatmul.bf16.gmra.mxu0 %v872
        %v1120 = vpop.f32.mrf.mxu0
        %v1121 = vadd.f32 %v790, %v1120
        %v1122 = vpop.f32.mrf.mxu0
        %v1123 = vadd.f32 %v790, %v1122
        %1124 = vmatmul.bf16.gmra.mxu0 %v875
        %v1125 = vpop.f32.mrf.mxu0
        %v1126 = vadd.f32 %v790, %v1125
        %v1127 = vpop.f32.mrf.mxu0
        %v1128 = vadd.f32 %v790, %v1127
        %1129 = vmatmul.bf16.gmra.mxu0 %v878
        %v1130 = vpop.f32.mrf.mxu0
        %v1131 = vadd.f32 %v790, %v1130
        %v1132 = vpop.f32.mrf.mxu0
        %v1133 = vadd.f32 %v790, %v1132
        %1134 = vmatmul.bf16.gmra.mxu0 %v881
        %v1135 = vpop.f32.mrf.mxu0
        %v1136 = vadd.f32 %v790, %v1135
        %v1137 = vpop.f32.mrf.mxu0
        %v1138 = vadd.f32 %v790, %v1137
        %1139 = vmatmul.bf16.gmra.mxu0 %v884
        %v1140 = vpop.f32.mrf.mxu0
        %v1141 = vadd.f32 %v790, %v1140
        %v1142 = vpop.f32.mrf.mxu0
        %v1143 = vadd.f32 %v790, %v1142
        %1144 = vmatmul.bf16.gmra.mxu0 %v887
        %v1145 = vpop.f32.mrf.mxu0
        %v1146 = vadd.f32 %v790, %v1145
        %v1147 = vpop.f32.mrf.mxu0
        %v1148 = vadd.f32 %v790, %v1147
        %1149 = vmatmul.bf16.gmra.mxu0 %v890
        %v1150 = vpop.f32.mrf.mxu0
        %v1151 = vadd.f32 %v790, %v1150
        %v1152 = vpop.f32.mrf.mxu0
        %v1153 = vadd.f32 %v790, %v1152
        %1154 = vmatmul.bf16.gmra.mxu0 %v893
        %v1155 = vpop.f32.mrf.mxu0
        %v1156 = vadd.f32 %v790, %v1155
        %v1157 = vpop.f32.mrf.mxu0
        %v1158 = vadd.f32 %v790, %v1157
        %1159 = vmatmul.bf16.gmra.mxu0 %v896
        %v1160 = vpop.f32.mrf.mxu0
        %v1161 = vadd.f32 %v790, %v1160
        %v1162 = vpop.f32.mrf.mxu0
        %v1163 = vadd.f32 %v790, %v1162
        %1164 = vmatmul.bf16.gmra.mxu0 %v899
        %v1165 = vpop.f32.mrf.mxu0
        %v1166 = vadd.f32 %v790, %v1165
        %v1167 = vpop.f32.mrf.mxu0
        %v1168 = vadd.f32 %v790, %v1167
        %1169 = vmatmul.bf16.gmra.mxu0 %v902
        %v1170 = vpop.f32.mrf.mxu0
        %v1171 = vadd.f32 %v790, %v1170
        %v1172 = vpop.f32.mrf.mxu0
        %v1173 = vadd.f32 %v790, %v1172
        %1174 = vmatmul.bf16.gmra.mxu0 %v905
        %v1175 = vpop.f32.mrf.mxu0
        %v1176 = vadd.f32 %v790, %v1175
        %v1177 = vpop.f32.mrf.mxu0
        %v1178 = vadd.f32 %v790, %v1177
        %1179 = vmatmul.bf16.gmra.mxu0 %v908
        %v1180 = vpop.f32.mrf.mxu0
        %v1181 = vadd.f32 %v790, %v1180
        %v1182 = vpop.f32.mrf.mxu0
        %v1183 = vadd.f32 %v790, %v1182
        %1184 = vmatmul.bf16.gmra.mxu0 %v911
        %v1185 = vpop.f32.mrf.mxu0
        %v1186 = vadd.f32 %v790, %v1185
        %v1187 = vpop.f32.mrf.mxu0
        %v1188 = vadd.f32 %v790, %v1187
        %1189 = vmatmul.bf16.gmra.mxu0 %v914
        %v1190 = vpop.f32.mrf.mxu0
        %v1191 = vadd.f32 %v790, %v1190
        %v1192 = vpop.f32.mrf.mxu0
        %v1193 = vadd.f32 %v790, %v1192
        %1194 = vmatmul.bf16.gmra.mxu0 %v917
        %v1195 = vpop.f32.mrf.mxu0
        %v1196 = vadd.f32 %v790, %v1195
        %v1197 = vpop.f32.mrf.mxu0
        %v1198 = vadd.f32 %v790, %v1197
        %1199 = vmatmul.bf16.gmra.mxu0 %v920
        %v1200 = vpop.f32.mrf.mxu0
        %v1201 = vadd.f32 %v790, %v1200
        %v1202 = vpop.f32.mrf.mxu0
        %v1203 = vadd.f32 %v790, %v1202
        %1204 = vmatmul.bf16.gmra.mxu0 %v923
        %v1205 = vpop.f32.mrf.mxu0
        %v1206 = vadd.f32 %v790, %v1205
        %v1207 = vpop.f32.mrf.mxu0
        %v1208 = vadd.f32 %v790, %v1207
        %1209 = vmatmul.bf16.gmra.mxu0 %v926
        %v1210 = vpop.f32.mrf.mxu0
        %v1211 = vadd.f32 %v790, %v1210
        %v1212 = vpop.f32.mrf.mxu0
        %v1213 = vadd.f32 %v790, %v1212
        %1214 = vmatmul.bf16.gmra.mxu0 %v929
        %v1215 = vpop.f32.mrf.mxu0
        %v1216 = vadd.f32 %v790, %v1215
        %v1217 = vpop.f32.mrf.mxu0
        %v1218 = vadd.f32 %v790, %v1217
        %1219 = vmatmul.bf16.gmra.mxu0 %v932
        %v1220 = vpop.f32.mrf.mxu0
        %v1221 = vadd.f32 %v790, %v1220
        %v1222 = vpop.f32.mrf.mxu0
        %v1223 = vadd.f32 %v790, %v1222
        %1224 = vmatmul.bf16.gmra.mxu0 %v935
        %v1225 = vpop.f32.mrf.mxu0
        %v1226 = vadd.f32 %v790, %v1225
        %v1227 = vpop.f32.mrf.mxu0
        %v1228 = vadd.f32 %v790, %v1227
        %1229 = vmatmul.bf16.gmra.mxu0 %v938
        %v1230 = vpop.f32.mrf.mxu0
        %v1231 = vadd.f32 %v790, %v1230
        %v1232 = vpop.f32.mrf.mxu0
        %v1233 = vadd.f32 %v790, %v1232
        %1234 = vmatmul.bf16.gmra.mxu0 %v941
        %v1235 = vpop.f32.mrf.mxu0
        %v1236 = vadd.f32 %v790, %v1235
        %v1237 = vpop.f32.mrf.mxu0
        %v1238 = vadd.f32 %v790, %v1237
        %1239 = vmatmul.bf16.gmra.mxu0 %v944
        %v1240 = vpop.f32.mrf.mxu0
        %v1241 = vadd.f32 %v790, %v1240
        %v1242 = vpop.f32.mrf.mxu0
        %v1243 = vadd.f32 %v790, %v1242
        %1244 = vmatmul.bf16.gmra.mxu0 %v947
        %v1245 = vpop.f32.mrf.mxu0
        %v1246 = vadd.f32 %v790, %v1245
        %v1247 = vpop.f32.mrf.mxu0
        %v1248 = vadd.f32 %v790, %v1247
        %1249 = vmatmul.bf16.gmra.mxu0 %v950
        %v1250 = vpop.f32.mrf.mxu0
        %v1251 = vadd.f32 %v790, %v1250
        %v1252 = vpop.f32.mrf.mxu0
        %v1253 = vadd.f32 %v790, %v1252
        %1254 = vmatmul.bf16.gmra.mxu0 %v953
        %v1255 = vpop.f32.mrf.mxu0
        %v1256 = vadd.f32 %v790, %v1255
        %v1257 = vpop.f32.mrf.mxu0
        %v1258 = vadd.f32 %v790, %v1257
        %1259 = vmatmul.bf16.gmra.mxu0 %v956
        %v1260 = vpop.f32.mrf.mxu0
        %v1261 = vadd.f32 %v790, %v1260
        %v1262 = vpop.f32.mrf.mxu0
        %v1263 = vadd.f32 %v790, %v1262
        %1264 = vmatmul.bf16.gmra.mxu0 %v959
        %v1265 = vpop.f32.mrf.mxu0
        %v1266 = vadd.f32 %v790, %v1265
        %v1267 = vpop.f32.mrf.mxu0
        %v1268 = vadd.f32 %v790, %v1267
        %1269 = vmatmul.bf16.gmra.mxu0 %v962
        %v1270 = vpop.f32.mrf.mxu0
        %v1271 = vadd.f32 %v790, %v1270
        %v1272 = vpop.f32.mrf.mxu0
        %v1273 = vadd.f32 %v790, %v1272
        %1274 = vmatmul.bf16.gmra.mxu0 %v965
        %v1275 = vpop.f32.mrf.mxu0
        %v1276 = vadd.f32 %v790, %v1275
        %v1277 = vpop.f32.mrf.mxu0
        %v1278 = vadd.f32 %v790, %v1277
        %1279 = vmatmul.bf16.gmra.mxu0 %v968
        %v1280 = vpop.f32.mrf.mxu0
        %v1281 = vadd.f32 %v790, %v1280
        %v1282 = vpop.f32.mrf.mxu0
        %v1283 = vadd.f32 %v790, %v1282
        %1284 = vmatmul.bf16.gmra.mxu0 %v971
        %v1285 = vpop.f32.mrf.mxu0
        %v1286 = vadd.f32 %v790, %v1285
        %v1287 = vpop.f32.mrf.mxu0
        %v1288 = vadd.f32 %v790, %v1287
        %1289 = vmatmul.bf16.gmra.mxu0 %v974
        %v1290 = vpop.f32.mrf.mxu0
        %v1291 = vadd.f32 %v790, %v1290
        %v1292 = vpop.f32.mrf.mxu0
        %v1293 = vadd.f32 %v790, %v1292
        %1294 = vmatmul.bf16.gmra.mxu0 %v977
        %v1295 = vpop.f32.mrf.mxu0
        %v1296 = vadd.f32 %v790, %v1295
        %v1297 = vpop.f32.mrf.mxu0
        %v1298 = vadd.f32 %v790, %v1297
        %1299 = vmatmul.bf16.gmra.mxu0 %v980
        %v1300 = vpop.f32.mrf.mxu0
        %v1301 = vadd.f32 %v790, %v1300
        %v1302 = vpop.f32.mrf.mxu0
        %v1303 = vadd.f32 %v790, %v1302
        %1304 = vmatmul.bf16.gmra.mxu0 %v983
        %v1305 = vpop.f32.mrf.mxu0
        %v1306 = vadd.f32 %v790, %v1305
        %v1307 = vpop.f32.mrf.mxu0
        %v1308 = vadd.f32 %v790, %v1307
        %1309 = vmatmul.bf16.gmra.mxu0 %v986
        %v1310 = vpop.f32.mrf.mxu0
        %v1311 = vadd.f32 %v790, %v1310
        %v1312 = vpop.f32.mrf.mxu0
        %v1313 = vadd.f32 %v790, %v1312
        %1314 = vmatmul.bf16.gmra.mxu0 %v989
        %v1315 = vpop.f32.mrf.mxu0
        %v1316 = vadd.f32 %v790, %v1315
        %v1317 = vpop.f32.mrf.mxu0
        %v1318 = vadd.f32 %v790, %v1317
        %1319 = vdwg.mxu0
        %v1320 = vpack.c.bf16 %v1003, %v1001
        %v1321 = vpack.c.bf16 %v1008, %v1006
        %v1322 = vpack.c.bf16 %v1013, %v1011
        %v1323 = vpack.c.bf16 %v1018, %v1016
        %v1324 = vpack.c.bf16 %v1023, %v1021
        %v1325 = vpack.c.bf16 %v1028, %v1026
        %v1326 = vpack.c.bf16 %v1033, %v1031
        %v1327 = vpack.c.bf16 %v1038, %v1036
        %v1328 = vpack.c.bf16 %v1043, %v1041
        %v1329 = vpack.c.bf16 %v1048, %v1046
        %v1330 = vpack.c.bf16 %v1053, %v1051
        %v1331 = vpack.c.bf16 %v1058, %v1056
        %v1332 = vpack.c.bf16 %v1063, %v1061
        %v1333 = vpack.c.bf16 %v1068, %v1066
        %v1334 = vpack.c.bf16 %v1073, %v1071
        %v1335 = vpack.c.bf16 %v1078, %v1076
        %v1336 = vpack.c.bf16 %v1083, %v1081
        %v1337 = vpack.c.bf16 %v1088, %v1086
        %v1338 = vpack.c.bf16 %v1093, %v1091
        %v1339 = vpack.c.bf16 %v1098, %v1096
        %v1340 = vpack.c.bf16 %v1103, %v1101
        %v1341 = vpack.c.bf16 %v1108, %v1106
        %v1342 = vpack.c.bf16 %v1113, %v1111
        %v1343 = vpack.c.bf16 %v1118, %v1116
        %v1344 = vpack.c.bf16 %v1123, %v1121
        %v1345 = vpack.c.bf16 %v1128, %v1126
        %v1346 = vpack.c.bf16 %v1133, %v1131
        %v1347 = vpack.c.bf16 %v1138, %v1136
        %v1348 = vpack.c.bf16 %v1143, %v1141
        %v1349 = vpack.c.bf16 %v1148, %v1146
        %v1350 = vpack.c.bf16 %v1153, %v1151
        %v1351 = vpack.c.bf16 %v1158, %v1156
        %v1352 = vpack.c.bf16 %v1163, %v1161
        %v1353 = vpack.c.bf16 %v1168, %v1166
        %v1354 = vpack.c.bf16 %v1173, %v1171
        %v1355 = vpack.c.bf16 %v1178, %v1176
        %v1356 = vpack.c.bf16 %v1183, %v1181
        %v1357 = vpack.c.bf16 %v1188, %v1186
        %v1358 = vpack.c.bf16 %v1193, %v1191
        %v1359 = vpack.c.bf16 %v1198, %v1196
        %v1360 = vpack.c.bf16 %v1203, %v1201
        %v1361 = vpack.c.bf16 %v1208, %v1206
        %v1362 = vpack.c.bf16 %v1213, %v1211
        %v1363 = vpack.c.bf16 %v1218, %v1216
        %v1364 = vpack.c.bf16 %v1223, %v1221
        %v1365 = vpack.c.bf16 %v1228, %v1226
        %v1366 = vpack.c.bf16 %v1233, %v1231
        %v1367 = vpack.c.bf16 %v1238, %v1236
        %v1368 = vpack.c.bf16 %v1243, %v1241
        %v1369 = vpack.c.bf16 %v1248, %v1246
        %v1370 = vpack.c.bf16 %v1253, %v1251
        %v1371 = vpack.c.bf16 %v1258, %v1256
        %v1372 = vpack.c.bf16 %v1263, %v1261
        %v1373 = vpack.c.bf16 %v1268, %v1266
        %v1374 = vpack.c.bf16 %v1273, %v1271
        %v1375 = vpack.c.bf16 %v1278, %v1276
        %v1376 = vpack.c.bf16 %v1283, %v1281
        %v1377 = vpack.c.bf16 %v1288, %v1286
        %v1378 = vpack.c.bf16 %v1293, %v1291
        %v1379 = vpack.c.bf16 %v1298, %v1296
        %v1380 = vpack.c.bf16 %v1303, %v1301
        %v1381 = vpack.c.bf16 %v1308, %v1306
        %v1382 = vpack.c.bf16 %v1313, %v1311
        %v1383 = vpack.c.bf16 %v1318, %v1316
        %v1392 = vunpack.c.l.b16 %v434
        %v1393 = vunpack.c.h.b16 %v434
        %v1394 = vunpack.c.l.b16 %v435
        %v1395 = vunpack.c.h.b16 %v435
        %v1396 = vunpack.c.l.b16 %v436
        %v1397 = vunpack.c.h.b16 %v436
        %v1398 = vunpack.c.l.b16 %v437
        %v1399 = vunpack.c.h.b16 %v437
        %v1400 = vunpack.c.l.b16 %v438
        %v1401 = vunpack.c.h.b16 %v438
        %v1402 = vunpack.c.l.b16 %v439
        %v1403 = vunpack.c.h.b16 %v439
        %v1404 = vunpack.c.l.b16 %v440
        %v1405 = vunpack.c.h.b16 %v440
        %v1406 = vunpack.c.l.b16 %v441
        %v1407 = vunpack.c.h.b16 %v441
        %v1408 = vpack.c.b16 %v1400, %v1392
        %v1409 = vpack.c.b16 %v1401, %v1393
        %v1410 = vpack.c.b16 %v1402, %v1394
        %v1411 = vpack.c.b16 %v1403, %v1395
        %v1412 = vpack.c.b16 %v1404, %v1396
        %v1413 = vpack.c.b16 %v1405, %v1397
        %v1414 = vpack.c.b16 %v1406, %v1398
        %v1415 = vpack.c.b16 %v1407, %v1399
        %v1425 = vsel %vm798, %v1320, 0
        %v1428 = vsel %vm798, %v1321, 0
        %v1431 = vsel %vm798, %v1322, 0
        %v1434 = vsel %vm798, %v1323, 0
        %v1437 = vsel %vm798, %v1324, 0
        %v1440 = vsel %vm798, %v1325, 0
        %v1443 = vsel %vm798, %v1326, 0
        %v1446 = vsel %vm798, %v1327, 0
        %v1449 = vsel %vm798, %v1328, 0
        %v1452 = vsel %vm798, %v1329, 0
        %v1455 = vsel %vm798, %v1330, 0
        %v1458 = vsel %vm798, %v1331, 0
        %v1461 = vsel %vm798, %v1332, 0
        %v1464 = vsel %vm798, %v1333, 0
        %v1467 = vsel %vm798, %v1334, 0
        %v1470 = vsel %vm798, %v1335, 0
        %v1473 = vsel %vm798, %v1336, 0
        %v1476 = vsel %vm798, %v1337, 0
        %v1479 = vsel %vm798, %v1338, 0
        %v1482 = vsel %vm798, %v1339, 0
        %v1485 = vsel %vm798, %v1340, 0
        %v1488 = vsel %vm798, %v1341, 0
        %v1491 = vsel %vm798, %v1342, 0
        %v1494 = vsel %vm798, %v1343, 0
        %v1497 = vsel %vm798, %v1344, 0
        %v1500 = vsel %vm798, %v1345, 0
        %v1503 = vsel %vm798, %v1346, 0
        %v1506 = vsel %vm798, %v1347, 0
        %v1509 = vsel %vm798, %v1348, 0
        %v1512 = vsel %vm798, %v1349, 0
        %v1515 = vsel %vm798, %v1350, 0
        %v1518 = vsel %vm798, %v1351, 0
        %v1521 = vsel %vm798, %v1352, 0
        %v1524 = vsel %vm798, %v1353, 0
        %v1527 = vsel %vm798, %v1354, 0
        %v1530 = vsel %vm798, %v1355, 0
        %v1533 = vsel %vm798, %v1356, 0
        %v1536 = vsel %vm798, %v1357, 0
        %v1539 = vsel %vm798, %v1358, 0
        %v1542 = vsel %vm798, %v1359, 0
        %v1545 = vsel %vm798, %v1360, 0
        %v1548 = vsel %vm798, %v1361, 0
        %v1551 = vsel %vm798, %v1362, 0
        %v1554 = vsel %vm798, %v1363, 0
        %v1557 = vsel %vm798, %v1364, 0
        %v1560 = vsel %vm798, %v1365, 0
        %v1563 = vsel %vm798, %v1366, 0
        %v1566 = vsel %vm798, %v1367, 0
        %v1569 = vsel %vm798, %v1368, 0
        %v1572 = vsel %vm798, %v1369, 0
        %v1575 = vsel %vm798, %v1370, 0
        %v1578 = vsel %vm798, %v1371, 0
        %v1581 = vsel %vm798, %v1372, 0
        %v1584 = vsel %vm798, %v1373, 0
        %v1587 = vsel %vm798, %v1374, 0
        %v1590 = vsel %vm798, %v1375, 0
        %v1593 = vsel %vm798, %v1376, 0
        %v1596 = vsel %vm798, %v1377, 0
        %v1599 = vsel %vm798, %v1378, 0
        %v1602 = vsel %vm798, %v1379, 0
        %v1605 = vsel %vm798, %v1380, 0
        %v1608 = vsel %vm798, %v1381, 0
        %v1611 = vsel %vm798, %v1382, 0
        %v1614 = vsel %vm798, %v1383, 0
        %1616 = vmatpush.bf16.msra.mxu0 0
        %1617 = vmatpush.bf16.msra.mxu0 0
        %1618 = vmatpush.bf16.msra.mxu0 0
        %1619 = vmatpush.bf16.msra.mxu0 0
        %1620 = vmatpush.bf16.msra.mxu0 0
        %1621 = vmatpush.bf16.msra.mxu0 0
        %1622 = vmatpush.bf16.msra.mxu0 0
        %1623 = vmatpush.bf16.msra.mxu0 %v1408
        %1624 = vmatmul.bf16.gmra.mxu0 %v1425
        %v1625 = vpop.f32.mrf.mxu0
        %v1626 = vadd.f32 0.0, %v1625
        %v1627 = vpop.f32.mrf.mxu0
        %v1628 = vadd.f32 0.0, %v1627
        %1629 = vmatmul.bf16.gmra.mxu0 %v1428
        %v1630 = vpop.f32.mrf.mxu0
        %v1631 = vadd.f32 0.0, %v1630
        %v1632 = vpop.f32.mrf.mxu0
        %v1633 = vadd.f32 0.0, %v1632
        %1634 = vmatmul.bf16.gmra.mxu0 %v1431
        %v1635 = vpop.f32.mrf.mxu0
        %v1636 = vadd.f32 0.0, %v1635
        %v1637 = vpop.f32.mrf.mxu0
        %v1638 = vadd.f32 0.0, %v1637
        %1639 = vmatmul.bf16.gmra.mxu0 %v1434
        %v1640 = vpop.f32.mrf.mxu0
        %v1641 = vadd.f32 0.0, %v1640
        %v1642 = vpop.f32.mrf.mxu0
        %v1643 = vadd.f32 0.0, %v1642
        %1644 = vmatmul.bf16.gmra.mxu0 %v1437
        %v1645 = vpop.f32.mrf.mxu0
        %v1646 = vadd.f32 0.0, %v1645
        %v1647 = vpop.f32.mrf.mxu0
        %v1648 = vadd.f32 0.0, %v1647
        %1649 = vmatmul.bf16.gmra.mxu0 %v1440
        %v1650 = vpop.f32.mrf.mxu0
        %v1651 = vadd.f32 0.0, %v1650
        %v1652 = vpop.f32.mrf.mxu0
        %v1653 = vadd.f32 0.0, %v1652
        %1654 = vmatmul.bf16.gmra.mxu0 %v1443
        %v1655 = vpop.f32.mrf.mxu0
        %v1656 = vadd.f32 0.0, %v1655
        %v1657 = vpop.f32.mrf.mxu0
        %v1658 = vadd.f32 0.0, %v1657
        %1659 = vmatmul.bf16.gmra.mxu0 %v1446
        %v1660 = vpop.f32.mrf.mxu0
        %v1661 = vadd.f32 0.0, %v1660
        %v1662 = vpop.f32.mrf.mxu0
        %v1663 = vadd.f32 0.0, %v1662
        %1664 = vmatmul.bf16.gmra.mxu0 %v1449
        %v1665 = vpop.f32.mrf.mxu0
        %v1666 = vadd.f32 0.0, %v1665
        %v1667 = vpop.f32.mrf.mxu0
        %v1668 = vadd.f32 0.0, %v1667
        %1669 = vmatmul.bf16.gmra.mxu0 %v1452
        %v1670 = vpop.f32.mrf.mxu0
        %v1671 = vadd.f32 0.0, %v1670
        %v1672 = vpop.f32.mrf.mxu0
        %v1673 = vadd.f32 0.0, %v1672
        %1674 = vmatmul.bf16.gmra.mxu0 %v1455
        %v1675 = vpop.f32.mrf.mxu0
        %v1676 = vadd.f32 0.0, %v1675
        %v1677 = vpop.f32.mrf.mxu0
        %v1678 = vadd.f32 0.0, %v1677
        %1679 = vmatmul.bf16.gmra.mxu0 %v1458
        %v1680 = vpop.f32.mrf.mxu0
        %v1681 = vadd.f32 0.0, %v1680
        %v1682 = vpop.f32.mrf.mxu0
        %v1683 = vadd.f32 0.0, %v1682
        %1684 = vmatmul.bf16.gmra.mxu0 %v1461
        %v1685 = vpop.f32.mrf.mxu0
        %v1686 = vadd.f32 0.0, %v1685
        %v1687 = vpop.f32.mrf.mxu0
        %v1688 = vadd.f32 0.0, %v1687
        %1689 = vmatmul.bf16.gmra.mxu0 %v1464
        %v1690 = vpop.f32.mrf.mxu0
        %v1691 = vadd.f32 0.0, %v1690
        %v1692 = vpop.f32.mrf.mxu0
        %v1693 = vadd.f32 0.0, %v1692
        %1694 = vmatmul.bf16.gmra.mxu0 %v1467
        %v1695 = vpop.f32.mrf.mxu0
        %v1696 = vadd.f32 0.0, %v1695
        %v1697 = vpop.f32.mrf.mxu0
        %v1698 = vadd.f32 0.0, %v1697
        %1699 = vmatmul.bf16.gmra.mxu0 %v1470
        %v1700 = vpop.f32.mrf.mxu0
        %v1701 = vadd.f32 0.0, %v1700
        %v1702 = vpop.f32.mrf.mxu0
        %v1703 = vadd.f32 0.0, %v1702
        %1704 = vmatmul.bf16.gmra.mxu0 %v1473
        %v1705 = vpop.f32.mrf.mxu0
        %v1706 = vadd.f32 0.0, %v1705
        %v1707 = vpop.f32.mrf.mxu0
        %v1708 = vadd.f32 0.0, %v1707
        %1709 = vmatmul.bf16.gmra.mxu0 %v1476
        %v1710 = vpop.f32.mrf.mxu0
        %v1711 = vadd.f32 0.0, %v1710
        %v1712 = vpop.f32.mrf.mxu0
        %v1713 = vadd.f32 0.0, %v1712
        %1714 = vmatmul.bf16.gmra.mxu0 %v1479
        %v1715 = vpop.f32.mrf.mxu0
        %v1716 = vadd.f32 0.0, %v1715
        %v1717 = vpop.f32.mrf.mxu0
        %v1718 = vadd.f32 0.0, %v1717
        %1719 = vmatmul.bf16.gmra.mxu0 %v1482
        %v1720 = vpop.f32.mrf.mxu0
        %v1721 = vadd.f32 0.0, %v1720
        %v1722 = vpop.f32.mrf.mxu0
        %v1723 = vadd.f32 0.0, %v1722
        %1724 = vmatmul.bf16.gmra.mxu0 %v1485
        %v1725 = vpop.f32.mrf.mxu0
        %v1726 = vadd.f32 0.0, %v1725
        %v1727 = vpop.f32.mrf.mxu0
        %v1728 = vadd.f32 0.0, %v1727
        %1729 = vmatmul.bf16.gmra.mxu0 %v1488
        %v1730 = vpop.f32.mrf.mxu0
        %v1731 = vadd.f32 0.0, %v1730
        %v1732 = vpop.f32.mrf.mxu0
        %v1733 = vadd.f32 0.0, %v1732
        %1734 = vmatmul.bf16.gmra.mxu0 %v1491
        %v1735 = vpop.f32.mrf.mxu0
        %v1736 = vadd.f32 0.0, %v1735
        %v1737 = vpop.f32.mrf.mxu0
        %v1738 = vadd.f32 0.0, %v1737
        %1739 = vmatmul.bf16.gmra.mxu0 %v1494
        %v1740 = vpop.f32.mrf.mxu0
        %v1741 = vadd.f32 0.0, %v1740
        %v1742 = vpop.f32.mrf.mxu0
        %v1743 = vadd.f32 0.0, %v1742
        %1744 = vmatmul.bf16.gmra.mxu0 %v1497
        %v1745 = vpop.f32.mrf.mxu0
        %v1746 = vadd.f32 0.0, %v1745
        %v1747 = vpop.f32.mrf.mxu0
        %v1748 = vadd.f32 0.0, %v1747
        %1749 = vmatmul.bf16.gmra.mxu0 %v1500
        %v1750 = vpop.f32.mrf.mxu0
        %v1751 = vadd.f32 0.0, %v1750
        %v1752 = vpop.f32.mrf.mxu0
        %v1753 = vadd.f32 0.0, %v1752
        %1754 = vmatmul.bf16.gmra.mxu0 %v1503
        %v1755 = vpop.f32.mrf.mxu0
        %v1756 = vadd.f32 0.0, %v1755
        %v1757 = vpop.f32.mrf.mxu0
        %v1758 = vadd.f32 0.0, %v1757
        %1759 = vmatmul.bf16.gmra.mxu0 %v1506
        %v1760 = vpop.f32.mrf.mxu0
        %v1761 = vadd.f32 0.0, %v1760
        %v1762 = vpop.f32.mrf.mxu0
        %v1763 = vadd.f32 0.0, %v1762
        %1764 = vmatmul.bf16.gmra.mxu0 %v1509
        %v1765 = vpop.f32.mrf.mxu0
        %v1766 = vadd.f32 0.0, %v1765
        %v1767 = vpop.f32.mrf.mxu0
        %v1768 = vadd.f32 0.0, %v1767
        %1769 = vmatmul.bf16.gmra.mxu0 %v1512
        %v1770 = vpop.f32.mrf.mxu0
        %v1771 = vadd.f32 0.0, %v1770
        %v1772 = vpop.f32.mrf.mxu0
        %v1773 = vadd.f32 0.0, %v1772
        %1774 = vmatmul.bf16.gmra.mxu0 %v1515
        %v1775 = vpop.f32.mrf.mxu0
        %v1776 = vadd.f32 0.0, %v1775
        %v1777 = vpop.f32.mrf.mxu0
        %v1778 = vadd.f32 0.0, %v1777
        %1779 = vmatmul.bf16.gmra.mxu0 %v1518
        %v1780 = vpop.f32.mrf.mxu0
        %v1781 = vadd.f32 0.0, %v1780
        %v1782 = vpop.f32.mrf.mxu0
        %v1783 = vadd.f32 0.0, %v1782
        %1784 = vmatmul.bf16.gmra.mxu0 %v1521
        %v1785 = vpop.f32.mrf.mxu0
        %v1786 = vadd.f32 0.0, %v1785
        %v1787 = vpop.f32.mrf.mxu0
        %v1788 = vadd.f32 0.0, %v1787
        %1789 = vmatmul.bf16.gmra.mxu0 %v1524
        %v1790 = vpop.f32.mrf.mxu0
        %v1791 = vadd.f32 0.0, %v1790
        %v1792 = vpop.f32.mrf.mxu0
        %v1793 = vadd.f32 0.0, %v1792
        %1794 = vmatmul.bf16.gmra.mxu0 %v1527
        %v1795 = vpop.f32.mrf.mxu0
        %v1796 = vadd.f32 0.0, %v1795
        %v1797 = vpop.f32.mrf.mxu0
        %v1798 = vadd.f32 0.0, %v1797
        %1799 = vmatmul.bf16.gmra.mxu0 %v1530
        %v1800 = vpop.f32.mrf.mxu0
        %v1801 = vadd.f32 0.0, %v1800
        %v1802 = vpop.f32.mrf.mxu0
        %v1803 = vadd.f32 0.0, %v1802
        %1804 = vmatmul.bf16.gmra.mxu0 %v1533
        %v1805 = vpop.f32.mrf.mxu0
        %v1806 = vadd.f32 0.0, %v1805
        %v1807 = vpop.f32.mrf.mxu0
        %v1808 = vadd.f32 0.0, %v1807
        %1809 = vmatmul.bf16.gmra.mxu0 %v1536
        %v1810 = vpop.f32.mrf.mxu0
        %v1811 = vadd.f32 0.0, %v1810
        %v1812 = vpop.f32.mrf.mxu0
        %v1813 = vadd.f32 0.0, %v1812
        %1814 = vmatmul.bf16.gmra.mxu0 %v1539
        %v1815 = vpop.f32.mrf.mxu0
        %v1816 = vadd.f32 0.0, %v1815
        %v1817 = vpop.f32.mrf.mxu0
        %v1818 = vadd.f32 0.0, %v1817
        %1819 = vmatmul.bf16.gmra.mxu0 %v1542
        %v1820 = vpop.f32.mrf.mxu0
        %v1821 = vadd.f32 0.0, %v1820
        %v1822 = vpop.f32.mrf.mxu0
        %v1823 = vadd.f32 0.0, %v1822
        %1824 = vmatmul.bf16.gmra.mxu0 %v1545
        %v1825 = vpop.f32.mrf.mxu0
        %v1826 = vadd.f32 0.0, %v1825
        %v1827 = vpop.f32.mrf.mxu0
        %v1828 = vadd.f32 0.0, %v1827
        %1829 = vmatmul.bf16.gmra.mxu0 %v1548
        %v1830 = vpop.f32.mrf.mxu0
        %v1831 = vadd.f32 0.0, %v1830
        %v1832 = vpop.f32.mrf.mxu0
        %v1833 = vadd.f32 0.0, %v1832
        %1834 = vmatmul.bf16.gmra.mxu0 %v1551
        %v1835 = vpop.f32.mrf.mxu0
        %v1836 = vadd.f32 0.0, %v1835
        %v1837 = vpop.f32.mrf.mxu0
        %v1838 = vadd.f32 0.0, %v1837
        %1839 = vmatmul.bf16.gmra.mxu0 %v1554
        %v1840 = vpop.f32.mrf.mxu0
        %v1841 = vadd.f32 0.0, %v1840
        %v1842 = vpop.f32.mrf.mxu0
        %v1843 = vadd.f32 0.0, %v1842
        %1844 = vmatmul.bf16.gmra.mxu0 %v1557
        %v1845 = vpop.f32.mrf.mxu0
        %v1846 = vadd.f32 0.0, %v1845
        %v1847 = vpop.f32.mrf.mxu0
        %v1848 = vadd.f32 0.0, %v1847
        %1849 = vmatmul.bf16.gmra.mxu0 %v1560
        %v1850 = vpop.f32.mrf.mxu0
        %v1851 = vadd.f32 0.0, %v1850
        %v1852 = vpop.f32.mrf.mxu0
        %v1853 = vadd.f32 0.0, %v1852
        %1854 = vmatmul.bf16.gmra.mxu0 %v1563
        %v1855 = vpop.f32.mrf.mxu0
        %v1856 = vadd.f32 0.0, %v1855
        %v1857 = vpop.f32.mrf.mxu0
        %v1858 = vadd.f32 0.0, %v1857
        %1859 = vmatmul.bf16.gmra.mxu0 %v1566
        %v1860 = vpop.f32.mrf.mxu0
        %v1861 = vadd.f32 0.0, %v1860
        %v1862 = vpop.f32.mrf.mxu0
        %v1863 = vadd.f32 0.0, %v1862
        %1864 = vmatmul.bf16.gmra.mxu0 %v1569
        %v1865 = vpop.f32.mrf.mxu0
        %v1866 = vadd.f32 0.0, %v1865
        %v1867 = vpop.f32.mrf.mxu0
        %v1868 = vadd.f32 0.0, %v1867
        %1869 = vmatmul.bf16.gmra.mxu0 %v1572
        %v1870 = vpop.f32.mrf.mxu0
        %v1871 = vadd.f32 0.0, %v1870
        %v1872 = vpop.f32.mrf.mxu0
        %v1873 = vadd.f32 0.0, %v1872
        %1874 = vmatmul.bf16.gmra.mxu0 %v1575
        %v1875 = vpop.f32.mrf.mxu0
        %v1876 = vadd.f32 0.0, %v1875
        %v1877 = vpop.f32.mrf.mxu0
        %v1878 = vadd.f32 0.0, %v1877
        %1879 = vmatmul.bf16.gmra.mxu0 %v1578
        %v1880 = vpop.f32.mrf.mxu0
        %v1881 = vadd.f32 0.0, %v1880
        %v1882 = vpop.f32.mrf.mxu0
        %v1883 = vadd.f32 0.0, %v1882
        %1884 = vmatmul.bf16.gmra.mxu0 %v1581
        %v1885 = vpop.f32.mrf.mxu0
        %v1886 = vadd.f32 0.0, %v1885
        %v1887 = vpop.f32.mrf.mxu0
        %v1888 = vadd.f32 0.0, %v1887
        %1889 = vmatmul.bf16.gmra.mxu0 %v1584
        %v1890 = vpop.f32.mrf.mxu0
        %v1891 = vadd.f32 0.0, %v1890
        %v1892 = vpop.f32.mrf.mxu0
        %v1893 = vadd.f32 0.0, %v1892
        %1894 = vmatmul.bf16.gmra.mxu0 %v1587
        %v1895 = vpop.f32.mrf.mxu0
        %v1896 = vadd.f32 0.0, %v1895
        %v1897 = vpop.f32.mrf.mxu0
        %v1898 = vadd.f32 0.0, %v1897
        %1899 = vmatmul.bf16.gmra.mxu0 %v1590
        %v1900 = vpop.f32.mrf.mxu0
        %v1901 = vadd.f32 0.0, %v1900
        %v1902 = vpop.f32.mrf.mxu0
        %v1903 = vadd.f32 0.0, %v1902
        %1904 = vmatmul.bf16.gmra.mxu0 %v1593
        %v1905 = vpop.f32.mrf.mxu0
        %v1906 = vadd.f32 0.0, %v1905
        %v1907 = vpop.f32.mrf.mxu0
        %v1908 = vadd.f32 0.0, %v1907
        %1909 = vmatmul.bf16.gmra.mxu0 %v1596
        %v1910 = vpop.f32.mrf.mxu0
        %v1911 = vadd.f32 0.0, %v1910
        %v1912 = vpop.f32.mrf.mxu0
        %v1913 = vadd.f32 0.0, %v1912
        %1914 = vmatmul.bf16.gmra.mxu0 %v1599
        %v1915 = vpop.f32.mrf.mxu0
        %v1916 = vadd.f32 0.0, %v1915
        %v1917 = vpop.f32.mrf.mxu0
        %v1918 = vadd.f32 0.0, %v1917
        %1919 = vmatmul.bf16.gmra.mxu0 %v1602
        %v1920 = vpop.f32.mrf.mxu0
        %v1921 = vadd.f32 0.0, %v1920
        %v1922 = vpop.f32.mrf.mxu0
        %v1923 = vadd.f32 0.0, %v1922
        %1924 = vmatmul.bf16.gmra.mxu0 %v1605
        %v1925 = vpop.f32.mrf.mxu0
        %v1926 = vadd.f32 0.0, %v1925
        %v1927 = vpop.f32.mrf.mxu0
        %v1928 = vadd.f32 0.0, %v1927
        %1929 = vmatmul.bf16.gmra.mxu0 %v1608
        %v1930 = vpop.f32.mrf.mxu0
        %v1931 = vadd.f32 0.0, %v1930
        %v1932 = vpop.f32.mrf.mxu0
        %v1933 = vadd.f32 0.0, %v1932
        %1934 = vmatmul.bf16.gmra.mxu0 %v1611
        %v1935 = vpop.f32.mrf.mxu0
        %v1936 = vadd.f32 0.0, %v1935
        %v1937 = vpop.f32.mrf.mxu0
        %v1938 = vadd.f32 0.0, %v1937
        %1939 = vmatmul.bf16.gmra.mxu0 %v1614
        %v1940 = vpop.f32.mrf.mxu0
        %v1941 = vadd.f32 0.0, %v1940
        %v1942 = vpop.f32.mrf.mxu0
        %v1943 = vadd.f32 0.0, %v1942
        %1944 = vdwg.mxu0
        %1945 = vmatpush.bf16.msra.mxu0 0
        %1946 = vmatpush.bf16.msra.mxu0 0
        %1947 = vmatpush.bf16.msra.mxu0 0
        %1948 = vmatpush.bf16.msra.mxu0 0
        %1949 = vmatpush.bf16.msra.mxu0 0
        %1950 = vmatpush.bf16.msra.mxu0 0
        %1951 = vmatpush.bf16.msra.mxu0 0
        %1952 = vmatpush.bf16.msra.mxu0 %v1409
        %1953 = vmatmul.bf16.gmra.mxu0 %v1425
        %v1954 = vpop.f32.mrf.mxu0
        %v1955 = vadd.f32 0.0, %v1954
        %v1956 = vpop.f32.mrf.mxu0
        %v1957 = vadd.f32 0.0, %v1956
        %1958 = vmatmul.bf16.gmra.mxu0 %v1428
        %v1959 = vpop.f32.mrf.mxu0
        %v1960 = vadd.f32 0.0, %v1959
        %v1961 = vpop.f32.mrf.mxu0
        %v1962 = vadd.f32 0.0, %v1961
        %1963 = vmatmul.bf16.gmra.mxu0 %v1431
        %v1964 = vpop.f32.mrf.mxu0
        %v1965 = vadd.f32 0.0, %v1964
        %v1966 = vpop.f32.mrf.mxu0
        %v1967 = vadd.f32 0.0, %v1966
        %1968 = vmatmul.bf16.gmra.mxu0 %v1434
        %v1969 = vpop.f32.mrf.mxu0
        %v1970 = vadd.f32 0.0, %v1969
        %v1971 = vpop.f32.mrf.mxu0
        %v1972 = vadd.f32 0.0, %v1971
        %1973 = vmatmul.bf16.gmra.mxu0 %v1437
        %v1974 = vpop.f32.mrf.mxu0
        %v1975 = vadd.f32 0.0, %v1974
        %v1976 = vpop.f32.mrf.mxu0
        %v1977 = vadd.f32 0.0, %v1976
        %1978 = vmatmul.bf16.gmra.mxu0 %v1440
        %v1979 = vpop.f32.mrf.mxu0
        %v1980 = vadd.f32 0.0, %v1979
        %v1981 = vpop.f32.mrf.mxu0
        %v1982 = vadd.f32 0.0, %v1981
        %1983 = vmatmul.bf16.gmra.mxu0 %v1443
        %v1984 = vpop.f32.mrf.mxu0
        %v1985 = vadd.f32 0.0, %v1984
        %v1986 = vpop.f32.mrf.mxu0
        %v1987 = vadd.f32 0.0, %v1986
        %1988 = vmatmul.bf16.gmra.mxu0 %v1446
        %v1989 = vpop.f32.mrf.mxu0
        %v1990 = vadd.f32 0.0, %v1989
        %v1991 = vpop.f32.mrf.mxu0
        %v1992 = vadd.f32 0.0, %v1991
        %1993 = vmatmul.bf16.gmra.mxu0 %v1449
        %v1994 = vpop.f32.mrf.mxu0
        %v1995 = vadd.f32 0.0, %v1994
        %v1996 = vpop.f32.mrf.mxu0
        %v1997 = vadd.f32 0.0, %v1996
        %1998 = vmatmul.bf16.gmra.mxu0 %v1452
        %v1999 = vpop.f32.mrf.mxu0
        %v2000 = vadd.f32 0.0, %v1999
        %v2001 = vpop.f32.mrf.mxu0
        %v2002 = vadd.f32 0.0, %v2001
        %2003 = vmatmul.bf16.gmra.mxu0 %v1455
        %v2004 = vpop.f32.mrf.mxu0
        %v2005 = vadd.f32 0.0, %v2004
        %v2006 = vpop.f32.mrf.mxu0
        %v2007 = vadd.f32 0.0, %v2006
        %2008 = vmatmul.bf16.gmra.mxu0 %v1458
        %v2009 = vpop.f32.mrf.mxu0
        %v2010 = vadd.f32 0.0, %v2009
        %v2011 = vpop.f32.mrf.mxu0
        %v2012 = vadd.f32 0.0, %v2011
        %2013 = vmatmul.bf16.gmra.mxu0 %v1461
        %v2014 = vpop.f32.mrf.mxu0
        %v2015 = vadd.f32 0.0, %v2014
        %v2016 = vpop.f32.mrf.mxu0
        %v2017 = vadd.f32 0.0, %v2016
        %2018 = vmatmul.bf16.gmra.mxu0 %v1464
        %v2019 = vpop.f32.mrf.mxu0
        %v2020 = vadd.f32 0.0, %v2019
        %v2021 = vpop.f32.mrf.mxu0
        %v2022 = vadd.f32 0.0, %v2021
        %2023 = vmatmul.bf16.gmra.mxu0 %v1467
        %v2024 = vpop.f32.mrf.mxu0
        %v2025 = vadd.f32 0.0, %v2024
        %v2026 = vpop.f32.mrf.mxu0
        %v2027 = vadd.f32 0.0, %v2026
        %2028 = vmatmul.bf16.gmra.mxu0 %v1470
        %v2029 = vpop.f32.mrf.mxu0
        %v2030 = vadd.f32 0.0, %v2029
        %v2031 = vpop.f32.mrf.mxu0
        %v2032 = vadd.f32 0.0, %v2031
        %2033 = vmatmul.bf16.gmra.mxu0 %v1473
        %v2034 = vpop.f32.mrf.mxu0
        %v2035 = vadd.f32 0.0, %v2034
        %v2036 = vpop.f32.mrf.mxu0
        %v2037 = vadd.f32 0.0, %v2036
        %2038 = vmatmul.bf16.gmra.mxu0 %v1476
        %v2039 = vpop.f32.mrf.mxu0
        %v2040 = vadd.f32 0.0, %v2039
        %v2041 = vpop.f32.mrf.mxu0
        %v2042 = vadd.f32 0.0, %v2041
        %2043 = vmatmul.bf16.gmra.mxu0 %v1479
        %v2044 = vpop.f32.mrf.mxu0
        %v2045 = vadd.f32 0.0, %v2044
        %v2046 = vpop.f32.mrf.mxu0
        %v2047 = vadd.f32 0.0, %v2046
        %2048 = vmatmul.bf16.gmra.mxu0 %v1482
        %v2049 = vpop.f32.mrf.mxu0
        %v2050 = vadd.f32 0.0, %v2049
        %v2051 = vpop.f32.mrf.mxu0
        %v2052 = vadd.f32 0.0, %v2051
        %2053 = vmatmul.bf16.gmra.mxu0 %v1485
        %v2054 = vpop.f32.mrf.mxu0
        %v2055 = vadd.f32 0.0, %v2054
        %v2056 = vpop.f32.mrf.mxu0
        %v2057 = vadd.f32 0.0, %v2056
        %2058 = vmatmul.bf16.gmra.mxu0 %v1488
        %v2059 = vpop.f32.mrf.mxu0
        %v2060 = vadd.f32 0.0, %v2059
        %v2061 = vpop.f32.mrf.mxu0
        %v2062 = vadd.f32 0.0, %v2061
        %2063 = vmatmul.bf16.gmra.mxu0 %v1491
        %v2064 = vpop.f32.mrf.mxu0
        %v2065 = vadd.f32 0.0, %v2064
        %v2066 = vpop.f32.mrf.mxu0
        %v2067 = vadd.f32 0.0, %v2066
        %2068 = vmatmul.bf16.gmra.mxu0 %v1494
        %v2069 = vpop.f32.mrf.mxu0
        %v2070 = vadd.f32 0.0, %v2069
        %v2071 = vpop.f32.mrf.mxu0
        %v2072 = vadd.f32 0.0, %v2071
        %2073 = vmatmul.bf16.gmra.mxu0 %v1497
        %v2074 = vpop.f32.mrf.mxu0
        %v2075 = vadd.f32 0.0, %v2074
        %v2076 = vpop.f32.mrf.mxu0
        %v2077 = vadd.f32 0.0, %v2076
        %2078 = vmatmul.bf16.gmra.mxu0 %v1500
        %v2079 = vpop.f32.mrf.mxu0
        %v2080 = vadd.f32 0.0, %v2079
        %v2081 = vpop.f32.mrf.mxu0
        %v2082 = vadd.f32 0.0, %v2081
        %2083 = vmatmul.bf16.gmra.mxu0 %v1503
        %v2084 = vpop.f32.mrf.mxu0
        %v2085 = vadd.f32 0.0, %v2084
        %v2086 = vpop.f32.mrf.mxu0
        %v2087 = vadd.f32 0.0, %v2086
        %2088 = vmatmul.bf16.gmra.mxu0 %v1506
        %v2089 = vpop.f32.mrf.mxu0
        %v2090 = vadd.f32 0.0, %v2089
        %v2091 = vpop.f32.mrf.mxu0
        %v2092 = vadd.f32 0.0, %v2091
        %2093 = vmatmul.bf16.gmra.mxu0 %v1509
        %v2094 = vpop.f32.mrf.mxu0
        %v2095 = vadd.f32 0.0, %v2094
        %v2096 = vpop.f32.mrf.mxu0
        %v2097 = vadd.f32 0.0, %v2096
        %2098 = vmatmul.bf16.gmra.mxu0 %v1512
        %v2099 = vpop.f32.mrf.mxu0
        %v2100 = vadd.f32 0.0, %v2099
        %v2101 = vpop.f32.mrf.mxu0
        %v2102 = vadd.f32 0.0, %v2101
        %2103 = vmatmul.bf16.gmra.mxu0 %v1515
        %v2104 = vpop.f32.mrf.mxu0
        %v2105 = vadd.f32 0.0, %v2104
        %v2106 = vpop.f32.mrf.mxu0
        %v2107 = vadd.f32 0.0, %v2106
        %2108 = vmatmul.bf16.gmra.mxu0 %v1518
        %v2109 = vpop.f32.mrf.mxu0
        %v2110 = vadd.f32 0.0, %v2109
        %v2111 = vpop.f32.mrf.mxu0
        %v2112 = vadd.f32 0.0, %v2111
        %2113 = vmatmul.bf16.gmra.mxu0 %v1521
        %v2114 = vpop.f32.mrf.mxu0
        %v2115 = vadd.f32 0.0, %v2114
        %v2116 = vpop.f32.mrf.mxu0
        %v2117 = vadd.f32 0.0, %v2116
        %2118 = vmatmul.bf16.gmra.mxu0 %v1524
        %v2119 = vpop.f32.mrf.mxu0
        %v2120 = vadd.f32 0.0, %v2119
        %v2121 = vpop.f32.mrf.mxu0
        %v2122 = vadd.f32 0.0, %v2121
        %2123 = vmatmul.bf16.gmra.mxu0 %v1527
        %v2124 = vpop.f32.mrf.mxu0
        %v2125 = vadd.f32 0.0, %v2124
        %v2126 = vpop.f32.mrf.mxu0
        %v2127 = vadd.f32 0.0, %v2126
        %2128 = vmatmul.bf16.gmra.mxu0 %v1530
        %v2129 = vpop.f32.mrf.mxu0
        %v2130 = vadd.f32 0.0, %v2129
        %v2131 = vpop.f32.mrf.mxu0
        %v2132 = vadd.f32 0.0, %v2131
        %2133 = vmatmul.bf16.gmra.mxu0 %v1533
        %v2134 = vpop.f32.mrf.mxu0
        %v2135 = vadd.f32 0.0, %v2134
        %v2136 = vpop.f32.mrf.mxu0
        %v2137 = vadd.f32 0.0, %v2136
        %2138 = vmatmul.bf16.gmra.mxu0 %v1536
        %v2139 = vpop.f32.mrf.mxu0
        %v2140 = vadd.f32 0.0, %v2139
        %v2141 = vpop.f32.mrf.mxu0
        %v2142 = vadd.f32 0.0, %v2141
        %2143 = vmatmul.bf16.gmra.mxu0 %v1539
        %v2144 = vpop.f32.mrf.mxu0
        %v2145 = vadd.f32 0.0, %v2144
        %v2146 = vpop.f32.mrf.mxu0
        %v2147 = vadd.f32 0.0, %v2146
        %2148 = vmatmul.bf16.gmra.mxu0 %v1542
        %v2149 = vpop.f32.mrf.mxu0
        %v2150 = vadd.f32 0.0, %v2149
        %v2151 = vpop.f32.mrf.mxu0
        %v2152 = vadd.f32 0.0, %v2151
        %2153 = vmatmul.bf16.gmra.mxu0 %v1545
        %v2154 = vpop.f32.mrf.mxu0
        %v2155 = vadd.f32 0.0, %v2154
        %v2156 = vpop.f32.mrf.mxu0
        %v2157 = vadd.f32 0.0, %v2156
        %2158 = vmatmul.bf16.gmra.mxu0 %v1548
        %v2159 = vpop.f32.mrf.mxu0
        %v2160 = vadd.f32 0.0, %v2159
        %v2161 = vpop.f32.mrf.mxu0
        %v2162 = vadd.f32 0.0, %v2161
        %2163 = vmatmul.bf16.gmra.mxu0 %v1551
        %v2164 = vpop.f32.mrf.mxu0
        %v2165 = vadd.f32 0.0, %v2164
        %v2166 = vpop.f32.mrf.mxu0
        %v2167 = vadd.f32 0.0, %v2166
        %2168 = vmatmul.bf16.gmra.mxu0 %v1554
        %v2169 = vpop.f32.mrf.mxu0
        %v2170 = vadd.f32 0.0, %v2169
        %v2171 = vpop.f32.mrf.mxu0
        %v2172 = vadd.f32 0.0, %v2171
        %2173 = vmatmul.bf16.gmra.mxu0 %v1557
        %v2174 = vpop.f32.mrf.mxu0
        %v2175 = vadd.f32 0.0, %v2174
        %v2176 = vpop.f32.mrf.mxu0
        %v2177 = vadd.f32 0.0, %v2176
        %2178 = vmatmul.bf16.gmra.mxu0 %v1560
        %v2179 = vpop.f32.mrf.mxu0
        %v2180 = vadd.f32 0.0, %v2179
        %v2181 = vpop.f32.mrf.mxu0
        %v2182 = vadd.f32 0.0, %v2181
        %2183 = vmatmul.bf16.gmra.mxu0 %v1563
        %v2184 = vpop.f32.mrf.mxu0
        %v2185 = vadd.f32 0.0, %v2184
        %v2186 = vpop.f32.mrf.mxu0
        %v2187 = vadd.f32 0.0, %v2186
        %2188 = vmatmul.bf16.gmra.mxu0 %v1566
        %v2189 = vpop.f32.mrf.mxu0
        %v2190 = vadd.f32 0.0, %v2189
        %v2191 = vpop.f32.mrf.mxu0
        %v2192 = vadd.f32 0.0, %v2191
        %2193 = vmatmul.bf16.gmra.mxu0 %v1569
        %v2194 = vpop.f32.mrf.mxu0
        %v2195 = vadd.f32 0.0, %v2194
        %v2196 = vpop.f32.mrf.mxu0
        %v2197 = vadd.f32 0.0, %v2196
        %2198 = vmatmul.bf16.gmra.mxu0 %v1572
        %v2199 = vpop.f32.mrf.mxu0
        %v2200 = vadd.f32 0.0, %v2199
        %v2201 = vpop.f32.mrf.mxu0
        %v2202 = vadd.f32 0.0, %v2201
        %2203 = vmatmul.bf16.gmra.mxu0 %v1575
        %v2204 = vpop.f32.mrf.mxu0
        %v2205 = vadd.f32 0.0, %v2204
        %v2206 = vpop.f32.mrf.mxu0
        %v2207 = vadd.f32 0.0, %v2206
        %2208 = vmatmul.bf16.gmra.mxu0 %v1578
        %v2209 = vpop.f32.mrf.mxu0
        %v2210 = vadd.f32 0.0, %v2209
        %v2211 = vpop.f32.mrf.mxu0
        %v2212 = vadd.f32 0.0, %v2211
        %2213 = vmatmul.bf16.gmra.mxu0 %v1581
        %v2214 = vpop.f32.mrf.mxu0
        %v2215 = vadd.f32 0.0, %v2214
        %v2216 = vpop.f32.mrf.mxu0
        %v2217 = vadd.f32 0.0, %v2216
        %2218 = vmatmul.bf16.gmra.mxu0 %v1584
        %v2219 = vpop.f32.mrf.mxu0
        %v2220 = vadd.f32 0.0, %v2219
        %v2221 = vpop.f32.mrf.mxu0
        %v2222 = vadd.f32 0.0, %v2221
        %2223 = vmatmul.bf16.gmra.mxu0 %v1587
        %v2224 = vpop.f32.mrf.mxu0
        %v2225 = vadd.f32 0.0, %v2224
        %v2226 = vpop.f32.mrf.mxu0
        %v2227 = vadd.f32 0.0, %v2226
        %2228 = vmatmul.bf16.gmra.mxu0 %v1590
        %v2229 = vpop.f32.mrf.mxu0
        %v2230 = vadd.f32 0.0, %v2229
        %v2231 = vpop.f32.mrf.mxu0
        %v2232 = vadd.f32 0.0, %v2231
        %2233 = vmatmul.bf16.gmra.mxu0 %v1593
        %v2234 = vpop.f32.mrf.mxu0
        %v2235 = vadd.f32 0.0, %v2234
        %v2236 = vpop.f32.mrf.mxu0
        %v2237 = vadd.f32 0.0, %v2236
        %2238 = vmatmul.bf16.gmra.mxu0 %v1596
        %v2239 = vpop.f32.mrf.mxu0
        %v2240 = vadd.f32 0.0, %v2239
        %v2241 = vpop.f32.mrf.mxu0
        %v2242 = vadd.f32 0.0, %v2241
        %2243 = vmatmul.bf16.gmra.mxu0 %v1599
        %v2244 = vpop.f32.mrf.mxu0
        %v2245 = vadd.f32 0.0, %v2244
        %v2246 = vpop.f32.mrf.mxu0
        %v2247 = vadd.f32 0.0, %v2246
        %2248 = vmatmul.bf16.gmra.mxu0 %v1602
        %v2249 = vpop.f32.mrf.mxu0
        %v2250 = vadd.f32 0.0, %v2249
        %v2251 = vpop.f32.mrf.mxu0
        %v2252 = vadd.f32 0.0, %v2251
        %2253 = vmatmul.bf16.gmra.mxu0 %v1605
        %v2254 = vpop.f32.mrf.mxu0
        %v2255 = vadd.f32 0.0, %v2254
        %v2256 = vpop.f32.mrf.mxu0
        %v2257 = vadd.f32 0.0, %v2256
        %2258 = vmatmul.bf16.gmra.mxu0 %v1608
        %v2259 = vpop.f32.mrf.mxu0
        %v2260 = vadd.f32 0.0, %v2259
        %v2261 = vpop.f32.mrf.mxu0
        %v2262 = vadd.f32 0.0, %v2261
        %2263 = vmatmul.bf16.gmra.mxu0 %v1611
        %v2264 = vpop.f32.mrf.mxu0
        %v2265 = vadd.f32 0.0, %v2264
        %v2266 = vpop.f32.mrf.mxu0
        %v2267 = vadd.f32 0.0, %v2266
        %2268 = vmatmul.bf16.gmra.mxu0 %v1614
        %v2269 = vpop.f32.mrf.mxu0
        %v2270 = vadd.f32 0.0, %v2269
        %v2271 = vpop.f32.mrf.mxu0
        %v2272 = vadd.f32 0.0, %v2271
        %2273 = vdwg.mxu0
        %2274 = vmatpush.bf16.msra.mxu0 0
        %2275 = vmatpush.bf16.msra.mxu0 0
        %2276 = vmatpush.bf16.msra.mxu0 0
        %2277 = vmatpush.bf16.msra.mxu0 0
        %2278 = vmatpush.bf16.msra.mxu0 0
        %2279 = vmatpush.bf16.msra.mxu0 0
        %2280 = vmatpush.bf16.msra.mxu0 0
        %2281 = vmatpush.bf16.msra.mxu0 %v1410
        %2282 = vmatmul.bf16.gmra.mxu0 %v1425
        %v2283 = vpop.f32.mrf.mxu0
        %v2284 = vadd.f32 0.0, %v2283
        %v2285 = vpop.f32.mrf.mxu0
        %v2286 = vadd.f32 0.0, %v2285
        %2287 = vmatmul.bf16.gmra.mxu0 %v1428
        %v2288 = vpop.f32.mrf.mxu0
        %v2289 = vadd.f32 0.0, %v2288
        %v2290 = vpop.f32.mrf.mxu0
        %v2291 = vadd.f32 0.0, %v2290
        %2292 = vmatmul.bf16.gmra.mxu0 %v1431
        %v2293 = vpop.f32.mrf.mxu0
        %v2294 = vadd.f32 0.0, %v2293
        %v2295 = vpop.f32.mrf.mxu0
        %v2296 = vadd.f32 0.0, %v2295
        %2297 = vmatmul.bf16.gmra.mxu0 %v1434
        %v2298 = vpop.f32.mrf.mxu0
        %v2299 = vadd.f32 0.0, %v2298
        %v2300 = vpop.f32.mrf.mxu0
        %v2301 = vadd.f32 0.0, %v2300
        %2302 = vmatmul.bf16.gmra.mxu0 %v1437
        %v2303 = vpop.f32.mrf.mxu0
        %v2304 = vadd.f32 0.0, %v2303
        %v2305 = vpop.f32.mrf.mxu0
        %v2306 = vadd.f32 0.0, %v2305
        %2307 = vmatmul.bf16.gmra.mxu0 %v1440
        %v2308 = vpop.f32.mrf.mxu0
        %v2309 = vadd.f32 0.0, %v2308
        %v2310 = vpop.f32.mrf.mxu0
        %v2311 = vadd.f32 0.0, %v2310
        %2312 = vmatmul.bf16.gmra.mxu0 %v1443
        %v2313 = vpop.f32.mrf.mxu0
        %v2314 = vadd.f32 0.0, %v2313
        %v2315 = vpop.f32.mrf.mxu0
        %v2316 = vadd.f32 0.0, %v2315
        %2317 = vmatmul.bf16.gmra.mxu0 %v1446
        %v2318 = vpop.f32.mrf.mxu0
        %v2319 = vadd.f32 0.0, %v2318
        %v2320 = vpop.f32.mrf.mxu0
        %v2321 = vadd.f32 0.0, %v2320
        %2322 = vmatmul.bf16.gmra.mxu0 %v1449
        %v2323 = vpop.f32.mrf.mxu0
        %v2324 = vadd.f32 0.0, %v2323
        %v2325 = vpop.f32.mrf.mxu0
        %v2326 = vadd.f32 0.0, %v2325
        %2327 = vmatmul.bf16.gmra.mxu0 %v1452
        %v2328 = vpop.f32.mrf.mxu0
        %v2329 = vadd.f32 0.0, %v2328
        %v2330 = vpop.f32.mrf.mxu0
        %v2331 = vadd.f32 0.0, %v2330
        %2332 = vmatmul.bf16.gmra.mxu0 %v1455
        %v2333 = vpop.f32.mrf.mxu0
        %v2334 = vadd.f32 0.0, %v2333
        %v2335 = vpop.f32.mrf.mxu0
        %v2336 = vadd.f32 0.0, %v2335
        %2337 = vmatmul.bf16.gmra.mxu0 %v1458
        %v2338 = vpop.f32.mrf.mxu0
        %v2339 = vadd.f32 0.0, %v2338
        %v2340 = vpop.f32.mrf.mxu0
        %v2341 = vadd.f32 0.0, %v2340
        %2342 = vmatmul.bf16.gmra.mxu0 %v1461
        %v2343 = vpop.f32.mrf.mxu0
        %v2344 = vadd.f32 0.0, %v2343
        %v2345 = vpop.f32.mrf.mxu0
        %v2346 = vadd.f32 0.0, %v2345
        %2347 = vmatmul.bf16.gmra.mxu0 %v1464
        %v2348 = vpop.f32.mrf.mxu0
        %v2349 = vadd.f32 0.0, %v2348
        %v2350 = vpop.f32.mrf.mxu0
        %v2351 = vadd.f32 0.0, %v2350
        %2352 = vmatmul.bf16.gmra.mxu0 %v1467
        %v2353 = vpop.f32.mrf.mxu0
        %v2354 = vadd.f32 0.0, %v2353
        %v2355 = vpop.f32.mrf.mxu0
        %v2356 = vadd.f32 0.0, %v2355
        %2357 = vmatmul.bf16.gmra.mxu0 %v1470
        %v2358 = vpop.f32.mrf.mxu0
        %v2359 = vadd.f32 0.0, %v2358
        %v2360 = vpop.f32.mrf.mxu0
        %v2361 = vadd.f32 0.0, %v2360
        %2362 = vmatmul.bf16.gmra.mxu0 %v1473
        %v2363 = vpop.f32.mrf.mxu0
        %v2364 = vadd.f32 0.0, %v2363
        %v2365 = vpop.f32.mrf.mxu0
        %v2366 = vadd.f32 0.0, %v2365
        %2367 = vmatmul.bf16.gmra.mxu0 %v1476
        %v2368 = vpop.f32.mrf.mxu0
        %v2369 = vadd.f32 0.0, %v2368
        %v2370 = vpop.f32.mrf.mxu0
        %v2371 = vadd.f32 0.0, %v2370
        %2372 = vmatmul.bf16.gmra.mxu0 %v1479
        %v2373 = vpop.f32.mrf.mxu0
        %v2374 = vadd.f32 0.0, %v2373
        %v2375 = vpop.f32.mrf.mxu0
        %v2376 = vadd.f32 0.0, %v2375
        %2377 = vmatmul.bf16.gmra.mxu0 %v1482
        %v2378 = vpop.f32.mrf.mxu0
        %v2379 = vadd.f32 0.0, %v2378
        %v2380 = vpop.f32.mrf.mxu0
        %v2381 = vadd.f32 0.0, %v2380
        %2382 = vmatmul.bf16.gmra.mxu0 %v1485
        %v2383 = vpop.f32.mrf.mxu0
        %v2384 = vadd.f32 0.0, %v2383
        %v2385 = vpop.f32.mrf.mxu0
        %v2386 = vadd.f32 0.0, %v2385
        %2387 = vmatmul.bf16.gmra.mxu0 %v1488
        %v2388 = vpop.f32.mrf.mxu0
        %v2389 = vadd.f32 0.0, %v2388
        %v2390 = vpop.f32.mrf.mxu0
        %v2391 = vadd.f32 0.0, %v2390
        %2392 = vmatmul.bf16.gmra.mxu0 %v1491
        %v2393 = vpop.f32.mrf.mxu0
        %v2394 = vadd.f32 0.0, %v2393
        %v2395 = vpop.f32.mrf.mxu0
        %v2396 = vadd.f32 0.0, %v2395
        %2397 = vmatmul.bf16.gmra.mxu0 %v1494
        %v2398 = vpop.f32.mrf.mxu0
        %v2399 = vadd.f32 0.0, %v2398
        %v2400 = vpop.f32.mrf.mxu0
        %v2401 = vadd.f32 0.0, %v2400
        %2402 = vmatmul.bf16.gmra.mxu0 %v1497
        %v2403 = vpop.f32.mrf.mxu0
        %v2404 = vadd.f32 0.0, %v2403
        %v2405 = vpop.f32.mrf.mxu0
        %v2406 = vadd.f32 0.0, %v2405
        %2407 = vmatmul.bf16.gmra.mxu0 %v1500
        %v2408 = vpop.f32.mrf.mxu0
        %v2409 = vadd.f32 0.0, %v2408
        %v2410 = vpop.f32.mrf.mxu0
        %v2411 = vadd.f32 0.0, %v2410
        %2412 = vmatmul.bf16.gmra.mxu0 %v1503
        %v2413 = vpop.f32.mrf.mxu0
        %v2414 = vadd.f32 0.0, %v2413
        %v2415 = vpop.f32.mrf.mxu0
        %v2416 = vadd.f32 0.0, %v2415
        %2417 = vmatmul.bf16.gmra.mxu0 %v1506
        %v2418 = vpop.f32.mrf.mxu0
        %v2419 = vadd.f32 0.0, %v2418
        %v2420 = vpop.f32.mrf.mxu0
        %v2421 = vadd.f32 0.0, %v2420
        %2422 = vmatmul.bf16.gmra.mxu0 %v1509
        %v2423 = vpop.f32.mrf.mxu0
        %v2424 = vadd.f32 0.0, %v2423
        %v2425 = vpop.f32.mrf.mxu0
        %v2426 = vadd.f32 0.0, %v2425
        %2427 = vmatmul.bf16.gmra.mxu0 %v1512
        %v2428 = vpop.f32.mrf.mxu0
        %v2429 = vadd.f32 0.0, %v2428
        %v2430 = vpop.f32.mrf.mxu0
        %v2431 = vadd.f32 0.0, %v2430
        %2432 = vmatmul.bf16.gmra.mxu0 %v1515
        %v2433 = vpop.f32.mrf.mxu0
        %v2434 = vadd.f32 0.0, %v2433
        %v2435 = vpop.f32.mrf.mxu0
        %v2436 = vadd.f32 0.0, %v2435
        %2437 = vmatmul.bf16.gmra.mxu0 %v1518
        %v2438 = vpop.f32.mrf.mxu0
        %v2439 = vadd.f32 0.0, %v2438
        %v2440 = vpop.f32.mrf.mxu0
        %v2441 = vadd.f32 0.0, %v2440
        %2442 = vmatmul.bf16.gmra.mxu0 %v1521
        %v2443 = vpop.f32.mrf.mxu0
        %v2444 = vadd.f32 0.0, %v2443
        %v2445 = vpop.f32.mrf.mxu0
        %v2446 = vadd.f32 0.0, %v2445
        %2447 = vmatmul.bf16.gmra.mxu0 %v1524
        %v2448 = vpop.f32.mrf.mxu0
        %v2449 = vadd.f32 0.0, %v2448
        %v2450 = vpop.f32.mrf.mxu0
        %v2451 = vadd.f32 0.0, %v2450
        %2452 = vmatmul.bf16.gmra.mxu0 %v1527
        %v2453 = vpop.f32.mrf.mxu0
        %v2454 = vadd.f32 0.0, %v2453
        %v2455 = vpop.f32.mrf.mxu0
        %v2456 = vadd.f32 0.0, %v2455
        %2457 = vmatmul.bf16.gmra.mxu0 %v1530
        %v2458 = vpop.f32.mrf.mxu0
        %v2459 = vadd.f32 0.0, %v2458
        %v2460 = vpop.f32.mrf.mxu0
        %v2461 = vadd.f32 0.0, %v2460
        %2462 = vmatmul.bf16.gmra.mxu0 %v1533
        %v2463 = vpop.f32.mrf.mxu0
        %v2464 = vadd.f32 0.0, %v2463
        %v2465 = vpop.f32.mrf.mxu0
        %v2466 = vadd.f32 0.0, %v2465
        %2467 = vmatmul.bf16.gmra.mxu0 %v1536
        %v2468 = vpop.f32.mrf.mxu0
        %v2469 = vadd.f32 0.0, %v2468
        %v2470 = vpop.f32.mrf.mxu0
        %v2471 = vadd.f32 0.0, %v2470
        %2472 = vmatmul.bf16.gmra.mxu0 %v1539
        %v2473 = vpop.f32.mrf.mxu0
        %v2474 = vadd.f32 0.0, %v2473
        %v2475 = vpop.f32.mrf.mxu0
        %v2476 = vadd.f32 0.0, %v2475
        %2477 = vmatmul.bf16.gmra.mxu0 %v1542
        %v2478 = vpop.f32.mrf.mxu0
        %v2479 = vadd.f32 0.0, %v2478
        %v2480 = vpop.f32.mrf.mxu0
        %v2481 = vadd.f32 0.0, %v2480
        %2482 = vmatmul.bf16.gmra.mxu0 %v1545
        %v2483 = vpop.f32.mrf.mxu0
        %v2484 = vadd.f32 0.0, %v2483
        %v2485 = vpop.f32.mrf.mxu0
        %v2486 = vadd.f32 0.0, %v2485
        %2487 = vmatmul.bf16.gmra.mxu0 %v1548
        %v2488 = vpop.f32.mrf.mxu0
        %v2489 = vadd.f32 0.0, %v2488
        %v2490 = vpop.f32.mrf.mxu0
        %v2491 = vadd.f32 0.0, %v2490
        %2492 = vmatmul.bf16.gmra.mxu0 %v1551
        %v2493 = vpop.f32.mrf.mxu0
        %v2494 = vadd.f32 0.0, %v2493
        %v2495 = vpop.f32.mrf.mxu0
        %v2496 = vadd.f32 0.0, %v2495
        %2497 = vmatmul.bf16.gmra.mxu0 %v1554
        %v2498 = vpop.f32.mrf.mxu0
        %v2499 = vadd.f32 0.0, %v2498
        %v2500 = vpop.f32.mrf.mxu0
        %v2501 = vadd.f32 0.0, %v2500
        %2502 = vmatmul.bf16.gmra.mxu0 %v1557
        %v2503 = vpop.f32.mrf.mxu0
        %v2504 = vadd.f32 0.0, %v2503
        %v2505 = vpop.f32.mrf.mxu0
        %v2506 = vadd.f32 0.0, %v2505
        %2507 = vmatmul.bf16.gmra.mxu0 %v1560
        %v2508 = vpop.f32.mrf.mxu0
        %v2509 = vadd.f32 0.0, %v2508
        %v2510 = vpop.f32.mrf.mxu0
        %v2511 = vadd.f32 0.0, %v2510
        %2512 = vmatmul.bf16.gmra.mxu0 %v1563
        %v2513 = vpop.f32.mrf.mxu0
        %v2514 = vadd.f32 0.0, %v2513
        %v2515 = vpop.f32.mrf.mxu0
        %v2516 = vadd.f32 0.0, %v2515
        %2517 = vmatmul.bf16.gmra.mxu0 %v1566
        %v2518 = vpop.f32.mrf.mxu0
        %v2519 = vadd.f32 0.0, %v2518
        %v2520 = vpop.f32.mrf.mxu0
        %v2521 = vadd.f32 0.0, %v2520
        %2522 = vmatmul.bf16.gmra.mxu0 %v1569
        %v2523 = vpop.f32.mrf.mxu0
        %v2524 = vadd.f32 0.0, %v2523
        %v2525 = vpop.f32.mrf.mxu0
        %v2526 = vadd.f32 0.0, %v2525
        %2527 = vmatmul.bf16.gmra.mxu0 %v1572
        %v2528 = vpop.f32.mrf.mxu0
        %v2529 = vadd.f32 0.0, %v2528
        %v2530 = vpop.f32.mrf.mxu0
        %v2531 = vadd.f32 0.0, %v2530
        %2532 = vmatmul.bf16.gmra.mxu0 %v1575
        %v2533 = vpop.f32.mrf.mxu0
        %v2534 = vadd.f32 0.0, %v2533
        %v2535 = vpop.f32.mrf.mxu0
        %v2536 = vadd.f32 0.0, %v2535
        %2537 = vmatmul.bf16.gmra.mxu0 %v1578
        %v2538 = vpop.f32.mrf.mxu0
        %v2539 = vadd.f32 0.0, %v2538
        %v2540 = vpop.f32.mrf.mxu0
        %v2541 = vadd.f32 0.0, %v2540
        %2542 = vmatmul.bf16.gmra.mxu0 %v1581
        %v2543 = vpop.f32.mrf.mxu0
        %v2544 = vadd.f32 0.0, %v2543
        %v2545 = vpop.f32.mrf.mxu0
        %v2546 = vadd.f32 0.0, %v2545
        %2547 = vmatmul.bf16.gmra.mxu0 %v1584
        %v2548 = vpop.f32.mrf.mxu0
        %v2549 = vadd.f32 0.0, %v2548
        %v2550 = vpop.f32.mrf.mxu0
        %v2551 = vadd.f32 0.0, %v2550
        %2552 = vmatmul.bf16.gmra.mxu0 %v1587
        %v2553 = vpop.f32.mrf.mxu0
        %v2554 = vadd.f32 0.0, %v2553
        %v2555 = vpop.f32.mrf.mxu0
        %v2556 = vadd.f32 0.0, %v2555
        %2557 = vmatmul.bf16.gmra.mxu0 %v1590
        %v2558 = vpop.f32.mrf.mxu0
        %v2559 = vadd.f32 0.0, %v2558
        %v2560 = vpop.f32.mrf.mxu0
        %v2561 = vadd.f32 0.0, %v2560
        %2562 = vmatmul.bf16.gmra.mxu0 %v1593
        %v2563 = vpop.f32.mrf.mxu0
        %v2564 = vadd.f32 0.0, %v2563
        %v2565 = vpop.f32.mrf.mxu0
        %v2566 = vadd.f32 0.0, %v2565
        %2567 = vmatmul.bf16.gmra.mxu0 %v1596
        %v2568 = vpop.f32.mrf.mxu0
        %v2569 = vadd.f32 0.0, %v2568
        %v2570 = vpop.f32.mrf.mxu0
        %v2571 = vadd.f32 0.0, %v2570
        %2572 = vmatmul.bf16.gmra.mxu0 %v1599
        %v2573 = vpop.f32.mrf.mxu0
        %v2574 = vadd.f32 0.0, %v2573
        %v2575 = vpop.f32.mrf.mxu0
        %v2576 = vadd.f32 0.0, %v2575
        %2577 = vmatmul.bf16.gmra.mxu0 %v1602
        %v2578 = vpop.f32.mrf.mxu0
        %v2579 = vadd.f32 0.0, %v2578
        %v2580 = vpop.f32.mrf.mxu0
        %v2581 = vadd.f32 0.0, %v2580
        %2582 = vmatmul.bf16.gmra.mxu0 %v1605
        %v2583 = vpop.f32.mrf.mxu0
        %v2584 = vadd.f32 0.0, %v2583
        %v2585 = vpop.f32.mrf.mxu0
        %v2586 = vadd.f32 0.0, %v2585
        %2587 = vmatmul.bf16.gmra.mxu0 %v1608
        %v2588 = vpop.f32.mrf.mxu0
        %v2589 = vadd.f32 0.0, %v2588
        %v2590 = vpop.f32.mrf.mxu0
        %v2591 = vadd.f32 0.0, %v2590
        %2592 = vmatmul.bf16.gmra.mxu0 %v1611
        %v2593 = vpop.f32.mrf.mxu0
        %v2594 = vadd.f32 0.0, %v2593
        %v2595 = vpop.f32.mrf.mxu0
        %v2596 = vadd.f32 0.0, %v2595
        %2597 = vmatmul.bf16.gmra.mxu0 %v1614
        %v2598 = vpop.f32.mrf.mxu0
        %v2599 = vadd.f32 0.0, %v2598
        %v2600 = vpop.f32.mrf.mxu0
        %v2601 = vadd.f32 0.0, %v2600
        %2602 = vdwg.mxu0
        %2603 = vmatpush.bf16.msra.mxu0 0
        %2604 = vmatpush.bf16.msra.mxu0 0
        %2605 = vmatpush.bf16.msra.mxu0 0
        %2606 = vmatpush.bf16.msra.mxu0 0
        %2607 = vmatpush.bf16.msra.mxu0 0
        %2608 = vmatpush.bf16.msra.mxu0 0
        %2609 = vmatpush.bf16.msra.mxu0 0
        %2610 = vmatpush.bf16.msra.mxu0 %v1411
        %2611 = vmatmul.bf16.gmra.mxu0 %v1425
        %v2612 = vpop.f32.mrf.mxu0
        %v2613 = vadd.f32 0.0, %v2612
        %v2614 = vpop.f32.mrf.mxu0
        %v2615 = vadd.f32 0.0, %v2614
        %2616 = vmatmul.bf16.gmra.mxu0 %v1428
        %v2617 = vpop.f32.mrf.mxu0
        %v2618 = vadd.f32 0.0, %v2617
        %v2619 = vpop.f32.mrf.mxu0
        %v2620 = vadd.f32 0.0, %v2619
        %2621 = vmatmul.bf16.gmra.mxu0 %v1431
        %v2622 = vpop.f32.mrf.mxu0
        %v2623 = vadd.f32 0.0, %v2622
        %v2624 = vpop.f32.mrf.mxu0
        %v2625 = vadd.f32 0.0, %v2624
        %2626 = vmatmul.bf16.gmra.mxu0 %v1434
        %v2627 = vpop.f32.mrf.mxu0
        %v2628 = vadd.f32 0.0, %v2627
        %v2629 = vpop.f32.mrf.mxu0
        %v2630 = vadd.f32 0.0, %v2629
        %2631 = vmatmul.bf16.gmra.mxu0 %v1437
        %v2632 = vpop.f32.mrf.mxu0
        %v2633 = vadd.f32 0.0, %v2632
        %v2634 = vpop.f32.mrf.mxu0
        %v2635 = vadd.f32 0.0, %v2634
        %2636 = vmatmul.bf16.gmra.mxu0 %v1440
        %v2637 = vpop.f32.mrf.mxu0
        %v2638 = vadd.f32 0.0, %v2637
        %v2639 = vpop.f32.mrf.mxu0
        %v2640 = vadd.f32 0.0, %v2639
        %2641 = vmatmul.bf16.gmra.mxu0 %v1443
        %v2642 = vpop.f32.mrf.mxu0
        %v2643 = vadd.f32 0.0, %v2642
        %v2644 = vpop.f32.mrf.mxu0
        %v2645 = vadd.f32 0.0, %v2644
        %2646 = vmatmul.bf16.gmra.mxu0 %v1446
        %v2647 = vpop.f32.mrf.mxu0
        %v2648 = vadd.f32 0.0, %v2647
        %v2649 = vpop.f32.mrf.mxu0
        %v2650 = vadd.f32 0.0, %v2649
        %2651 = vmatmul.bf16.gmra.mxu0 %v1449
        %v2652 = vpop.f32.mrf.mxu0
        %v2653 = vadd.f32 0.0, %v2652
        %v2654 = vpop.f32.mrf.mxu0
        %v2655 = vadd.f32 0.0, %v2654
        %2656 = vmatmul.bf16.gmra.mxu0 %v1452
        %v2657 = vpop.f32.mrf.mxu0
        %v2658 = vadd.f32 0.0, %v2657
        %v2659 = vpop.f32.mrf.mxu0
        %v2660 = vadd.f32 0.0, %v2659
        %2661 = vmatmul.bf16.gmra.mxu0 %v1455
        %v2662 = vpop.f32.mrf.mxu0
        %v2663 = vadd.f32 0.0, %v2662
        %v2664 = vpop.f32.mrf.mxu0
        %v2665 = vadd.f32 0.0, %v2664
        %2666 = vmatmul.bf16.gmra.mxu0 %v1458
        %v2667 = vpop.f32.mrf.mxu0
        %v2668 = vadd.f32 0.0, %v2667
        %v2669 = vpop.f32.mrf.mxu0
        %v2670 = vadd.f32 0.0, %v2669
        %2671 = vmatmul.bf16.gmra.mxu0 %v1461
        %v2672 = vpop.f32.mrf.mxu0
        %v2673 = vadd.f32 0.0, %v2672
        %v2674 = vpop.f32.mrf.mxu0
        %v2675 = vadd.f32 0.0, %v2674
        %2676 = vmatmul.bf16.gmra.mxu0 %v1464
        %v2677 = vpop.f32.mrf.mxu0
        %v2678 = vadd.f32 0.0, %v2677
        %v2679 = vpop.f32.mrf.mxu0
        %v2680 = vadd.f32 0.0, %v2679
        %2681 = vmatmul.bf16.gmra.mxu0 %v1467
        %v2682 = vpop.f32.mrf.mxu0
        %v2683 = vadd.f32 0.0, %v2682
        %v2684 = vpop.f32.mrf.mxu0
        %v2685 = vadd.f32 0.0, %v2684
        %2686 = vmatmul.bf16.gmra.mxu0 %v1470
        %v2687 = vpop.f32.mrf.mxu0
        %v2688 = vadd.f32 0.0, %v2687
        %v2689 = vpop.f32.mrf.mxu0
        %v2690 = vadd.f32 0.0, %v2689
        %2691 = vmatmul.bf16.gmra.mxu0 %v1473
        %v2692 = vpop.f32.mrf.mxu0
        %v2693 = vadd.f32 0.0, %v2692
        %v2694 = vpop.f32.mrf.mxu0
        %v2695 = vadd.f32 0.0, %v2694
        %2696 = vmatmul.bf16.gmra.mxu0 %v1476
        %v2697 = vpop.f32.mrf.mxu0
        %v2698 = vadd.f32 0.0, %v2697
        %v2699 = vpop.f32.mrf.mxu0
        %v2700 = vadd.f32 0.0, %v2699
        %2701 = vmatmul.bf16.gmra.mxu0 %v1479
        %v2702 = vpop.f32.mrf.mxu0
        %v2703 = vadd.f32 0.0, %v2702
        %v2704 = vpop.f32.mrf.mxu0
        %v2705 = vadd.f32 0.0, %v2704
        %2706 = vmatmul.bf16.gmra.mxu0 %v1482
        %v2707 = vpop.f32.mrf.mxu0
        %v2708 = vadd.f32 0.0, %v2707
        %v2709 = vpop.f32.mrf.mxu0
        %v2710 = vadd.f32 0.0, %v2709
        %2711 = vmatmul.bf16.gmra.mxu0 %v1485
        %v2712 = vpop.f32.mrf.mxu0
        %v2713 = vadd.f32 0.0, %v2712
        %v2714 = vpop.f32.mrf.mxu0
        %v2715 = vadd.f32 0.0, %v2714
        %2716 = vmatmul.bf16.gmra.mxu0 %v1488
        %v2717 = vpop.f32.mrf.mxu0
        %v2718 = vadd.f32 0.0, %v2717
        %v2719 = vpop.f32.mrf.mxu0
        %v2720 = vadd.f32 0.0, %v2719
        %2721 = vmatmul.bf16.gmra.mxu0 %v1491
        %v2722 = vpop.f32.mrf.mxu0
        %v2723 = vadd.f32 0.0, %v2722
        %v2724 = vpop.f32.mrf.mxu0
        %v2725 = vadd.f32 0.0, %v2724
        %2726 = vmatmul.bf16.gmra.mxu0 %v1494
        %v2727 = vpop.f32.mrf.mxu0
        %v2728 = vadd.f32 0.0, %v2727
        %v2729 = vpop.f32.mrf.mxu0
        %v2730 = vadd.f32 0.0, %v2729
        %2731 = vmatmul.bf16.gmra.mxu0 %v1497
        %v2732 = vpop.f32.mrf.mxu0
        %v2733 = vadd.f32 0.0, %v2732
        %v2734 = vpop.f32.mrf.mxu0
        %v2735 = vadd.f32 0.0, %v2734
        %2736 = vmatmul.bf16.gmra.mxu0 %v1500
        %v2737 = vpop.f32.mrf.mxu0
        %v2738 = vadd.f32 0.0, %v2737
        %v2739 = vpop.f32.mrf.mxu0
        %v2740 = vadd.f32 0.0, %v2739
        %2741 = vmatmul.bf16.gmra.mxu0 %v1503
        %v2742 = vpop.f32.mrf.mxu0
        %v2743 = vadd.f32 0.0, %v2742
        %v2744 = vpop.f32.mrf.mxu0
        %v2745 = vadd.f32 0.0, %v2744
        %2746 = vmatmul.bf16.gmra.mxu0 %v1506
        %v2747 = vpop.f32.mrf.mxu0
        %v2748 = vadd.f32 0.0, %v2747
        %v2749 = vpop.f32.mrf.mxu0
        %v2750 = vadd.f32 0.0, %v2749
        %2751 = vmatmul.bf16.gmra.mxu0 %v1509
        %v2752 = vpop.f32.mrf.mxu0
        %v2753 = vadd.f32 0.0, %v2752
        %v2754 = vpop.f32.mrf.mxu0
        %v2755 = vadd.f32 0.0, %v2754
        %2756 = vmatmul.bf16.gmra.mxu0 %v1512
        %v2757 = vpop.f32.mrf.mxu0
        %v2758 = vadd.f32 0.0, %v2757
        %v2759 = vpop.f32.mrf.mxu0
        %v2760 = vadd.f32 0.0, %v2759
        %2761 = vmatmul.bf16.gmra.mxu0 %v1515
        %v2762 = vpop.f32.mrf.mxu0
        %v2763 = vadd.f32 0.0, %v2762
        %v2764 = vpop.f32.mrf.mxu0
        %v2765 = vadd.f32 0.0, %v2764
        %2766 = vmatmul.bf16.gmra.mxu0 %v1518
        %v2767 = vpop.f32.mrf.mxu0
        %v2768 = vadd.f32 0.0, %v2767
        %v2769 = vpop.f32.mrf.mxu0
        %v2770 = vadd.f32 0.0, %v2769
        %2771 = vmatmul.bf16.gmra.mxu0 %v1521
        %v2772 = vpop.f32.mrf.mxu0
        %v2773 = vadd.f32 0.0, %v2772
        %v2774 = vpop.f32.mrf.mxu0
        %v2775 = vadd.f32 0.0, %v2774
        %2776 = vmatmul.bf16.gmra.mxu0 %v1524
        %v2777 = vpop.f32.mrf.mxu0
        %v2778 = vadd.f32 0.0, %v2777
        %v2779 = vpop.f32.mrf.mxu0
        %v2780 = vadd.f32 0.0, %v2779
        %2781 = vmatmul.bf16.gmra.mxu0 %v1527
        %v2782 = vpop.f32.mrf.mxu0
        %v2783 = vadd.f32 0.0, %v2782
        %v2784 = vpop.f32.mrf.mxu0
        %v2785 = vadd.f32 0.0, %v2784
        %2786 = vmatmul.bf16.gmra.mxu0 %v1530
        %v2787 = vpop.f32.mrf.mxu0
        %v2788 = vadd.f32 0.0, %v2787
        %v2789 = vpop.f32.mrf.mxu0
        %v2790 = vadd.f32 0.0, %v2789
        %2791 = vmatmul.bf16.gmra.mxu0 %v1533
        %v2792 = vpop.f32.mrf.mxu0
        %v2793 = vadd.f32 0.0, %v2792
        %v2794 = vpop.f32.mrf.mxu0
        %v2795 = vadd.f32 0.0, %v2794
        %2796 = vmatmul.bf16.gmra.mxu0 %v1536
        %v2797 = vpop.f32.mrf.mxu0
        %v2798 = vadd.f32 0.0, %v2797
        %v2799 = vpop.f32.mrf.mxu0
        %v2800 = vadd.f32 0.0, %v2799
        %2801 = vmatmul.bf16.gmra.mxu0 %v1539
        %v2802 = vpop.f32.mrf.mxu0
        %v2803 = vadd.f32 0.0, %v2802
        %v2804 = vpop.f32.mrf.mxu0
        %v2805 = vadd.f32 0.0, %v2804
        %2806 = vmatmul.bf16.gmra.mxu0 %v1542
        %v2807 = vpop.f32.mrf.mxu0
        %v2808 = vadd.f32 0.0, %v2807
        %v2809 = vpop.f32.mrf.mxu0
        %v2810 = vadd.f32 0.0, %v2809
        %2811 = vmatmul.bf16.gmra.mxu0 %v1545
        %v2812 = vpop.f32.mrf.mxu0
        %v2813 = vadd.f32 0.0, %v2812
        %v2814 = vpop.f32.mrf.mxu0
        %v2815 = vadd.f32 0.0, %v2814
        %2816 = vmatmul.bf16.gmra.mxu0 %v1548
        %v2817 = vpop.f32.mrf.mxu0
        %v2818 = vadd.f32 0.0, %v2817
        %v2819 = vpop.f32.mrf.mxu0
        %v2820 = vadd.f32 0.0, %v2819
        %2821 = vmatmul.bf16.gmra.mxu0 %v1551
        %v2822 = vpop.f32.mrf.mxu0
        %v2823 = vadd.f32 0.0, %v2822
        %v2824 = vpop.f32.mrf.mxu0
        %v2825 = vadd.f32 0.0, %v2824
        %2826 = vmatmul.bf16.gmra.mxu0 %v1554
        %v2827 = vpop.f32.mrf.mxu0
        %v2828 = vadd.f32 0.0, %v2827
        %v2829 = vpop.f32.mrf.mxu0
        %v2830 = vadd.f32 0.0, %v2829
        %2831 = vmatmul.bf16.gmra.mxu0 %v1557
        %v2832 = vpop.f32.mrf.mxu0
        %v2833 = vadd.f32 0.0, %v2832
        %v2834 = vpop.f32.mrf.mxu0
        %v2835 = vadd.f32 0.0, %v2834
        %2836 = vmatmul.bf16.gmra.mxu0 %v1560
        %v2837 = vpop.f32.mrf.mxu0
        %v2838 = vadd.f32 0.0, %v2837
        %v2839 = vpop.f32.mrf.mxu0
        %v2840 = vadd.f32 0.0, %v2839
        %2841 = vmatmul.bf16.gmra.mxu0 %v1563
        %v2842 = vpop.f32.mrf.mxu0
        %v2843 = vadd.f32 0.0, %v2842
        %v2844 = vpop.f32.mrf.mxu0
        %v2845 = vadd.f32 0.0, %v2844
        %2846 = vmatmul.bf16.gmra.mxu0 %v1566
        %v2847 = vpop.f32.mrf.mxu0
        %v2848 = vadd.f32 0.0, %v2847
        %v2849 = vpop.f32.mrf.mxu0
        %v2850 = vadd.f32 0.0, %v2849
        %2851 = vmatmul.bf16.gmra.mxu0 %v1569
        %v2852 = vpop.f32.mrf.mxu0
        %v2853 = vadd.f32 0.0, %v2852
        %v2854 = vpop.f32.mrf.mxu0
        %v2855 = vadd.f32 0.0, %v2854
        %2856 = vmatmul.bf16.gmra.mxu0 %v1572
        %v2857 = vpop.f32.mrf.mxu0
        %v2858 = vadd.f32 0.0, %v2857
        %v2859 = vpop.f32.mrf.mxu0
        %v2860 = vadd.f32 0.0, %v2859
        %2861 = vmatmul.bf16.gmra.mxu0 %v1575
        %v2862 = vpop.f32.mrf.mxu0
        %v2863 = vadd.f32 0.0, %v2862
        %v2864 = vpop.f32.mrf.mxu0
        %v2865 = vadd.f32 0.0, %v2864
        %2866 = vmatmul.bf16.gmra.mxu0 %v1578
        %v2867 = vpop.f32.mrf.mxu0
        %v2868 = vadd.f32 0.0, %v2867
        %v2869 = vpop.f32.mrf.mxu0
        %v2870 = vadd.f32 0.0, %v2869
        %2871 = vmatmul.bf16.gmra.mxu0 %v1581
        %v2872 = vpop.f32.mrf.mxu0
        %v2873 = vadd.f32 0.0, %v2872
        %v2874 = vpop.f32.mrf.mxu0
        %v2875 = vadd.f32 0.0, %v2874
        %2876 = vmatmul.bf16.gmra.mxu0 %v1584
        %v2877 = vpop.f32.mrf.mxu0
        %v2878 = vadd.f32 0.0, %v2877
        %v2879 = vpop.f32.mrf.mxu0
        %v2880 = vadd.f32 0.0, %v2879
        %2881 = vmatmul.bf16.gmra.mxu0 %v1587
        %v2882 = vpop.f32.mrf.mxu0
        %v2883 = vadd.f32 0.0, %v2882
        %v2884 = vpop.f32.mrf.mxu0
        %v2885 = vadd.f32 0.0, %v2884
        %2886 = vmatmul.bf16.gmra.mxu0 %v1590
        %v2887 = vpop.f32.mrf.mxu0
        %v2888 = vadd.f32 0.0, %v2887
        %v2889 = vpop.f32.mrf.mxu0
        %v2890 = vadd.f32 0.0, %v2889
        %2891 = vmatmul.bf16.gmra.mxu0 %v1593
        %v2892 = vpop.f32.mrf.mxu0
        %v2893 = vadd.f32 0.0, %v2892
        %v2894 = vpop.f32.mrf.mxu0
        %v2895 = vadd.f32 0.0, %v2894
        %2896 = vmatmul.bf16.gmra.mxu0 %v1596
        %v2897 = vpop.f32.mrf.mxu0
        %v2898 = vadd.f32 0.0, %v2897
        %v2899 = vpop.f32.mrf.mxu0
        %v2900 = vadd.f32 0.0, %v2899
        %2901 = vmatmul.bf16.gmra.mxu0 %v1599
        %v2902 = vpop.f32.mrf.mxu0
        %v2903 = vadd.f32 0.0, %v2902
        %v2904 = vpop.f32.mrf.mxu0
        %v2905 = vadd.f32 0.0, %v2904
        %2906 = vmatmul.bf16.gmra.mxu0 %v1602
        %v2907 = vpop.f32.mrf.mxu0
        %v2908 = vadd.f32 0.0, %v2907
        %v2909 = vpop.f32.mrf.mxu0
        %v2910 = vadd.f32 0.0, %v2909
        %2911 = vmatmul.bf16.gmra.mxu0 %v1605
        %v2912 = vpop.f32.mrf.mxu0
        %v2913 = vadd.f32 0.0, %v2912
        %v2914 = vpop.f32.mrf.mxu0
        %v2915 = vadd.f32 0.0, %v2914
        %2916 = vmatmul.bf16.gmra.mxu0 %v1608
        %v2917 = vpop.f32.mrf.mxu0
        %v2918 = vadd.f32 0.0, %v2917
        %v2919 = vpop.f32.mrf.mxu0
        %v2920 = vadd.f32 0.0, %v2919
        %2921 = vmatmul.bf16.gmra.mxu0 %v1611
        %v2922 = vpop.f32.mrf.mxu0
        %v2923 = vadd.f32 0.0, %v2922
        %v2924 = vpop.f32.mrf.mxu0
        %v2925 = vadd.f32 0.0, %v2924
        %2926 = vmatmul.bf16.gmra.mxu0 %v1614
        %v2927 = vpop.f32.mrf.mxu0
        %v2928 = vadd.f32 0.0, %v2927
        %v2929 = vpop.f32.mrf.mxu0
        %v2930 = vadd.f32 0.0, %v2929
        %2931 = vdwg.mxu0
        %2932 = vmatpush.bf16.msra.mxu0 0
        %2933 = vmatpush.bf16.msra.mxu0 0
        %2934 = vmatpush.bf16.msra.mxu0 0
        %2935 = vmatpush.bf16.msra.mxu0 0
        %2936 = vmatpush.bf16.msra.mxu0 0
        %2937 = vmatpush.bf16.msra.mxu0 0
        %2938 = vmatpush.bf16.msra.mxu0 0
        %2939 = vmatpush.bf16.msra.mxu0 %v1412
        %2940 = vmatmul.bf16.gmra.mxu0 %v1425
        %v2941 = vpop.f32.mrf.mxu0
        %v2942 = vadd.f32 0.0, %v2941
        %v2943 = vpop.f32.mrf.mxu0
        %v2944 = vadd.f32 0.0, %v2943
        %2945 = vmatmul.bf16.gmra.mxu0 %v1428
        %v2946 = vpop.f32.mrf.mxu0
        %v2947 = vadd.f32 0.0, %v2946
        %v2948 = vpop.f32.mrf.mxu0
        %v2949 = vadd.f32 0.0, %v2948
        %2950 = vmatmul.bf16.gmra.mxu0 %v1431
        %v2951 = vpop.f32.mrf.mxu0
        %v2952 = vadd.f32 0.0, %v2951
        %v2953 = vpop.f32.mrf.mxu0
        %v2954 = vadd.f32 0.0, %v2953
        %2955 = vmatmul.bf16.gmra.mxu0 %v1434
        %v2956 = vpop.f32.mrf.mxu0
        %v2957 = vadd.f32 0.0, %v2956
        %v2958 = vpop.f32.mrf.mxu0
        %v2959 = vadd.f32 0.0, %v2958
        %2960 = vmatmul.bf16.gmra.mxu0 %v1437
        %v2961 = vpop.f32.mrf.mxu0
        %v2962 = vadd.f32 0.0, %v2961
        %v2963 = vpop.f32.mrf.mxu0
        %v2964 = vadd.f32 0.0, %v2963
        %2965 = vmatmul.bf16.gmra.mxu0 %v1440
        %v2966 = vpop.f32.mrf.mxu0
        %v2967 = vadd.f32 0.0, %v2966
        %v2968 = vpop.f32.mrf.mxu0
        %v2969 = vadd.f32 0.0, %v2968
        %2970 = vmatmul.bf16.gmra.mxu0 %v1443
        %v2971 = vpop.f32.mrf.mxu0
        %v2972 = vadd.f32 0.0, %v2971
        %v2973 = vpop.f32.mrf.mxu0
        %v2974 = vadd.f32 0.0, %v2973
        %2975 = vmatmul.bf16.gmra.mxu0 %v1446
        %v2976 = vpop.f32.mrf.mxu0
        %v2977 = vadd.f32 0.0, %v2976
        %v2978 = vpop.f32.mrf.mxu0
        %v2979 = vadd.f32 0.0, %v2978
        %2980 = vmatmul.bf16.gmra.mxu0 %v1449
        %v2981 = vpop.f32.mrf.mxu0
        %v2982 = vadd.f32 0.0, %v2981
        %v2983 = vpop.f32.mrf.mxu0
        %v2984 = vadd.f32 0.0, %v2983
        %2985 = vmatmul.bf16.gmra.mxu0 %v1452
        %v2986 = vpop.f32.mrf.mxu0
        %v2987 = vadd.f32 0.0, %v2986
        %v2988 = vpop.f32.mrf.mxu0
        %v2989 = vadd.f32 0.0, %v2988
        %2990 = vmatmul.bf16.gmra.mxu0 %v1455
        %v2991 = vpop.f32.mrf.mxu0
        %v2992 = vadd.f32 0.0, %v2991
        %v2993 = vpop.f32.mrf.mxu0
        %v2994 = vadd.f32 0.0, %v2993
        %2995 = vmatmul.bf16.gmra.mxu0 %v1458
        %v2996 = vpop.f32.mrf.mxu0
        %v2997 = vadd.f32 0.0, %v2996
        %v2998 = vpop.f32.mrf.mxu0
        %v2999 = vadd.f32 0.0, %v2998
        %3000 = vmatmul.bf16.gmra.mxu0 %v1461
        %v3001 = vpop.f32.mrf.mxu0
        %v3002 = vadd.f32 0.0, %v3001
        %v3003 = vpop.f32.mrf.mxu0
        %v3004 = vadd.f32 0.0, %v3003
        %3005 = vmatmul.bf16.gmra.mxu0 %v1464
        %v3006 = vpop.f32.mrf.mxu0
        %v3007 = vadd.f32 0.0, %v3006
        %v3008 = vpop.f32.mrf.mxu0
        %v3009 = vadd.f32 0.0, %v3008
        %3010 = vmatmul.bf16.gmra.mxu0 %v1467
        %v3011 = vpop.f32.mrf.mxu0
        %v3012 = vadd.f32 0.0, %v3011
        %v3013 = vpop.f32.mrf.mxu0
        %v3014 = vadd.f32 0.0, %v3013
        %3015 = vmatmul.bf16.gmra.mxu0 %v1470
        %v3016 = vpop.f32.mrf.mxu0
        %v3017 = vadd.f32 0.0, %v3016
        %v3018 = vpop.f32.mrf.mxu0
        %v3019 = vadd.f32 0.0, %v3018
        %3020 = vmatmul.bf16.gmra.mxu0 %v1473
        %v3021 = vpop.f32.mrf.mxu0
        %v3022 = vadd.f32 0.0, %v3021
        %v3023 = vpop.f32.mrf.mxu0
        %v3024 = vadd.f32 0.0, %v3023
        %3025 = vmatmul.bf16.gmra.mxu0 %v1476
        %v3026 = vpop.f32.mrf.mxu0
        %v3027 = vadd.f32 0.0, %v3026
        %v3028 = vpop.f32.mrf.mxu0
        %v3029 = vadd.f32 0.0, %v3028
        %3030 = vmatmul.bf16.gmra.mxu0 %v1479
        %v3031 = vpop.f32.mrf.mxu0
        %v3032 = vadd.f32 0.0, %v3031
        %v3033 = vpop.f32.mrf.mxu0
        %v3034 = vadd.f32 0.0, %v3033
        %3035 = vmatmul.bf16.gmra.mxu0 %v1482
        %v3036 = vpop.f32.mrf.mxu0
        %v3037 = vadd.f32 0.0, %v3036
        %v3038 = vpop.f32.mrf.mxu0
        %v3039 = vadd.f32 0.0, %v3038
        %3040 = vmatmul.bf16.gmra.mxu0 %v1485
        %v3041 = vpop.f32.mrf.mxu0
        %v3042 = vadd.f32 0.0, %v3041
        %v3043 = vpop.f32.mrf.mxu0
        %v3044 = vadd.f32 0.0, %v3043
        %3045 = vmatmul.bf16.gmra.mxu0 %v1488
        %v3046 = vpop.f32.mrf.mxu0
        %v3047 = vadd.f32 0.0, %v3046
        %v3048 = vpop.f32.mrf.mxu0
        %v3049 = vadd.f32 0.0, %v3048
        %3050 = vmatmul.bf16.gmra.mxu0 %v1491
        %v3051 = vpop.f32.mrf.mxu0
        %v3052 = vadd.f32 0.0, %v3051
        %v3053 = vpop.f32.mrf.mxu0
        %v3054 = vadd.f32 0.0, %v3053
        %3055 = vmatmul.bf16.gmra.mxu0 %v1494
        %v3056 = vpop.f32.mrf.mxu0
        %v3057 = vadd.f32 0.0, %v3056
        %v3058 = vpop.f32.mrf.mxu0
        %v3059 = vadd.f32 0.0, %v3058
        %3060 = vmatmul.bf16.gmra.mxu0 %v1497
        %v3061 = vpop.f32.mrf.mxu0
        %v3062 = vadd.f32 0.0, %v3061
        %v3063 = vpop.f32.mrf.mxu0
        %v3064 = vadd.f32 0.0, %v3063
        %3065 = vmatmul.bf16.gmra.mxu0 %v1500
        %v3066 = vpop.f32.mrf.mxu0
        %v3067 = vadd.f32 0.0, %v3066
        %v3068 = vpop.f32.mrf.mxu0
        %v3069 = vadd.f32 0.0, %v3068
        %3070 = vmatmul.bf16.gmra.mxu0 %v1503
        %v3071 = vpop.f32.mrf.mxu0
        %v3072 = vadd.f32 0.0, %v3071
        %v3073 = vpop.f32.mrf.mxu0
        %v3074 = vadd.f32 0.0, %v3073
        %3075 = vmatmul.bf16.gmra.mxu0 %v1506
        %v3076 = vpop.f32.mrf.mxu0
        %v3077 = vadd.f32 0.0, %v3076
        %v3078 = vpop.f32.mrf.mxu0
        %v3079 = vadd.f32 0.0, %v3078
        %3080 = vmatmul.bf16.gmra.mxu0 %v1509
        %v3081 = vpop.f32.mrf.mxu0
        %v3082 = vadd.f32 0.0, %v3081
        %v3083 = vpop.f32.mrf.mxu0
        %v3084 = vadd.f32 0.0, %v3083
        %3085 = vmatmul.bf16.gmra.mxu0 %v1512
        %v3086 = vpop.f32.mrf.mxu0
        %v3087 = vadd.f32 0.0, %v3086
        %v3088 = vpop.f32.mrf.mxu0
        %v3089 = vadd.f32 0.0, %v3088
        %3090 = vmatmul.bf16.gmra.mxu0 %v1515
        %v3091 = vpop.f32.mrf.mxu0
        %v3092 = vadd.f32 0.0, %v3091
        %v3093 = vpop.f32.mrf.mxu0
        %v3094 = vadd.f32 0.0, %v3093
        %3095 = vmatmul.bf16.gmra.mxu0 %v1518
        %v3096 = vpop.f32.mrf.mxu0
        %v3097 = vadd.f32 0.0, %v3096
        %v3098 = vpop.f32.mrf.mxu0
        %v3099 = vadd.f32 0.0, %v3098
        %3100 = vmatmul.bf16.gmra.mxu0 %v1521
        %v3101 = vpop.f32.mrf.mxu0
        %v3102 = vadd.f32 0.0, %v3101
        %v3103 = vpop.f32.mrf.mxu0
        %v3104 = vadd.f32 0.0, %v3103
        %3105 = vmatmul.bf16.gmra.mxu0 %v1524
        %v3106 = vpop.f32.mrf.mxu0
        %v3107 = vadd.f32 0.0, %v3106
        %v3108 = vpop.f32.mrf.mxu0
        %v3109 = vadd.f32 0.0, %v3108
        %3110 = vmatmul.bf16.gmra.mxu0 %v1527
        %v3111 = vpop.f32.mrf.mxu0
        %v3112 = vadd.f32 0.0, %v3111
        %v3113 = vpop.f32.mrf.mxu0
        %v3114 = vadd.f32 0.0, %v3113
        %3115 = vmatmul.bf16.gmra.mxu0 %v1530
        %v3116 = vpop.f32.mrf.mxu0
        %v3117 = vadd.f32 0.0, %v3116
        %v3118 = vpop.f32.mrf.mxu0
        %v3119 = vadd.f32 0.0, %v3118
        %3120 = vmatmul.bf16.gmra.mxu0 %v1533
        %v3121 = vpop.f32.mrf.mxu0
        %v3122 = vadd.f32 0.0, %v3121
        %v3123 = vpop.f32.mrf.mxu0
        %v3124 = vadd.f32 0.0, %v3123
        %3125 = vmatmul.bf16.gmra.mxu0 %v1536
        %v3126 = vpop.f32.mrf.mxu0
        %v3127 = vadd.f32 0.0, %v3126
        %v3128 = vpop.f32.mrf.mxu0
        %v3129 = vadd.f32 0.0, %v3128
        %3130 = vmatmul.bf16.gmra.mxu0 %v1539
        %v3131 = vpop.f32.mrf.mxu0
        %v3132 = vadd.f32 0.0, %v3131
        %v3133 = vpop.f32.mrf.mxu0
        %v3134 = vadd.f32 0.0, %v3133
        %3135 = vmatmul.bf16.gmra.mxu0 %v1542
        %v3136 = vpop.f32.mrf.mxu0
        %v3137 = vadd.f32 0.0, %v3136
        %v3138 = vpop.f32.mrf.mxu0
        %v3139 = vadd.f32 0.0, %v3138
        %3140 = vmatmul.bf16.gmra.mxu0 %v1545
        %v3141 = vpop.f32.mrf.mxu0
        %v3142 = vadd.f32 0.0, %v3141
        %v3143 = vpop.f32.mrf.mxu0
        %v3144 = vadd.f32 0.0, %v3143
        %3145 = vmatmul.bf16.gmra.mxu0 %v1548
        %v3146 = vpop.f32.mrf.mxu0
        %v3147 = vadd.f32 0.0, %v3146
        %v3148 = vpop.f32.mrf.mxu0
        %v3149 = vadd.f32 0.0, %v3148
        %3150 = vmatmul.bf16.gmra.mxu0 %v1551
        %v3151 = vpop.f32.mrf.mxu0
        %v3152 = vadd.f32 0.0, %v3151
        %v3153 = vpop.f32.mrf.mxu0
        %v3154 = vadd.f32 0.0, %v3153
        %3155 = vmatmul.bf16.gmra.mxu0 %v1554
        %v3156 = vpop.f32.mrf.mxu0
        %v3157 = vadd.f32 0.0, %v3156
        %v3158 = vpop.f32.mrf.mxu0
        %v3159 = vadd.f32 0.0, %v3158
        %3160 = vmatmul.bf16.gmra.mxu0 %v1557
        %v3161 = vpop.f32.mrf.mxu0
        %v3162 = vadd.f32 0.0, %v3161
        %v3163 = vpop.f32.mrf.mxu0
        %v3164 = vadd.f32 0.0, %v3163
        %3165 = vmatmul.bf16.gmra.mxu0 %v1560
        %v3166 = vpop.f32.mrf.mxu0
        %v3167 = vadd.f32 0.0, %v3166
        %v3168 = vpop.f32.mrf.mxu0
        %v3169 = vadd.f32 0.0, %v3168
        %3170 = vmatmul.bf16.gmra.mxu0 %v1563
        %v3171 = vpop.f32.mrf.mxu0
        %v3172 = vadd.f32 0.0, %v3171
        %v3173 = vpop.f32.mrf.mxu0
        %v3174 = vadd.f32 0.0, %v3173
        %3175 = vmatmul.bf16.gmra.mxu0 %v1566
        %v3176 = vpop.f32.mrf.mxu0
        %v3177 = vadd.f32 0.0, %v3176
        %v3178 = vpop.f32.mrf.mxu0
        %v3179 = vadd.f32 0.0, %v3178
        %3180 = vmatmul.bf16.gmra.mxu0 %v1569
        %v3181 = vpop.f32.mrf.mxu0
        %v3182 = vadd.f32 0.0, %v3181
        %v3183 = vpop.f32.mrf.mxu0
        %v3184 = vadd.f32 0.0, %v3183
        %3185 = vmatmul.bf16.gmra.mxu0 %v1572
        %v3186 = vpop.f32.mrf.mxu0
        %v3187 = vadd.f32 0.0, %v3186
        %v3188 = vpop.f32.mrf.mxu0
        %v3189 = vadd.f32 0.0, %v3188
        %3190 = vmatmul.bf16.gmra.mxu0 %v1575
        %v3191 = vpop.f32.mrf.mxu0
        %v3192 = vadd.f32 0.0, %v3191
        %v3193 = vpop.f32.mrf.mxu0
        %v3194 = vadd.f32 0.0, %v3193
        %3195 = vmatmul.bf16.gmra.mxu0 %v1578
        %v3196 = vpop.f32.mrf.mxu0
        %v3197 = vadd.f32 0.0, %v3196
        %v3198 = vpop.f32.mrf.mxu0
        %v3199 = vadd.f32 0.0, %v3198
        %3200 = vmatmul.bf16.gmra.mxu0 %v1581
        %v3201 = vpop.f32.mrf.mxu0
        %v3202 = vadd.f32 0.0, %v3201
        %v3203 = vpop.f32.mrf.mxu0
        %v3204 = vadd.f32 0.0, %v3203
        %3205 = vmatmul.bf16.gmra.mxu0 %v1584
        %v3206 = vpop.f32.mrf.mxu0
        %v3207 = vadd.f32 0.0, %v3206
        %v3208 = vpop.f32.mrf.mxu0
        %v3209 = vadd.f32 0.0, %v3208
        %3210 = vmatmul.bf16.gmra.mxu0 %v1587
        %v3211 = vpop.f32.mrf.mxu0
        %v3212 = vadd.f32 0.0, %v3211
        %v3213 = vpop.f32.mrf.mxu0
        %v3214 = vadd.f32 0.0, %v3213
        %3215 = vmatmul.bf16.gmra.mxu0 %v1590
        %v3216 = vpop.f32.mrf.mxu0
        %v3217 = vadd.f32 0.0, %v3216
        %v3218 = vpop.f32.mrf.mxu0
        %v3219 = vadd.f32 0.0, %v3218
        %3220 = vmatmul.bf16.gmra.mxu0 %v1593
        %v3221 = vpop.f32.mrf.mxu0
        %v3222 = vadd.f32 0.0, %v3221
        %v3223 = vpop.f32.mrf.mxu0
        %v3224 = vadd.f32 0.0, %v3223
        %3225 = vmatmul.bf16.gmra.mxu0 %v1596
        %v3226 = vpop.f32.mrf.mxu0
        %v3227 = vadd.f32 0.0, %v3226
        %v3228 = vpop.f32.mrf.mxu0
        %v3229 = vadd.f32 0.0, %v3228
        %3230 = vmatmul.bf16.gmra.mxu0 %v1599
        %v3231 = vpop.f32.mrf.mxu0
        %v3232 = vadd.f32 0.0, %v3231
        %v3233 = vpop.f32.mrf.mxu0
        %v3234 = vadd.f32 0.0, %v3233
        %3235 = vmatmul.bf16.gmra.mxu0 %v1602
        %v3236 = vpop.f32.mrf.mxu0
        %v3237 = vadd.f32 0.0, %v3236
        %v3238 = vpop.f32.mrf.mxu0
        %v3239 = vadd.f32 0.0, %v3238
        %3240 = vmatmul.bf16.gmra.mxu0 %v1605
        %v3241 = vpop.f32.mrf.mxu0
        %v3242 = vadd.f32 0.0, %v3241
        %v3243 = vpop.f32.mrf.mxu0
        %v3244 = vadd.f32 0.0, %v3243
        %3245 = vmatmul.bf16.gmra.mxu0 %v1608
        %v3246 = vpop.f32.mrf.mxu0
        %v3247 = vadd.f32 0.0, %v3246
        %v3248 = vpop.f32.mrf.mxu0
        %v3249 = vadd.f32 0.0, %v3248
        %3250 = vmatmul.bf16.gmra.mxu0 %v1611
        %v3251 = vpop.f32.mrf.mxu0
        %v3252 = vadd.f32 0.0, %v3251
        %v3253 = vpop.f32.mrf.mxu0
        %v3254 = vadd.f32 0.0, %v3253
        %3255 = vmatmul.bf16.gmra.mxu0 %v1614
        %v3256 = vpop.f32.mrf.mxu0
        %v3257 = vadd.f32 0.0, %v3256
        %v3258 = vpop.f32.mrf.mxu0
        %v3259 = vadd.f32 0.0, %v3258
        %3260 = vdwg.mxu0
        %3261 = vmatpush.bf16.msra.mxu0 0
        %3262 = vmatpush.bf16.msra.mxu0 0
        %3263 = vmatpush.bf16.msra.mxu0 0
        %3264 = vmatpush.bf16.msra.mxu0 0
        %3265 = vmatpush.bf16.msra.mxu0 0
        %3266 = vmatpush.bf16.msra.mxu0 0
        %3267 = vmatpush.bf16.msra.mxu0 0
        %3268 = vmatpush.bf16.msra.mxu0 %v1413
        %3269 = vmatmul.bf16.gmra.mxu0 %v1425
        %v3270 = vpop.f32.mrf.mxu0
        %v3271 = vadd.f32 0.0, %v3270
        %v3272 = vpop.f32.mrf.mxu0
        %v3273 = vadd.f32 0.0, %v3272
        %3274 = vmatmul.bf16.gmra.mxu0 %v1428
        %v3275 = vpop.f32.mrf.mxu0
        %v3276 = vadd.f32 0.0, %v3275
        %v3277 = vpop.f32.mrf.mxu0
        %v3278 = vadd.f32 0.0, %v3277
        %3279 = vmatmul.bf16.gmra.mxu0 %v1431
        %v3280 = vpop.f32.mrf.mxu0
        %v3281 = vadd.f32 0.0, %v3280
        %v3282 = vpop.f32.mrf.mxu0
        %v3283 = vadd.f32 0.0, %v3282
        %3284 = vmatmul.bf16.gmra.mxu0 %v1434
        %v3285 = vpop.f32.mrf.mxu0
        %v3286 = vadd.f32 0.0, %v3285
        %v3287 = vpop.f32.mrf.mxu0
        %v3288 = vadd.f32 0.0, %v3287
        %3289 = vmatmul.bf16.gmra.mxu0 %v1437
        %v3290 = vpop.f32.mrf.mxu0
        %v3291 = vadd.f32 0.0, %v3290
        %v3292 = vpop.f32.mrf.mxu0
        %v3293 = vadd.f32 0.0, %v3292
        %3294 = vmatmul.bf16.gmra.mxu0 %v1440
        %v3295 = vpop.f32.mrf.mxu0
        %v3296 = vadd.f32 0.0, %v3295
        %v3297 = vpop.f32.mrf.mxu0
        %v3298 = vadd.f32 0.0, %v3297
        %3299 = vmatmul.bf16.gmra.mxu0 %v1443
        %v3300 = vpop.f32.mrf.mxu0
        %v3301 = vadd.f32 0.0, %v3300
        %v3302 = vpop.f32.mrf.mxu0
        %v3303 = vadd.f32 0.0, %v3302
        %3304 = vmatmul.bf16.gmra.mxu0 %v1446
        %v3305 = vpop.f32.mrf.mxu0
        %v3306 = vadd.f32 0.0, %v3305
        %v3307 = vpop.f32.mrf.mxu0
        %v3308 = vadd.f32 0.0, %v3307
        %3309 = vmatmul.bf16.gmra.mxu0 %v1449
        %v3310 = vpop.f32.mrf.mxu0
        %v3311 = vadd.f32 0.0, %v3310
        %v3312 = vpop.f32.mrf.mxu0
        %v3313 = vadd.f32 0.0, %v3312
        %3314 = vmatmul.bf16.gmra.mxu0 %v1452
        %v3315 = vpop.f32.mrf.mxu0
        %v3316 = vadd.f32 0.0, %v3315
        %v3317 = vpop.f32.mrf.mxu0
        %v3318 = vadd.f32 0.0, %v3317
        %3319 = vmatmul.bf16.gmra.mxu0 %v1455
        %v3320 = vpop.f32.mrf.mxu0
        %v3321 = vadd.f32 0.0, %v3320
        %v3322 = vpop.f32.mrf.mxu0
        %v3323 = vadd.f32 0.0, %v3322
        %3324 = vmatmul.bf16.gmra.mxu0 %v1458
        %v3325 = vpop.f32.mrf.mxu0
        %v3326 = vadd.f32 0.0, %v3325
        %v3327 = vpop.f32.mrf.mxu0
        %v3328 = vadd.f32 0.0, %v3327
        %3329 = vmatmul.bf16.gmra.mxu0 %v1461
        %v3330 = vpop.f32.mrf.mxu0
        %v3331 = vadd.f32 0.0, %v3330
        %v3332 = vpop.f32.mrf.mxu0
        %v3333 = vadd.f32 0.0, %v3332
        %3334 = vmatmul.bf16.gmra.mxu0 %v1464
        %v3335 = vpop.f32.mrf.mxu0
        %v3336 = vadd.f32 0.0, %v3335
        %v3337 = vpop.f32.mrf.mxu0
        %v3338 = vadd.f32 0.0, %v3337
        %3339 = vmatmul.bf16.gmra.mxu0 %v1467
        %v3340 = vpop.f32.mrf.mxu0
        %v3341 = vadd.f32 0.0, %v3340
        %v3342 = vpop.f32.mrf.mxu0
        %v3343 = vadd.f32 0.0, %v3342
        %3344 = vmatmul.bf16.gmra.mxu0 %v1470
        %v3345 = vpop.f32.mrf.mxu0
        %v3346 = vadd.f32 0.0, %v3345
        %v3347 = vpop.f32.mrf.mxu0
        %v3348 = vadd.f32 0.0, %v3347
        %3349 = vmatmul.bf16.gmra.mxu0 %v1473
        %v3350 = vpop.f32.mrf.mxu0
        %v3351 = vadd.f32 0.0, %v3350
        %v3352 = vpop.f32.mrf.mxu0
        %v3353 = vadd.f32 0.0, %v3352
        %3354 = vmatmul.bf16.gmra.mxu0 %v1476
        %v3355 = vpop.f32.mrf.mxu0
        %v3356 = vadd.f32 0.0, %v3355
        %v3357 = vpop.f32.mrf.mxu0
        %v3358 = vadd.f32 0.0, %v3357
        %3359 = vmatmul.bf16.gmra.mxu0 %v1479
        %v3360 = vpop.f32.mrf.mxu0
        %v3361 = vadd.f32 0.0, %v3360
        %v3362 = vpop.f32.mrf.mxu0
        %v3363 = vadd.f32 0.0, %v3362
        %3364 = vmatmul.bf16.gmra.mxu0 %v1482
        %v3365 = vpop.f32.mrf.mxu0
        %v3366 = vadd.f32 0.0, %v3365
        %v3367 = vpop.f32.mrf.mxu0
        %v3368 = vadd.f32 0.0, %v3367
        %3369 = vmatmul.bf16.gmra.mxu0 %v1485
        %v3370 = vpop.f32.mrf.mxu0
        %v3371 = vadd.f32 0.0, %v3370
        %v3372 = vpop.f32.mrf.mxu0
        %v3373 = vadd.f32 0.0, %v3372
        %3374 = vmatmul.bf16.gmra.mxu0 %v1488
        %v3375 = vpop.f32.mrf.mxu0
        %v3376 = vadd.f32 0.0, %v3375
        %v3377 = vpop.f32.mrf.mxu0
        %v3378 = vadd.f32 0.0, %v3377
        %3379 = vmatmul.bf16.gmra.mxu0 %v1491
        %v3380 = vpop.f32.mrf.mxu0
        %v3381 = vadd.f32 0.0, %v3380
        %v3382 = vpop.f32.mrf.mxu0
        %v3383 = vadd.f32 0.0, %v3382
        %3384 = vmatmul.bf16.gmra.mxu0 %v1494
        %v3385 = vpop.f32.mrf.mxu0
        %v3386 = vadd.f32 0.0, %v3385
        %v3387 = vpop.f32.mrf.mxu0
        %v3388 = vadd.f32 0.0, %v3387
        %3389 = vmatmul.bf16.gmra.mxu0 %v1497
        %v3390 = vpop.f32.mrf.mxu0
        %v3391 = vadd.f32 0.0, %v3390
        %v3392 = vpop.f32.mrf.mxu0
        %v3393 = vadd.f32 0.0, %v3392
        %3394 = vmatmul.bf16.gmra.mxu0 %v1500
        %v3395 = vpop.f32.mrf.mxu0
        %v3396 = vadd.f32 0.0, %v3395
        %v3397 = vpop.f32.mrf.mxu0
        %v3398 = vadd.f32 0.0, %v3397
        %3399 = vmatmul.bf16.gmra.mxu0 %v1503
        %v3400 = vpop.f32.mrf.mxu0
        %v3401 = vadd.f32 0.0, %v3400
        %v3402 = vpop.f32.mrf.mxu0
        %v3403 = vadd.f32 0.0, %v3402
        %3404 = vmatmul.bf16.gmra.mxu0 %v1506
        %v3405 = vpop.f32.mrf.mxu0
        %v3406 = vadd.f32 0.0, %v3405
        %v3407 = vpop.f32.mrf.mxu0
        %v3408 = vadd.f32 0.0, %v3407
        %3409 = vmatmul.bf16.gmra.mxu0 %v1509
        %v3410 = vpop.f32.mrf.mxu0
        %v3411 = vadd.f32 0.0, %v3410
        %v3412 = vpop.f32.mrf.mxu0
        %v3413 = vadd.f32 0.0, %v3412
        %3414 = vmatmul.bf16.gmra.mxu0 %v1512
        %v3415 = vpop.f32.mrf.mxu0
        %v3416 = vadd.f32 0.0, %v3415
        %v3417 = vpop.f32.mrf.mxu0
        %v3418 = vadd.f32 0.0, %v3417
        %3419 = vmatmul.bf16.gmra.mxu0 %v1515
        %v3420 = vpop.f32.mrf.mxu0
        %v3421 = vadd.f32 0.0, %v3420
        %v3422 = vpop.f32.mrf.mxu0
        %v3423 = vadd.f32 0.0, %v3422
        %3424 = vmatmul.bf16.gmra.mxu0 %v1518
        %v3425 = vpop.f32.mrf.mxu0
        %v3426 = vadd.f32 0.0, %v3425
        %v3427 = vpop.f32.mrf.mxu0
        %v3428 = vadd.f32 0.0, %v3427
        %3429 = vmatmul.bf16.gmra.mxu0 %v1521
        %v3430 = vpop.f32.mrf.mxu0
        %v3431 = vadd.f32 0.0, %v3430
        %v3432 = vpop.f32.mrf.mxu0
        %v3433 = vadd.f32 0.0, %v3432
        %3434 = vmatmul.bf16.gmra.mxu0 %v1524
        %v3435 = vpop.f32.mrf.mxu0
        %v3436 = vadd.f32 0.0, %v3435
        %v3437 = vpop.f32.mrf.mxu0
        %v3438 = vadd.f32 0.0, %v3437
        %3439 = vmatmul.bf16.gmra.mxu0 %v1527
        %v3440 = vpop.f32.mrf.mxu0
        %v3441 = vadd.f32 0.0, %v3440
        %v3442 = vpop.f32.mrf.mxu0
        %v3443 = vadd.f32 0.0, %v3442
        %3444 = vmatmul.bf16.gmra.mxu0 %v1530
        %v3445 = vpop.f32.mrf.mxu0
        %v3446 = vadd.f32 0.0, %v3445
        %v3447 = vpop.f32.mrf.mxu0
        %v3448 = vadd.f32 0.0, %v3447
        %3449 = vmatmul.bf16.gmra.mxu0 %v1533
        %v3450 = vpop.f32.mrf.mxu0
        %v3451 = vadd.f32 0.0, %v3450
        %v3452 = vpop.f32.mrf.mxu0
        %v3453 = vadd.f32 0.0, %v3452
        %3454 = vmatmul.bf16.gmra.mxu0 %v1536
        %v3455 = vpop.f32.mrf.mxu0
        %v3456 = vadd.f32 0.0, %v3455
        %v3457 = vpop.f32.mrf.mxu0
        %v3458 = vadd.f32 0.0, %v3457
        %3459 = vmatmul.bf16.gmra.mxu0 %v1539
        %v3460 = vpop.f32.mrf.mxu0
        %v3461 = vadd.f32 0.0, %v3460
        %v3462 = vpop.f32.mrf.mxu0
        %v3463 = vadd.f32 0.0, %v3462
        %3464 = vmatmul.bf16.gmra.mxu0 %v1542
        %v3465 = vpop.f32.mrf.mxu0
        %v3466 = vadd.f32 0.0, %v3465
        %v3467 = vpop.f32.mrf.mxu0
        %v3468 = vadd.f32 0.0, %v3467
        %3469 = vmatmul.bf16.gmra.mxu0 %v1545
        %v3470 = vpop.f32.mrf.mxu0
        %v3471 = vadd.f32 0.0, %v3470
        %v3472 = vpop.f32.mrf.mxu0
        %v3473 = vadd.f32 0.0, %v3472
        %3474 = vmatmul.bf16.gmra.mxu0 %v1548
        %v3475 = vpop.f32.mrf.mxu0
        %v3476 = vadd.f32 0.0, %v3475
        %v3477 = vpop.f32.mrf.mxu0
        %v3478 = vadd.f32 0.0, %v3477
        %3479 = vmatmul.bf16.gmra.mxu0 %v1551
        %v3480 = vpop.f32.mrf.mxu0
        %v3481 = vadd.f32 0.0, %v3480
        %v3482 = vpop.f32.mrf.mxu0
        %v3483 = vadd.f32 0.0, %v3482
        %3484 = vmatmul.bf16.gmra.mxu0 %v1554
        %v3485 = vpop.f32.mrf.mxu0
        %v3486 = vadd.f32 0.0, %v3485
        %v3487 = vpop.f32.mrf.mxu0
        %v3488 = vadd.f32 0.0, %v3487
        %3489 = vmatmul.bf16.gmra.mxu0 %v1557
        %v3490 = vpop.f32.mrf.mxu0
        %v3491 = vadd.f32 0.0, %v3490
        %v3492 = vpop.f32.mrf.mxu0
        %v3493 = vadd.f32 0.0, %v3492
        %3494 = vmatmul.bf16.gmra.mxu0 %v1560
        %v3495 = vpop.f32.mrf.mxu0
        %v3496 = vadd.f32 0.0, %v3495
        %v3497 = vpop.f32.mrf.mxu0
        %v3498 = vadd.f32 0.0, %v3497
        %3499 = vmatmul.bf16.gmra.mxu0 %v1563
        %v3500 = vpop.f32.mrf.mxu0
        %v3501 = vadd.f32 0.0, %v3500
        %v3502 = vpop.f32.mrf.mxu0
        %v3503 = vadd.f32 0.0, %v3502
        %3504 = vmatmul.bf16.gmra.mxu0 %v1566
        %v3505 = vpop.f32.mrf.mxu0
        %v3506 = vadd.f32 0.0, %v3505
        %v3507 = vpop.f32.mrf.mxu0
        %v3508 = vadd.f32 0.0, %v3507
        %3509 = vmatmul.bf16.gmra.mxu0 %v1569
        %v3510 = vpop.f32.mrf.mxu0
        %v3511 = vadd.f32 0.0, %v3510
        %v3512 = vpop.f32.mrf.mxu0
        %v3513 = vadd.f32 0.0, %v3512
        %3514 = vmatmul.bf16.gmra.mxu0 %v1572
        %v3515 = vpop.f32.mrf.mxu0
        %v3516 = vadd.f32 0.0, %v3515
        %v3517 = vpop.f32.mrf.mxu0
        %v3518 = vadd.f32 0.0, %v3517
        %3519 = vmatmul.bf16.gmra.mxu0 %v1575
        %v3520 = vpop.f32.mrf.mxu0
        %v3521 = vadd.f32 0.0, %v3520
        %v3522 = vpop.f32.mrf.mxu0
        %v3523 = vadd.f32 0.0, %v3522
        %3524 = vmatmul.bf16.gmra.mxu0 %v1578
        %v3525 = vpop.f32.mrf.mxu0
        %v3526 = vadd.f32 0.0, %v3525
        %v3527 = vpop.f32.mrf.mxu0
        %v3528 = vadd.f32 0.0, %v3527
        %3529 = vmatmul.bf16.gmra.mxu0 %v1581
        %v3530 = vpop.f32.mrf.mxu0
        %v3531 = vadd.f32 0.0, %v3530
        %v3532 = vpop.f32.mrf.mxu0
        %v3533 = vadd.f32 0.0, %v3532
        %3534 = vmatmul.bf16.gmra.mxu0 %v1584
        %v3535 = vpop.f32.mrf.mxu0
        %v3536 = vadd.f32 0.0, %v3535
        %v3537 = vpop.f32.mrf.mxu0
        %v3538 = vadd.f32 0.0, %v3537
        %3539 = vmatmul.bf16.gmra.mxu0 %v1587
        %v3540 = vpop.f32.mrf.mxu0
        %v3541 = vadd.f32 0.0, %v3540
        %v3542 = vpop.f32.mrf.mxu0
        %v3543 = vadd.f32 0.0, %v3542
        %3544 = vmatmul.bf16.gmra.mxu0 %v1590
        %v3545 = vpop.f32.mrf.mxu0
        %v3546 = vadd.f32 0.0, %v3545
        %v3547 = vpop.f32.mrf.mxu0
        %v3548 = vadd.f32 0.0, %v3547
        %3549 = vmatmul.bf16.gmra.mxu0 %v1593
        %v3550 = vpop.f32.mrf.mxu0
        %v3551 = vadd.f32 0.0, %v3550
        %v3552 = vpop.f32.mrf.mxu0
        %v3553 = vadd.f32 0.0, %v3552
        %3554 = vmatmul.bf16.gmra.mxu0 %v1596
        %v3555 = vpop.f32.mrf.mxu0
        %v3556 = vadd.f32 0.0, %v3555
        %v3557 = vpop.f32.mrf.mxu0
        %v3558 = vadd.f32 0.0, %v3557
        %3559 = vmatmul.bf16.gmra.mxu0 %v1599
        %v3560 = vpop.f32.mrf.mxu0
        %v3561 = vadd.f32 0.0, %v3560
        %v3562 = vpop.f32.mrf.mxu0
        %v3563 = vadd.f32 0.0, %v3562
        %3564 = vmatmul.bf16.gmra.mxu0 %v1602
        %v3565 = vpop.f32.mrf.mxu0
        %v3566 = vadd.f32 0.0, %v3565
        %v3567 = vpop.f32.mrf.mxu0
        %v3568 = vadd.f32 0.0, %v3567
        %3569 = vmatmul.bf16.gmra.mxu0 %v1605
        %v3570 = vpop.f32.mrf.mxu0
        %v3571 = vadd.f32 0.0, %v3570
        %v3572 = vpop.f32.mrf.mxu0
        %v3573 = vadd.f32 0.0, %v3572
        %3574 = vmatmul.bf16.gmra.mxu0 %v1608
        %v3575 = vpop.f32.mrf.mxu0
        %v3576 = vadd.f32 0.0, %v3575
        %v3577 = vpop.f32.mrf.mxu0
        %v3578 = vadd.f32 0.0, %v3577
        %3579 = vmatmul.bf16.gmra.mxu0 %v1611
        %v3580 = vpop.f32.mrf.mxu0
        %v3581 = vadd.f32 0.0, %v3580
        %v3582 = vpop.f32.mrf.mxu0
        %v3583 = vadd.f32 0.0, %v3582
        %3584 = vmatmul.bf16.gmra.mxu0 %v1614
        %v3585 = vpop.f32.mrf.mxu0
        %v3586 = vadd.f32 0.0, %v3585
        %v3587 = vpop.f32.mrf.mxu0
        %v3588 = vadd.f32 0.0, %v3587
        %3589 = vdwg.mxu0
        %3590 = vmatpush.bf16.msra.mxu0 0
        %3591 = vmatpush.bf16.msra.mxu0 0
        %3592 = vmatpush.bf16.msra.mxu0 0
        %3593 = vmatpush.bf16.msra.mxu0 0
        %3594 = vmatpush.bf16.msra.mxu0 0
        %3595 = vmatpush.bf16.msra.mxu0 0
        %3596 = vmatpush.bf16.msra.mxu0 0
        %3597 = vmatpush.bf16.msra.mxu0 %v1414
        %3598 = vmatmul.bf16.gmra.mxu0 %v1425
        %v3599 = vpop.f32.mrf.mxu0
        %v3600 = vadd.f32 0.0, %v3599
        %v3601 = vpop.f32.mrf.mxu0
        %v3602 = vadd.f32 0.0, %v3601
        %3603 = vmatmul.bf16.gmra.mxu0 %v1428
        %v3604 = vpop.f32.mrf.mxu0
        %v3605 = vadd.f32 0.0, %v3604
        %v3606 = vpop.f32.mrf.mxu0
        %v3607 = vadd.f32 0.0, %v3606
        %3608 = vmatmul.bf16.gmra.mxu0 %v1431
        %v3609 = vpop.f32.mrf.mxu0
        %v3610 = vadd.f32 0.0, %v3609
        %v3611 = vpop.f32.mrf.mxu0
        %v3612 = vadd.f32 0.0, %v3611
        %3613 = vmatmul.bf16.gmra.mxu0 %v1434
        %v3614 = vpop.f32.mrf.mxu0
        %v3615 = vadd.f32 0.0, %v3614
        %v3616 = vpop.f32.mrf.mxu0
        %v3617 = vadd.f32 0.0, %v3616
        %3618 = vmatmul.bf16.gmra.mxu0 %v1437
        %v3619 = vpop.f32.mrf.mxu0
        %v3620 = vadd.f32 0.0, %v3619
        %v3621 = vpop.f32.mrf.mxu0
        %v3622 = vadd.f32 0.0, %v3621
        %3623 = vmatmul.bf16.gmra.mxu0 %v1440
        %v3624 = vpop.f32.mrf.mxu0
        %v3625 = vadd.f32 0.0, %v3624
        %v3626 = vpop.f32.mrf.mxu0
        %v3627 = vadd.f32 0.0, %v3626
        %3628 = vmatmul.bf16.gmra.mxu0 %v1443
        %v3629 = vpop.f32.mrf.mxu0
        %v3630 = vadd.f32 0.0, %v3629
        %v3631 = vpop.f32.mrf.mxu0
        %v3632 = vadd.f32 0.0, %v3631
        %3633 = vmatmul.bf16.gmra.mxu0 %v1446
        %v3634 = vpop.f32.mrf.mxu0
        %v3635 = vadd.f32 0.0, %v3634
        %v3636 = vpop.f32.mrf.mxu0
        %v3637 = vadd.f32 0.0, %v3636
        %3638 = vmatmul.bf16.gmra.mxu0 %v1449
        %v3639 = vpop.f32.mrf.mxu0
        %v3640 = vadd.f32 0.0, %v3639
        %v3641 = vpop.f32.mrf.mxu0
        %v3642 = vadd.f32 0.0, %v3641
        %3643 = vmatmul.bf16.gmra.mxu0 %v1452
        %v3644 = vpop.f32.mrf.mxu0
        %v3645 = vadd.f32 0.0, %v3644
        %v3646 = vpop.f32.mrf.mxu0
        %v3647 = vadd.f32 0.0, %v3646
        %3648 = vmatmul.bf16.gmra.mxu0 %v1455
        %v3649 = vpop.f32.mrf.mxu0
        %v3650 = vadd.f32 0.0, %v3649
        %v3651 = vpop.f32.mrf.mxu0
        %v3652 = vadd.f32 0.0, %v3651
        %3653 = vmatmul.bf16.gmra.mxu0 %v1458
        %v3654 = vpop.f32.mrf.mxu0
        %v3655 = vadd.f32 0.0, %v3654
        %v3656 = vpop.f32.mrf.mxu0
        %v3657 = vadd.f32 0.0, %v3656
        %3658 = vmatmul.bf16.gmra.mxu0 %v1461
        %v3659 = vpop.f32.mrf.mxu0
        %v3660 = vadd.f32 0.0, %v3659
        %v3661 = vpop.f32.mrf.mxu0
        %v3662 = vadd.f32 0.0, %v3661
        %3663 = vmatmul.bf16.gmra.mxu0 %v1464
        %v3664 = vpop.f32.mrf.mxu0
        %v3665 = vadd.f32 0.0, %v3664
        %v3666 = vpop.f32.mrf.mxu0
        %v3667 = vadd.f32 0.0, %v3666
        %3668 = vmatmul.bf16.gmra.mxu0 %v1467
        %v3669 = vpop.f32.mrf.mxu0
        %v3670 = vadd.f32 0.0, %v3669
        %v3671 = vpop.f32.mrf.mxu0
        %v3672 = vadd.f32 0.0, %v3671
        %3673 = vmatmul.bf16.gmra.mxu0 %v1470
        %v3674 = vpop.f32.mrf.mxu0
        %v3675 = vadd.f32 0.0, %v3674
        %v3676 = vpop.f32.mrf.mxu0
        %v3677 = vadd.f32 0.0, %v3676
        %3678 = vmatmul.bf16.gmra.mxu0 %v1473
        %v3679 = vpop.f32.mrf.mxu0
        %v3680 = vadd.f32 0.0, %v3679
        %v3681 = vpop.f32.mrf.mxu0
        %v3682 = vadd.f32 0.0, %v3681
        %3683 = vmatmul.bf16.gmra.mxu0 %v1476
        %v3684 = vpop.f32.mrf.mxu0
        %v3685 = vadd.f32 0.0, %v3684
        %v3686 = vpop.f32.mrf.mxu0
        %v3687 = vadd.f32 0.0, %v3686
        %3688 = vmatmul.bf16.gmra.mxu0 %v1479
        %v3689 = vpop.f32.mrf.mxu0
        %v3690 = vadd.f32 0.0, %v3689
        %v3691 = vpop.f32.mrf.mxu0
        %v3692 = vadd.f32 0.0, %v3691
        %3693 = vmatmul.bf16.gmra.mxu0 %v1482
        %v3694 = vpop.f32.mrf.mxu0
        %v3695 = vadd.f32 0.0, %v3694
        %v3696 = vpop.f32.mrf.mxu0
        %v3697 = vadd.f32 0.0, %v3696
        %3698 = vmatmul.bf16.gmra.mxu0 %v1485
        %v3699 = vpop.f32.mrf.mxu0
        %v3700 = vadd.f32 0.0, %v3699
        %v3701 = vpop.f32.mrf.mxu0
        %v3702 = vadd.f32 0.0, %v3701
        %3703 = vmatmul.bf16.gmra.mxu0 %v1488
        %v3704 = vpop.f32.mrf.mxu0
        %v3705 = vadd.f32 0.0, %v3704
        %v3706 = vpop.f32.mrf.mxu0
        %v3707 = vadd.f32 0.0, %v3706
        %3708 = vmatmul.bf16.gmra.mxu0 %v1491
        %v3709 = vpop.f32.mrf.mxu0
        %v3710 = vadd.f32 0.0, %v3709
        %v3711 = vpop.f32.mrf.mxu0
        %v3712 = vadd.f32 0.0, %v3711
        %3713 = vmatmul.bf16.gmra.mxu0 %v1494
        %v3714 = vpop.f32.mrf.mxu0
        %v3715 = vadd.f32 0.0, %v3714
        %v3716 = vpop.f32.mrf.mxu0
        %v3717 = vadd.f32 0.0, %v3716
        %3718 = vmatmul.bf16.gmra.mxu0 %v1497
        %v3719 = vpop.f32.mrf.mxu0
        %v3720 = vadd.f32 0.0, %v3719
        %v3721 = vpop.f32.mrf.mxu0
        %v3722 = vadd.f32 0.0, %v3721
        %3723 = vmatmul.bf16.gmra.mxu0 %v1500
        %v3724 = vpop.f32.mrf.mxu0
        %v3725 = vadd.f32 0.0, %v3724
        %v3726 = vpop.f32.mrf.mxu0
        %v3727 = vadd.f32 0.0, %v3726
        %3728 = vmatmul.bf16.gmra.mxu0 %v1503
        %v3729 = vpop.f32.mrf.mxu0
        %v3730 = vadd.f32 0.0, %v3729
        %v3731 = vpop.f32.mrf.mxu0
        %v3732 = vadd.f32 0.0, %v3731
        %3733 = vmatmul.bf16.gmra.mxu0 %v1506
        %v3734 = vpop.f32.mrf.mxu0
        %v3735 = vadd.f32 0.0, %v3734
        %v3736 = vpop.f32.mrf.mxu0
        %v3737 = vadd.f32 0.0, %v3736
        %3738 = vmatmul.bf16.gmra.mxu0 %v1509
        %v3739 = vpop.f32.mrf.mxu0
        %v3740 = vadd.f32 0.0, %v3739
        %v3741 = vpop.f32.mrf.mxu0
        %v3742 = vadd.f32 0.0, %v3741
        %3743 = vmatmul.bf16.gmra.mxu0 %v1512
        %v3744 = vpop.f32.mrf.mxu0
        %v3745 = vadd.f32 0.0, %v3744
        %v3746 = vpop.f32.mrf.mxu0
        %v3747 = vadd.f32 0.0, %v3746
        %3748 = vmatmul.bf16.gmra.mxu0 %v1515
        %v3749 = vpop.f32.mrf.mxu0
        %v3750 = vadd.f32 0.0, %v3749
        %v3751 = vpop.f32.mrf.mxu0
        %v3752 = vadd.f32 0.0, %v3751
        %3753 = vmatmul.bf16.gmra.mxu0 %v1518
        %v3754 = vpop.f32.mrf.mxu0
        %v3755 = vadd.f32 0.0, %v3754
        %v3756 = vpop.f32.mrf.mxu0
        %v3757 = vadd.f32 0.0, %v3756
        %3758 = vmatmul.bf16.gmra.mxu0 %v1521
        %v3759 = vpop.f32.mrf.mxu0
        %v3760 = vadd.f32 0.0, %v3759
        %v3761 = vpop.f32.mrf.mxu0
        %v3762 = vadd.f32 0.0, %v3761
        %3763 = vmatmul.bf16.gmra.mxu0 %v1524
        %v3764 = vpop.f32.mrf.mxu0
        %v3765 = vadd.f32 0.0, %v3764
        %v3766 = vpop.f32.mrf.mxu0
        %v3767 = vadd.f32 0.0, %v3766
        %3768 = vmatmul.bf16.gmra.mxu0 %v1527
        %v3769 = vpop.f32.mrf.mxu0
        %v3770 = vadd.f32 0.0, %v3769
        %v3771 = vpop.f32.mrf.mxu0
        %v3772 = vadd.f32 0.0, %v3771
        %3773 = vmatmul.bf16.gmra.mxu0 %v1530
        %v3774 = vpop.f32.mrf.mxu0
        %v3775 = vadd.f32 0.0, %v3774
        %v3776 = vpop.f32.mrf.mxu0
        %v3777 = vadd.f32 0.0, %v3776
        %3778 = vmatmul.bf16.gmra.mxu0 %v1533
        %v3779 = vpop.f32.mrf.mxu0
        %v3780 = vadd.f32 0.0, %v3779
        %v3781 = vpop.f32.mrf.mxu0
        %v3782 = vadd.f32 0.0, %v3781
        %3783 = vmatmul.bf16.gmra.mxu0 %v1536
        %v3784 = vpop.f32.mrf.mxu0
        %v3785 = vadd.f32 0.0, %v3784
        %v3786 = vpop.f32.mrf.mxu0
        %v3787 = vadd.f32 0.0, %v3786
        %3788 = vmatmul.bf16.gmra.mxu0 %v1539
        %v3789 = vpop.f32.mrf.mxu0
        %v3790 = vadd.f32 0.0, %v3789
        %v3791 = vpop.f32.mrf.mxu0
        %v3792 = vadd.f32 0.0, %v3791
        %3793 = vmatmul.bf16.gmra.mxu0 %v1542
        %v3794 = vpop.f32.mrf.mxu0
        %v3795 = vadd.f32 0.0, %v3794
        %v3796 = vpop.f32.mrf.mxu0
        %v3797 = vadd.f32 0.0, %v3796
        %3798 = vmatmul.bf16.gmra.mxu0 %v1545
        %v3799 = vpop.f32.mrf.mxu0
        %v3800 = vadd.f32 0.0, %v3799
        %v3801 = vpop.f32.mrf.mxu0
        %v3802 = vadd.f32 0.0, %v3801
        %3803 = vmatmul.bf16.gmra.mxu0 %v1548
        %v3804 = vpop.f32.mrf.mxu0
        %v3805 = vadd.f32 0.0, %v3804
        %v3806 = vpop.f32.mrf.mxu0
        %v3807 = vadd.f32 0.0, %v3806
        %3808 = vmatmul.bf16.gmra.mxu0 %v1551
        %v3809 = vpop.f32.mrf.mxu0
        %v3810 = vadd.f32 0.0, %v3809
        %v3811 = vpop.f32.mrf.mxu0
        %v3812 = vadd.f32 0.0, %v3811
        %3813 = vmatmul.bf16.gmra.mxu0 %v1554
        %v3814 = vpop.f32.mrf.mxu0
        %v3815 = vadd.f32 0.0, %v3814
        %v3816 = vpop.f32.mrf.mxu0
        %v3817 = vadd.f32 0.0, %v3816
        %3818 = vmatmul.bf16.gmra.mxu0 %v1557
        %v3819 = vpop.f32.mrf.mxu0
        %v3820 = vadd.f32 0.0, %v3819
        %v3821 = vpop.f32.mrf.mxu0
        %v3822 = vadd.f32 0.0, %v3821
        %3823 = vmatmul.bf16.gmra.mxu0 %v1560
        %v3824 = vpop.f32.mrf.mxu0
        %v3825 = vadd.f32 0.0, %v3824
        %v3826 = vpop.f32.mrf.mxu0
        %v3827 = vadd.f32 0.0, %v3826
        %3828 = vmatmul.bf16.gmra.mxu0 %v1563
        %v3829 = vpop.f32.mrf.mxu0
        %v3830 = vadd.f32 0.0, %v3829
        %v3831 = vpop.f32.mrf.mxu0
        %v3832 = vadd.f32 0.0, %v3831
        %3833 = vmatmul.bf16.gmra.mxu0 %v1566
        %v3834 = vpop.f32.mrf.mxu0
        %v3835 = vadd.f32 0.0, %v3834
        %v3836 = vpop.f32.mrf.mxu0
        %v3837 = vadd.f32 0.0, %v3836
        %3838 = vmatmul.bf16.gmra.mxu0 %v1569
        %v3839 = vpop.f32.mrf.mxu0
        %v3840 = vadd.f32 0.0, %v3839
        %v3841 = vpop.f32.mrf.mxu0
        %v3842 = vadd.f32 0.0, %v3841
        %3843 = vmatmul.bf16.gmra.mxu0 %v1572
        %v3844 = vpop.f32.mrf.mxu0
        %v3845 = vadd.f32 0.0, %v3844
        %v3846 = vpop.f32.mrf.mxu0
        %v3847 = vadd.f32 0.0, %v3846
        %3848 = vmatmul.bf16.gmra.mxu0 %v1575
        %v3849 = vpop.f32.mrf.mxu0
        %v3850 = vadd.f32 0.0, %v3849
        %v3851 = vpop.f32.mrf.mxu0
        %v3852 = vadd.f32 0.0, %v3851
        %3853 = vmatmul.bf16.gmra.mxu0 %v1578
        %v3854 = vpop.f32.mrf.mxu0
        %v3855 = vadd.f32 0.0, %v3854
        %v3856 = vpop.f32.mrf.mxu0
        %v3857 = vadd.f32 0.0, %v3856
        %3858 = vmatmul.bf16.gmra.mxu0 %v1581
        %v3859 = vpop.f32.mrf.mxu0
        %v3860 = vadd.f32 0.0, %v3859
        %v3861 = vpop.f32.mrf.mxu0
        %v3862 = vadd.f32 0.0, %v3861
        %3863 = vmatmul.bf16.gmra.mxu0 %v1584
        %v3864 = vpop.f32.mrf.mxu0
        %v3865 = vadd.f32 0.0, %v3864
        %v3866 = vpop.f32.mrf.mxu0
        %v3867 = vadd.f32 0.0, %v3866
        %3868 = vmatmul.bf16.gmra.mxu0 %v1587
        %v3869 = vpop.f32.mrf.mxu0
        %v3870 = vadd.f32 0.0, %v3869
        %v3871 = vpop.f32.mrf.mxu0
        %v3872 = vadd.f32 0.0, %v3871
        %3873 = vmatmul.bf16.gmra.mxu0 %v1590
        %v3874 = vpop.f32.mrf.mxu0
        %v3875 = vadd.f32 0.0, %v3874
        %v3876 = vpop.f32.mrf.mxu0
        %v3877 = vadd.f32 0.0, %v3876
        %3878 = vmatmul.bf16.gmra.mxu0 %v1593
        %v3879 = vpop.f32.mrf.mxu0
        %v3880 = vadd.f32 0.0, %v3879
        %v3881 = vpop.f32.mrf.mxu0
        %v3882 = vadd.f32 0.0, %v3881
        %3883 = vmatmul.bf16.gmra.mxu0 %v1596
        %v3884 = vpop.f32.mrf.mxu0
        %v3885 = vadd.f32 0.0, %v3884
        %v3886 = vpop.f32.mrf.mxu0
        %v3887 = vadd.f32 0.0, %v3886
        %3888 = vmatmul.bf16.gmra.mxu0 %v1599
        %v3889 = vpop.f32.mrf.mxu0
        %v3890 = vadd.f32 0.0, %v3889
        %v3891 = vpop.f32.mrf.mxu0
        %v3892 = vadd.f32 0.0, %v3891
        %3893 = vmatmul.bf16.gmra.mxu0 %v1602
        %v3894 = vpop.f32.mrf.mxu0
        %v3895 = vadd.f32 0.0, %v3894
        %v3896 = vpop.f32.mrf.mxu0
        %v3897 = vadd.f32 0.0, %v3896
        %3898 = vmatmul.bf16.gmra.mxu0 %v1605
        %v3899 = vpop.f32.mrf.mxu0
        %v3900 = vadd.f32 0.0, %v3899
        %v3901 = vpop.f32.mrf.mxu0
        %v3902 = vadd.f32 0.0, %v3901
        %3903 = vmatmul.bf16.gmra.mxu0 %v1608
        %v3904 = vpop.f32.mrf.mxu0
        %v3905 = vadd.f32 0.0, %v3904
        %v3906 = vpop.f32.mrf.mxu0
        %v3907 = vadd.f32 0.0, %v3906
        %3908 = vmatmul.bf16.gmra.mxu0 %v1611
        %v3909 = vpop.f32.mrf.mxu0
        %v3910 = vadd.f32 0.0, %v3909
        %v3911 = vpop.f32.mrf.mxu0
        %v3912 = vadd.f32 0.0, %v3911
        %3913 = vmatmul.bf16.gmra.mxu0 %v1614
        %v3914 = vpop.f32.mrf.mxu0
        %v3915 = vadd.f32 0.0, %v3914
        %v3916 = vpop.f32.mrf.mxu0
        %v3917 = vadd.f32 0.0, %v3916
        %3918 = vdwg.mxu0
        %3919 = vmatpush.bf16.msra.mxu0 0
        %3920 = vmatpush.bf16.msra.mxu0 0
        %3921 = vmatpush.bf16.msra.mxu0 0
        %3922 = vmatpush.bf16.msra.mxu0 0
        %3923 = vmatpush.bf16.msra.mxu0 0
        %3924 = vmatpush.bf16.msra.mxu0 0
        %3925 = vmatpush.bf16.msra.mxu0 0
        %3926 = vmatpush.bf16.msra.mxu0 %v1415
        %3927 = vmatmul.bf16.gmra.mxu0 %v1425
        %v3928 = vpop.f32.mrf.mxu0
        %v3929 = vadd.f32 0.0, %v3928
        %v3930 = vpop.f32.mrf.mxu0
        %v3931 = vadd.f32 0.0, %v3930
        %3932 = vmatmul.bf16.gmra.mxu0 %v1428
        %v3933 = vpop.f32.mrf.mxu0
        %v3934 = vadd.f32 0.0, %v3933
        %v3935 = vpop.f32.mrf.mxu0
        %v3936 = vadd.f32 0.0, %v3935
        %3937 = vmatmul.bf16.gmra.mxu0 %v1431
        %v3938 = vpop.f32.mrf.mxu0
        %v3939 = vadd.f32 0.0, %v3938
        %v3940 = vpop.f32.mrf.mxu0
        %v3941 = vadd.f32 0.0, %v3940
        %3942 = vmatmul.bf16.gmra.mxu0 %v1434
        %v3943 = vpop.f32.mrf.mxu0
        %v3944 = vadd.f32 0.0, %v3943
        %v3945 = vpop.f32.mrf.mxu0
        %v3946 = vadd.f32 0.0, %v3945
        %3947 = vmatmul.bf16.gmra.mxu0 %v1437
        %v3948 = vpop.f32.mrf.mxu0
        %v3949 = vadd.f32 0.0, %v3948
        %v3950 = vpop.f32.mrf.mxu0
        %v3951 = vadd.f32 0.0, %v3950
        %3952 = vmatmul.bf16.gmra.mxu0 %v1440
        %v3953 = vpop.f32.mrf.mxu0
        %v3954 = vadd.f32 0.0, %v3953
        %v3955 = vpop.f32.mrf.mxu0
        %v3956 = vadd.f32 0.0, %v3955
        %3957 = vmatmul.bf16.gmra.mxu0 %v1443
        %v3958 = vpop.f32.mrf.mxu0
        %v3959 = vadd.f32 0.0, %v3958
        %v3960 = vpop.f32.mrf.mxu0
        %v3961 = vadd.f32 0.0, %v3960
        %3962 = vmatmul.bf16.gmra.mxu0 %v1446
        %v3963 = vpop.f32.mrf.mxu0
        %v3964 = vadd.f32 0.0, %v3963
        %v3965 = vpop.f32.mrf.mxu0
        %v3966 = vadd.f32 0.0, %v3965
        %3967 = vmatmul.bf16.gmra.mxu0 %v1449
        %v3968 = vpop.f32.mrf.mxu0
        %v3969 = vadd.f32 0.0, %v3968
        %v3970 = vpop.f32.mrf.mxu0
        %v3971 = vadd.f32 0.0, %v3970
        %3972 = vmatmul.bf16.gmra.mxu0 %v1452
        %v3973 = vpop.f32.mrf.mxu0
        %v3974 = vadd.f32 0.0, %v3973
        %v3975 = vpop.f32.mrf.mxu0
        %v3976 = vadd.f32 0.0, %v3975
        %3977 = vmatmul.bf16.gmra.mxu0 %v1455
        %v3978 = vpop.f32.mrf.mxu0
        %v3979 = vadd.f32 0.0, %v3978
        %v3980 = vpop.f32.mrf.mxu0
        %v3981 = vadd.f32 0.0, %v3980
        %3982 = vmatmul.bf16.gmra.mxu0 %v1458
        %v3983 = vpop.f32.mrf.mxu0
        %v3984 = vadd.f32 0.0, %v3983
        %v3985 = vpop.f32.mrf.mxu0
        %v3986 = vadd.f32 0.0, %v3985
        %3987 = vmatmul.bf16.gmra.mxu0 %v1461
        %v3988 = vpop.f32.mrf.mxu0
        %v3989 = vadd.f32 0.0, %v3988
        %v3990 = vpop.f32.mrf.mxu0
        %v3991 = vadd.f32 0.0, %v3990
        %3992 = vmatmul.bf16.gmra.mxu0 %v1464
        %v3993 = vpop.f32.mrf.mxu0
        %v3994 = vadd.f32 0.0, %v3993
        %v3995 = vpop.f32.mrf.mxu0
        %v3996 = vadd.f32 0.0, %v3995
        %3997 = vmatmul.bf16.gmra.mxu0 %v1467
        %v3998 = vpop.f32.mrf.mxu0
        %v3999 = vadd.f32 0.0, %v3998
        %v4000 = vpop.f32.mrf.mxu0
        %v4001 = vadd.f32 0.0, %v4000
        %4002 = vmatmul.bf16.gmra.mxu0 %v1470
        %v4003 = vpop.f32.mrf.mxu0
        %v4004 = vadd.f32 0.0, %v4003
        %v4005 = vpop.f32.mrf.mxu0
        %v4006 = vadd.f32 0.0, %v4005
        %4007 = vmatmul.bf16.gmra.mxu0 %v1473
        %v4008 = vpop.f32.mrf.mxu0
        %v4009 = vadd.f32 0.0, %v4008
        %v4010 = vpop.f32.mrf.mxu0
        %v4011 = vadd.f32 0.0, %v4010
        %4012 = vmatmul.bf16.gmra.mxu0 %v1476
        %v4013 = vpop.f32.mrf.mxu0
        %v4014 = vadd.f32 0.0, %v4013
        %v4015 = vpop.f32.mrf.mxu0
        %v4016 = vadd.f32 0.0, %v4015
        %4017 = vmatmul.bf16.gmra.mxu0 %v1479
        %v4018 = vpop.f32.mrf.mxu0
        %v4019 = vadd.f32 0.0, %v4018
        %v4020 = vpop.f32.mrf.mxu0
        %v4021 = vadd.f32 0.0, %v4020
        %4022 = vmatmul.bf16.gmra.mxu0 %v1482
        %v4023 = vpop.f32.mrf.mxu0
        %v4024 = vadd.f32 0.0, %v4023
        %v4025 = vpop.f32.mrf.mxu0
        %v4026 = vadd.f32 0.0, %v4025
        %4027 = vmatmul.bf16.gmra.mxu0 %v1485
        %v4028 = vpop.f32.mrf.mxu0
        %v4029 = vadd.f32 0.0, %v4028
        %v4030 = vpop.f32.mrf.mxu0
        %v4031 = vadd.f32 0.0, %v4030
        %4032 = vmatmul.bf16.gmra.mxu0 %v1488
        %v4033 = vpop.f32.mrf.mxu0
        %v4034 = vadd.f32 0.0, %v4033
        %v4035 = vpop.f32.mrf.mxu0
        %v4036 = vadd.f32 0.0, %v4035
        %4037 = vmatmul.bf16.gmra.mxu0 %v1491
        %v4038 = vpop.f32.mrf.mxu0
        %v4039 = vadd.f32 0.0, %v4038
        %v4040 = vpop.f32.mrf.mxu0
        %v4041 = vadd.f32 0.0, %v4040
        %4042 = vmatmul.bf16.gmra.mxu0 %v1494
        %v4043 = vpop.f32.mrf.mxu0
        %v4044 = vadd.f32 0.0, %v4043
        %v4045 = vpop.f32.mrf.mxu0
        %v4046 = vadd.f32 0.0, %v4045
        %4047 = vmatmul.bf16.gmra.mxu0 %v1497
        %v4048 = vpop.f32.mrf.mxu0
        %v4049 = vadd.f32 0.0, %v4048
        %v4050 = vpop.f32.mrf.mxu0
        %v4051 = vadd.f32 0.0, %v4050
        %4052 = vmatmul.bf16.gmra.mxu0 %v1500
        %v4053 = vpop.f32.mrf.mxu0
        %v4054 = vadd.f32 0.0, %v4053
        %v4055 = vpop.f32.mrf.mxu0
        %v4056 = vadd.f32 0.0, %v4055
        %4057 = vmatmul.bf16.gmra.mxu0 %v1503
        %v4058 = vpop.f32.mrf.mxu0
        %v4059 = vadd.f32 0.0, %v4058
        %v4060 = vpop.f32.mrf.mxu0
        %v4061 = vadd.f32 0.0, %v4060
        %4062 = vmatmul.bf16.gmra.mxu0 %v1506
        %v4063 = vpop.f32.mrf.mxu0
        %v4064 = vadd.f32 0.0, %v4063
        %v4065 = vpop.f32.mrf.mxu0
        %v4066 = vadd.f32 0.0, %v4065
        %4067 = vmatmul.bf16.gmra.mxu0 %v1509
        %v4068 = vpop.f32.mrf.mxu0
        %v4069 = vadd.f32 0.0, %v4068
        %v4070 = vpop.f32.mrf.mxu0
        %v4071 = vadd.f32 0.0, %v4070
        %4072 = vmatmul.bf16.gmra.mxu0 %v1512
        %v4073 = vpop.f32.mrf.mxu0
        %v4074 = vadd.f32 0.0, %v4073
        %v4075 = vpop.f32.mrf.mxu0
        %v4076 = vadd.f32 0.0, %v4075
        %4077 = vmatmul.bf16.gmra.mxu0 %v1515
        %v4078 = vpop.f32.mrf.mxu0
        %v4079 = vadd.f32 0.0, %v4078
        %v4080 = vpop.f32.mrf.mxu0
        %v4081 = vadd.f32 0.0, %v4080
        %4082 = vmatmul.bf16.gmra.mxu0 %v1518
        %v4083 = vpop.f32.mrf.mxu0
        %v4084 = vadd.f32 0.0, %v4083
        %v4085 = vpop.f32.mrf.mxu0
        %v4086 = vadd.f32 0.0, %v4085
        %4087 = vmatmul.bf16.gmra.mxu0 %v1521
        %v4088 = vpop.f32.mrf.mxu0
        %v4089 = vadd.f32 0.0, %v4088
        %v4090 = vpop.f32.mrf.mxu0
        %v4091 = vadd.f32 0.0, %v4090
        %4092 = vmatmul.bf16.gmra.mxu0 %v1524
        %v4093 = vpop.f32.mrf.mxu0
        %v4094 = vadd.f32 0.0, %v4093
        %v4095 = vpop.f32.mrf.mxu0
        %v4096 = vadd.f32 0.0, %v4095
        %4097 = vmatmul.bf16.gmra.mxu0 %v1527
        %v4098 = vpop.f32.mrf.mxu0
        %v4099 = vadd.f32 0.0, %v4098
        %v4100 = vpop.f32.mrf.mxu0
        %v4101 = vadd.f32 0.0, %v4100
        %4102 = vmatmul.bf16.gmra.mxu0 %v1530
        %v4103 = vpop.f32.mrf.mxu0
        %v4104 = vadd.f32 0.0, %v4103
        %v4105 = vpop.f32.mrf.mxu0
        %v4106 = vadd.f32 0.0, %v4105
        %4107 = vmatmul.bf16.gmra.mxu0 %v1533
        %v4108 = vpop.f32.mrf.mxu0
        %v4109 = vadd.f32 0.0, %v4108
        %v4110 = vpop.f32.mrf.mxu0
        %v4111 = vadd.f32 0.0, %v4110
        %4112 = vmatmul.bf16.gmra.mxu0 %v1536
        %v4113 = vpop.f32.mrf.mxu0
        %v4114 = vadd.f32 0.0, %v4113
        %v4115 = vpop.f32.mrf.mxu0
        %v4116 = vadd.f32 0.0, %v4115
        %4117 = vmatmul.bf16.gmra.mxu0 %v1539
        %v4118 = vpop.f32.mrf.mxu0
        %v4119 = vadd.f32 0.0, %v4118
        %v4120 = vpop.f32.mrf.mxu0
        %v4121 = vadd.f32 0.0, %v4120
        %4122 = vmatmul.bf16.gmra.mxu0 %v1542
        %v4123 = vpop.f32.mrf.mxu0
        %v4124 = vadd.f32 0.0, %v4123
        %v4125 = vpop.f32.mrf.mxu0
        %v4126 = vadd.f32 0.0, %v4125
        %4127 = vmatmul.bf16.gmra.mxu0 %v1545
        %v4128 = vpop.f32.mrf.mxu0
        %v4129 = vadd.f32 0.0, %v4128
        %v4130 = vpop.f32.mrf.mxu0
        %v4131 = vadd.f32 0.0, %v4130
        %4132 = vmatmul.bf16.gmra.mxu0 %v1548
        %v4133 = vpop.f32.mrf.mxu0
        %v4134 = vadd.f32 0.0, %v4133
        %v4135 = vpop.f32.mrf.mxu0
        %v4136 = vadd.f32 0.0, %v4135
        %4137 = vmatmul.bf16.gmra.mxu0 %v1551
        %v4138 = vpop.f32.mrf.mxu0
        %v4139 = vadd.f32 0.0, %v4138
        %v4140 = vpop.f32.mrf.mxu0
        %v4141 = vadd.f32 0.0, %v4140
        %4142 = vmatmul.bf16.gmra.mxu0 %v1554
        %v4143 = vpop.f32.mrf.mxu0
        %v4144 = vadd.f32 0.0, %v4143
        %v4145 = vpop.f32.mrf.mxu0
        %v4146 = vadd.f32 0.0, %v4145
        %4147 = vmatmul.bf16.gmra.mxu0 %v1557
        %v4148 = vpop.f32.mrf.mxu0
        %v4149 = vadd.f32 0.0, %v4148
        %v4150 = vpop.f32.mrf.mxu0
        %v4151 = vadd.f32 0.0, %v4150
        %4152 = vmatmul.bf16.gmra.mxu0 %v1560
        %v4153 = vpop.f32.mrf.mxu0
        %v4154 = vadd.f32 0.0, %v4153
        %v4155 = vpop.f32.mrf.mxu0
        %v4156 = vadd.f32 0.0, %v4155
        %4157 = vmatmul.bf16.gmra.mxu0 %v1563
        %v4158 = vpop.f32.mrf.mxu0
        %v4159 = vadd.f32 0.0, %v4158
        %v4160 = vpop.f32.mrf.mxu0
        %v4161 = vadd.f32 0.0, %v4160
        %4162 = vmatmul.bf16.gmra.mxu0 %v1566
        %v4163 = vpop.f32.mrf.mxu0
        %v4164 = vadd.f32 0.0, %v4163
        %v4165 = vpop.f32.mrf.mxu0
        %v4166 = vadd.f32 0.0, %v4165
        %4167 = vmatmul.bf16.gmra.mxu0 %v1569
        %v4168 = vpop.f32.mrf.mxu0
        %v4169 = vadd.f32 0.0, %v4168
        %v4170 = vpop.f32.mrf.mxu0
        %v4171 = vadd.f32 0.0, %v4170
        %4172 = vmatmul.bf16.gmra.mxu0 %v1572
        %v4173 = vpop.f32.mrf.mxu0
        %v4174 = vadd.f32 0.0, %v4173
        %v4175 = vpop.f32.mrf.mxu0
        %v4176 = vadd.f32 0.0, %v4175
        %4177 = vmatmul.bf16.gmra.mxu0 %v1575
        %v4178 = vpop.f32.mrf.mxu0
        %v4179 = vadd.f32 0.0, %v4178
        %v4180 = vpop.f32.mrf.mxu0
        %v4181 = vadd.f32 0.0, %v4180
        %4182 = vmatmul.bf16.gmra.mxu0 %v1578
        %v4183 = vpop.f32.mrf.mxu0
        %v4184 = vadd.f32 0.0, %v4183
        %v4185 = vpop.f32.mrf.mxu0
        %v4186 = vadd.f32 0.0, %v4185
        %4187 = vmatmul.bf16.gmra.mxu0 %v1581
        %v4188 = vpop.f32.mrf.mxu0
        %v4189 = vadd.f32 0.0, %v4188
        %v4190 = vpop.f32.mrf.mxu0
        %v4191 = vadd.f32 0.0, %v4190
        %4192 = vmatmul.bf16.gmra.mxu0 %v1584
        %v4193 = vpop.f32.mrf.mxu0
        %v4194 = vadd.f32 0.0, %v4193
        %v4195 = vpop.f32.mrf.mxu0
        %v4196 = vadd.f32 0.0, %v4195
        %4197 = vmatmul.bf16.gmra.mxu0 %v1587
        %v4198 = vpop.f32.mrf.mxu0
        %v4199 = vadd.f32 0.0, %v4198
        %v4200 = vpop.f32.mrf.mxu0
        %v4201 = vadd.f32 0.0, %v4200
        %4202 = vmatmul.bf16.gmra.mxu0 %v1590
        %v4203 = vpop.f32.mrf.mxu0
        %v4204 = vadd.f32 0.0, %v4203
        %v4205 = vpop.f32.mrf.mxu0
        %v4206 = vadd.f32 0.0, %v4205
        %4207 = vmatmul.bf16.gmra.mxu0 %v1593
        %v4208 = vpop.f32.mrf.mxu0
        %v4209 = vadd.f32 0.0, %v4208
        %v4210 = vpop.f32.mrf.mxu0
        %v4211 = vadd.f32 0.0, %v4210
        %4212 = vmatmul.bf16.gmra.mxu0 %v1596
        %v4213 = vpop.f32.mrf.mxu0
        %v4214 = vadd.f32 0.0, %v4213
        %v4215 = vpop.f32.mrf.mxu0
        %v4216 = vadd.f32 0.0, %v4215
        %4217 = vmatmul.bf16.gmra.mxu0 %v1599
        %v4218 = vpop.f32.mrf.mxu0
        %v4219 = vadd.f32 0.0, %v4218
        %v4220 = vpop.f32.mrf.mxu0
        %v4221 = vadd.f32 0.0, %v4220
        %4222 = vmatmul.bf16.gmra.mxu0 %v1602
        %v4223 = vpop.f32.mrf.mxu0
        %v4224 = vadd.f32 0.0, %v4223
        %v4225 = vpop.f32.mrf.mxu0
        %v4226 = vadd.f32 0.0, %v4225
        %4227 = vmatmul.bf16.gmra.mxu0 %v1605
        %v4228 = vpop.f32.mrf.mxu0
        %v4229 = vadd.f32 0.0, %v4228
        %v4230 = vpop.f32.mrf.mxu0
        %v4231 = vadd.f32 0.0, %v4230
        %4232 = vmatmul.bf16.gmra.mxu0 %v1608
        %v4233 = vpop.f32.mrf.mxu0
        %v4234 = vadd.f32 0.0, %v4233
        %v4235 = vpop.f32.mrf.mxu0
        %v4236 = vadd.f32 0.0, %v4235
        %4237 = vmatmul.bf16.gmra.mxu0 %v1611
        %v4238 = vpop.f32.mrf.mxu0
        %v4239 = vadd.f32 0.0, %v4238
        %v4240 = vpop.f32.mrf.mxu0
        %v4241 = vadd.f32 0.0, %v4240
        %4242 = vmatmul.bf16.gmra.mxu0 %v1614
        %v4243 = vpop.f32.mrf.mxu0
        %v4244 = vadd.f32 0.0, %v4243
        %v4245 = vpop.f32.mrf.mxu0
        %v4246 = vadd.f32 0.0, %v4245
        %4247 = vdwg.mxu0
        %v4248 = vmax.f32 %v1626, %v1955
        %v4249 = vmax.f32 %v4248, %v2284
        %v4250 = vmax.f32 %v4249, %v2613
        %v4251 = vmax.f32 %v4250, %v2942
        %v4252 = vmax.f32 %v4251, %v3271
        %v4253 = vmax.f32 %v4252, %v3600
        %v4254 = vmax.f32 %v4253, %v3929
        %4255 = vmax.xlane.f32.xlu0 %v4254
        %v4256 = vpop.xlane.xlu0 %4255
        %v4257 = vmax.f32 %v1628, %v1957
        %v4258 = vmax.f32 %v4257, %v2286
        %v4259 = vmax.f32 %v4258, %v2615
        %v4260 = vmax.f32 %v4259, %v2944
        %v4261 = vmax.f32 %v4260, %v3273
        %v4262 = vmax.f32 %v4261, %v3602
        %v4263 = vmax.f32 %v4262, %v3931
        %4264 = vmax.xlane.f32.xlu0 %v4263
        %v4265 = vpop.xlane.xlu0 %4264
        %v4266 = vmax.f32 %v1631, %v1960
        %v4267 = vmax.f32 %v4266, %v2289
        %v4268 = vmax.f32 %v4267, %v2618
        %v4269 = vmax.f32 %v4268, %v2947
        %v4270 = vmax.f32 %v4269, %v3276
        %v4271 = vmax.f32 %v4270, %v3605
        %v4272 = vmax.f32 %v4271, %v3934
        %4273 = vmax.xlane.f32.xlu0 %v4272
        %v4274 = vpop.xlane.xlu0 %4273
        %v4275 = vmax.f32 %v1633, %v1962
        %v4276 = vmax.f32 %v4275, %v2291
        %v4277 = vmax.f32 %v4276, %v2620
        %v4278 = vmax.f32 %v4277, %v2949
        %v4279 = vmax.f32 %v4278, %v3278
        %v4280 = vmax.f32 %v4279, %v3607
        %v4281 = vmax.f32 %v4280, %v3936
        %4282 = vmax.xlane.f32.xlu0 %v4281
        %v4283 = vpop.xlane.xlu0 %4282
        %v4284 = vmax.f32 %v1636, %v1965
        %v4285 = vmax.f32 %v4284, %v2294
        %v4286 = vmax.f32 %v4285, %v2623
        %v4287 = vmax.f32 %v4286, %v2952
        %v4288 = vmax.f32 %v4287, %v3281
        %v4289 = vmax.f32 %v4288, %v3610
        %v4290 = vmax.f32 %v4289, %v3939
        %4291 = vmax.xlane.f32.xlu0 %v4290
        %v4292 = vpop.xlane.xlu0 %4291
        %v4293 = vmax.f32 %v1638, %v1967
        %v4294 = vmax.f32 %v4293, %v2296
        %v4295 = vmax.f32 %v4294, %v2625
        %v4296 = vmax.f32 %v4295, %v2954
        %v4297 = vmax.f32 %v4296, %v3283
        %v4298 = vmax.f32 %v4297, %v3612
        %v4299 = vmax.f32 %v4298, %v3941
        %4300 = vmax.xlane.f32.xlu0 %v4299
        %v4301 = vpop.xlane.xlu0 %4300
        %v4302 = vmax.f32 %v1641, %v1970
        %v4303 = vmax.f32 %v4302, %v2299
        %v4304 = vmax.f32 %v4303, %v2628
        %v4305 = vmax.f32 %v4304, %v2957
        %v4306 = vmax.f32 %v4305, %v3286
        %v4307 = vmax.f32 %v4306, %v3615
        %v4308 = vmax.f32 %v4307, %v3944
        %4309 = vmax.xlane.f32.xlu0 %v4308
        %v4310 = vpop.xlane.xlu0 %4309
        %v4311 = vmax.f32 %v1643, %v1972
        %v4312 = vmax.f32 %v4311, %v2301
        %v4313 = vmax.f32 %v4312, %v2630
        %v4314 = vmax.f32 %v4313, %v2959
        %v4315 = vmax.f32 %v4314, %v3288
        %v4316 = vmax.f32 %v4315, %v3617
        %v4317 = vmax.f32 %v4316, %v3946
        %4318 = vmax.xlane.f32.xlu0 %v4317
        %v4319 = vpop.xlane.xlu0 %4318
        %v4320 = vmax.f32 %v1646, %v1975
        %v4321 = vmax.f32 %v4320, %v2304
        %v4322 = vmax.f32 %v4321, %v2633
        %v4323 = vmax.f32 %v4322, %v2962
        %v4324 = vmax.f32 %v4323, %v3291
        %v4325 = vmax.f32 %v4324, %v3620
        %v4326 = vmax.f32 %v4325, %v3949
        %4327 = vmax.xlane.f32.xlu0 %v4326
        %v4328 = vpop.xlane.xlu0 %4327
        %v4329 = vmax.f32 %v1648, %v1977
        %v4330 = vmax.f32 %v4329, %v2306
        %v4331 = vmax.f32 %v4330, %v2635
        %v4332 = vmax.f32 %v4331, %v2964
        %v4333 = vmax.f32 %v4332, %v3293
        %v4334 = vmax.f32 %v4333, %v3622
        %v4335 = vmax.f32 %v4334, %v3951
        %4336 = vmax.xlane.f32.xlu0 %v4335
        %v4337 = vpop.xlane.xlu0 %4336
        %v4338 = vmax.f32 %v1651, %v1980
        %v4339 = vmax.f32 %v4338, %v2309
        %v4340 = vmax.f32 %v4339, %v2638
        %v4341 = vmax.f32 %v4340, %v2967
        %v4342 = vmax.f32 %v4341, %v3296
        %v4343 = vmax.f32 %v4342, %v3625
        %v4344 = vmax.f32 %v4343, %v3954
        %4345 = vmax.xlane.f32.xlu0 %v4344
        %v4346 = vpop.xlane.xlu0 %4345
        %v4347 = vmax.f32 %v1653, %v1982
        %v4348 = vmax.f32 %v4347, %v2311
        %v4349 = vmax.f32 %v4348, %v2640
        %v4350 = vmax.f32 %v4349, %v2969
        %v4351 = vmax.f32 %v4350, %v3298
        %v4352 = vmax.f32 %v4351, %v3627
        %v4353 = vmax.f32 %v4352, %v3956
        %4354 = vmax.xlane.f32.xlu0 %v4353
        %v4355 = vpop.xlane.xlu0 %4354
        %v4356 = vmax.f32 %v1656, %v1985
        %v4357 = vmax.f32 %v4356, %v2314
        %v4358 = vmax.f32 %v4357, %v2643
        %v4359 = vmax.f32 %v4358, %v2972
        %v4360 = vmax.f32 %v4359, %v3301
        %v4361 = vmax.f32 %v4360, %v3630
        %v4362 = vmax.f32 %v4361, %v3959
        %4363 = vmax.xlane.f32.xlu0 %v4362
        %v4364 = vpop.xlane.xlu0 %4363
        %v4365 = vmax.f32 %v1658, %v1987
        %v4366 = vmax.f32 %v4365, %v2316
        %v4367 = vmax.f32 %v4366, %v2645
        %v4368 = vmax.f32 %v4367, %v2974
        %v4369 = vmax.f32 %v4368, %v3303
        %v4370 = vmax.f32 %v4369, %v3632
        %v4371 = vmax.f32 %v4370, %v3961
        %4372 = vmax.xlane.f32.xlu0 %v4371
        %v4373 = vpop.xlane.xlu0 %4372
        %v4374 = vmax.f32 %v1661, %v1990
        %v4375 = vmax.f32 %v4374, %v2319
        %v4376 = vmax.f32 %v4375, %v2648
        %v4377 = vmax.f32 %v4376, %v2977
        %v4378 = vmax.f32 %v4377, %v3306
        %v4379 = vmax.f32 %v4378, %v3635
        %v4380 = vmax.f32 %v4379, %v3964
        %4381 = vmax.xlane.f32.xlu0 %v4380
        %v4382 = vpop.xlane.xlu0 %4381
        %v4383 = vmax.f32 %v1663, %v1992
        %v4384 = vmax.f32 %v4383, %v2321
        %v4385 = vmax.f32 %v4384, %v2650
        %v4386 = vmax.f32 %v4385, %v2979
        %v4387 = vmax.f32 %v4386, %v3308
        %v4388 = vmax.f32 %v4387, %v3637
        %v4389 = vmax.f32 %v4388, %v3966
        %4390 = vmax.xlane.f32.xlu0 %v4389
        %v4391 = vpop.xlane.xlu0 %4390
        %v4392 = vmax.f32 %v1666, %v1995
        %v4393 = vmax.f32 %v4392, %v2324
        %v4394 = vmax.f32 %v4393, %v2653
        %v4395 = vmax.f32 %v4394, %v2982
        %v4396 = vmax.f32 %v4395, %v3311
        %v4397 = vmax.f32 %v4396, %v3640
        %v4398 = vmax.f32 %v4397, %v3969
        %4399 = vmax.xlane.f32.xlu0 %v4398
        %v4400 = vpop.xlane.xlu0 %4399
        %v4401 = vmax.f32 %v1668, %v1997
        %v4402 = vmax.f32 %v4401, %v2326
        %v4403 = vmax.f32 %v4402, %v2655
        %v4404 = vmax.f32 %v4403, %v2984
        %v4405 = vmax.f32 %v4404, %v3313
        %v4406 = vmax.f32 %v4405, %v3642
        %v4407 = vmax.f32 %v4406, %v3971
        %4408 = vmax.xlane.f32.xlu0 %v4407
        %v4409 = vpop.xlane.xlu0 %4408
        %v4410 = vmax.f32 %v1671, %v2000
        %v4411 = vmax.f32 %v4410, %v2329
        %v4412 = vmax.f32 %v4411, %v2658
        %v4413 = vmax.f32 %v4412, %v2987
        %v4414 = vmax.f32 %v4413, %v3316
        %v4415 = vmax.f32 %v4414, %v3645
        %v4416 = vmax.f32 %v4415, %v3974
        %4417 = vmax.xlane.f32.xlu0 %v4416
        %v4418 = vpop.xlane.xlu0 %4417
        %v4419 = vmax.f32 %v1673, %v2002
        %v4420 = vmax.f32 %v4419, %v2331
        %v4421 = vmax.f32 %v4420, %v2660
        %v4422 = vmax.f32 %v4421, %v2989
        %v4423 = vmax.f32 %v4422, %v3318
        %v4424 = vmax.f32 %v4423, %v3647
        %v4425 = vmax.f32 %v4424, %v3976
        %4426 = vmax.xlane.f32.xlu0 %v4425
        %v4427 = vpop.xlane.xlu0 %4426
        %v4428 = vmax.f32 %v1676, %v2005
        %v4429 = vmax.f32 %v4428, %v2334
        %v4430 = vmax.f32 %v4429, %v2663
        %v4431 = vmax.f32 %v4430, %v2992
        %v4432 = vmax.f32 %v4431, %v3321
        %v4433 = vmax.f32 %v4432, %v3650
        %v4434 = vmax.f32 %v4433, %v3979
        %4435 = vmax.xlane.f32.xlu0 %v4434
        %v4436 = vpop.xlane.xlu0 %4435
        %v4437 = vmax.f32 %v1678, %v2007
        %v4438 = vmax.f32 %v4437, %v2336
        %v4439 = vmax.f32 %v4438, %v2665
        %v4440 = vmax.f32 %v4439, %v2994
        %v4441 = vmax.f32 %v4440, %v3323
        %v4442 = vmax.f32 %v4441, %v3652
        %v4443 = vmax.f32 %v4442, %v3981
        %4444 = vmax.xlane.f32.xlu0 %v4443
        %v4445 = vpop.xlane.xlu0 %4444
        %v4446 = vmax.f32 %v1681, %v2010
        %v4447 = vmax.f32 %v4446, %v2339
        %v4448 = vmax.f32 %v4447, %v2668
        %v4449 = vmax.f32 %v4448, %v2997
        %v4450 = vmax.f32 %v4449, %v3326
        %v4451 = vmax.f32 %v4450, %v3655
        %v4452 = vmax.f32 %v4451, %v3984
        %4453 = vmax.xlane.f32.xlu0 %v4452
        %v4454 = vpop.xlane.xlu0 %4453
        %v4455 = vmax.f32 %v1683, %v2012
        %v4456 = vmax.f32 %v4455, %v2341
        %v4457 = vmax.f32 %v4456, %v2670
        %v4458 = vmax.f32 %v4457, %v2999
        %v4459 = vmax.f32 %v4458, %v3328
        %v4460 = vmax.f32 %v4459, %v3657
        %v4461 = vmax.f32 %v4460, %v3986
        %4462 = vmax.xlane.f32.xlu0 %v4461
        %v4463 = vpop.xlane.xlu0 %4462
        %v4464 = vmax.f32 %v1686, %v2015
        %v4465 = vmax.f32 %v4464, %v2344
        %v4466 = vmax.f32 %v4465, %v2673
        %v4467 = vmax.f32 %v4466, %v3002
        %v4468 = vmax.f32 %v4467, %v3331
        %v4469 = vmax.f32 %v4468, %v3660
        %v4470 = vmax.f32 %v4469, %v3989
        %4471 = vmax.xlane.f32.xlu0 %v4470
        %v4472 = vpop.xlane.xlu0 %4471
        %v4473 = vmax.f32 %v1688, %v2017
        %v4474 = vmax.f32 %v4473, %v2346
        %v4475 = vmax.f32 %v4474, %v2675
        %v4476 = vmax.f32 %v4475, %v3004
        %v4477 = vmax.f32 %v4476, %v3333
        %v4478 = vmax.f32 %v4477, %v3662
        %v4479 = vmax.f32 %v4478, %v3991
        %4480 = vmax.xlane.f32.xlu0 %v4479
        %v4481 = vpop.xlane.xlu0 %4480
        %v4482 = vmax.f32 %v1691, %v2020
        %v4483 = vmax.f32 %v4482, %v2349
        %v4484 = vmax.f32 %v4483, %v2678
        %v4485 = vmax.f32 %v4484, %v3007
        %v4486 = vmax.f32 %v4485, %v3336
        %v4487 = vmax.f32 %v4486, %v3665
        %v4488 = vmax.f32 %v4487, %v3994
        %4489 = vmax.xlane.f32.xlu0 %v4488
        %v4490 = vpop.xlane.xlu0 %4489
        %v4491 = vmax.f32 %v1693, %v2022
        %v4492 = vmax.f32 %v4491, %v2351
        %v4493 = vmax.f32 %v4492, %v2680
        %v4494 = vmax.f32 %v4493, %v3009
        %v4495 = vmax.f32 %v4494, %v3338
        %v4496 = vmax.f32 %v4495, %v3667
        %v4497 = vmax.f32 %v4496, %v3996
        %4498 = vmax.xlane.f32.xlu0 %v4497
        %v4499 = vpop.xlane.xlu0 %4498
        %v4500 = vmax.f32 %v1696, %v2025
        %v4501 = vmax.f32 %v4500, %v2354
        %v4502 = vmax.f32 %v4501, %v2683
        %v4503 = vmax.f32 %v4502, %v3012
        %v4504 = vmax.f32 %v4503, %v3341
        %v4505 = vmax.f32 %v4504, %v3670
        %v4506 = vmax.f32 %v4505, %v3999
        %4507 = vmax.xlane.f32.xlu0 %v4506
        %v4508 = vpop.xlane.xlu0 %4507
        %v4509 = vmax.f32 %v1698, %v2027
        %v4510 = vmax.f32 %v4509, %v2356
        %v4511 = vmax.f32 %v4510, %v2685
        %v4512 = vmax.f32 %v4511, %v3014
        %v4513 = vmax.f32 %v4512, %v3343
        %v4514 = vmax.f32 %v4513, %v3672
        %v4515 = vmax.f32 %v4514, %v4001
        %4516 = vmax.xlane.f32.xlu0 %v4515
        %v4517 = vpop.xlane.xlu0 %4516
        %v4518 = vmax.f32 %v1701, %v2030
        %v4519 = vmax.f32 %v4518, %v2359
        %v4520 = vmax.f32 %v4519, %v2688
        %v4521 = vmax.f32 %v4520, %v3017
        %v4522 = vmax.f32 %v4521, %v3346
        %v4523 = vmax.f32 %v4522, %v3675
        %v4524 = vmax.f32 %v4523, %v4004
        %4525 = vmax.xlane.f32.xlu0 %v4524
        %v4526 = vpop.xlane.xlu0 %4525
        %v4527 = vmax.f32 %v1703, %v2032
        %v4528 = vmax.f32 %v4527, %v2361
        %v4529 = vmax.f32 %v4528, %v2690
        %v4530 = vmax.f32 %v4529, %v3019
        %v4531 = vmax.f32 %v4530, %v3348
        %v4532 = vmax.f32 %v4531, %v3677
        %v4533 = vmax.f32 %v4532, %v4006
        %4534 = vmax.xlane.f32.xlu0 %v4533
        %v4535 = vpop.xlane.xlu0 %4534
        %v4536 = vmax.f32 %v1706, %v2035
        %v4537 = vmax.f32 %v4536, %v2364
        %v4538 = vmax.f32 %v4537, %v2693
        %v4539 = vmax.f32 %v4538, %v3022
        %v4540 = vmax.f32 %v4539, %v3351
        %v4541 = vmax.f32 %v4540, %v3680
        %v4542 = vmax.f32 %v4541, %v4009
        %4543 = vmax.xlane.f32.xlu0 %v4542
        %v4544 = vpop.xlane.xlu0 %4543
        %v4545 = vmax.f32 %v1708, %v2037
        %v4546 = vmax.f32 %v4545, %v2366
        %v4547 = vmax.f32 %v4546, %v2695
        %v4548 = vmax.f32 %v4547, %v3024
        %v4549 = vmax.f32 %v4548, %v3353
        %v4550 = vmax.f32 %v4549, %v3682
        %v4551 = vmax.f32 %v4550, %v4011
        %4552 = vmax.xlane.f32.xlu0 %v4551
        %v4553 = vpop.xlane.xlu0 %4552
        %v4554 = vmax.f32 %v1711, %v2040
        %v4555 = vmax.f32 %v4554, %v2369
        %v4556 = vmax.f32 %v4555, %v2698
        %v4557 = vmax.f32 %v4556, %v3027
        %v4558 = vmax.f32 %v4557, %v3356
        %v4559 = vmax.f32 %v4558, %v3685
        %v4560 = vmax.f32 %v4559, %v4014
        %4561 = vmax.xlane.f32.xlu0 %v4560
        %v4562 = vpop.xlane.xlu0 %4561
        %v4563 = vmax.f32 %v1713, %v2042
        %v4564 = vmax.f32 %v4563, %v2371
        %v4565 = vmax.f32 %v4564, %v2700
        %v4566 = vmax.f32 %v4565, %v3029
        %v4567 = vmax.f32 %v4566, %v3358
        %v4568 = vmax.f32 %v4567, %v3687
        %v4569 = vmax.f32 %v4568, %v4016
        %4570 = vmax.xlane.f32.xlu0 %v4569
        %v4571 = vpop.xlane.xlu0 %4570
        %v4572 = vmax.f32 %v1716, %v2045
        %v4573 = vmax.f32 %v4572, %v2374
        %v4574 = vmax.f32 %v4573, %v2703
        %v4575 = vmax.f32 %v4574, %v3032
        %v4576 = vmax.f32 %v4575, %v3361
        %v4577 = vmax.f32 %v4576, %v3690
        %v4578 = vmax.f32 %v4577, %v4019
        %4579 = vmax.xlane.f32.xlu0 %v4578
        %v4580 = vpop.xlane.xlu0 %4579
        %v4581 = vmax.f32 %v1718, %v2047
        %v4582 = vmax.f32 %v4581, %v2376
        %v4583 = vmax.f32 %v4582, %v2705
        %v4584 = vmax.f32 %v4583, %v3034
        %v4585 = vmax.f32 %v4584, %v3363
        %v4586 = vmax.f32 %v4585, %v3692
        %v4587 = vmax.f32 %v4586, %v4021
        %4588 = vmax.xlane.f32.xlu0 %v4587
        %v4589 = vpop.xlane.xlu0 %4588
        %v4590 = vmax.f32 %v1721, %v2050
        %v4591 = vmax.f32 %v4590, %v2379
        %v4592 = vmax.f32 %v4591, %v2708
        %v4593 = vmax.f32 %v4592, %v3037
        %v4594 = vmax.f32 %v4593, %v3366
        %v4595 = vmax.f32 %v4594, %v3695
        %v4596 = vmax.f32 %v4595, %v4024
        %4597 = vmax.xlane.f32.xlu0 %v4596
        %v4598 = vpop.xlane.xlu0 %4597
        %v4599 = vmax.f32 %v1723, %v2052
        %v4600 = vmax.f32 %v4599, %v2381
        %v4601 = vmax.f32 %v4600, %v2710
        %v4602 = vmax.f32 %v4601, %v3039
        %v4603 = vmax.f32 %v4602, %v3368
        %v4604 = vmax.f32 %v4603, %v3697
        %v4605 = vmax.f32 %v4604, %v4026
        %4606 = vmax.xlane.f32.xlu0 %v4605
        %v4607 = vpop.xlane.xlu0 %4606
        %v4608 = vmax.f32 %v1726, %v2055
        %v4609 = vmax.f32 %v4608, %v2384
        %v4610 = vmax.f32 %v4609, %v2713
        %v4611 = vmax.f32 %v4610, %v3042
        %v4612 = vmax.f32 %v4611, %v3371
        %v4613 = vmax.f32 %v4612, %v3700
        %v4614 = vmax.f32 %v4613, %v4029
        %4615 = vmax.xlane.f32.xlu0 %v4614
        %v4616 = vpop.xlane.xlu0 %4615
        %v4617 = vmax.f32 %v1728, %v2057
        %v4618 = vmax.f32 %v4617, %v2386
        %v4619 = vmax.f32 %v4618, %v2715
        %v4620 = vmax.f32 %v4619, %v3044
        %v4621 = vmax.f32 %v4620, %v3373
        %v4622 = vmax.f32 %v4621, %v3702
        %v4623 = vmax.f32 %v4622, %v4031
        %4624 = vmax.xlane.f32.xlu0 %v4623
        %v4625 = vpop.xlane.xlu0 %4624
        %v4626 = vmax.f32 %v1731, %v2060
        %v4627 = vmax.f32 %v4626, %v2389
        %v4628 = vmax.f32 %v4627, %v2718
        %v4629 = vmax.f32 %v4628, %v3047
        %v4630 = vmax.f32 %v4629, %v3376
        %v4631 = vmax.f32 %v4630, %v3705
        %v4632 = vmax.f32 %v4631, %v4034
        %4633 = vmax.xlane.f32.xlu0 %v4632
        %v4634 = vpop.xlane.xlu0 %4633
        %v4635 = vmax.f32 %v1733, %v2062
        %v4636 = vmax.f32 %v4635, %v2391
        %v4637 = vmax.f32 %v4636, %v2720
        %v4638 = vmax.f32 %v4637, %v3049
        %v4639 = vmax.f32 %v4638, %v3378
        %v4640 = vmax.f32 %v4639, %v3707
        %v4641 = vmax.f32 %v4640, %v4036
        %4642 = vmax.xlane.f32.xlu0 %v4641
        %v4643 = vpop.xlane.xlu0 %4642
        %v4644 = vmax.f32 %v1736, %v2065
        %v4645 = vmax.f32 %v4644, %v2394
        %v4646 = vmax.f32 %v4645, %v2723
        %v4647 = vmax.f32 %v4646, %v3052
        %v4648 = vmax.f32 %v4647, %v3381
        %v4649 = vmax.f32 %v4648, %v3710
        %v4650 = vmax.f32 %v4649, %v4039
        %4651 = vmax.xlane.f32.xlu0 %v4650
        %v4652 = vpop.xlane.xlu0 %4651
        %v4653 = vmax.f32 %v1738, %v2067
        %v4654 = vmax.f32 %v4653, %v2396
        %v4655 = vmax.f32 %v4654, %v2725
        %v4656 = vmax.f32 %v4655, %v3054
        %v4657 = vmax.f32 %v4656, %v3383
        %v4658 = vmax.f32 %v4657, %v3712
        %v4659 = vmax.f32 %v4658, %v4041
        %4660 = vmax.xlane.f32.xlu0 %v4659
        %v4661 = vpop.xlane.xlu0 %4660
        %v4662 = vmax.f32 %v1741, %v2070
        %v4663 = vmax.f32 %v4662, %v2399
        %v4664 = vmax.f32 %v4663, %v2728
        %v4665 = vmax.f32 %v4664, %v3057
        %v4666 = vmax.f32 %v4665, %v3386
        %v4667 = vmax.f32 %v4666, %v3715
        %v4668 = vmax.f32 %v4667, %v4044
        %4669 = vmax.xlane.f32.xlu0 %v4668
        %v4670 = vpop.xlane.xlu0 %4669
        %v4671 = vmax.f32 %v1743, %v2072
        %v4672 = vmax.f32 %v4671, %v2401
        %v4673 = vmax.f32 %v4672, %v2730
        %v4674 = vmax.f32 %v4673, %v3059
        %v4675 = vmax.f32 %v4674, %v3388
        %v4676 = vmax.f32 %v4675, %v3717
        %v4677 = vmax.f32 %v4676, %v4046
        %4678 = vmax.xlane.f32.xlu0 %v4677
        %v4679 = vpop.xlane.xlu0 %4678
        %v4680 = vmax.f32 %v1746, %v2075
        %v4681 = vmax.f32 %v4680, %v2404
        %v4682 = vmax.f32 %v4681, %v2733
        %v4683 = vmax.f32 %v4682, %v3062
        %v4684 = vmax.f32 %v4683, %v3391
        %v4685 = vmax.f32 %v4684, %v3720
        %v4686 = vmax.f32 %v4685, %v4049
        %4687 = vmax.xlane.f32.xlu0 %v4686
        %v4688 = vpop.xlane.xlu0 %4687
        %v4689 = vmax.f32 %v1748, %v2077
        %v4690 = vmax.f32 %v4689, %v2406
        %v4691 = vmax.f32 %v4690, %v2735
        %v4692 = vmax.f32 %v4691, %v3064
        %v4693 = vmax.f32 %v4692, %v3393
        %v4694 = vmax.f32 %v4693, %v3722
        %v4695 = vmax.f32 %v4694, %v4051
        %4696 = vmax.xlane.f32.xlu0 %v4695
        %v4697 = vpop.xlane.xlu0 %4696
        %v4698 = vmax.f32 %v1751, %v2080
        %v4699 = vmax.f32 %v4698, %v2409
        %v4700 = vmax.f32 %v4699, %v2738
        %v4701 = vmax.f32 %v4700, %v3067
        %v4702 = vmax.f32 %v4701, %v3396
        %v4703 = vmax.f32 %v4702, %v3725
        %v4704 = vmax.f32 %v4703, %v4054
        %4705 = vmax.xlane.f32.xlu0 %v4704
        %v4706 = vpop.xlane.xlu0 %4705
        %v4707 = vmax.f32 %v1753, %v2082
        %v4708 = vmax.f32 %v4707, %v2411
        %v4709 = vmax.f32 %v4708, %v2740
        %v4710 = vmax.f32 %v4709, %v3069
        %v4711 = vmax.f32 %v4710, %v3398
        %v4712 = vmax.f32 %v4711, %v3727
        %v4713 = vmax.f32 %v4712, %v4056
        %4714 = vmax.xlane.f32.xlu0 %v4713
        %v4715 = vpop.xlane.xlu0 %4714
        %v4716 = vmax.f32 %v1756, %v2085
        %v4717 = vmax.f32 %v4716, %v2414
        %v4718 = vmax.f32 %v4717, %v2743
        %v4719 = vmax.f32 %v4718, %v3072
        %v4720 = vmax.f32 %v4719, %v3401
        %v4721 = vmax.f32 %v4720, %v3730
        %v4722 = vmax.f32 %v4721, %v4059
        %4723 = vmax.xlane.f32.xlu0 %v4722
        %v4724 = vpop.xlane.xlu0 %4723
        %v4725 = vmax.f32 %v1758, %v2087
        %v4726 = vmax.f32 %v4725, %v2416
        %v4727 = vmax.f32 %v4726, %v2745
        %v4728 = vmax.f32 %v4727, %v3074
        %v4729 = vmax.f32 %v4728, %v3403
        %v4730 = vmax.f32 %v4729, %v3732
        %v4731 = vmax.f32 %v4730, %v4061
        %4732 = vmax.xlane.f32.xlu0 %v4731
        %v4733 = vpop.xlane.xlu0 %4732
        %v4734 = vmax.f32 %v1761, %v2090
        %v4735 = vmax.f32 %v4734, %v2419
        %v4736 = vmax.f32 %v4735, %v2748
        %v4737 = vmax.f32 %v4736, %v3077
        %v4738 = vmax.f32 %v4737, %v3406
        %v4739 = vmax.f32 %v4738, %v3735
        %v4740 = vmax.f32 %v4739, %v4064
        %4741 = vmax.xlane.f32.xlu0 %v4740
        %v4742 = vpop.xlane.xlu0 %4741
        %v4743 = vmax.f32 %v1763, %v2092
        %v4744 = vmax.f32 %v4743, %v2421
        %v4745 = vmax.f32 %v4744, %v2750
        %v4746 = vmax.f32 %v4745, %v3079
        %v4747 = vmax.f32 %v4746, %v3408
        %v4748 = vmax.f32 %v4747, %v3737
        %v4749 = vmax.f32 %v4748, %v4066
        %4750 = vmax.xlane.f32.xlu0 %v4749
        %v4751 = vpop.xlane.xlu0 %4750
        %v4752 = vmax.f32 %v1766, %v2095
        %v4753 = vmax.f32 %v4752, %v2424
        %v4754 = vmax.f32 %v4753, %v2753
        %v4755 = vmax.f32 %v4754, %v3082
        %v4756 = vmax.f32 %v4755, %v3411
        %v4757 = vmax.f32 %v4756, %v3740
        %v4758 = vmax.f32 %v4757, %v4069
        %4759 = vmax.xlane.f32.xlu0 %v4758
        %v4760 = vpop.xlane.xlu0 %4759
        %v4761 = vmax.f32 %v1768, %v2097
        %v4762 = vmax.f32 %v4761, %v2426
        %v4763 = vmax.f32 %v4762, %v2755
        %v4764 = vmax.f32 %v4763, %v3084
        %v4765 = vmax.f32 %v4764, %v3413
        %v4766 = vmax.f32 %v4765, %v3742
        %v4767 = vmax.f32 %v4766, %v4071
        %4768 = vmax.xlane.f32.xlu0 %v4767
        %v4769 = vpop.xlane.xlu0 %4768
        %v4770 = vmax.f32 %v1771, %v2100
        %v4771 = vmax.f32 %v4770, %v2429
        %v4772 = vmax.f32 %v4771, %v2758
        %v4773 = vmax.f32 %v4772, %v3087
        %v4774 = vmax.f32 %v4773, %v3416
        %v4775 = vmax.f32 %v4774, %v3745
        %v4776 = vmax.f32 %v4775, %v4074
        %4777 = vmax.xlane.f32.xlu0 %v4776
        %v4778 = vpop.xlane.xlu0 %4777
        %v4779 = vmax.f32 %v1773, %v2102
        %v4780 = vmax.f32 %v4779, %v2431
        %v4781 = vmax.f32 %v4780, %v2760
        %v4782 = vmax.f32 %v4781, %v3089
        %v4783 = vmax.f32 %v4782, %v3418
        %v4784 = vmax.f32 %v4783, %v3747
        %v4785 = vmax.f32 %v4784, %v4076
        %4786 = vmax.xlane.f32.xlu0 %v4785
        %v4787 = vpop.xlane.xlu0 %4786
        %v4788 = vmax.f32 %v1776, %v2105
        %v4789 = vmax.f32 %v4788, %v2434
        %v4790 = vmax.f32 %v4789, %v2763
        %v4791 = vmax.f32 %v4790, %v3092
        %v4792 = vmax.f32 %v4791, %v3421
        %v4793 = vmax.f32 %v4792, %v3750
        %v4794 = vmax.f32 %v4793, %v4079
        %4795 = vmax.xlane.f32.xlu0 %v4794
        %v4796 = vpop.xlane.xlu0 %4795
        %v4797 = vmax.f32 %v1778, %v2107
        %v4798 = vmax.f32 %v4797, %v2436
        %v4799 = vmax.f32 %v4798, %v2765
        %v4800 = vmax.f32 %v4799, %v3094
        %v4801 = vmax.f32 %v4800, %v3423
        %v4802 = vmax.f32 %v4801, %v3752
        %v4803 = vmax.f32 %v4802, %v4081
        %4804 = vmax.xlane.f32.xlu0 %v4803
        %v4805 = vpop.xlane.xlu0 %4804
        %v4806 = vmax.f32 %v1781, %v2110
        %v4807 = vmax.f32 %v4806, %v2439
        %v4808 = vmax.f32 %v4807, %v2768
        %v4809 = vmax.f32 %v4808, %v3097
        %v4810 = vmax.f32 %v4809, %v3426
        %v4811 = vmax.f32 %v4810, %v3755
        %v4812 = vmax.f32 %v4811, %v4084
        %4813 = vmax.xlane.f32.xlu0 %v4812
        %v4814 = vpop.xlane.xlu0 %4813
        %v4815 = vmax.f32 %v1783, %v2112
        %v4816 = vmax.f32 %v4815, %v2441
        %v4817 = vmax.f32 %v4816, %v2770
        %v4818 = vmax.f32 %v4817, %v3099
        %v4819 = vmax.f32 %v4818, %v3428
        %v4820 = vmax.f32 %v4819, %v3757
        %v4821 = vmax.f32 %v4820, %v4086
        %4822 = vmax.xlane.f32.xlu0 %v4821
        %v4823 = vpop.xlane.xlu0 %4822
        %v4824 = vmax.f32 %v1786, %v2115
        %v4825 = vmax.f32 %v4824, %v2444
        %v4826 = vmax.f32 %v4825, %v2773
        %v4827 = vmax.f32 %v4826, %v3102
        %v4828 = vmax.f32 %v4827, %v3431
        %v4829 = vmax.f32 %v4828, %v3760
        %v4830 = vmax.f32 %v4829, %v4089
        %4831 = vmax.xlane.f32.xlu0 %v4830
        %v4832 = vpop.xlane.xlu0 %4831
        %v4833 = vmax.f32 %v1788, %v2117
        %v4834 = vmax.f32 %v4833, %v2446
        %v4835 = vmax.f32 %v4834, %v2775
        %v4836 = vmax.f32 %v4835, %v3104
        %v4837 = vmax.f32 %v4836, %v3433
        %v4838 = vmax.f32 %v4837, %v3762
        %v4839 = vmax.f32 %v4838, %v4091
        %4840 = vmax.xlane.f32.xlu0 %v4839
        %v4841 = vpop.xlane.xlu0 %4840
        %v4842 = vmax.f32 %v1791, %v2120
        %v4843 = vmax.f32 %v4842, %v2449
        %v4844 = vmax.f32 %v4843, %v2778
        %v4845 = vmax.f32 %v4844, %v3107
        %v4846 = vmax.f32 %v4845, %v3436
        %v4847 = vmax.f32 %v4846, %v3765
        %v4848 = vmax.f32 %v4847, %v4094
        %4849 = vmax.xlane.f32.xlu0 %v4848
        %v4850 = vpop.xlane.xlu0 %4849
        %v4851 = vmax.f32 %v1793, %v2122
        %v4852 = vmax.f32 %v4851, %v2451
        %v4853 = vmax.f32 %v4852, %v2780
        %v4854 = vmax.f32 %v4853, %v3109
        %v4855 = vmax.f32 %v4854, %v3438
        %v4856 = vmax.f32 %v4855, %v3767
        %v4857 = vmax.f32 %v4856, %v4096
        %4858 = vmax.xlane.f32.xlu0 %v4857
        %v4859 = vpop.xlane.xlu0 %4858
        %v4860 = vmax.f32 %v1796, %v2125
        %v4861 = vmax.f32 %v4860, %v2454
        %v4862 = vmax.f32 %v4861, %v2783
        %v4863 = vmax.f32 %v4862, %v3112
        %v4864 = vmax.f32 %v4863, %v3441
        %v4865 = vmax.f32 %v4864, %v3770
        %v4866 = vmax.f32 %v4865, %v4099
        %4867 = vmax.xlane.f32.xlu0 %v4866
        %v4868 = vpop.xlane.xlu0 %4867
        %v4869 = vmax.f32 %v1798, %v2127
        %v4870 = vmax.f32 %v4869, %v2456
        %v4871 = vmax.f32 %v4870, %v2785
        %v4872 = vmax.f32 %v4871, %v3114
        %v4873 = vmax.f32 %v4872, %v3443
        %v4874 = vmax.f32 %v4873, %v3772
        %v4875 = vmax.f32 %v4874, %v4101
        %4876 = vmax.xlane.f32.xlu0 %v4875
        %v4877 = vpop.xlane.xlu0 %4876
        %v4878 = vmax.f32 %v1801, %v2130
        %v4879 = vmax.f32 %v4878, %v2459
        %v4880 = vmax.f32 %v4879, %v2788
        %v4881 = vmax.f32 %v4880, %v3117
        %v4882 = vmax.f32 %v4881, %v3446
        %v4883 = vmax.f32 %v4882, %v3775
        %v4884 = vmax.f32 %v4883, %v4104
        %4885 = vmax.xlane.f32.xlu0 %v4884
        %v4886 = vpop.xlane.xlu0 %4885
        %v4887 = vmax.f32 %v1803, %v2132
        %v4888 = vmax.f32 %v4887, %v2461
        %v4889 = vmax.f32 %v4888, %v2790
        %v4890 = vmax.f32 %v4889, %v3119
        %v4891 = vmax.f32 %v4890, %v3448
        %v4892 = vmax.f32 %v4891, %v3777
        %v4893 = vmax.f32 %v4892, %v4106
        %4894 = vmax.xlane.f32.xlu0 %v4893
        %v4895 = vpop.xlane.xlu0 %4894
        %v4896 = vmax.f32 %v1806, %v2135
        %v4897 = vmax.f32 %v4896, %v2464
        %v4898 = vmax.f32 %v4897, %v2793
        %v4899 = vmax.f32 %v4898, %v3122
        %v4900 = vmax.f32 %v4899, %v3451
        %v4901 = vmax.f32 %v4900, %v3780
        %v4902 = vmax.f32 %v4901, %v4109
        %4903 = vmax.xlane.f32.xlu0 %v4902
        %v4904 = vpop.xlane.xlu0 %4903
        %v4905 = vmax.f32 %v1808, %v2137
        %v4906 = vmax.f32 %v4905, %v2466
        %v4907 = vmax.f32 %v4906, %v2795
        %v4908 = vmax.f32 %v4907, %v3124
        %v4909 = vmax.f32 %v4908, %v3453
        %v4910 = vmax.f32 %v4909, %v3782
        %v4911 = vmax.f32 %v4910, %v4111
        %4912 = vmax.xlane.f32.xlu0 %v4911
        %v4913 = vpop.xlane.xlu0 %4912
        %v4914 = vmax.f32 %v1811, %v2140
        %v4915 = vmax.f32 %v4914, %v2469
        %v4916 = vmax.f32 %v4915, %v2798
        %v4917 = vmax.f32 %v4916, %v3127
        %v4918 = vmax.f32 %v4917, %v3456
        %v4919 = vmax.f32 %v4918, %v3785
        %v4920 = vmax.f32 %v4919, %v4114
        %4921 = vmax.xlane.f32.xlu0 %v4920
        %v4922 = vpop.xlane.xlu0 %4921
        %v4923 = vmax.f32 %v1813, %v2142
        %v4924 = vmax.f32 %v4923, %v2471
        %v4925 = vmax.f32 %v4924, %v2800
        %v4926 = vmax.f32 %v4925, %v3129
        %v4927 = vmax.f32 %v4926, %v3458
        %v4928 = vmax.f32 %v4927, %v3787
        %v4929 = vmax.f32 %v4928, %v4116
        %4930 = vmax.xlane.f32.xlu0 %v4929
        %v4931 = vpop.xlane.xlu0 %4930
        %v4932 = vmax.f32 %v1816, %v2145
        %v4933 = vmax.f32 %v4932, %v2474
        %v4934 = vmax.f32 %v4933, %v2803
        %v4935 = vmax.f32 %v4934, %v3132
        %v4936 = vmax.f32 %v4935, %v3461
        %v4937 = vmax.f32 %v4936, %v3790
        %v4938 = vmax.f32 %v4937, %v4119
        %4939 = vmax.xlane.f32.xlu0 %v4938
        %v4940 = vpop.xlane.xlu0 %4939
        %v4941 = vmax.f32 %v1818, %v2147
        %v4942 = vmax.f32 %v4941, %v2476
        %v4943 = vmax.f32 %v4942, %v2805
        %v4944 = vmax.f32 %v4943, %v3134
        %v4945 = vmax.f32 %v4944, %v3463
        %v4946 = vmax.f32 %v4945, %v3792
        %v4947 = vmax.f32 %v4946, %v4121
        %4948 = vmax.xlane.f32.xlu0 %v4947
        %v4949 = vpop.xlane.xlu0 %4948
        %v4950 = vmax.f32 %v1821, %v2150
        %v4951 = vmax.f32 %v4950, %v2479
        %v4952 = vmax.f32 %v4951, %v2808
        %v4953 = vmax.f32 %v4952, %v3137
        %v4954 = vmax.f32 %v4953, %v3466
        %v4955 = vmax.f32 %v4954, %v3795
        %v4956 = vmax.f32 %v4955, %v4124
        %4957 = vmax.xlane.f32.xlu0 %v4956
        %v4958 = vpop.xlane.xlu0 %4957
        %v4959 = vmax.f32 %v1823, %v2152
        %v4960 = vmax.f32 %v4959, %v2481
        %v4961 = vmax.f32 %v4960, %v2810
        %v4962 = vmax.f32 %v4961, %v3139
        %v4963 = vmax.f32 %v4962, %v3468
        %v4964 = vmax.f32 %v4963, %v3797
        %v4965 = vmax.f32 %v4964, %v4126
        %4966 = vmax.xlane.f32.xlu0 %v4965
        %v4967 = vpop.xlane.xlu0 %4966
        %v4968 = vmax.f32 %v1826, %v2155
        %v4969 = vmax.f32 %v4968, %v2484
        %v4970 = vmax.f32 %v4969, %v2813
        %v4971 = vmax.f32 %v4970, %v3142
        %v4972 = vmax.f32 %v4971, %v3471
        %v4973 = vmax.f32 %v4972, %v3800
        %v4974 = vmax.f32 %v4973, %v4129
        %4975 = vmax.xlane.f32.xlu0 %v4974
        %v4976 = vpop.xlane.xlu0 %4975
        %v4977 = vmax.f32 %v1828, %v2157
        %v4978 = vmax.f32 %v4977, %v2486
        %v4979 = vmax.f32 %v4978, %v2815
        %v4980 = vmax.f32 %v4979, %v3144
        %v4981 = vmax.f32 %v4980, %v3473
        %v4982 = vmax.f32 %v4981, %v3802
        %v4983 = vmax.f32 %v4982, %v4131
        %4984 = vmax.xlane.f32.xlu0 %v4983
        %v4985 = vpop.xlane.xlu0 %4984
        %v4986 = vmax.f32 %v1831, %v2160
        %v4987 = vmax.f32 %v4986, %v2489
        %v4988 = vmax.f32 %v4987, %v2818
        %v4989 = vmax.f32 %v4988, %v3147
        %v4990 = vmax.f32 %v4989, %v3476
        %v4991 = vmax.f32 %v4990, %v3805
        %v4992 = vmax.f32 %v4991, %v4134
        %4993 = vmax.xlane.f32.xlu0 %v4992
        %v4994 = vpop.xlane.xlu0 %4993
        %v4995 = vmax.f32 %v1833, %v2162
        %v4996 = vmax.f32 %v4995, %v2491
        %v4997 = vmax.f32 %v4996, %v2820
        %v4998 = vmax.f32 %v4997, %v3149
        %v4999 = vmax.f32 %v4998, %v3478
        %v5000 = vmax.f32 %v4999, %v3807
        %v5001 = vmax.f32 %v5000, %v4136
        %5002 = vmax.xlane.f32.xlu0 %v5001
        %v5003 = vpop.xlane.xlu0 %5002
        %v5004 = vmax.f32 %v1836, %v2165
        %v5005 = vmax.f32 %v5004, %v2494
        %v5006 = vmax.f32 %v5005, %v2823
        %v5007 = vmax.f32 %v5006, %v3152
        %v5008 = vmax.f32 %v5007, %v3481
        %v5009 = vmax.f32 %v5008, %v3810
        %v5010 = vmax.f32 %v5009, %v4139
        %5011 = vmax.xlane.f32.xlu0 %v5010
        %v5012 = vpop.xlane.xlu0 %5011
        %v5013 = vmax.f32 %v1838, %v2167
        %v5014 = vmax.f32 %v5013, %v2496
        %v5015 = vmax.f32 %v5014, %v2825
        %v5016 = vmax.f32 %v5015, %v3154
        %v5017 = vmax.f32 %v5016, %v3483
        %v5018 = vmax.f32 %v5017, %v3812
        %v5019 = vmax.f32 %v5018, %v4141
        %5020 = vmax.xlane.f32.xlu0 %v5019
        %v5021 = vpop.xlane.xlu0 %5020
        %v5022 = vmax.f32 %v1841, %v2170
        %v5023 = vmax.f32 %v5022, %v2499
        %v5024 = vmax.f32 %v5023, %v2828
        %v5025 = vmax.f32 %v5024, %v3157
        %v5026 = vmax.f32 %v5025, %v3486
        %v5027 = vmax.f32 %v5026, %v3815
        %v5028 = vmax.f32 %v5027, %v4144
        %5029 = vmax.xlane.f32.xlu0 %v5028
        %v5030 = vpop.xlane.xlu0 %5029
        %v5031 = vmax.f32 %v1843, %v2172
        %v5032 = vmax.f32 %v5031, %v2501
        %v5033 = vmax.f32 %v5032, %v2830
        %v5034 = vmax.f32 %v5033, %v3159
        %v5035 = vmax.f32 %v5034, %v3488
        %v5036 = vmax.f32 %v5035, %v3817
        %v5037 = vmax.f32 %v5036, %v4146
        %5038 = vmax.xlane.f32.xlu0 %v5037
        %v5039 = vpop.xlane.xlu0 %5038
        %v5040 = vmax.f32 %v1846, %v2175
        %v5041 = vmax.f32 %v5040, %v2504
        %v5042 = vmax.f32 %v5041, %v2833
        %v5043 = vmax.f32 %v5042, %v3162
        %v5044 = vmax.f32 %v5043, %v3491
        %v5045 = vmax.f32 %v5044, %v3820
        %v5046 = vmax.f32 %v5045, %v4149
        %5047 = vmax.xlane.f32.xlu0 %v5046
        %v5048 = vpop.xlane.xlu0 %5047
        %v5049 = vmax.f32 %v1848, %v2177
        %v5050 = vmax.f32 %v5049, %v2506
        %v5051 = vmax.f32 %v5050, %v2835
        %v5052 = vmax.f32 %v5051, %v3164
        %v5053 = vmax.f32 %v5052, %v3493
        %v5054 = vmax.f32 %v5053, %v3822
        %v5055 = vmax.f32 %v5054, %v4151
        %5056 = vmax.xlane.f32.xlu0 %v5055
        %v5057 = vpop.xlane.xlu0 %5056
        %v5058 = vmax.f32 %v1851, %v2180
        %v5059 = vmax.f32 %v5058, %v2509
        %v5060 = vmax.f32 %v5059, %v2838
        %v5061 = vmax.f32 %v5060, %v3167
        %v5062 = vmax.f32 %v5061, %v3496
        %v5063 = vmax.f32 %v5062, %v3825
        %v5064 = vmax.f32 %v5063, %v4154
        %5065 = vmax.xlane.f32.xlu0 %v5064
        %v5066 = vpop.xlane.xlu0 %5065
        %v5067 = vmax.f32 %v1853, %v2182
        %v5068 = vmax.f32 %v5067, %v2511
        %v5069 = vmax.f32 %v5068, %v2840
        %v5070 = vmax.f32 %v5069, %v3169
        %v5071 = vmax.f32 %v5070, %v3498
        %v5072 = vmax.f32 %v5071, %v3827
        %v5073 = vmax.f32 %v5072, %v4156
        %5074 = vmax.xlane.f32.xlu0 %v5073
        %v5075 = vpop.xlane.xlu0 %5074
        %v5076 = vmax.f32 %v1856, %v2185
        %v5077 = vmax.f32 %v5076, %v2514
        %v5078 = vmax.f32 %v5077, %v2843
        %v5079 = vmax.f32 %v5078, %v3172
        %v5080 = vmax.f32 %v5079, %v3501
        %v5081 = vmax.f32 %v5080, %v3830
        %v5082 = vmax.f32 %v5081, %v4159
        %5083 = vmax.xlane.f32.xlu0 %v5082
        %v5084 = vpop.xlane.xlu0 %5083
        %v5085 = vmax.f32 %v1858, %v2187
        %v5086 = vmax.f32 %v5085, %v2516
        %v5087 = vmax.f32 %v5086, %v2845
        %v5088 = vmax.f32 %v5087, %v3174
        %v5089 = vmax.f32 %v5088, %v3503
        %v5090 = vmax.f32 %v5089, %v3832
        %v5091 = vmax.f32 %v5090, %v4161
        %5092 = vmax.xlane.f32.xlu0 %v5091
        %v5093 = vpop.xlane.xlu0 %5092
        %v5094 = vmax.f32 %v1861, %v2190
        %v5095 = vmax.f32 %v5094, %v2519
        %v5096 = vmax.f32 %v5095, %v2848
        %v5097 = vmax.f32 %v5096, %v3177
        %v5098 = vmax.f32 %v5097, %v3506
        %v5099 = vmax.f32 %v5098, %v3835
        %v5100 = vmax.f32 %v5099, %v4164
        %5101 = vmax.xlane.f32.xlu0 %v5100
        %v5102 = vpop.xlane.xlu0 %5101
        %v5103 = vmax.f32 %v1863, %v2192
        %v5104 = vmax.f32 %v5103, %v2521
        %v5105 = vmax.f32 %v5104, %v2850
        %v5106 = vmax.f32 %v5105, %v3179
        %v5107 = vmax.f32 %v5106, %v3508
        %v5108 = vmax.f32 %v5107, %v3837
        %v5109 = vmax.f32 %v5108, %v4166
        %5110 = vmax.xlane.f32.xlu0 %v5109
        %v5111 = vpop.xlane.xlu0 %5110
        %v5112 = vmax.f32 %v1866, %v2195
        %v5113 = vmax.f32 %v5112, %v2524
        %v5114 = vmax.f32 %v5113, %v2853
        %v5115 = vmax.f32 %v5114, %v3182
        %v5116 = vmax.f32 %v5115, %v3511
        %v5117 = vmax.f32 %v5116, %v3840
        %v5118 = vmax.f32 %v5117, %v4169
        %5119 = vmax.xlane.f32.xlu0 %v5118
        %v5120 = vpop.xlane.xlu0 %5119
        %v5121 = vmax.f32 %v1868, %v2197
        %v5122 = vmax.f32 %v5121, %v2526
        %v5123 = vmax.f32 %v5122, %v2855
        %v5124 = vmax.f32 %v5123, %v3184
        %v5125 = vmax.f32 %v5124, %v3513
        %v5126 = vmax.f32 %v5125, %v3842
        %v5127 = vmax.f32 %v5126, %v4171
        %5128 = vmax.xlane.f32.xlu0 %v5127
        %v5129 = vpop.xlane.xlu0 %5128
        %v5130 = vmax.f32 %v1871, %v2200
        %v5131 = vmax.f32 %v5130, %v2529
        %v5132 = vmax.f32 %v5131, %v2858
        %v5133 = vmax.f32 %v5132, %v3187
        %v5134 = vmax.f32 %v5133, %v3516
        %v5135 = vmax.f32 %v5134, %v3845
        %v5136 = vmax.f32 %v5135, %v4174
        %5137 = vmax.xlane.f32.xlu0 %v5136
        %v5138 = vpop.xlane.xlu0 %5137
        %v5139 = vmax.f32 %v1873, %v2202
        %v5140 = vmax.f32 %v5139, %v2531
        %v5141 = vmax.f32 %v5140, %v2860
        %v5142 = vmax.f32 %v5141, %v3189
        %v5143 = vmax.f32 %v5142, %v3518
        %v5144 = vmax.f32 %v5143, %v3847
        %v5145 = vmax.f32 %v5144, %v4176
        %5146 = vmax.xlane.f32.xlu0 %v5145
        %v5147 = vpop.xlane.xlu0 %5146
        %v5148 = vmax.f32 %v1876, %v2205
        %v5149 = vmax.f32 %v5148, %v2534
        %v5150 = vmax.f32 %v5149, %v2863
        %v5151 = vmax.f32 %v5150, %v3192
        %v5152 = vmax.f32 %v5151, %v3521
        %v5153 = vmax.f32 %v5152, %v3850
        %v5154 = vmax.f32 %v5153, %v4179
        %5155 = vmax.xlane.f32.xlu0 %v5154
        %v5156 = vpop.xlane.xlu0 %5155
        %v5157 = vmax.f32 %v1878, %v2207
        %v5158 = vmax.f32 %v5157, %v2536
        %v5159 = vmax.f32 %v5158, %v2865
        %v5160 = vmax.f32 %v5159, %v3194
        %v5161 = vmax.f32 %v5160, %v3523
        %v5162 = vmax.f32 %v5161, %v3852
        %v5163 = vmax.f32 %v5162, %v4181
        %5164 = vmax.xlane.f32.xlu0 %v5163
        %v5165 = vpop.xlane.xlu0 %5164
        %v5166 = vmax.f32 %v1881, %v2210
        %v5167 = vmax.f32 %v5166, %v2539
        %v5168 = vmax.f32 %v5167, %v2868
        %v5169 = vmax.f32 %v5168, %v3197
        %v5170 = vmax.f32 %v5169, %v3526
        %v5171 = vmax.f32 %v5170, %v3855
        %v5172 = vmax.f32 %v5171, %v4184
        %5173 = vmax.xlane.f32.xlu0 %v5172
        %v5174 = vpop.xlane.xlu0 %5173
        %v5175 = vmax.f32 %v1883, %v2212
        %v5176 = vmax.f32 %v5175, %v2541
        %v5177 = vmax.f32 %v5176, %v2870
        %v5178 = vmax.f32 %v5177, %v3199
        %v5179 = vmax.f32 %v5178, %v3528
        %v5180 = vmax.f32 %v5179, %v3857
        %v5181 = vmax.f32 %v5180, %v4186
        %5182 = vmax.xlane.f32.xlu0 %v5181
        %v5183 = vpop.xlane.xlu0 %5182
        %v5184 = vmax.f32 %v1886, %v2215
        %v5185 = vmax.f32 %v5184, %v2544
        %v5186 = vmax.f32 %v5185, %v2873
        %v5187 = vmax.f32 %v5186, %v3202
        %v5188 = vmax.f32 %v5187, %v3531
        %v5189 = vmax.f32 %v5188, %v3860
        %v5190 = vmax.f32 %v5189, %v4189
        %5191 = vmax.xlane.f32.xlu0 %v5190
        %v5192 = vpop.xlane.xlu0 %5191
        %v5193 = vmax.f32 %v1888, %v2217
        %v5194 = vmax.f32 %v5193, %v2546
        %v5195 = vmax.f32 %v5194, %v2875
        %v5196 = vmax.f32 %v5195, %v3204
        %v5197 = vmax.f32 %v5196, %v3533
        %v5198 = vmax.f32 %v5197, %v3862
        %v5199 = vmax.f32 %v5198, %v4191
        %5200 = vmax.xlane.f32.xlu0 %v5199
        %v5201 = vpop.xlane.xlu0 %5200
        %v5202 = vmax.f32 %v1891, %v2220
        %v5203 = vmax.f32 %v5202, %v2549
        %v5204 = vmax.f32 %v5203, %v2878
        %v5205 = vmax.f32 %v5204, %v3207
        %v5206 = vmax.f32 %v5205, %v3536
        %v5207 = vmax.f32 %v5206, %v3865
        %v5208 = vmax.f32 %v5207, %v4194
        %5209 = vmax.xlane.f32.xlu0 %v5208
        %v5210 = vpop.xlane.xlu0 %5209
        %v5211 = vmax.f32 %v1893, %v2222
        %v5212 = vmax.f32 %v5211, %v2551
        %v5213 = vmax.f32 %v5212, %v2880
        %v5214 = vmax.f32 %v5213, %v3209
        %v5215 = vmax.f32 %v5214, %v3538
        %v5216 = vmax.f32 %v5215, %v3867
        %v5217 = vmax.f32 %v5216, %v4196
        %5218 = vmax.xlane.f32.xlu0 %v5217
        %v5219 = vpop.xlane.xlu0 %5218
        %v5220 = vmax.f32 %v1896, %v2225
        %v5221 = vmax.f32 %v5220, %v2554
        %v5222 = vmax.f32 %v5221, %v2883
        %v5223 = vmax.f32 %v5222, %v3212
        %v5224 = vmax.f32 %v5223, %v3541
        %v5225 = vmax.f32 %v5224, %v3870
        %v5226 = vmax.f32 %v5225, %v4199
        %5227 = vmax.xlane.f32.xlu0 %v5226
        %v5228 = vpop.xlane.xlu0 %5227
        %v5229 = vmax.f32 %v1898, %v2227
        %v5230 = vmax.f32 %v5229, %v2556
        %v5231 = vmax.f32 %v5230, %v2885
        %v5232 = vmax.f32 %v5231, %v3214
        %v5233 = vmax.f32 %v5232, %v3543
        %v5234 = vmax.f32 %v5233, %v3872
        %v5235 = vmax.f32 %v5234, %v4201
        %5236 = vmax.xlane.f32.xlu0 %v5235
        %v5237 = vpop.xlane.xlu0 %5236
        %v5238 = vmax.f32 %v1901, %v2230
        %v5239 = vmax.f32 %v5238, %v2559
        %v5240 = vmax.f32 %v5239, %v2888
        %v5241 = vmax.f32 %v5240, %v3217
        %v5242 = vmax.f32 %v5241, %v3546
        %v5243 = vmax.f32 %v5242, %v3875
        %v5244 = vmax.f32 %v5243, %v4204
        %5245 = vmax.xlane.f32.xlu0 %v5244
        %v5246 = vpop.xlane.xlu0 %5245
        %v5247 = vmax.f32 %v1903, %v2232
        %v5248 = vmax.f32 %v5247, %v2561
        %v5249 = vmax.f32 %v5248, %v2890
        %v5250 = vmax.f32 %v5249, %v3219
        %v5251 = vmax.f32 %v5250, %v3548
        %v5252 = vmax.f32 %v5251, %v3877
        %v5253 = vmax.f32 %v5252, %v4206
        %5254 = vmax.xlane.f32.xlu0 %v5253
        %v5255 = vpop.xlane.xlu0 %5254
        %v5256 = vmax.f32 %v1906, %v2235
        %v5257 = vmax.f32 %v5256, %v2564
        %v5258 = vmax.f32 %v5257, %v2893
        %v5259 = vmax.f32 %v5258, %v3222
        %v5260 = vmax.f32 %v5259, %v3551
        %v5261 = vmax.f32 %v5260, %v3880
        %v5262 = vmax.f32 %v5261, %v4209
        %5263 = vmax.xlane.f32.xlu0 %v5262
        %v5264 = vpop.xlane.xlu0 %5263
        %v5265 = vmax.f32 %v1908, %v2237
        %v5266 = vmax.f32 %v5265, %v2566
        %v5267 = vmax.f32 %v5266, %v2895
        %v5268 = vmax.f32 %v5267, %v3224
        %v5269 = vmax.f32 %v5268, %v3553
        %v5270 = vmax.f32 %v5269, %v3882
        %v5271 = vmax.f32 %v5270, %v4211
        %5272 = vmax.xlane.f32.xlu0 %v5271
        %v5273 = vpop.xlane.xlu0 %5272
        %v5274 = vmax.f32 %v1911, %v2240
        %v5275 = vmax.f32 %v5274, %v2569
        %v5276 = vmax.f32 %v5275, %v2898
        %v5277 = vmax.f32 %v5276, %v3227
        %v5278 = vmax.f32 %v5277, %v3556
        %v5279 = vmax.f32 %v5278, %v3885
        %v5280 = vmax.f32 %v5279, %v4214
        %5281 = vmax.xlane.f32.xlu0 %v5280
        %v5282 = vpop.xlane.xlu0 %5281
        %v5283 = vmax.f32 %v1913, %v2242
        %v5284 = vmax.f32 %v5283, %v2571
        %v5285 = vmax.f32 %v5284, %v2900
        %v5286 = vmax.f32 %v5285, %v3229
        %v5287 = vmax.f32 %v5286, %v3558
        %v5288 = vmax.f32 %v5287, %v3887
        %v5289 = vmax.f32 %v5288, %v4216
        %5290 = vmax.xlane.f32.xlu0 %v5289
        %v5291 = vpop.xlane.xlu0 %5290
        %v5292 = vmax.f32 %v1916, %v2245
        %v5293 = vmax.f32 %v5292, %v2574
        %v5294 = vmax.f32 %v5293, %v2903
        %v5295 = vmax.f32 %v5294, %v3232
        %v5296 = vmax.f32 %v5295, %v3561
        %v5297 = vmax.f32 %v5296, %v3890
        %v5298 = vmax.f32 %v5297, %v4219
        %5299 = vmax.xlane.f32.xlu0 %v5298
        %v5300 = vpop.xlane.xlu0 %5299
        %v5301 = vmax.f32 %v1918, %v2247
        %v5302 = vmax.f32 %v5301, %v2576
        %v5303 = vmax.f32 %v5302, %v2905
        %v5304 = vmax.f32 %v5303, %v3234
        %v5305 = vmax.f32 %v5304, %v3563
        %v5306 = vmax.f32 %v5305, %v3892
        %v5307 = vmax.f32 %v5306, %v4221
        %5308 = vmax.xlane.f32.xlu0 %v5307
        %v5309 = vpop.xlane.xlu0 %5308
        %v5310 = vmax.f32 %v1921, %v2250
        %v5311 = vmax.f32 %v5310, %v2579
        %v5312 = vmax.f32 %v5311, %v2908
        %v5313 = vmax.f32 %v5312, %v3237
        %v5314 = vmax.f32 %v5313, %v3566
        %v5315 = vmax.f32 %v5314, %v3895
        %v5316 = vmax.f32 %v5315, %v4224
        %5317 = vmax.xlane.f32.xlu0 %v5316
        %v5318 = vpop.xlane.xlu0 %5317
        %v5319 = vmax.f32 %v1923, %v2252
        %v5320 = vmax.f32 %v5319, %v2581
        %v5321 = vmax.f32 %v5320, %v2910
        %v5322 = vmax.f32 %v5321, %v3239
        %v5323 = vmax.f32 %v5322, %v3568
        %v5324 = vmax.f32 %v5323, %v3897
        %v5325 = vmax.f32 %v5324, %v4226
        %5326 = vmax.xlane.f32.xlu0 %v5325
        %v5327 = vpop.xlane.xlu0 %5326
        %v5328 = vmax.f32 %v1926, %v2255
        %v5329 = vmax.f32 %v5328, %v2584
        %v5330 = vmax.f32 %v5329, %v2913
        %v5331 = vmax.f32 %v5330, %v3242
        %v5332 = vmax.f32 %v5331, %v3571
        %v5333 = vmax.f32 %v5332, %v3900
        %v5334 = vmax.f32 %v5333, %v4229
        %5335 = vmax.xlane.f32.xlu0 %v5334
        %v5336 = vpop.xlane.xlu0 %5335
        %v5337 = vmax.f32 %v1928, %v2257
        %v5338 = vmax.f32 %v5337, %v2586
        %v5339 = vmax.f32 %v5338, %v2915
        %v5340 = vmax.f32 %v5339, %v3244
        %v5341 = vmax.f32 %v5340, %v3573
        %v5342 = vmax.f32 %v5341, %v3902
        %v5343 = vmax.f32 %v5342, %v4231
        %5344 = vmax.xlane.f32.xlu0 %v5343
        %v5345 = vpop.xlane.xlu0 %5344
        %v5346 = vmax.f32 %v1931, %v2260
        %v5347 = vmax.f32 %v5346, %v2589
        %v5348 = vmax.f32 %v5347, %v2918
        %v5349 = vmax.f32 %v5348, %v3247
        %v5350 = vmax.f32 %v5349, %v3576
        %v5351 = vmax.f32 %v5350, %v3905
        %v5352 = vmax.f32 %v5351, %v4234
        %5353 = vmax.xlane.f32.xlu0 %v5352
        %v5354 = vpop.xlane.xlu0 %5353
        %v5355 = vmax.f32 %v1933, %v2262
        %v5356 = vmax.f32 %v5355, %v2591
        %v5357 = vmax.f32 %v5356, %v2920
        %v5358 = vmax.f32 %v5357, %v3249
        %v5359 = vmax.f32 %v5358, %v3578
        %v5360 = vmax.f32 %v5359, %v3907
        %v5361 = vmax.f32 %v5360, %v4236
        %5362 = vmax.xlane.f32.xlu0 %v5361
        %v5363 = vpop.xlane.xlu0 %5362
        %v5364 = vmax.f32 %v1936, %v2265
        %v5365 = vmax.f32 %v5364, %v2594
        %v5366 = vmax.f32 %v5365, %v2923
        %v5367 = vmax.f32 %v5366, %v3252
        %v5368 = vmax.f32 %v5367, %v3581
        %v5369 = vmax.f32 %v5368, %v3910
        %v5370 = vmax.f32 %v5369, %v4239
        %5371 = vmax.xlane.f32.xlu0 %v5370
        %v5372 = vpop.xlane.xlu0 %5371
        %v5373 = vmax.f32 %v1938, %v2267
        %v5374 = vmax.f32 %v5373, %v2596
        %v5375 = vmax.f32 %v5374, %v2925
        %v5376 = vmax.f32 %v5375, %v3254
        %v5377 = vmax.f32 %v5376, %v3583
        %v5378 = vmax.f32 %v5377, %v3912
        %v5379 = vmax.f32 %v5378, %v4241
        %5380 = vmax.xlane.f32.xlu0 %v5379
        %v5381 = vpop.xlane.xlu0 %5380
        %v5382 = vmax.f32 %v1941, %v2270
        %v5383 = vmax.f32 %v5382, %v2599
        %v5384 = vmax.f32 %v5383, %v2928
        %v5385 = vmax.f32 %v5384, %v3257
        %v5386 = vmax.f32 %v5385, %v3586
        %v5387 = vmax.f32 %v5386, %v3915
        %v5388 = vmax.f32 %v5387, %v4244
        %5389 = vmax.xlane.f32.xlu0 %v5388
        %v5390 = vpop.xlane.xlu0 %5389
        %v5391 = vmax.f32 %v1943, %v2272
        %v5392 = vmax.f32 %v5391, %v2601
        %v5393 = vmax.f32 %v5392, %v2930
        %v5394 = vmax.f32 %v5393, %v3259
        %v5395 = vmax.f32 %v5394, %v3588
        %v5396 = vmax.f32 %v5395, %v3917
        %v5397 = vmax.f32 %v5396, %v4246
        %5398 = vmax.xlane.f32.xlu0 %v5397
        %v5399 = vpop.xlane.xlu0 %5398
        %v5400 = vsub.f32 %v1626, %v4256
        %v5401 = vsub.f32 %v1955, %v4256
        %v5402 = vsub.f32 %v2284, %v4256
        %v5403 = vsub.f32 %v2613, %v4256
        %v5404 = vsub.f32 %v2942, %v4256
        %v5405 = vsub.f32 %v3271, %v4256
        %v5406 = vsub.f32 %v3600, %v4256
        %v5407 = vsub.f32 %v3929, %v4256
        %v5408 = vsub.f32 %v1628, %v4265
        %v5409 = vsub.f32 %v1957, %v4265
        %v5410 = vsub.f32 %v2286, %v4265
        %v5411 = vsub.f32 %v2615, %v4265
        %v5412 = vsub.f32 %v2944, %v4265
        %v5413 = vsub.f32 %v3273, %v4265
        %v5414 = vsub.f32 %v3602, %v4265
        %v5415 = vsub.f32 %v3931, %v4265
        %v5416 = vsub.f32 %v1631, %v4274
        %v5417 = vsub.f32 %v1960, %v4274
        %v5418 = vsub.f32 %v2289, %v4274
        %v5419 = vsub.f32 %v2618, %v4274
        %v5420 = vsub.f32 %v2947, %v4274
        %v5421 = vsub.f32 %v3276, %v4274
        %v5422 = vsub.f32 %v3605, %v4274
        %v5423 = vsub.f32 %v3934, %v4274
        %v5424 = vsub.f32 %v1633, %v4283
        %v5425 = vsub.f32 %v1962, %v4283
        %v5426 = vsub.f32 %v2291, %v4283
        %v5427 = vsub.f32 %v2620, %v4283
        %v5428 = vsub.f32 %v2949, %v4283
        %v5429 = vsub.f32 %v3278, %v4283
        %v5430 = vsub.f32 %v3607, %v4283
        %v5431 = vsub.f32 %v3936, %v4283
        %v5432 = vsub.f32 %v1636, %v4292
        %v5433 = vsub.f32 %v1965, %v4292
        %v5434 = vsub.f32 %v2294, %v4292
        %v5435 = vsub.f32 %v2623, %v4292
        %v5436 = vsub.f32 %v2952, %v4292
        %v5437 = vsub.f32 %v3281, %v4292
        %v5438 = vsub.f32 %v3610, %v4292
        %v5439 = vsub.f32 %v3939, %v4292
        %v5440 = vsub.f32 %v1638, %v4301
        %v5441 = vsub.f32 %v1967, %v4301
        %v5442 = vsub.f32 %v2296, %v4301
        %v5443 = vsub.f32 %v2625, %v4301
        %v5444 = vsub.f32 %v2954, %v4301
        %v5445 = vsub.f32 %v3283, %v4301
        %v5446 = vsub.f32 %v3612, %v4301
        %v5447 = vsub.f32 %v3941, %v4301
        %v5448 = vsub.f32 %v1641, %v4310
        %v5449 = vsub.f32 %v1970, %v4310
        %v5450 = vsub.f32 %v2299, %v4310
        %v5451 = vsub.f32 %v2628, %v4310
        %v5452 = vsub.f32 %v2957, %v4310
        %v5453 = vsub.f32 %v3286, %v4310
        %v5454 = vsub.f32 %v3615, %v4310
        %v5455 = vsub.f32 %v3944, %v4310
        %v5456 = vsub.f32 %v1643, %v4319
        %v5457 = vsub.f32 %v1972, %v4319
        %v5458 = vsub.f32 %v2301, %v4319
        %v5459 = vsub.f32 %v2630, %v4319
        %v5460 = vsub.f32 %v2959, %v4319
        %v5461 = vsub.f32 %v3288, %v4319
        %v5462 = vsub.f32 %v3617, %v4319
        %v5463 = vsub.f32 %v3946, %v4319
        %v5464 = vsub.f32 %v1646, %v4328
        %v5465 = vsub.f32 %v1975, %v4328
        %v5466 = vsub.f32 %v2304, %v4328
        %v5467 = vsub.f32 %v2633, %v4328
        %v5468 = vsub.f32 %v2962, %v4328
        %v5469 = vsub.f32 %v3291, %v4328
        %v5470 = vsub.f32 %v3620, %v4328
        %v5471 = vsub.f32 %v3949, %v4328
        %v5472 = vsub.f32 %v1648, %v4337
        %v5473 = vsub.f32 %v1977, %v4337
        %v5474 = vsub.f32 %v2306, %v4337
        %v5475 = vsub.f32 %v2635, %v4337
        %v5476 = vsub.f32 %v2964, %v4337
        %v5477 = vsub.f32 %v3293, %v4337
        %v5478 = vsub.f32 %v3622, %v4337
        %v5479 = vsub.f32 %v3951, %v4337
        %v5480 = vsub.f32 %v1651, %v4346
        %v5481 = vsub.f32 %v1980, %v4346
        %v5482 = vsub.f32 %v2309, %v4346
        %v5483 = vsub.f32 %v2638, %v4346
        %v5484 = vsub.f32 %v2967, %v4346
        %v5485 = vsub.f32 %v3296, %v4346
        %v5486 = vsub.f32 %v3625, %v4346
        %v5487 = vsub.f32 %v3954, %v4346
        %v5488 = vsub.f32 %v1653, %v4355
        %v5489 = vsub.f32 %v1982, %v4355
        %v5490 = vsub.f32 %v2311, %v4355
        %v5491 = vsub.f32 %v2640, %v4355
        %v5492 = vsub.f32 %v2969, %v4355
        %v5493 = vsub.f32 %v3298, %v4355
        %v5494 = vsub.f32 %v3627, %v4355
        %v5495 = vsub.f32 %v3956, %v4355
        %v5496 = vsub.f32 %v1656, %v4364
        %v5497 = vsub.f32 %v1985, %v4364
        %v5498 = vsub.f32 %v2314, %v4364
        %v5499 = vsub.f32 %v2643, %v4364
        %v5500 = vsub.f32 %v2972, %v4364
        %v5501 = vsub.f32 %v3301, %v4364
        %v5502 = vsub.f32 %v3630, %v4364
        %v5503 = vsub.f32 %v3959, %v4364
        %v5504 = vsub.f32 %v1658, %v4373
        %v5505 = vsub.f32 %v1987, %v4373
        %v5506 = vsub.f32 %v2316, %v4373
        %v5507 = vsub.f32 %v2645, %v4373
        %v5508 = vsub.f32 %v2974, %v4373
        %v5509 = vsub.f32 %v3303, %v4373
        %v5510 = vsub.f32 %v3632, %v4373
        %v5511 = vsub.f32 %v3961, %v4373
        %v5512 = vsub.f32 %v1661, %v4382
        %v5513 = vsub.f32 %v1990, %v4382
        %v5514 = vsub.f32 %v2319, %v4382
        %v5515 = vsub.f32 %v2648, %v4382
        %v5516 = vsub.f32 %v2977, %v4382
        %v5517 = vsub.f32 %v3306, %v4382
        %v5518 = vsub.f32 %v3635, %v4382
        %v5519 = vsub.f32 %v3964, %v4382
        %v5520 = vsub.f32 %v1663, %v4391
        %v5521 = vsub.f32 %v1992, %v4391
        %v5522 = vsub.f32 %v2321, %v4391
        %v5523 = vsub.f32 %v2650, %v4391
        %v5524 = vsub.f32 %v2979, %v4391
        %v5525 = vsub.f32 %v3308, %v4391
        %v5526 = vsub.f32 %v3637, %v4391
        %v5527 = vsub.f32 %v3966, %v4391
        %v5528 = vsub.f32 %v1666, %v4400
        %v5529 = vsub.f32 %v1995, %v4400
        %v5530 = vsub.f32 %v2324, %v4400
        %v5531 = vsub.f32 %v2653, %v4400
        %v5532 = vsub.f32 %v2982, %v4400
        %v5533 = vsub.f32 %v3311, %v4400
        %v5534 = vsub.f32 %v3640, %v4400
        %v5535 = vsub.f32 %v3969, %v4400
        %v5536 = vsub.f32 %v1668, %v4409
        %v5537 = vsub.f32 %v1997, %v4409
        %v5538 = vsub.f32 %v2326, %v4409
        %v5539 = vsub.f32 %v2655, %v4409
        %v5540 = vsub.f32 %v2984, %v4409
        %v5541 = vsub.f32 %v3313, %v4409
        %v5542 = vsub.f32 %v3642, %v4409
        %v5543 = vsub.f32 %v3971, %v4409
        %v5544 = vsub.f32 %v1671, %v4418
        %v5545 = vsub.f32 %v2000, %v4418
        %v5546 = vsub.f32 %v2329, %v4418
        %v5547 = vsub.f32 %v2658, %v4418
        %v5548 = vsub.f32 %v2987, %v4418
        %v5549 = vsub.f32 %v3316, %v4418
        %v5550 = vsub.f32 %v3645, %v4418
        %v5551 = vsub.f32 %v3974, %v4418
        %v5552 = vsub.f32 %v1673, %v4427
        %v5553 = vsub.f32 %v2002, %v4427
        %v5554 = vsub.f32 %v2331, %v4427
        %v5555 = vsub.f32 %v2660, %v4427
        %v5556 = vsub.f32 %v2989, %v4427
        %v5557 = vsub.f32 %v3318, %v4427
        %v5558 = vsub.f32 %v3647, %v4427
        %v5559 = vsub.f32 %v3976, %v4427
        %v5560 = vsub.f32 %v1676, %v4436
        %v5561 = vsub.f32 %v2005, %v4436
        %v5562 = vsub.f32 %v2334, %v4436
        %v5563 = vsub.f32 %v2663, %v4436
        %v5564 = vsub.f32 %v2992, %v4436
        %v5565 = vsub.f32 %v3321, %v4436
        %v5566 = vsub.f32 %v3650, %v4436
        %v5567 = vsub.f32 %v3979, %v4436
        %v5568 = vsub.f32 %v1678, %v4445
        %v5569 = vsub.f32 %v2007, %v4445
        %v5570 = vsub.f32 %v2336, %v4445
        %v5571 = vsub.f32 %v2665, %v4445
        %v5572 = vsub.f32 %v2994, %v4445
        %v5573 = vsub.f32 %v3323, %v4445
        %v5574 = vsub.f32 %v3652, %v4445
        %v5575 = vsub.f32 %v3981, %v4445
        %v5576 = vsub.f32 %v1681, %v4454
        %v5577 = vsub.f32 %v2010, %v4454
        %v5578 = vsub.f32 %v2339, %v4454
        %v5579 = vsub.f32 %v2668, %v4454
        %v5580 = vsub.f32 %v2997, %v4454
        %v5581 = vsub.f32 %v3326, %v4454
        %v5582 = vsub.f32 %v3655, %v4454
        %v5583 = vsub.f32 %v3984, %v4454
        %v5584 = vsub.f32 %v1683, %v4463
        %v5585 = vsub.f32 %v2012, %v4463
        %v5586 = vsub.f32 %v2341, %v4463
        %v5587 = vsub.f32 %v2670, %v4463
        %v5588 = vsub.f32 %v2999, %v4463
        %v5589 = vsub.f32 %v3328, %v4463
        %v5590 = vsub.f32 %v3657, %v4463
        %v5591 = vsub.f32 %v3986, %v4463
        %v5592 = vsub.f32 %v1686, %v4472
        %v5593 = vsub.f32 %v2015, %v4472
        %v5594 = vsub.f32 %v2344, %v4472
        %v5595 = vsub.f32 %v2673, %v4472
        %v5596 = vsub.f32 %v3002, %v4472
        %v5597 = vsub.f32 %v3331, %v4472
        %v5598 = vsub.f32 %v3660, %v4472
        %v5599 = vsub.f32 %v3989, %v4472
        %v5600 = vsub.f32 %v1688, %v4481
        %v5601 = vsub.f32 %v2017, %v4481
        %v5602 = vsub.f32 %v2346, %v4481
        %v5603 = vsub.f32 %v2675, %v4481
        %v5604 = vsub.f32 %v3004, %v4481
        %v5605 = vsub.f32 %v3333, %v4481
        %v5606 = vsub.f32 %v3662, %v4481
        %v5607 = vsub.f32 %v3991, %v4481
        %v5608 = vsub.f32 %v1691, %v4490
        %v5609 = vsub.f32 %v2020, %v4490
        %v5610 = vsub.f32 %v2349, %v4490
        %v5611 = vsub.f32 %v2678, %v4490
        %v5612 = vsub.f32 %v3007, %v4490
        %v5613 = vsub.f32 %v3336, %v4490
        %v5614 = vsub.f32 %v3665, %v4490
        %v5615 = vsub.f32 %v3994, %v4490
        %v5616 = vsub.f32 %v1693, %v4499
        %v5617 = vsub.f32 %v2022, %v4499
        %v5618 = vsub.f32 %v2351, %v4499
        %v5619 = vsub.f32 %v2680, %v4499
        %v5620 = vsub.f32 %v3009, %v4499
        %v5621 = vsub.f32 %v3338, %v4499
        %v5622 = vsub.f32 %v3667, %v4499
        %v5623 = vsub.f32 %v3996, %v4499
        %v5624 = vsub.f32 %v1696, %v4508
        %v5625 = vsub.f32 %v2025, %v4508
        %v5626 = vsub.f32 %v2354, %v4508
        %v5627 = vsub.f32 %v2683, %v4508
        %v5628 = vsub.f32 %v3012, %v4508
        %v5629 = vsub.f32 %v3341, %v4508
        %v5630 = vsub.f32 %v3670, %v4508
        %v5631 = vsub.f32 %v3999, %v4508
        %v5632 = vsub.f32 %v1698, %v4517
        %v5633 = vsub.f32 %v2027, %v4517
        %v5634 = vsub.f32 %v2356, %v4517
        %v5635 = vsub.f32 %v2685, %v4517
        %v5636 = vsub.f32 %v3014, %v4517
        %v5637 = vsub.f32 %v3343, %v4517
        %v5638 = vsub.f32 %v3672, %v4517
        %v5639 = vsub.f32 %v4001, %v4517
        %v5640 = vsub.f32 %v1701, %v4526
        %v5641 = vsub.f32 %v2030, %v4526
        %v5642 = vsub.f32 %v2359, %v4526
        %v5643 = vsub.f32 %v2688, %v4526
        %v5644 = vsub.f32 %v3017, %v4526
        %v5645 = vsub.f32 %v3346, %v4526
        %v5646 = vsub.f32 %v3675, %v4526
        %v5647 = vsub.f32 %v4004, %v4526
        %v5648 = vsub.f32 %v1703, %v4535
        %v5649 = vsub.f32 %v2032, %v4535
        %v5650 = vsub.f32 %v2361, %v4535
        %v5651 = vsub.f32 %v2690, %v4535
        %v5652 = vsub.f32 %v3019, %v4535
        %v5653 = vsub.f32 %v3348, %v4535
        %v5654 = vsub.f32 %v3677, %v4535
        %v5655 = vsub.f32 %v4006, %v4535
        %v5656 = vsub.f32 %v1706, %v4544
        %v5657 = vsub.f32 %v2035, %v4544
        %v5658 = vsub.f32 %v2364, %v4544
        %v5659 = vsub.f32 %v2693, %v4544
        %v5660 = vsub.f32 %v3022, %v4544
        %v5661 = vsub.f32 %v3351, %v4544
        %v5662 = vsub.f32 %v3680, %v4544
        %v5663 = vsub.f32 %v4009, %v4544
        %v5664 = vsub.f32 %v1708, %v4553
        %v5665 = vsub.f32 %v2037, %v4553
        %v5666 = vsub.f32 %v2366, %v4553
        %v5667 = vsub.f32 %v2695, %v4553
        %v5668 = vsub.f32 %v3024, %v4553
        %v5669 = vsub.f32 %v3353, %v4553
        %v5670 = vsub.f32 %v3682, %v4553
        %v5671 = vsub.f32 %v4011, %v4553
        %v5672 = vsub.f32 %v1711, %v4562
        %v5673 = vsub.f32 %v2040, %v4562
        %v5674 = vsub.f32 %v2369, %v4562
        %v5675 = vsub.f32 %v2698, %v4562
        %v5676 = vsub.f32 %v3027, %v4562
        %v5677 = vsub.f32 %v3356, %v4562
        %v5678 = vsub.f32 %v3685, %v4562
        %v5679 = vsub.f32 %v4014, %v4562
        %v5680 = vsub.f32 %v1713, %v4571
        %v5681 = vsub.f32 %v2042, %v4571
        %v5682 = vsub.f32 %v2371, %v4571
        %v5683 = vsub.f32 %v2700, %v4571
        %v5684 = vsub.f32 %v3029, %v4571
        %v5685 = vsub.f32 %v3358, %v4571
        %v5686 = vsub.f32 %v3687, %v4571
        %v5687 = vsub.f32 %v4016, %v4571
        %v5688 = vsub.f32 %v1716, %v4580
        %v5689 = vsub.f32 %v2045, %v4580
        %v5690 = vsub.f32 %v2374, %v4580
        %v5691 = vsub.f32 %v2703, %v4580
        %v5692 = vsub.f32 %v3032, %v4580
        %v5693 = vsub.f32 %v3361, %v4580
        %v5694 = vsub.f32 %v3690, %v4580
        %v5695 = vsub.f32 %v4019, %v4580
        %v5696 = vsub.f32 %v1718, %v4589
        %v5697 = vsub.f32 %v2047, %v4589
        %v5698 = vsub.f32 %v2376, %v4589
        %v5699 = vsub.f32 %v2705, %v4589
        %v5700 = vsub.f32 %v3034, %v4589
        %v5701 = vsub.f32 %v3363, %v4589
        %v5702 = vsub.f32 %v3692, %v4589
        %v5703 = vsub.f32 %v4021, %v4589
        %v5704 = vsub.f32 %v1721, %v4598
        %v5705 = vsub.f32 %v2050, %v4598
        %v5706 = vsub.f32 %v2379, %v4598
        %v5707 = vsub.f32 %v2708, %v4598
        %v5708 = vsub.f32 %v3037, %v4598
        %v5709 = vsub.f32 %v3366, %v4598
        %v5710 = vsub.f32 %v3695, %v4598
        %v5711 = vsub.f32 %v4024, %v4598
        %v5712 = vsub.f32 %v1723, %v4607
        %v5713 = vsub.f32 %v2052, %v4607
        %v5714 = vsub.f32 %v2381, %v4607
        %v5715 = vsub.f32 %v2710, %v4607
        %v5716 = vsub.f32 %v3039, %v4607
        %v5717 = vsub.f32 %v3368, %v4607
        %v5718 = vsub.f32 %v3697, %v4607
        %v5719 = vsub.f32 %v4026, %v4607
        %v5720 = vsub.f32 %v1726, %v4616
        %v5721 = vsub.f32 %v2055, %v4616
        %v5722 = vsub.f32 %v2384, %v4616
        %v5723 = vsub.f32 %v2713, %v4616
        %v5724 = vsub.f32 %v3042, %v4616
        %v5725 = vsub.f32 %v3371, %v4616
        %v5726 = vsub.f32 %v3700, %v4616
        %v5727 = vsub.f32 %v4029, %v4616
        %v5728 = vsub.f32 %v1728, %v4625
        %v5729 = vsub.f32 %v2057, %v4625
        %v5730 = vsub.f32 %v2386, %v4625
        %v5731 = vsub.f32 %v2715, %v4625
        %v5732 = vsub.f32 %v3044, %v4625
        %v5733 = vsub.f32 %v3373, %v4625
        %v5734 = vsub.f32 %v3702, %v4625
        %v5735 = vsub.f32 %v4031, %v4625
        %v5736 = vsub.f32 %v1731, %v4634
        %v5737 = vsub.f32 %v2060, %v4634
        %v5738 = vsub.f32 %v2389, %v4634
        %v5739 = vsub.f32 %v2718, %v4634
        %v5740 = vsub.f32 %v3047, %v4634
        %v5741 = vsub.f32 %v3376, %v4634
        %v5742 = vsub.f32 %v3705, %v4634
        %v5743 = vsub.f32 %v4034, %v4634
        %v5744 = vsub.f32 %v1733, %v4643
        %v5745 = vsub.f32 %v2062, %v4643
        %v5746 = vsub.f32 %v2391, %v4643
        %v5747 = vsub.f32 %v2720, %v4643
        %v5748 = vsub.f32 %v3049, %v4643
        %v5749 = vsub.f32 %v3378, %v4643
        %v5750 = vsub.f32 %v3707, %v4643
        %v5751 = vsub.f32 %v4036, %v4643
        %v5752 = vsub.f32 %v1736, %v4652
        %v5753 = vsub.f32 %v2065, %v4652
        %v5754 = vsub.f32 %v2394, %v4652
        %v5755 = vsub.f32 %v2723, %v4652
        %v5756 = vsub.f32 %v3052, %v4652
        %v5757 = vsub.f32 %v3381, %v4652
        %v5758 = vsub.f32 %v3710, %v4652
        %v5759 = vsub.f32 %v4039, %v4652
        %v5760 = vsub.f32 %v1738, %v4661
        %v5761 = vsub.f32 %v2067, %v4661
        %v5762 = vsub.f32 %v2396, %v4661
        %v5763 = vsub.f32 %v2725, %v4661
        %v5764 = vsub.f32 %v3054, %v4661
        %v5765 = vsub.f32 %v3383, %v4661
        %v5766 = vsub.f32 %v3712, %v4661
        %v5767 = vsub.f32 %v4041, %v4661
        %v5768 = vsub.f32 %v1741, %v4670
        %v5769 = vsub.f32 %v2070, %v4670
        %v5770 = vsub.f32 %v2399, %v4670
        %v5771 = vsub.f32 %v2728, %v4670
        %v5772 = vsub.f32 %v3057, %v4670
        %v5773 = vsub.f32 %v3386, %v4670
        %v5774 = vsub.f32 %v3715, %v4670
        %v5775 = vsub.f32 %v4044, %v4670
        %v5776 = vsub.f32 %v1743, %v4679
        %v5777 = vsub.f32 %v2072, %v4679
        %v5778 = vsub.f32 %v2401, %v4679
        %v5779 = vsub.f32 %v2730, %v4679
        %v5780 = vsub.f32 %v3059, %v4679
        %v5781 = vsub.f32 %v3388, %v4679
        %v5782 = vsub.f32 %v3717, %v4679
        %v5783 = vsub.f32 %v4046, %v4679
        %v5784 = vsub.f32 %v1746, %v4688
        %v5785 = vsub.f32 %v2075, %v4688
        %v5786 = vsub.f32 %v2404, %v4688
        %v5787 = vsub.f32 %v2733, %v4688
        %v5788 = vsub.f32 %v3062, %v4688
        %v5789 = vsub.f32 %v3391, %v4688
        %v5790 = vsub.f32 %v3720, %v4688
        %v5791 = vsub.f32 %v4049, %v4688
        %v5792 = vsub.f32 %v1748, %v4697
        %v5793 = vsub.f32 %v2077, %v4697
        %v5794 = vsub.f32 %v2406, %v4697
        %v5795 = vsub.f32 %v2735, %v4697
        %v5796 = vsub.f32 %v3064, %v4697
        %v5797 = vsub.f32 %v3393, %v4697
        %v5798 = vsub.f32 %v3722, %v4697
        %v5799 = vsub.f32 %v4051, %v4697
        %v5800 = vsub.f32 %v1751, %v4706
        %v5801 = vsub.f32 %v2080, %v4706
        %v5802 = vsub.f32 %v2409, %v4706
        %v5803 = vsub.f32 %v2738, %v4706
        %v5804 = vsub.f32 %v3067, %v4706
        %v5805 = vsub.f32 %v3396, %v4706
        %v5806 = vsub.f32 %v3725, %v4706
        %v5807 = vsub.f32 %v4054, %v4706
        %v5808 = vsub.f32 %v1753, %v4715
        %v5809 = vsub.f32 %v2082, %v4715
        %v5810 = vsub.f32 %v2411, %v4715
        %v5811 = vsub.f32 %v2740, %v4715
        %v5812 = vsub.f32 %v3069, %v4715
        %v5813 = vsub.f32 %v3398, %v4715
        %v5814 = vsub.f32 %v3727, %v4715
        %v5815 = vsub.f32 %v4056, %v4715
        %v5816 = vsub.f32 %v1756, %v4724
        %v5817 = vsub.f32 %v2085, %v4724
        %v5818 = vsub.f32 %v2414, %v4724
        %v5819 = vsub.f32 %v2743, %v4724
        %v5820 = vsub.f32 %v3072, %v4724
        %v5821 = vsub.f32 %v3401, %v4724
        %v5822 = vsub.f32 %v3730, %v4724
        %v5823 = vsub.f32 %v4059, %v4724
        %v5824 = vsub.f32 %v1758, %v4733
        %v5825 = vsub.f32 %v2087, %v4733
        %v5826 = vsub.f32 %v2416, %v4733
        %v5827 = vsub.f32 %v2745, %v4733
        %v5828 = vsub.f32 %v3074, %v4733
        %v5829 = vsub.f32 %v3403, %v4733
        %v5830 = vsub.f32 %v3732, %v4733
        %v5831 = vsub.f32 %v4061, %v4733
        %v5832 = vsub.f32 %v1761, %v4742
        %v5833 = vsub.f32 %v2090, %v4742
        %v5834 = vsub.f32 %v2419, %v4742
        %v5835 = vsub.f32 %v2748, %v4742
        %v5836 = vsub.f32 %v3077, %v4742
        %v5837 = vsub.f32 %v3406, %v4742
        %v5838 = vsub.f32 %v3735, %v4742
        %v5839 = vsub.f32 %v4064, %v4742
        %v5840 = vsub.f32 %v1763, %v4751
        %v5841 = vsub.f32 %v2092, %v4751
        %v5842 = vsub.f32 %v2421, %v4751
        %v5843 = vsub.f32 %v2750, %v4751
        %v5844 = vsub.f32 %v3079, %v4751
        %v5845 = vsub.f32 %v3408, %v4751
        %v5846 = vsub.f32 %v3737, %v4751
        %v5847 = vsub.f32 %v4066, %v4751
        %v5848 = vsub.f32 %v1766, %v4760
        %v5849 = vsub.f32 %v2095, %v4760
        %v5850 = vsub.f32 %v2424, %v4760
        %v5851 = vsub.f32 %v2753, %v4760
        %v5852 = vsub.f32 %v3082, %v4760
        %v5853 = vsub.f32 %v3411, %v4760
        %v5854 = vsub.f32 %v3740, %v4760
        %v5855 = vsub.f32 %v4069, %v4760
        %v5856 = vsub.f32 %v1768, %v4769
        %v5857 = vsub.f32 %v2097, %v4769
        %v5858 = vsub.f32 %v2426, %v4769
        %v5859 = vsub.f32 %v2755, %v4769
        %v5860 = vsub.f32 %v3084, %v4769
        %v5861 = vsub.f32 %v3413, %v4769
        %v5862 = vsub.f32 %v3742, %v4769
        %v5863 = vsub.f32 %v4071, %v4769
        %v5864 = vsub.f32 %v1771, %v4778
        %v5865 = vsub.f32 %v2100, %v4778
        %v5866 = vsub.f32 %v2429, %v4778
        %v5867 = vsub.f32 %v2758, %v4778
        %v5868 = vsub.f32 %v3087, %v4778
        %v5869 = vsub.f32 %v3416, %v4778
        %v5870 = vsub.f32 %v3745, %v4778
        %v5871 = vsub.f32 %v4074, %v4778
        %v5872 = vsub.f32 %v1773, %v4787
        %v5873 = vsub.f32 %v2102, %v4787
        %v5874 = vsub.f32 %v2431, %v4787
        %v5875 = vsub.f32 %v2760, %v4787
        %v5876 = vsub.f32 %v3089, %v4787
        %v5877 = vsub.f32 %v3418, %v4787
        %v5878 = vsub.f32 %v3747, %v4787
        %v5879 = vsub.f32 %v4076, %v4787
        %v5880 = vsub.f32 %v1776, %v4796
        %v5881 = vsub.f32 %v2105, %v4796
        %v5882 = vsub.f32 %v2434, %v4796
        %v5883 = vsub.f32 %v2763, %v4796
        %v5884 = vsub.f32 %v3092, %v4796
        %v5885 = vsub.f32 %v3421, %v4796
        %v5886 = vsub.f32 %v3750, %v4796
        %v5887 = vsub.f32 %v4079, %v4796
        %v5888 = vsub.f32 %v1778, %v4805
        %v5889 = vsub.f32 %v2107, %v4805
        %v5890 = vsub.f32 %v2436, %v4805
        %v5891 = vsub.f32 %v2765, %v4805
        %v5892 = vsub.f32 %v3094, %v4805
        %v5893 = vsub.f32 %v3423, %v4805
        %v5894 = vsub.f32 %v3752, %v4805
        %v5895 = vsub.f32 %v4081, %v4805
        %v5896 = vsub.f32 %v1781, %v4814
        %v5897 = vsub.f32 %v2110, %v4814
        %v5898 = vsub.f32 %v2439, %v4814
        %v5899 = vsub.f32 %v2768, %v4814
        %v5900 = vsub.f32 %v3097, %v4814
        %v5901 = vsub.f32 %v3426, %v4814
        %v5902 = vsub.f32 %v3755, %v4814
        %v5903 = vsub.f32 %v4084, %v4814
        %v5904 = vsub.f32 %v1783, %v4823
        %v5905 = vsub.f32 %v2112, %v4823
        %v5906 = vsub.f32 %v2441, %v4823
        %v5907 = vsub.f32 %v2770, %v4823
        %v5908 = vsub.f32 %v3099, %v4823
        %v5909 = vsub.f32 %v3428, %v4823
        %v5910 = vsub.f32 %v3757, %v4823
        %v5911 = vsub.f32 %v4086, %v4823
        %v5912 = vsub.f32 %v1786, %v4832
        %v5913 = vsub.f32 %v2115, %v4832
        %v5914 = vsub.f32 %v2444, %v4832
        %v5915 = vsub.f32 %v2773, %v4832
        %v5916 = vsub.f32 %v3102, %v4832
        %v5917 = vsub.f32 %v3431, %v4832
        %v5918 = vsub.f32 %v3760, %v4832
        %v5919 = vsub.f32 %v4089, %v4832
        %v5920 = vsub.f32 %v1788, %v4841
        %v5921 = vsub.f32 %v2117, %v4841
        %v5922 = vsub.f32 %v2446, %v4841
        %v5923 = vsub.f32 %v2775, %v4841
        %v5924 = vsub.f32 %v3104, %v4841
        %v5925 = vsub.f32 %v3433, %v4841
        %v5926 = vsub.f32 %v3762, %v4841
        %v5927 = vsub.f32 %v4091, %v4841
        %v5928 = vsub.f32 %v1791, %v4850
        %v5929 = vsub.f32 %v2120, %v4850
        %v5930 = vsub.f32 %v2449, %v4850
        %v5931 = vsub.f32 %v2778, %v4850
        %v5932 = vsub.f32 %v3107, %v4850
        %v5933 = vsub.f32 %v3436, %v4850
        %v5934 = vsub.f32 %v3765, %v4850
        %v5935 = vsub.f32 %v4094, %v4850
        %v5936 = vsub.f32 %v1793, %v4859
        %v5937 = vsub.f32 %v2122, %v4859
        %v5938 = vsub.f32 %v2451, %v4859
        %v5939 = vsub.f32 %v2780, %v4859
        %v5940 = vsub.f32 %v3109, %v4859
        %v5941 = vsub.f32 %v3438, %v4859
        %v5942 = vsub.f32 %v3767, %v4859
        %v5943 = vsub.f32 %v4096, %v4859
        %v5944 = vsub.f32 %v1796, %v4868
        %v5945 = vsub.f32 %v2125, %v4868
        %v5946 = vsub.f32 %v2454, %v4868
        %v5947 = vsub.f32 %v2783, %v4868
        %v5948 = vsub.f32 %v3112, %v4868
        %v5949 = vsub.f32 %v3441, %v4868
        %v5950 = vsub.f32 %v3770, %v4868
        %v5951 = vsub.f32 %v4099, %v4868
        %v5952 = vsub.f32 %v1798, %v4877
        %v5953 = vsub.f32 %v2127, %v4877
        %v5954 = vsub.f32 %v2456, %v4877
        %v5955 = vsub.f32 %v2785, %v4877
        %v5956 = vsub.f32 %v3114, %v4877
        %v5957 = vsub.f32 %v3443, %v4877
        %v5958 = vsub.f32 %v3772, %v4877
        %v5959 = vsub.f32 %v4101, %v4877
        %v5960 = vsub.f32 %v1801, %v4886
        %v5961 = vsub.f32 %v2130, %v4886
        %v5962 = vsub.f32 %v2459, %v4886
        %v5963 = vsub.f32 %v2788, %v4886
        %v5964 = vsub.f32 %v3117, %v4886
        %v5965 = vsub.f32 %v3446, %v4886
        %v5966 = vsub.f32 %v3775, %v4886
        %v5967 = vsub.f32 %v4104, %v4886
        %v5968 = vsub.f32 %v1803, %v4895
        %v5969 = vsub.f32 %v2132, %v4895
        %v5970 = vsub.f32 %v2461, %v4895
        %v5971 = vsub.f32 %v2790, %v4895
        %v5972 = vsub.f32 %v3119, %v4895
        %v5973 = vsub.f32 %v3448, %v4895
        %v5974 = vsub.f32 %v3777, %v4895
        %v5975 = vsub.f32 %v4106, %v4895
        %v5976 = vsub.f32 %v1806, %v4904
        %v5977 = vsub.f32 %v2135, %v4904
        %v5978 = vsub.f32 %v2464, %v4904
        %v5979 = vsub.f32 %v2793, %v4904
        %v5980 = vsub.f32 %v3122, %v4904
        %v5981 = vsub.f32 %v3451, %v4904
        %v5982 = vsub.f32 %v3780, %v4904
        %v5983 = vsub.f32 %v4109, %v4904
        %v5984 = vsub.f32 %v1808, %v4913
        %v5985 = vsub.f32 %v2137, %v4913
        %v5986 = vsub.f32 %v2466, %v4913
        %v5987 = vsub.f32 %v2795, %v4913
        %v5988 = vsub.f32 %v3124, %v4913
        %v5989 = vsub.f32 %v3453, %v4913
        %v5990 = vsub.f32 %v3782, %v4913
        %v5991 = vsub.f32 %v4111, %v4913
        %v5992 = vsub.f32 %v1811, %v4922
        %v5993 = vsub.f32 %v2140, %v4922
        %v5994 = vsub.f32 %v2469, %v4922
        %v5995 = vsub.f32 %v2798, %v4922
        %v5996 = vsub.f32 %v3127, %v4922
        %v5997 = vsub.f32 %v3456, %v4922
        %v5998 = vsub.f32 %v3785, %v4922
        %v5999 = vsub.f32 %v4114, %v4922
        %v6000 = vsub.f32 %v1813, %v4931
        %v6001 = vsub.f32 %v2142, %v4931
        %v6002 = vsub.f32 %v2471, %v4931
        %v6003 = vsub.f32 %v2800, %v4931
        %v6004 = vsub.f32 %v3129, %v4931
        %v6005 = vsub.f32 %v3458, %v4931
        %v6006 = vsub.f32 %v3787, %v4931
        %v6007 = vsub.f32 %v4116, %v4931
        %v6008 = vsub.f32 %v1816, %v4940
        %v6009 = vsub.f32 %v2145, %v4940
        %v6010 = vsub.f32 %v2474, %v4940
        %v6011 = vsub.f32 %v2803, %v4940
        %v6012 = vsub.f32 %v3132, %v4940
        %v6013 = vsub.f32 %v3461, %v4940
        %v6014 = vsub.f32 %v3790, %v4940
        %v6015 = vsub.f32 %v4119, %v4940
        %v6016 = vsub.f32 %v1818, %v4949
        %v6017 = vsub.f32 %v2147, %v4949
        %v6018 = vsub.f32 %v2476, %v4949
        %v6019 = vsub.f32 %v2805, %v4949
        %v6020 = vsub.f32 %v3134, %v4949
        %v6021 = vsub.f32 %v3463, %v4949
        %v6022 = vsub.f32 %v3792, %v4949
        %v6023 = vsub.f32 %v4121, %v4949
        %v6024 = vsub.f32 %v1821, %v4958
        %v6025 = vsub.f32 %v2150, %v4958
        %v6026 = vsub.f32 %v2479, %v4958
        %v6027 = vsub.f32 %v2808, %v4958
        %v6028 = vsub.f32 %v3137, %v4958
        %v6029 = vsub.f32 %v3466, %v4958
        %v6030 = vsub.f32 %v3795, %v4958
        %v6031 = vsub.f32 %v4124, %v4958
        %v6032 = vsub.f32 %v1823, %v4967
        %v6033 = vsub.f32 %v2152, %v4967
        %v6034 = vsub.f32 %v2481, %v4967
        %v6035 = vsub.f32 %v2810, %v4967
        %v6036 = vsub.f32 %v3139, %v4967
        %v6037 = vsub.f32 %v3468, %v4967
        %v6038 = vsub.f32 %v3797, %v4967
        %v6039 = vsub.f32 %v4126, %v4967
        %v6040 = vsub.f32 %v1826, %v4976
        %v6041 = vsub.f32 %v2155, %v4976
        %v6042 = vsub.f32 %v2484, %v4976
        %v6043 = vsub.f32 %v2813, %v4976
        %v6044 = vsub.f32 %v3142, %v4976
        %v6045 = vsub.f32 %v3471, %v4976
        %v6046 = vsub.f32 %v3800, %v4976
        %v6047 = vsub.f32 %v4129, %v4976
        %v6048 = vsub.f32 %v1828, %v4985
        %v6049 = vsub.f32 %v2157, %v4985
        %v6050 = vsub.f32 %v2486, %v4985
        %v6051 = vsub.f32 %v2815, %v4985
        %v6052 = vsub.f32 %v3144, %v4985
        %v6053 = vsub.f32 %v3473, %v4985
        %v6054 = vsub.f32 %v3802, %v4985
        %v6055 = vsub.f32 %v4131, %v4985
        %v6056 = vsub.f32 %v1831, %v4994
        %v6057 = vsub.f32 %v2160, %v4994
        %v6058 = vsub.f32 %v2489, %v4994
        %v6059 = vsub.f32 %v2818, %v4994
        %v6060 = vsub.f32 %v3147, %v4994
        %v6061 = vsub.f32 %v3476, %v4994
        %v6062 = vsub.f32 %v3805, %v4994
        %v6063 = vsub.f32 %v4134, %v4994
        %v6064 = vsub.f32 %v1833, %v5003
        %v6065 = vsub.f32 %v2162, %v5003
        %v6066 = vsub.f32 %v2491, %v5003
        %v6067 = vsub.f32 %v2820, %v5003
        %v6068 = vsub.f32 %v3149, %v5003
        %v6069 = vsub.f32 %v3478, %v5003
        %v6070 = vsub.f32 %v3807, %v5003
        %v6071 = vsub.f32 %v4136, %v5003
        %v6072 = vsub.f32 %v1836, %v5012
        %v6073 = vsub.f32 %v2165, %v5012
        %v6074 = vsub.f32 %v2494, %v5012
        %v6075 = vsub.f32 %v2823, %v5012
        %v6076 = vsub.f32 %v3152, %v5012
        %v6077 = vsub.f32 %v3481, %v5012
        %v6078 = vsub.f32 %v3810, %v5012
        %v6079 = vsub.f32 %v4139, %v5012
        %v6080 = vsub.f32 %v1838, %v5021
        %v6081 = vsub.f32 %v2167, %v5021
        %v6082 = vsub.f32 %v2496, %v5021
        %v6083 = vsub.f32 %v2825, %v5021
        %v6084 = vsub.f32 %v3154, %v5021
        %v6085 = vsub.f32 %v3483, %v5021
        %v6086 = vsub.f32 %v3812, %v5021
        %v6087 = vsub.f32 %v4141, %v5021
        %v6088 = vsub.f32 %v1841, %v5030
        %v6089 = vsub.f32 %v2170, %v5030
        %v6090 = vsub.f32 %v2499, %v5030
        %v6091 = vsub.f32 %v2828, %v5030
        %v6092 = vsub.f32 %v3157, %v5030
        %v6093 = vsub.f32 %v3486, %v5030
        %v6094 = vsub.f32 %v3815, %v5030
        %v6095 = vsub.f32 %v4144, %v5030
        %v6096 = vsub.f32 %v1843, %v5039
        %v6097 = vsub.f32 %v2172, %v5039
        %v6098 = vsub.f32 %v2501, %v5039
        %v6099 = vsub.f32 %v2830, %v5039
        %v6100 = vsub.f32 %v3159, %v5039
        %v6101 = vsub.f32 %v3488, %v5039
        %v6102 = vsub.f32 %v3817, %v5039
        %v6103 = vsub.f32 %v4146, %v5039
        %v6104 = vsub.f32 %v1846, %v5048
        %v6105 = vsub.f32 %v2175, %v5048
        %v6106 = vsub.f32 %v2504, %v5048
        %v6107 = vsub.f32 %v2833, %v5048
        %v6108 = vsub.f32 %v3162, %v5048
        %v6109 = vsub.f32 %v3491, %v5048
        %v6110 = vsub.f32 %v3820, %v5048
        %v6111 = vsub.f32 %v4149, %v5048
        %v6112 = vsub.f32 %v1848, %v5057
        %v6113 = vsub.f32 %v2177, %v5057
        %v6114 = vsub.f32 %v2506, %v5057
        %v6115 = vsub.f32 %v2835, %v5057
        %v6116 = vsub.f32 %v3164, %v5057
        %v6117 = vsub.f32 %v3493, %v5057
        %v6118 = vsub.f32 %v3822, %v5057
        %v6119 = vsub.f32 %v4151, %v5057
        %v6120 = vsub.f32 %v1851, %v5066
        %v6121 = vsub.f32 %v2180, %v5066
        %v6122 = vsub.f32 %v2509, %v5066
        %v6123 = vsub.f32 %v2838, %v5066
        %v6124 = vsub.f32 %v3167, %v5066
        %v6125 = vsub.f32 %v3496, %v5066
        %v6126 = vsub.f32 %v3825, %v5066
        %v6127 = vsub.f32 %v4154, %v5066
        %v6128 = vsub.f32 %v1853, %v5075
        %v6129 = vsub.f32 %v2182, %v5075
        %v6130 = vsub.f32 %v2511, %v5075
        %v6131 = vsub.f32 %v2840, %v5075
        %v6132 = vsub.f32 %v3169, %v5075
        %v6133 = vsub.f32 %v3498, %v5075
        %v6134 = vsub.f32 %v3827, %v5075
        %v6135 = vsub.f32 %v4156, %v5075
        %v6136 = vsub.f32 %v1856, %v5084
        %v6137 = vsub.f32 %v2185, %v5084
        %v6138 = vsub.f32 %v2514, %v5084
        %v6139 = vsub.f32 %v2843, %v5084
        %v6140 = vsub.f32 %v3172, %v5084
        %v6141 = vsub.f32 %v3501, %v5084
        %v6142 = vsub.f32 %v3830, %v5084
        %v6143 = vsub.f32 %v4159, %v5084
        %v6144 = vsub.f32 %v1858, %v5093
        %v6145 = vsub.f32 %v2187, %v5093
        %v6146 = vsub.f32 %v2516, %v5093
        %v6147 = vsub.f32 %v2845, %v5093
        %v6148 = vsub.f32 %v3174, %v5093
        %v6149 = vsub.f32 %v3503, %v5093
        %v6150 = vsub.f32 %v3832, %v5093
        %v6151 = vsub.f32 %v4161, %v5093
        %v6152 = vsub.f32 %v1861, %v5102
        %v6153 = vsub.f32 %v2190, %v5102
        %v6154 = vsub.f32 %v2519, %v5102
        %v6155 = vsub.f32 %v2848, %v5102
        %v6156 = vsub.f32 %v3177, %v5102
        %v6157 = vsub.f32 %v3506, %v5102
        %v6158 = vsub.f32 %v3835, %v5102
        %v6159 = vsub.f32 %v4164, %v5102
        %v6160 = vsub.f32 %v1863, %v5111
        %v6161 = vsub.f32 %v2192, %v5111
        %v6162 = vsub.f32 %v2521, %v5111
        %v6163 = vsub.f32 %v2850, %v5111
        %v6164 = vsub.f32 %v3179, %v5111
        %v6165 = vsub.f32 %v3508, %v5111
        %v6166 = vsub.f32 %v3837, %v5111
        %v6167 = vsub.f32 %v4166, %v5111
        %v6168 = vsub.f32 %v1866, %v5120
        %v6169 = vsub.f32 %v2195, %v5120
        %v6170 = vsub.f32 %v2524, %v5120
        %v6171 = vsub.f32 %v2853, %v5120
        %v6172 = vsub.f32 %v3182, %v5120
        %v6173 = vsub.f32 %v3511, %v5120
        %v6174 = vsub.f32 %v3840, %v5120
        %v6175 = vsub.f32 %v4169, %v5120
        %v6176 = vsub.f32 %v1868, %v5129
        %v6177 = vsub.f32 %v2197, %v5129
        %v6178 = vsub.f32 %v2526, %v5129
        %v6179 = vsub.f32 %v2855, %v5129
        %v6180 = vsub.f32 %v3184, %v5129
        %v6181 = vsub.f32 %v3513, %v5129
        %v6182 = vsub.f32 %v3842, %v5129
        %v6183 = vsub.f32 %v4171, %v5129
        %v6184 = vsub.f32 %v1871, %v5138
        %v6185 = vsub.f32 %v2200, %v5138
        %v6186 = vsub.f32 %v2529, %v5138
        %v6187 = vsub.f32 %v2858, %v5138
        %v6188 = vsub.f32 %v3187, %v5138
        %v6189 = vsub.f32 %v3516, %v5138
        %v6190 = vsub.f32 %v3845, %v5138
        %v6191 = vsub.f32 %v4174, %v5138
        %v6192 = vsub.f32 %v1873, %v5147
        %v6193 = vsub.f32 %v2202, %v5147
        %v6194 = vsub.f32 %v2531, %v5147
        %v6195 = vsub.f32 %v2860, %v5147
        %v6196 = vsub.f32 %v3189, %v5147
        %v6197 = vsub.f32 %v3518, %v5147
        %v6198 = vsub.f32 %v3847, %v5147
        %v6199 = vsub.f32 %v4176, %v5147
        %v6200 = vsub.f32 %v1876, %v5156
        %v6201 = vsub.f32 %v2205, %v5156
        %v6202 = vsub.f32 %v2534, %v5156
        %v6203 = vsub.f32 %v2863, %v5156
        %v6204 = vsub.f32 %v3192, %v5156
        %v6205 = vsub.f32 %v3521, %v5156
        %v6206 = vsub.f32 %v3850, %v5156
        %v6207 = vsub.f32 %v4179, %v5156
        %v6208 = vsub.f32 %v1878, %v5165
        %v6209 = vsub.f32 %v2207, %v5165
        %v6210 = vsub.f32 %v2536, %v5165
        %v6211 = vsub.f32 %v2865, %v5165
        %v6212 = vsub.f32 %v3194, %v5165
        %v6213 = vsub.f32 %v3523, %v5165
        %v6214 = vsub.f32 %v3852, %v5165
        %v6215 = vsub.f32 %v4181, %v5165
        %v6216 = vsub.f32 %v1881, %v5174
        %v6217 = vsub.f32 %v2210, %v5174
        %v6218 = vsub.f32 %v2539, %v5174
        %v6219 = vsub.f32 %v2868, %v5174
        %v6220 = vsub.f32 %v3197, %v5174
        %v6221 = vsub.f32 %v3526, %v5174
        %v6222 = vsub.f32 %v3855, %v5174
        %v6223 = vsub.f32 %v4184, %v5174
        %v6224 = vsub.f32 %v1883, %v5183
        %v6225 = vsub.f32 %v2212, %v5183
        %v6226 = vsub.f32 %v2541, %v5183
        %v6227 = vsub.f32 %v2870, %v5183
        %v6228 = vsub.f32 %v3199, %v5183
        %v6229 = vsub.f32 %v3528, %v5183
        %v6230 = vsub.f32 %v3857, %v5183
        %v6231 = vsub.f32 %v4186, %v5183
        %v6232 = vsub.f32 %v1886, %v5192
        %v6233 = vsub.f32 %v2215, %v5192
        %v6234 = vsub.f32 %v2544, %v5192
        %v6235 = vsub.f32 %v2873, %v5192
        %v6236 = vsub.f32 %v3202, %v5192
        %v6237 = vsub.f32 %v3531, %v5192
        %v6238 = vsub.f32 %v3860, %v5192
        %v6239 = vsub.f32 %v4189, %v5192
        %v6240 = vsub.f32 %v1888, %v5201
        %v6241 = vsub.f32 %v2217, %v5201
        %v6242 = vsub.f32 %v2546, %v5201
        %v6243 = vsub.f32 %v2875, %v5201
        %v6244 = vsub.f32 %v3204, %v5201
        %v6245 = vsub.f32 %v3533, %v5201
        %v6246 = vsub.f32 %v3862, %v5201
        %v6247 = vsub.f32 %v4191, %v5201
        %v6248 = vsub.f32 %v1891, %v5210
        %v6249 = vsub.f32 %v2220, %v5210
        %v6250 = vsub.f32 %v2549, %v5210
        %v6251 = vsub.f32 %v2878, %v5210
        %v6252 = vsub.f32 %v3207, %v5210
        %v6253 = vsub.f32 %v3536, %v5210
        %v6254 = vsub.f32 %v3865, %v5210
        %v6255 = vsub.f32 %v4194, %v5210
        %v6256 = vsub.f32 %v1893, %v5219
        %v6257 = vsub.f32 %v2222, %v5219
        %v6258 = vsub.f32 %v2551, %v5219
        %v6259 = vsub.f32 %v2880, %v5219
        %v6260 = vsub.f32 %v3209, %v5219
        %v6261 = vsub.f32 %v3538, %v5219
        %v6262 = vsub.f32 %v3867, %v5219
        %v6263 = vsub.f32 %v4196, %v5219
        %v6264 = vsub.f32 %v1896, %v5228
        %v6265 = vsub.f32 %v2225, %v5228
        %v6266 = vsub.f32 %v2554, %v5228
        %v6267 = vsub.f32 %v2883, %v5228
        %v6268 = vsub.f32 %v3212, %v5228
        %v6269 = vsub.f32 %v3541, %v5228
        %v6270 = vsub.f32 %v3870, %v5228
        %v6271 = vsub.f32 %v4199, %v5228
        %v6272 = vsub.f32 %v1898, %v5237
        %v6273 = vsub.f32 %v2227, %v5237
        %v6274 = vsub.f32 %v2556, %v5237
        %v6275 = vsub.f32 %v2885, %v5237
        %v6276 = vsub.f32 %v3214, %v5237
        %v6277 = vsub.f32 %v3543, %v5237
        %v6278 = vsub.f32 %v3872, %v5237
        %v6279 = vsub.f32 %v4201, %v5237
        %v6280 = vsub.f32 %v1901, %v5246
        %v6281 = vsub.f32 %v2230, %v5246
        %v6282 = vsub.f32 %v2559, %v5246
        %v6283 = vsub.f32 %v2888, %v5246
        %v6284 = vsub.f32 %v3217, %v5246
        %v6285 = vsub.f32 %v3546, %v5246
        %v6286 = vsub.f32 %v3875, %v5246
        %v6287 = vsub.f32 %v4204, %v5246
        %v6288 = vsub.f32 %v1903, %v5255
        %v6289 = vsub.f32 %v2232, %v5255
        %v6290 = vsub.f32 %v2561, %v5255
        %v6291 = vsub.f32 %v2890, %v5255
        %v6292 = vsub.f32 %v3219, %v5255
        %v6293 = vsub.f32 %v3548, %v5255
        %v6294 = vsub.f32 %v3877, %v5255
        %v6295 = vsub.f32 %v4206, %v5255
        %v6296 = vsub.f32 %v1906, %v5264
        %v6297 = vsub.f32 %v2235, %v5264
        %v6298 = vsub.f32 %v2564, %v5264
        %v6299 = vsub.f32 %v2893, %v5264
        %v6300 = vsub.f32 %v3222, %v5264
        %v6301 = vsub.f32 %v3551, %v5264
        %v6302 = vsub.f32 %v3880, %v5264
        %v6303 = vsub.f32 %v4209, %v5264
        %v6304 = vsub.f32 %v1908, %v5273
        %v6305 = vsub.f32 %v2237, %v5273
        %v6306 = vsub.f32 %v2566, %v5273
        %v6307 = vsub.f32 %v2895, %v5273
        %v6308 = vsub.f32 %v3224, %v5273
        %v6309 = vsub.f32 %v3553, %v5273
        %v6310 = vsub.f32 %v3882, %v5273
        %v6311 = vsub.f32 %v4211, %v5273
        %v6312 = vsub.f32 %v1911, %v5282
        %v6313 = vsub.f32 %v2240, %v5282
        %v6314 = vsub.f32 %v2569, %v5282
        %v6315 = vsub.f32 %v2898, %v5282
        %v6316 = vsub.f32 %v3227, %v5282
        %v6317 = vsub.f32 %v3556, %v5282
        %v6318 = vsub.f32 %v3885, %v5282
        %v6319 = vsub.f32 %v4214, %v5282
        %v6320 = vsub.f32 %v1913, %v5291
        %v6321 = vsub.f32 %v2242, %v5291
        %v6322 = vsub.f32 %v2571, %v5291
        %v6323 = vsub.f32 %v2900, %v5291
        %v6324 = vsub.f32 %v3229, %v5291
        %v6325 = vsub.f32 %v3558, %v5291
        %v6326 = vsub.f32 %v3887, %v5291
        %v6327 = vsub.f32 %v4216, %v5291
        %v6328 = vsub.f32 %v1916, %v5300
        %v6329 = vsub.f32 %v2245, %v5300
        %v6330 = vsub.f32 %v2574, %v5300
        %v6331 = vsub.f32 %v2903, %v5300
        %v6332 = vsub.f32 %v3232, %v5300
        %v6333 = vsub.f32 %v3561, %v5300
        %v6334 = vsub.f32 %v3890, %v5300
        %v6335 = vsub.f32 %v4219, %v5300
        %v6336 = vsub.f32 %v1918, %v5309
        %v6337 = vsub.f32 %v2247, %v5309
        %v6338 = vsub.f32 %v2576, %v5309
        %v6339 = vsub.f32 %v2905, %v5309
        %v6340 = vsub.f32 %v3234, %v5309
        %v6341 = vsub.f32 %v3563, %v5309
        %v6342 = vsub.f32 %v3892, %v5309
        %v6343 = vsub.f32 %v4221, %v5309
        %v6344 = vsub.f32 %v1921, %v5318
        %v6345 = vsub.f32 %v2250, %v5318
        %v6346 = vsub.f32 %v2579, %v5318
        %v6347 = vsub.f32 %v2908, %v5318
        %v6348 = vsub.f32 %v3237, %v5318
        %v6349 = vsub.f32 %v3566, %v5318
        %v6350 = vsub.f32 %v3895, %v5318
        %v6351 = vsub.f32 %v4224, %v5318
        %v6352 = vsub.f32 %v1923, %v5327
        %v6353 = vsub.f32 %v2252, %v5327
        %v6354 = vsub.f32 %v2581, %v5327
        %v6355 = vsub.f32 %v2910, %v5327
        %v6356 = vsub.f32 %v3239, %v5327
        %v6357 = vsub.f32 %v3568, %v5327
        %v6358 = vsub.f32 %v3897, %v5327
        %v6359 = vsub.f32 %v4226, %v5327
        %v6360 = vsub.f32 %v1926, %v5336
        %v6361 = vsub.f32 %v2255, %v5336
        %v6362 = vsub.f32 %v2584, %v5336
        %v6363 = vsub.f32 %v2913, %v5336
        %v6364 = vsub.f32 %v3242, %v5336
        %v6365 = vsub.f32 %v3571, %v5336
        %v6366 = vsub.f32 %v3900, %v5336
        %v6367 = vsub.f32 %v4229, %v5336
        %v6368 = vsub.f32 %v1928, %v5345
        %v6369 = vsub.f32 %v2257, %v5345
        %v6370 = vsub.f32 %v2586, %v5345
        %v6371 = vsub.f32 %v2915, %v5345
        %v6372 = vsub.f32 %v3244, %v5345
        %v6373 = vsub.f32 %v3573, %v5345
        %v6374 = vsub.f32 %v3902, %v5345
        %v6375 = vsub.f32 %v4231, %v5345
        %v6376 = vsub.f32 %v1931, %v5354
        %v6377 = vsub.f32 %v2260, %v5354
        %v6378 = vsub.f32 %v2589, %v5354
        %v6379 = vsub.f32 %v2918, %v5354
        %v6380 = vsub.f32 %v3247, %v5354
        %v6381 = vsub.f32 %v3576, %v5354
        %v6382 = vsub.f32 %v3905, %v5354
        %v6383 = vsub.f32 %v4234, %v5354
        %v6384 = vsub.f32 %v1933, %v5363
        %v6385 = vsub.f32 %v2262, %v5363
        %v6386 = vsub.f32 %v2591, %v5363
        %v6387 = vsub.f32 %v2920, %v5363
        %v6388 = vsub.f32 %v3249, %v5363
        %v6389 = vsub.f32 %v3578, %v5363
        %v6390 = vsub.f32 %v3907, %v5363
        %v6391 = vsub.f32 %v4236, %v5363
        %v6392 = vsub.f32 %v1936, %v5372
        %v6393 = vsub.f32 %v2265, %v5372
        %v6394 = vsub.f32 %v2594, %v5372
        %v6395 = vsub.f32 %v2923, %v5372
        %v6396 = vsub.f32 %v3252, %v5372
        %v6397 = vsub.f32 %v3581, %v5372
        %v6398 = vsub.f32 %v3910, %v5372
        %v6399 = vsub.f32 %v4239, %v5372
        %v6400 = vsub.f32 %v1938, %v5381
        %v6401 = vsub.f32 %v2267, %v5381
        %v6402 = vsub.f32 %v2596, %v5381
        %v6403 = vsub.f32 %v2925, %v5381
        %v6404 = vsub.f32 %v3254, %v5381
        %v6405 = vsub.f32 %v3583, %v5381
        %v6406 = vsub.f32 %v3912, %v5381
        %v6407 = vsub.f32 %v4241, %v5381
        %v6408 = vsub.f32 %v1941, %v5390
        %v6409 = vsub.f32 %v2270, %v5390
        %v6410 = vsub.f32 %v2599, %v5390
        %v6411 = vsub.f32 %v2928, %v5390
        %v6412 = vsub.f32 %v3257, %v5390
        %v6413 = vsub.f32 %v3586, %v5390
        %v6414 = vsub.f32 %v3915, %v5390
        %v6415 = vsub.f32 %v4244, %v5390
        %v6416 = vsub.f32 %v1943, %v5399
        %v6417 = vsub.f32 %v2272, %v5399
        %v6418 = vsub.f32 %v2601, %v5399
        %v6419 = vsub.f32 %v2930, %v5399
        %v6420 = vsub.f32 %v3259, %v5399
        %v6421 = vsub.f32 %v3588, %v5399
        %v6422 = vsub.f32 %v3917, %v5399
        %v6423 = vsub.f32 %v4246, %v5399
        %v6424 = vmul.f32 %v5400, 1.442695
        %v6425 = vpow.pop %v6424
        %v6426 = vmul.f32 %v5401, 1.442695
        %v6427 = vpow.pop %v6426
        %v6428 = vmul.f32 %v5402, 1.442695
        %v6429 = vpow.pop %v6428
        %v6430 = vmul.f32 %v5403, 1.442695
        %v6431 = vpow.pop %v6430
        %v6432 = vmul.f32 %v5404, 1.442695
        %v6433 = vpow.pop %v6432
        %v6434 = vmul.f32 %v5405, 1.442695
        %v6435 = vpow.pop %v6434
        %v6436 = vmul.f32 %v5406, 1.442695
        %v6437 = vpow.pop %v6436
        %v6438 = vmul.f32 %v5407, 1.442695
        %v6439 = vpow.pop %v6438
        %v6440 = vmul.f32 %v5408, 1.442695
        %v6441 = vpow.pop %v6440
        %v6442 = vmul.f32 %v5409, 1.442695
        %v6443 = vpow.pop %v6442
        %v6444 = vmul.f32 %v5410, 1.442695
        %v6445 = vpow.pop %v6444
        %v6446 = vmul.f32 %v5411, 1.442695
        %v6447 = vpow.pop %v6446
        %v6448 = vmul.f32 %v5412, 1.442695
        %v6449 = vpow.pop %v6448
        %v6450 = vmul.f32 %v5413, 1.442695
        %v6451 = vpow.pop %v6450
        %v6452 = vmul.f32 %v5414, 1.442695
        %v6453 = vpow.pop %v6452
        %v6454 = vmul.f32 %v5415, 1.442695
        %v6455 = vpow.pop %v6454
        %v6456 = vmul.f32 %v5416, 1.442695
        %v6457 = vpow.pop %v6456
        %v6458 = vmul.f32 %v5417, 1.442695
        %v6459 = vpow.pop %v6458
        %v6460 = vmul.f32 %v5418, 1.442695
        %v6461 = vpow.pop %v6460
        %v6462 = vmul.f32 %v5419, 1.442695
        %v6463 = vpow.pop %v6462
        %v6464 = vmul.f32 %v5420, 1.442695
        %v6465 = vpow.pop %v6464
        %v6466 = vmul.f32 %v5421, 1.442695
        %v6467 = vpow.pop %v6466
        %v6468 = vmul.f32 %v5422, 1.442695
        %v6469 = vpow.pop %v6468
        %v6470 = vmul.f32 %v5423, 1.442695
        %v6471 = vpow.pop %v6470
        %v6472 = vmul.f32 %v5424, 1.442695
        %v6473 = vpow.pop %v6472
        %v6474 = vmul.f32 %v5425, 1.442695
        %v6475 = vpow.pop %v6474
        %v6476 = vmul.f32 %v5426, 1.442695
        %v6477 = vpow.pop %v6476
        %v6478 = vmul.f32 %v5427, 1.442695
        %v6479 = vpow.pop %v6478
        %v6480 = vmul.f32 %v5428, 1.442695
        %v6481 = vpow.pop %v6480
        %v6482 = vmul.f32 %v5429, 1.442695
        %v6483 = vpow.pop %v6482
        %v6484 = vmul.f32 %v5430, 1.442695
        %v6485 = vpow.pop %v6484
        %v6486 = vmul.f32 %v5431, 1.442695
        %v6487 = vpow.pop %v6486
        %v6488 = vmul.f32 %v5432, 1.442695
        %v6489 = vpow.pop %v6488
        %v6490 = vmul.f32 %v5433, 1.442695
        %v6491 = vpow.pop %v6490
        %v6492 = vmul.f32 %v5434, 1.442695
        %v6493 = vpow.pop %v6492
        %v6494 = vmul.f32 %v5435, 1.442695
        %v6495 = vpow.pop %v6494
        %v6496 = vmul.f32 %v5436, 1.442695
        %v6497 = vpow.pop %v6496
        %v6498 = vmul.f32 %v5437, 1.442695
        %v6499 = vpow.pop %v6498
        %v6500 = vmul.f32 %v5438, 1.442695
        %v6501 = vpow.pop %v6500
        %v6502 = vmul.f32 %v5439, 1.442695
        %v6503 = vpow.pop %v6502
        %v6504 = vmul.f32 %v5440, 1.442695
        %v6505 = vpow.pop %v6504
        %v6506 = vmul.f32 %v5441, 1.442695
        %v6507 = vpow.pop %v6506
        %v6508 = vmul.f32 %v5442, 1.442695
        %v6509 = vpow.pop %v6508
        %v6510 = vmul.f32 %v5443, 1.442695
        %v6511 = vpow.pop %v6510
        %v6512 = vmul.f32 %v5444, 1.442695
        %v6513 = vpow.pop %v6512
        %v6514 = vmul.f32 %v5445, 1.442695
        %v6515 = vpow.pop %v6514
        %v6516 = vmul.f32 %v5446, 1.442695
        %v6517 = vpow.pop %v6516
        %v6518 = vmul.f32 %v5447, 1.442695
        %v6519 = vpow.pop %v6518
        %v6520 = vmul.f32 %v5448, 1.442695
        %v6521 = vpow.pop %v6520
        %v6522 = vmul.f32 %v5449, 1.442695
        %v6523 = vpow.pop %v6522
        %v6524 = vmul.f32 %v5450, 1.442695
        %v6525 = vpow.pop %v6524
        %v6526 = vmul.f32 %v5451, 1.442695
        %v6527 = vpow.pop %v6526
        %v6528 = vmul.f32 %v5452, 1.442695
        %v6529 = vpow.pop %v6528
        %v6530 = vmul.f32 %v5453, 1.442695
        %v6531 = vpow.pop %v6530
        %v6532 = vmul.f32 %v5454, 1.442695
        %v6533 = vpow.pop %v6532
        %v6534 = vmul.f32 %v5455, 1.442695
        %v6535 = vpow.pop %v6534
        %v6536 = vmul.f32 %v5456, 1.442695
        %v6537 = vpow.pop %v6536
        %v6538 = vmul.f32 %v5457, 1.442695
        %v6539 = vpow.pop %v6538
        %v6540 = vmul.f32 %v5458, 1.442695
        %v6541 = vpow.pop %v6540
        %v6542 = vmul.f32 %v5459, 1.442695
        %v6543 = vpow.pop %v6542
        %v6544 = vmul.f32 %v5460, 1.442695
        %v6545 = vpow.pop %v6544
        %v6546 = vmul.f32 %v5461, 1.442695
        %v6547 = vpow.pop %v6546
        %v6548 = vmul.f32 %v5462, 1.442695
        %v6549 = vpow.pop %v6548
        %v6550 = vmul.f32 %v5463, 1.442695
        %v6551 = vpow.pop %v6550
        %v6552 = vmul.f32 %v5464, 1.442695
        %v6553 = vpow.pop %v6552
        %v6554 = vmul.f32 %v5465, 1.442695
        %v6555 = vpow.pop %v6554
        %v6556 = vmul.f32 %v5466, 1.442695
        %v6557 = vpow.pop %v6556
        %v6558 = vmul.f32 %v5467, 1.442695
        %v6559 = vpow.pop %v6558
        %v6560 = vmul.f32 %v5468, 1.442695
        %v6561 = vpow.pop %v6560
        %v6562 = vmul.f32 %v5469, 1.442695
        %v6563 = vpow.pop %v6562
        %v6564 = vmul.f32 %v5470, 1.442695
        %v6565 = vpow.pop %v6564
        %v6566 = vmul.f32 %v5471, 1.442695
        %v6567 = vpow.pop %v6566
        %v6568 = vmul.f32 %v5472, 1.442695
        %v6569 = vpow.pop %v6568
        %v6570 = vmul.f32 %v5473, 1.442695
        %v6571 = vpow.pop %v6570
        %v6572 = vmul.f32 %v5474, 1.442695
        %v6573 = vpow.pop %v6572
        %v6574 = vmul.f32 %v5475, 1.442695
        %v6575 = vpow.pop %v6574
        %v6576 = vmul.f32 %v5476, 1.442695
        %v6577 = vpow.pop %v6576
        %v6578 = vmul.f32 %v5477, 1.442695
        %v6579 = vpow.pop %v6578
        %v6580 = vmul.f32 %v5478, 1.442695
        %v6581 = vpow.pop %v6580
        %v6582 = vmul.f32 %v5479, 1.442695
        %v6583 = vpow.pop %v6582
        %v6584 = vmul.f32 %v5480, 1.442695
        %v6585 = vpow.pop %v6584
        %v6586 = vmul.f32 %v5481, 1.442695
        %v6587 = vpow.pop %v6586
        %v6588 = vmul.f32 %v5482, 1.442695
        %v6589 = vpow.pop %v6588
        %v6590 = vmul.f32 %v5483, 1.442695
        %v6591 = vpow.pop %v6590
        %v6592 = vmul.f32 %v5484, 1.442695
        %v6593 = vpow.pop %v6592
        %v6594 = vmul.f32 %v5485, 1.442695
        %v6595 = vpow.pop %v6594
        %v6596 = vmul.f32 %v5486, 1.442695
        %v6597 = vpow.pop %v6596
        %v6598 = vmul.f32 %v5487, 1.442695
        %v6599 = vpow.pop %v6598
        %v6600 = vmul.f32 %v5488, 1.442695
        %v6601 = vpow.pop %v6600
        %v6602 = vmul.f32 %v5489, 1.442695
        %v6603 = vpow.pop %v6602
        %v6604 = vmul.f32 %v5490, 1.442695
        %v6605 = vpow.pop %v6604
        %v6606 = vmul.f32 %v5491, 1.442695
        %v6607 = vpow.pop %v6606
        %v6608 = vmul.f32 %v5492, 1.442695
        %v6609 = vpow.pop %v6608
        %v6610 = vmul.f32 %v5493, 1.442695
        %v6611 = vpow.pop %v6610
        %v6612 = vmul.f32 %v5494, 1.442695
        %v6613 = vpow.pop %v6612
        %v6614 = vmul.f32 %v5495, 1.442695
        %v6615 = vpow.pop %v6614
        %v6616 = vmul.f32 %v5496, 1.442695
        %v6617 = vpow.pop %v6616
        %v6618 = vmul.f32 %v5497, 1.442695
        %v6619 = vpow.pop %v6618
        %v6620 = vmul.f32 %v5498, 1.442695
        %v6621 = vpow.pop %v6620
        %v6622 = vmul.f32 %v5499, 1.442695
        %v6623 = vpow.pop %v6622
        %v6624 = vmul.f32 %v5500, 1.442695
        %v6625 = vpow.pop %v6624
        %v6626 = vmul.f32 %v5501, 1.442695
        %v6627 = vpow.pop %v6626
        %v6628 = vmul.f32 %v5502, 1.442695
        %v6629 = vpow.pop %v6628
        %v6630 = vmul.f32 %v5503, 1.442695
        %v6631 = vpow.pop %v6630
        %v6632 = vmul.f32 %v5504, 1.442695
        %v6633 = vpow.pop %v6632
        %v6634 = vmul.f32 %v5505, 1.442695
        %v6635 = vpow.pop %v6634
        %v6636 = vmul.f32 %v5506, 1.442695
        %v6637 = vpow.pop %v6636
        %v6638 = vmul.f32 %v5507, 1.442695
        %v6639 = vpow.pop %v6638
        %v6640 = vmul.f32 %v5508, 1.442695
        %v6641 = vpow.pop %v6640
        %v6642 = vmul.f32 %v5509, 1.442695
        %v6643 = vpow.pop %v6642
        %v6644 = vmul.f32 %v5510, 1.442695
        %v6645 = vpow.pop %v6644
        %v6646 = vmul.f32 %v5511, 1.442695
        %v6647 = vpow.pop %v6646
        %v6648 = vmul.f32 %v5512, 1.442695
        %v6649 = vpow.pop %v6648
        %v6650 = vmul.f32 %v5513, 1.442695
        %v6651 = vpow.pop %v6650
        %v6652 = vmul.f32 %v5514, 1.442695
        %v6653 = vpow.pop %v6652
        %v6654 = vmul.f32 %v5515, 1.442695
        %v6655 = vpow.pop %v6654
        %v6656 = vmul.f32 %v5516, 1.442695
        %v6657 = vpow.pop %v6656
        %v6658 = vmul.f32 %v5517, 1.442695
        %v6659 = vpow.pop %v6658
        %v6660 = vmul.f32 %v5518, 1.442695
        %v6661 = vpow.pop %v6660
        %v6662 = vmul.f32 %v5519, 1.442695
        %v6663 = vpow.pop %v6662
        %v6664 = vmul.f32 %v5520, 1.442695
        %v6665 = vpow.pop %v6664
        %v6666 = vmul.f32 %v5521, 1.442695
        %v6667 = vpow.pop %v6666
        %v6668 = vmul.f32 %v5522, 1.442695
        %v6669 = vpow.pop %v6668
        %v6670 = vmul.f32 %v5523, 1.442695
        %v6671 = vpow.pop %v6670
        %v6672 = vmul.f32 %v5524, 1.442695
        %v6673 = vpow.pop %v6672
        %v6674 = vmul.f32 %v5525, 1.442695
        %v6675 = vpow.pop %v6674
        %v6676 = vmul.f32 %v5526, 1.442695
        %v6677 = vpow.pop %v6676
        %v6678 = vmul.f32 %v5527, 1.442695
        %v6679 = vpow.pop %v6678
        %v6680 = vmul.f32 %v5528, 1.442695
        %v6681 = vpow.pop %v6680
        %v6682 = vmul.f32 %v5529, 1.442695
        %v6683 = vpow.pop %v6682
        %v6684 = vmul.f32 %v5530, 1.442695
        %v6685 = vpow.pop %v6684
        %v6686 = vmul.f32 %v5531, 1.442695
        %v6687 = vpow.pop %v6686
        %v6688 = vmul.f32 %v5532, 1.442695
        %v6689 = vpow.pop %v6688
        %v6690 = vmul.f32 %v5533, 1.442695
        %v6691 = vpow.pop %v6690
        %v6692 = vmul.f32 %v5534, 1.442695
        %v6693 = vpow.pop %v6692
        %v6694 = vmul.f32 %v5535, 1.442695
        %v6695 = vpow.pop %v6694
        %v6696 = vmul.f32 %v5536, 1.442695
        %v6697 = vpow.pop %v6696
        %v6698 = vmul.f32 %v5537, 1.442695
        %v6699 = vpow.pop %v6698
        %v6700 = vmul.f32 %v5538, 1.442695
        %v6701 = vpow.pop %v6700
        %v6702 = vmul.f32 %v5539, 1.442695
        %v6703 = vpow.pop %v6702
        %v6704 = vmul.f32 %v5540, 1.442695
        %v6705 = vpow.pop %v6704
        %v6706 = vmul.f32 %v5541, 1.442695
        %v6707 = vpow.pop %v6706
        %v6708 = vmul.f32 %v5542, 1.442695
        %v6709 = vpow.pop %v6708
        %v6710 = vmul.f32 %v5543, 1.442695
        %v6711 = vpow.pop %v6710
        %v6712 = vmul.f32 %v5544, 1.442695
        %v6713 = vpow.pop %v6712
        %v6714 = vmul.f32 %v5545, 1.442695
        %v6715 = vpow.pop %v6714
        %v6716 = vmul.f32 %v5546, 1.442695
        %v6717 = vpow.pop %v6716
        %v6718 = vmul.f32 %v5547, 1.442695
        %v6719 = vpow.pop %v6718
        %v6720 = vmul.f32 %v5548, 1.442695
        %v6721 = vpow.pop %v6720
        %v6722 = vmul.f32 %v5549, 1.442695
        %v6723 = vpow.pop %v6722
        %v6724 = vmul.f32 %v5550, 1.442695
        %v6725 = vpow.pop %v6724
        %v6726 = vmul.f32 %v5551, 1.442695
        %v6727 = vpow.pop %v6726
        %v6728 = vmul.f32 %v5552, 1.442695
        %v6729 = vpow.pop %v6728
        %v6730 = vmul.f32 %v5553, 1.442695
        %v6731 = vpow.pop %v6730
        %v6732 = vmul.f32 %v5554, 1.442695
        %v6733 = vpow.pop %v6732
        %v6734 = vmul.f32 %v5555, 1.442695
        %v6735 = vpow.pop %v6734
        %v6736 = vmul.f32 %v5556, 1.442695
        %v6737 = vpow.pop %v6736
        %v6738 = vmul.f32 %v5557, 1.442695
        %v6739 = vpow.pop %v6738
        %v6740 = vmul.f32 %v5558, 1.442695
        %v6741 = vpow.pop %v6740
        %v6742 = vmul.f32 %v5559, 1.442695
        %v6743 = vpow.pop %v6742
        %v6744 = vmul.f32 %v5560, 1.442695
        %v6745 = vpow.pop %v6744
        %v6746 = vmul.f32 %v5561, 1.442695
        %v6747 = vpow.pop %v6746
        %v6748 = vmul.f32 %v5562, 1.442695
        %v6749 = vpow.pop %v6748
        %v6750 = vmul.f32 %v5563, 1.442695
        %v6751 = vpow.pop %v6750
        %v6752 = vmul.f32 %v5564, 1.442695
        %v6753 = vpow.pop %v6752
        %v6754 = vmul.f32 %v5565, 1.442695
        %v6755 = vpow.pop %v6754
        %v6756 = vmul.f32 %v5566, 1.442695
        %v6757 = vpow.pop %v6756
        %v6758 = vmul.f32 %v5567, 1.442695
        %v6759 = vpow.pop %v6758
        %v6760 = vmul.f32 %v5568, 1.442695
        %v6761 = vpow.pop %v6760
        %v6762 = vmul.f32 %v5569, 1.442695
        %v6763 = vpow.pop %v6762
        %v6764 = vmul.f32 %v5570, 1.442695
        %v6765 = vpow.pop %v6764
        %v6766 = vmul.f32 %v5571, 1.442695
        %v6767 = vpow.pop %v6766
        %v6768 = vmul.f32 %v5572, 1.442695
        %v6769 = vpow.pop %v6768
        %v6770 = vmul.f32 %v5573, 1.442695
        %v6771 = vpow.pop %v6770
        %v6772 = vmul.f32 %v5574, 1.442695
        %v6773 = vpow.pop %v6772
        %v6774 = vmul.f32 %v5575, 1.442695
        %v6775 = vpow.pop %v6774
        %v6776 = vmul.f32 %v5576, 1.442695
        %v6777 = vpow.pop %v6776
        %v6778 = vmul.f32 %v5577, 1.442695
        %v6779 = vpow.pop %v6778
        %v6780 = vmul.f32 %v5578, 1.442695
        %v6781 = vpow.pop %v6780
        %v6782 = vmul.f32 %v5579, 1.442695
        %v6783 = vpow.pop %v6782
        %v6784 = vmul.f32 %v5580, 1.442695
        %v6785 = vpow.pop %v6784
        %v6786 = vmul.f32 %v5581, 1.442695
        %v6787 = vpow.pop %v6786
        %v6788 = vmul.f32 %v5582, 1.442695
        %v6789 = vpow.pop %v6788
        %v6790 = vmul.f32 %v5583, 1.442695
        %v6791 = vpow.pop %v6790
        %v6792 = vmul.f32 %v5584, 1.442695
        %v6793 = vpow.pop %v6792
        %v6794 = vmul.f32 %v5585, 1.442695
        %v6795 = vpow.pop %v6794
        %v6796 = vmul.f32 %v5586, 1.442695
        %v6797 = vpow.pop %v6796
        %v6798 = vmul.f32 %v5587, 1.442695
        %v6799 = vpow.pop %v6798
        %v6800 = vmul.f32 %v5588, 1.442695
        %v6801 = vpow.pop %v6800
        %v6802 = vmul.f32 %v5589, 1.442695
        %v6803 = vpow.pop %v6802
        %v6804 = vmul.f32 %v5590, 1.442695
        %v6805 = vpow.pop %v6804
        %v6806 = vmul.f32 %v5591, 1.442695
        %v6807 = vpow.pop %v6806
        %v6808 = vmul.f32 %v5592, 1.442695
        %v6809 = vpow.pop %v6808
        %v6810 = vmul.f32 %v5593, 1.442695
        %v6811 = vpow.pop %v6810
        %v6812 = vmul.f32 %v5594, 1.442695
        %v6813 = vpow.pop %v6812
        %v6814 = vmul.f32 %v5595, 1.442695
        %v6815 = vpow.pop %v6814
        %v6816 = vmul.f32 %v5596, 1.442695
        %v6817 = vpow.pop %v6816
        %v6818 = vmul.f32 %v5597, 1.442695
        %v6819 = vpow.pop %v6818
        %v6820 = vmul.f32 %v5598, 1.442695
        %v6821 = vpow.pop %v6820
        %v6822 = vmul.f32 %v5599, 1.442695
        %v6823 = vpow.pop %v6822
        %v6824 = vmul.f32 %v5600, 1.442695
        %v6825 = vpow.pop %v6824
        %v6826 = vmul.f32 %v5601, 1.442695
        %v6827 = vpow.pop %v6826
        %v6828 = vmul.f32 %v5602, 1.442695
        %v6829 = vpow.pop %v6828
        %v6830 = vmul.f32 %v5603, 1.442695
        %v6831 = vpow.pop %v6830
        %v6832 = vmul.f32 %v5604, 1.442695
        %v6833 = vpow.pop %v6832
        %v6834 = vmul.f32 %v5605, 1.442695
        %v6835 = vpow.pop %v6834
        %v6836 = vmul.f32 %v5606, 1.442695
        %v6837 = vpow.pop %v6836
        %v6838 = vmul.f32 %v5607, 1.442695
        %v6839 = vpow.pop %v6838
        %v6840 = vmul.f32 %v5608, 1.442695
        %v6841 = vpow.pop %v6840
        %v6842 = vmul.f32 %v5609, 1.442695
        %v6843 = vpow.pop %v6842
        %v6844 = vmul.f32 %v5610, 1.442695
        %v6845 = vpow.pop %v6844
        %v6846 = vmul.f32 %v5611, 1.442695
        %v6847 = vpow.pop %v6846
        %v6848 = vmul.f32 %v5612, 1.442695
        %v6849 = vpow.pop %v6848
        %v6850 = vmul.f32 %v5613, 1.442695
        %v6851 = vpow.pop %v6850
        %v6852 = vmul.f32 %v5614, 1.442695
        %v6853 = vpow.pop %v6852
        %v6854 = vmul.f32 %v5615, 1.442695
        %v6855 = vpow.pop %v6854
        %v6856 = vmul.f32 %v5616, 1.442695
        %v6857 = vpow.pop %v6856
        %v6858 = vmul.f32 %v5617, 1.442695
        %v6859 = vpow.pop %v6858
        %v6860 = vmul.f32 %v5618, 1.442695
        %v6861 = vpow.pop %v6860
        %v6862 = vmul.f32 %v5619, 1.442695
        %v6863 = vpow.pop %v6862
        %v6864 = vmul.f32 %v5620, 1.442695
        %v6865 = vpow.pop %v6864
        %v6866 = vmul.f32 %v5621, 1.442695
        %v6867 = vpow.pop %v6866
        %v6868 = vmul.f32 %v5622, 1.442695
        %v6869 = vpow.pop %v6868
        %v6870 = vmul.f32 %v5623, 1.442695
        %v6871 = vpow.pop %v6870
        %v6872 = vmul.f32 %v5624, 1.442695
        %v6873 = vpow.pop %v6872
        %v6874 = vmul.f32 %v5625, 1.442695
        %v6875 = vpow.pop %v6874
        %v6876 = vmul.f32 %v5626, 1.442695
        %v6877 = vpow.pop %v6876
        %v6878 = vmul.f32 %v5627, 1.442695
        %v6879 = vpow.pop %v6878
        %v6880 = vmul.f32 %v5628, 1.442695
        %v6881 = vpow.pop %v6880
        %v6882 = vmul.f32 %v5629, 1.442695
        %v6883 = vpow.pop %v6882
        %v6884 = vmul.f32 %v5630, 1.442695
        %v6885 = vpow.pop %v6884
        %v6886 = vmul.f32 %v5631, 1.442695
        %v6887 = vpow.pop %v6886
        %v6888 = vmul.f32 %v5632, 1.442695
        %v6889 = vpow.pop %v6888
        %v6890 = vmul.f32 %v5633, 1.442695
        %v6891 = vpow.pop %v6890
        %v6892 = vmul.f32 %v5634, 1.442695
        %v6893 = vpow.pop %v6892
        %v6894 = vmul.f32 %v5635, 1.442695
        %v6895 = vpow.pop %v6894
        %v6896 = vmul.f32 %v5636, 1.442695
        %v6897 = vpow.pop %v6896
        %v6898 = vmul.f32 %v5637, 1.442695
        %v6899 = vpow.pop %v6898
        %v6900 = vmul.f32 %v5638, 1.442695
        %v6901 = vpow.pop %v6900
        %v6902 = vmul.f32 %v5639, 1.442695
        %v6903 = vpow.pop %v6902
        %v6904 = vmul.f32 %v5640, 1.442695
        %v6905 = vpow.pop %v6904
        %v6906 = vmul.f32 %v5641, 1.442695
        %v6907 = vpow.pop %v6906
        %v6908 = vmul.f32 %v5642, 1.442695
        %v6909 = vpow.pop %v6908
        %v6910 = vmul.f32 %v5643, 1.442695
        %v6911 = vpow.pop %v6910
        %v6912 = vmul.f32 %v5644, 1.442695
        %v6913 = vpow.pop %v6912
        %v6914 = vmul.f32 %v5645, 1.442695
        %v6915 = vpow.pop %v6914
        %v6916 = vmul.f32 %v5646, 1.442695
        %v6917 = vpow.pop %v6916
        %v6918 = vmul.f32 %v5647, 1.442695
        %v6919 = vpow.pop %v6918
        %v6920 = vmul.f32 %v5648, 1.442695
        %v6921 = vpow.pop %v6920
        %v6922 = vmul.f32 %v5649, 1.442695
        %v6923 = vpow.pop %v6922
        %v6924 = vmul.f32 %v5650, 1.442695
        %v6925 = vpow.pop %v6924
        %v6926 = vmul.f32 %v5651, 1.442695
        %v6927 = vpow.pop %v6926
        %v6928 = vmul.f32 %v5652, 1.442695
        %v6929 = vpow.pop %v6928
        %v6930 = vmul.f32 %v5653, 1.442695
        %v6931 = vpow.pop %v6930
        %v6932 = vmul.f32 %v5654, 1.442695
        %v6933 = vpow.pop %v6932
        %v6934 = vmul.f32 %v5655, 1.442695
        %v6935 = vpow.pop %v6934
        %v6936 = vmul.f32 %v5656, 1.442695
        %v6937 = vpow.pop %v6936
        %v6938 = vmul.f32 %v5657, 1.442695
        %v6939 = vpow.pop %v6938
        %v6940 = vmul.f32 %v5658, 1.442695
        %v6941 = vpow.pop %v6940
        %v6942 = vmul.f32 %v5659, 1.442695
        %v6943 = vpow.pop %v6942
        %v6944 = vmul.f32 %v5660, 1.442695
        %v6945 = vpow.pop %v6944
        %v6946 = vmul.f32 %v5661, 1.442695
        %v6947 = vpow.pop %v6946
        %v6948 = vmul.f32 %v5662, 1.442695
        %v6949 = vpow.pop %v6948
        %v6950 = vmul.f32 %v5663, 1.442695
        %v6951 = vpow.pop %v6950
        %v6952 = vmul.f32 %v5664, 1.442695
        %v6953 = vpow.pop %v6952
        %v6954 = vmul.f32 %v5665, 1.442695
        %v6955 = vpow.pop %v6954
        %v6956 = vmul.f32 %v5666, 1.442695
        %v6957 = vpow.pop %v6956
        %v6958 = vmul.f32 %v5667, 1.442695
        %v6959 = vpow.pop %v6958
        %v6960 = vmul.f32 %v5668, 1.442695
        %v6961 = vpow.pop %v6960
        %v6962 = vmul.f32 %v5669, 1.442695
        %v6963 = vpow.pop %v6962
        %v6964 = vmul.f32 %v5670, 1.442695
        %v6965 = vpow.pop %v6964
        %v6966 = vmul.f32 %v5671, 1.442695
        %v6967 = vpow.pop %v6966
        %v6968 = vmul.f32 %v5672, 1.442695
        %v6969 = vpow.pop %v6968
        %v6970 = vmul.f32 %v5673, 1.442695
        %v6971 = vpow.pop %v6970
        %v6972 = vmul.f32 %v5674, 1.442695
        %v6973 = vpow.pop %v6972
        %v6974 = vmul.f32 %v5675, 1.442695
        %v6975 = vpow.pop %v6974
        %v6976 = vmul.f32 %v5676, 1.442695
        %v6977 = vpow.pop %v6976
        %v6978 = vmul.f32 %v5677, 1.442695
        %v6979 = vpow.pop %v6978
        %v6980 = vmul.f32 %v5678, 1.442695
        %v6981 = vpow.pop %v6980
        %v6982 = vmul.f32 %v5679, 1.442695
        %v6983 = vpow.pop %v6982
        %v6984 = vmul.f32 %v5680, 1.442695
        %v6985 = vpow.pop %v6984
        %v6986 = vmul.f32 %v5681, 1.442695
        %v6987 = vpow.pop %v6986
        %v6988 = vmul.f32 %v5682, 1.442695
        %v6989 = vpow.pop %v6988
        %v6990 = vmul.f32 %v5683, 1.442695
        %v6991 = vpow.pop %v6990
        %v6992 = vmul.f32 %v5684, 1.442695
        %v6993 = vpow.pop %v6992
        %v6994 = vmul.f32 %v5685, 1.442695
        %v6995 = vpow.pop %v6994
        %v6996 = vmul.f32 %v5686, 1.442695
        %v6997 = vpow.pop %v6996
        %v6998 = vmul.f32 %v5687, 1.442695
        %v6999 = vpow.pop %v6998
        %v7000 = vmul.f32 %v5688, 1.442695
        %v7001 = vpow.pop %v7000
        %v7002 = vmul.f32 %v5689, 1.442695
        %v7003 = vpow.pop %v7002
        %v7004 = vmul.f32 %v5690, 1.442695
        %v7005 = vpow.pop %v7004
        %v7006 = vmul.f32 %v5691, 1.442695
        %v7007 = vpow.pop %v7006
        %v7008 = vmul.f32 %v5692, 1.442695
        %v7009 = vpow.pop %v7008
        %v7010 = vmul.f32 %v5693, 1.442695
        %v7011 = vpow.pop %v7010
        %v7012 = vmul.f32 %v5694, 1.442695
        %v7013 = vpow.pop %v7012
        %v7014 = vmul.f32 %v5695, 1.442695
        %v7015 = vpow.pop %v7014
        %v7016 = vmul.f32 %v5696, 1.442695
        %v7017 = vpow.pop %v7016
        %v7018 = vmul.f32 %v5697, 1.442695
        %v7019 = vpow.pop %v7018
        %v7020 = vmul.f32 %v5698, 1.442695
        %v7021 = vpow.pop %v7020
        %v7022 = vmul.f32 %v5699, 1.442695
        %v7023 = vpow.pop %v7022
        %v7024 = vmul.f32 %v5700, 1.442695
        %v7025 = vpow.pop %v7024
        %v7026 = vmul.f32 %v5701, 1.442695
        %v7027 = vpow.pop %v7026
        %v7028 = vmul.f32 %v5702, 1.442695
        %v7029 = vpow.pop %v7028
        %v7030 = vmul.f32 %v5703, 1.442695
        %v7031 = vpow.pop %v7030
        %v7032 = vmul.f32 %v5704, 1.442695
        %v7033 = vpow.pop %v7032
        %v7034 = vmul.f32 %v5705, 1.442695
        %v7035 = vpow.pop %v7034
        %v7036 = vmul.f32 %v5706, 1.442695
        %v7037 = vpow.pop %v7036
        %v7038 = vmul.f32 %v5707, 1.442695
        %v7039 = vpow.pop %v7038
        %v7040 = vmul.f32 %v5708, 1.442695
        %v7041 = vpow.pop %v7040
        %v7042 = vmul.f32 %v5709, 1.442695
        %v7043 = vpow.pop %v7042
        %v7044 = vmul.f32 %v5710, 1.442695
        %v7045 = vpow.pop %v7044
        %v7046 = vmul.f32 %v5711, 1.442695
        %v7047 = vpow.pop %v7046
        %v7048 = vmul.f32 %v5712, 1.442695
        %v7049 = vpow.pop %v7048
        %v7050 = vmul.f32 %v5713, 1.442695
        %v7051 = vpow.pop %v7050
        %v7052 = vmul.f32 %v5714, 1.442695
        %v7053 = vpow.pop %v7052
        %v7054 = vmul.f32 %v5715, 1.442695
        %v7055 = vpow.pop %v7054
        %v7056 = vmul.f32 %v5716, 1.442695
        %v7057 = vpow.pop %v7056
        %v7058 = vmul.f32 %v5717, 1.442695
        %v7059 = vpow.pop %v7058
        %v7060 = vmul.f32 %v5718, 1.442695
        %v7061 = vpow.pop %v7060
        %v7062 = vmul.f32 %v5719, 1.442695
        %v7063 = vpow.pop %v7062
        %v7064 = vmul.f32 %v5720, 1.442695
        %v7065 = vpow.pop %v7064
        %v7066 = vmul.f32 %v5721, 1.442695
        %v7067 = vpow.pop %v7066
        %v7068 = vmul.f32 %v5722, 1.442695
        %v7069 = vpow.pop %v7068
        %v7070 = vmul.f32 %v5723, 1.442695
        %v7071 = vpow.pop %v7070
        %v7072 = vmul.f32 %v5724, 1.442695
        %v7073 = vpow.pop %v7072
        %v7074 = vmul.f32 %v5725, 1.442695
        %v7075 = vpow.pop %v7074
        %v7076 = vmul.f32 %v5726, 1.442695
        %v7077 = vpow.pop %v7076
        %v7078 = vmul.f32 %v5727, 1.442695
        %v7079 = vpow.pop %v7078
        %v7080 = vmul.f32 %v5728, 1.442695
        %v7081 = vpow.pop %v7080
        %v7082 = vmul.f32 %v5729, 1.442695
        %v7083 = vpow.pop %v7082
        %v7084 = vmul.f32 %v5730, 1.442695
        %v7085 = vpow.pop %v7084
        %v7086 = vmul.f32 %v5731, 1.442695
        %v7087 = vpow.pop %v7086
        %v7088 = vmul.f32 %v5732, 1.442695
        %v7089 = vpow.pop %v7088
        %v7090 = vmul.f32 %v5733, 1.442695
        %v7091 = vpow.pop %v7090
        %v7092 = vmul.f32 %v5734, 1.442695
        %v7093 = vpow.pop %v7092
        %v7094 = vmul.f32 %v5735, 1.442695
        %v7095 = vpow.pop %v7094
        %v7096 = vmul.f32 %v5736, 1.442695
        %v7097 = vpow.pop %v7096
        %v7098 = vmul.f32 %v5737, 1.442695
        %v7099 = vpow.pop %v7098
        %v7100 = vmul.f32 %v5738, 1.442695
        %v7101 = vpow.pop %v7100
        %v7102 = vmul.f32 %v5739, 1.442695
        %v7103 = vpow.pop %v7102
        %v7104 = vmul.f32 %v5740, 1.442695
        %v7105 = vpow.pop %v7104
        %v7106 = vmul.f32 %v5741, 1.442695
        %v7107 = vpow.pop %v7106
        %v7108 = vmul.f32 %v5742, 1.442695
        %v7109 = vpow.pop %v7108
        %v7110 = vmul.f32 %v5743, 1.442695
        %v7111 = vpow.pop %v7110
        %v7112 = vmul.f32 %v5744, 1.442695
        %v7113 = vpow.pop %v7112
        %v7114 = vmul.f32 %v5745, 1.442695
        %v7115 = vpow.pop %v7114
        %v7116 = vmul.f32 %v5746, 1.442695
        %v7117 = vpow.pop %v7116
        %v7118 = vmul.f32 %v5747, 1.442695
        %v7119 = vpow.pop %v7118
        %v7120 = vmul.f32 %v5748, 1.442695
        %v7121 = vpow.pop %v7120
        %v7122 = vmul.f32 %v5749, 1.442695
        %v7123 = vpow.pop %v7122
        %v7124 = vmul.f32 %v5750, 1.442695
        %v7125 = vpow.pop %v7124
        %v7126 = vmul.f32 %v5751, 1.442695
        %v7127 = vpow.pop %v7126
        %v7128 = vmul.f32 %v5752, 1.442695
        %v7129 = vpow.pop %v7128
        %v7130 = vmul.f32 %v5753, 1.442695
        %v7131 = vpow.pop %v7130
        %v7132 = vmul.f32 %v5754, 1.442695
        %v7133 = vpow.pop %v7132
        %v7134 = vmul.f32 %v5755, 1.442695
        %v7135 = vpow.pop %v7134
        %v7136 = vmul.f32 %v5756, 1.442695
        %v7137 = vpow.pop %v7136
        %v7138 = vmul.f32 %v5757, 1.442695
        %v7139 = vpow.pop %v7138
        %v7140 = vmul.f32 %v5758, 1.442695
        %v7141 = vpow.pop %v7140
        %v7142 = vmul.f32 %v5759, 1.442695
        %v7143 = vpow.pop %v7142
        %v7144 = vmul.f32 %v5760, 1.442695
        %v7145 = vpow.pop %v7144
        %v7146 = vmul.f32 %v5761, 1.442695
        %v7147 = vpow.pop %v7146
        %v7148 = vmul.f32 %v5762, 1.442695
        %v7149 = vpow.pop %v7148
        %v7150 = vmul.f32 %v5763, 1.442695
        %v7151 = vpow.pop %v7150
        %v7152 = vmul.f32 %v5764, 1.442695
        %v7153 = vpow.pop %v7152
        %v7154 = vmul.f32 %v5765, 1.442695
        %v7155 = vpow.pop %v7154
        %v7156 = vmul.f32 %v5766, 1.442695
        %v7157 = vpow.pop %v7156
        %v7158 = vmul.f32 %v5767, 1.442695
        %v7159 = vpow.pop %v7158
        %v7160 = vmul.f32 %v5768, 1.442695
        %v7161 = vpow.pop %v7160
        %v7162 = vmul.f32 %v5769, 1.442695
        %v7163 = vpow.pop %v7162
        %v7164 = vmul.f32 %v5770, 1.442695
        %v7165 = vpow.pop %v7164
        %v7166 = vmul.f32 %v5771, 1.442695
        %v7167 = vpow.pop %v7166
        %v7168 = vmul.f32 %v5772, 1.442695
        %v7169 = vpow.pop %v7168
        %v7170 = vmul.f32 %v5773, 1.442695
        %v7171 = vpow.pop %v7170
        %v7172 = vmul.f32 %v5774, 1.442695
        %v7173 = vpow.pop %v7172
        %v7174 = vmul.f32 %v5775, 1.442695
        %v7175 = vpow.pop %v7174
        %v7176 = vmul.f32 %v5776, 1.442695
        %v7177 = vpow.pop %v7176
        %v7178 = vmul.f32 %v5777, 1.442695
        %v7179 = vpow.pop %v7178
        %v7180 = vmul.f32 %v5778, 1.442695
        %v7181 = vpow.pop %v7180
        %v7182 = vmul.f32 %v5779, 1.442695
        %v7183 = vpow.pop %v7182
        %v7184 = vmul.f32 %v5780, 1.442695
        %v7185 = vpow.pop %v7184
        %v7186 = vmul.f32 %v5781, 1.442695
        %v7187 = vpow.pop %v7186
        %v7188 = vmul.f32 %v5782, 1.442695
        %v7189 = vpow.pop %v7188
        %v7190 = vmul.f32 %v5783, 1.442695
        %v7191 = vpow.pop %v7190
        %v7192 = vmul.f32 %v5784, 1.442695
        %v7193 = vpow.pop %v7192
        %v7194 = vmul.f32 %v5785, 1.442695
        %v7195 = vpow.pop %v7194
        %v7196 = vmul.f32 %v5786, 1.442695
        %v7197 = vpow.pop %v7196
        %v7198 = vmul.f32 %v5787, 1.442695
        %v7199 = vpow.pop %v7198
        %v7200 = vmul.f32 %v5788, 1.442695
        %v7201 = vpow.pop %v7200
        %v7202 = vmul.f32 %v5789, 1.442695
        %v7203 = vpow.pop %v7202
        %v7204 = vmul.f32 %v5790, 1.442695
        %v7205 = vpow.pop %v7204
        %v7206 = vmul.f32 %v5791, 1.442695
        %v7207 = vpow.pop %v7206
        %v7208 = vmul.f32 %v5792, 1.442695
        %v7209 = vpow.pop %v7208
        %v7210 = vmul.f32 %v5793, 1.442695
        %v7211 = vpow.pop %v7210
        %v7212 = vmul.f32 %v5794, 1.442695
        %v7213 = vpow.pop %v7212
        %v7214 = vmul.f32 %v5795, 1.442695
        %v7215 = vpow.pop %v7214
        %v7216 = vmul.f32 %v5796, 1.442695
        %v7217 = vpow.pop %v7216
        %v7218 = vmul.f32 %v5797, 1.442695
        %v7219 = vpow.pop %v7218
        %v7220 = vmul.f32 %v5798, 1.442695
        %v7221 = vpow.pop %v7220
        %v7222 = vmul.f32 %v5799, 1.442695
        %v7223 = vpow.pop %v7222
        %v7224 = vmul.f32 %v5800, 1.442695
        %v7225 = vpow.pop %v7224
        %v7226 = vmul.f32 %v5801, 1.442695
        %v7227 = vpow.pop %v7226
        %v7228 = vmul.f32 %v5802, 1.442695
        %v7229 = vpow.pop %v7228
        %v7230 = vmul.f32 %v5803, 1.442695
        %v7231 = vpow.pop %v7230
        %v7232 = vmul.f32 %v5804, 1.442695
        %v7233 = vpow.pop %v7232
        %v7234 = vmul.f32 %v5805, 1.442695
        %v7235 = vpow.pop %v7234
        %v7236 = vmul.f32 %v5806, 1.442695
        %v7237 = vpow.pop %v7236
        %v7238 = vmul.f32 %v5807, 1.442695
        %v7239 = vpow.pop %v7238
        %v7240 = vmul.f32 %v5808, 1.442695
        %v7241 = vpow.pop %v7240
        %v7242 = vmul.f32 %v5809, 1.442695
        %v7243 = vpow.pop %v7242
        %v7244 = vmul.f32 %v5810, 1.442695
        %v7245 = vpow.pop %v7244
        %v7246 = vmul.f32 %v5811, 1.442695
        %v7247 = vpow.pop %v7246
        %v7248 = vmul.f32 %v5812, 1.442695
        %v7249 = vpow.pop %v7248
        %v7250 = vmul.f32 %v5813, 1.442695
        %v7251 = vpow.pop %v7250
        %v7252 = vmul.f32 %v5814, 1.442695
        %v7253 = vpow.pop %v7252
        %v7254 = vmul.f32 %v5815, 1.442695
        %v7255 = vpow.pop %v7254
        %v7256 = vmul.f32 %v5816, 1.442695
        %v7257 = vpow.pop %v7256
        %v7258 = vmul.f32 %v5817, 1.442695
        %v7259 = vpow.pop %v7258
        %v7260 = vmul.f32 %v5818, 1.442695
        %v7261 = vpow.pop %v7260
        %v7262 = vmul.f32 %v5819, 1.442695
        %v7263 = vpow.pop %v7262
        %v7264 = vmul.f32 %v5820, 1.442695
        %v7265 = vpow.pop %v7264
        %v7266 = vmul.f32 %v5821, 1.442695
        %v7267 = vpow.pop %v7266
        %v7268 = vmul.f32 %v5822, 1.442695
        %v7269 = vpow.pop %v7268
        %v7270 = vmul.f32 %v5823, 1.442695
        %v7271 = vpow.pop %v7270
        %v7272 = vmul.f32 %v5824, 1.442695
        %v7273 = vpow.pop %v7272
        %v7274 = vmul.f32 %v5825, 1.442695
        %v7275 = vpow.pop %v7274
        %v7276 = vmul.f32 %v5826, 1.442695
        %v7277 = vpow.pop %v7276
        %v7278 = vmul.f32 %v5827, 1.442695
        %v7279 = vpow.pop %v7278
        %v7280 = vmul.f32 %v5828, 1.442695
        %v7281 = vpow.pop %v7280
        %v7282 = vmul.f32 %v5829, 1.442695
        %v7283 = vpow.pop %v7282
        %v7284 = vmul.f32 %v5830, 1.442695
        %v7285 = vpow.pop %v7284
        %v7286 = vmul.f32 %v5831, 1.442695
        %v7287 = vpow.pop %v7286
        %v7288 = vmul.f32 %v5832, 1.442695
        %v7289 = vpow.pop %v7288
        %v7290 = vmul.f32 %v5833, 1.442695
        %v7291 = vpow.pop %v7290
        %v7292 = vmul.f32 %v5834, 1.442695
        %v7293 = vpow.pop %v7292
        %v7294 = vmul.f32 %v5835, 1.442695
        %v7295 = vpow.pop %v7294
        %v7296 = vmul.f32 %v5836, 1.442695
        %v7297 = vpow.pop %v7296
        %v7298 = vmul.f32 %v5837, 1.442695
        %v7299 = vpow.pop %v7298
        %v7300 = vmul.f32 %v5838, 1.442695
        %v7301 = vpow.pop %v7300
        %v7302 = vmul.f32 %v5839, 1.442695
        %v7303 = vpow.pop %v7302
        %v7304 = vmul.f32 %v5840, 1.442695
        %v7305 = vpow.pop %v7304
        %v7306 = vmul.f32 %v5841, 1.442695
        %v7307 = vpow.pop %v7306
        %v7308 = vmul.f32 %v5842, 1.442695
        %v7309 = vpow.pop %v7308
        %v7310 = vmul.f32 %v5843, 1.442695
        %v7311 = vpow.pop %v7310
        %v7312 = vmul.f32 %v5844, 1.442695
        %v7313 = vpow.pop %v7312
        %v7314 = vmul.f32 %v5845, 1.442695
        %v7315 = vpow.pop %v7314
        %v7316 = vmul.f32 %v5846, 1.442695
        %v7317 = vpow.pop %v7316
        %v7318 = vmul.f32 %v5847, 1.442695
        %v7319 = vpow.pop %v7318
        %v7320 = vmul.f32 %v5848, 1.442695
        %v7321 = vpow.pop %v7320
        %v7322 = vmul.f32 %v5849, 1.442695
        %v7323 = vpow.pop %v7322
        %v7324 = vmul.f32 %v5850, 1.442695
        %v7325 = vpow.pop %v7324
        %v7326 = vmul.f32 %v5851, 1.442695
        %v7327 = vpow.pop %v7326
        %v7328 = vmul.f32 %v5852, 1.442695
        %v7329 = vpow.pop %v7328
        %v7330 = vmul.f32 %v5853, 1.442695
        %v7331 = vpow.pop %v7330
        %v7332 = vmul.f32 %v5854, 1.442695
        %v7333 = vpow.pop %v7332
        %v7334 = vmul.f32 %v5855, 1.442695
        %v7335 = vpow.pop %v7334
        %v7336 = vmul.f32 %v5856, 1.442695
        %v7337 = vpow.pop %v7336
        %v7338 = vmul.f32 %v5857, 1.442695
        %v7339 = vpow.pop %v7338
        %v7340 = vmul.f32 %v5858, 1.442695
        %v7341 = vpow.pop %v7340
        %v7342 = vmul.f32 %v5859, 1.442695
        %v7343 = vpow.pop %v7342
        %v7344 = vmul.f32 %v5860, 1.442695
        %v7345 = vpow.pop %v7344
        %v7346 = vmul.f32 %v5861, 1.442695
        %v7347 = vpow.pop %v7346
        %v7348 = vmul.f32 %v5862, 1.442695
        %v7349 = vpow.pop %v7348
        %v7350 = vmul.f32 %v5863, 1.442695
        %v7351 = vpow.pop %v7350
        %v7352 = vmul.f32 %v5864, 1.442695
        %v7353 = vpow.pop %v7352
        %v7354 = vmul.f32 %v5865, 1.442695
        %v7355 = vpow.pop %v7354
        %v7356 = vmul.f32 %v5866, 1.442695
        %v7357 = vpow.pop %v7356
        %v7358 = vmul.f32 %v5867, 1.442695
        %v7359 = vpow.pop %v7358
        %v7360 = vmul.f32 %v5868, 1.442695
        %v7361 = vpow.pop %v7360
        %v7362 = vmul.f32 %v5869, 1.442695
        %v7363 = vpow.pop %v7362
        %v7364 = vmul.f32 %v5870, 1.442695
        %v7365 = vpow.pop %v7364
        %v7366 = vmul.f32 %v5871, 1.442695
        %v7367 = vpow.pop %v7366
        %v7368 = vmul.f32 %v5872, 1.442695
        %v7369 = vpow.pop %v7368
        %v7370 = vmul.f32 %v5873, 1.442695
        %v7371 = vpow.pop %v7370
        %v7372 = vmul.f32 %v5874, 1.442695
        %v7373 = vpow.pop %v7372
        %v7374 = vmul.f32 %v5875, 1.442695
        %v7375 = vpow.pop %v7374
        %v7376 = vmul.f32 %v5876, 1.442695
        %v7377 = vpow.pop %v7376
        %v7378 = vmul.f32 %v5877, 1.442695
        %v7379 = vpow.pop %v7378
        %v7380 = vmul.f32 %v5878, 1.442695
        %v7381 = vpow.pop %v7380
        %v7382 = vmul.f32 %v5879, 1.442695
        %v7383 = vpow.pop %v7382
        %v7384 = vmul.f32 %v5880, 1.442695
        %v7385 = vpow.pop %v7384
        %v7386 = vmul.f32 %v5881, 1.442695
        %v7387 = vpow.pop %v7386
        %v7388 = vmul.f32 %v5882, 1.442695
        %v7389 = vpow.pop %v7388
        %v7390 = vmul.f32 %v5883, 1.442695
        %v7391 = vpow.pop %v7390
        %v7392 = vmul.f32 %v5884, 1.442695
        %v7393 = vpow.pop %v7392
        %v7394 = vmul.f32 %v5885, 1.442695
        %v7395 = vpow.pop %v7394
        %v7396 = vmul.f32 %v5886, 1.442695
        %v7397 = vpow.pop %v7396
        %v7398 = vmul.f32 %v5887, 1.442695
        %v7399 = vpow.pop %v7398
        %v7400 = vmul.f32 %v5888, 1.442695
        %v7401 = vpow.pop %v7400
        %v7402 = vmul.f32 %v5889, 1.442695
        %v7403 = vpow.pop %v7402
        %v7404 = vmul.f32 %v5890, 1.442695
        %v7405 = vpow.pop %v7404
        %v7406 = vmul.f32 %v5891, 1.442695
        %v7407 = vpow.pop %v7406
        %v7408 = vmul.f32 %v5892, 1.442695
        %v7409 = vpow.pop %v7408
        %v7410 = vmul.f32 %v5893, 1.442695
        %v7411 = vpow.pop %v7410
        %v7412 = vmul.f32 %v5894, 1.442695
        %v7413 = vpow.pop %v7412
        %v7414 = vmul.f32 %v5895, 1.442695
        %v7415 = vpow.pop %v7414
        %v7416 = vmul.f32 %v5896, 1.442695
        %v7417 = vpow.pop %v7416
        %v7418 = vmul.f32 %v5897, 1.442695
        %v7419 = vpow.pop %v7418
        %v7420 = vmul.f32 %v5898, 1.442695
        %v7421 = vpow.pop %v7420
        %v7422 = vmul.f32 %v5899, 1.442695
        %v7423 = vpow.pop %v7422
        %v7424 = vmul.f32 %v5900, 1.442695
        %v7425 = vpow.pop %v7424
        %v7426 = vmul.f32 %v5901, 1.442695
        %v7427 = vpow.pop %v7426
        %v7428 = vmul.f32 %v5902, 1.442695
        %v7429 = vpow.pop %v7428
        %v7430 = vmul.f32 %v5903, 1.442695
        %v7431 = vpow.pop %v7430
        %v7432 = vmul.f32 %v5904, 1.442695
        %v7433 = vpow.pop %v7432
        %v7434 = vmul.f32 %v5905, 1.442695
        %v7435 = vpow.pop %v7434
        %v7436 = vmul.f32 %v5906, 1.442695
        %v7437 = vpow.pop %v7436
        %v7438 = vmul.f32 %v5907, 1.442695
        %v7439 = vpow.pop %v7438
        %v7440 = vmul.f32 %v5908, 1.442695
        %v7441 = vpow.pop %v7440
        %v7442 = vmul.f32 %v5909, 1.442695
        %v7443 = vpow.pop %v7442
        %v7444 = vmul.f32 %v5910, 1.442695
        %v7445 = vpow.pop %v7444
        %v7446 = vmul.f32 %v5911, 1.442695
        %v7447 = vpow.pop %v7446
        %v7448 = vmul.f32 %v5912, 1.442695
        %v7449 = vpow.pop %v7448
        %v7450 = vmul.f32 %v5913, 1.442695
        %v7451 = vpow.pop %v7450
        %v7452 = vmul.f32 %v5914, 1.442695
        %v7453 = vpow.pop %v7452
        %v7454 = vmul.f32 %v5915, 1.442695
        %v7455 = vpow.pop %v7454
        %v7456 = vmul.f32 %v5916, 1.442695
        %v7457 = vpow.pop %v7456
        %v7458 = vmul.f32 %v5917, 1.442695
        %v7459 = vpow.pop %v7458
        %v7460 = vmul.f32 %v5918, 1.442695
        %v7461 = vpow.pop %v7460
        %v7462 = vmul.f32 %v5919, 1.442695
        %v7463 = vpow.pop %v7462
        %v7464 = vmul.f32 %v5920, 1.442695
        %v7465 = vpow.pop %v7464
        %v7466 = vmul.f32 %v5921, 1.442695
        %v7467 = vpow.pop %v7466
        %v7468 = vmul.f32 %v5922, 1.442695
        %v7469 = vpow.pop %v7468
        %v7470 = vmul.f32 %v5923, 1.442695
        %v7471 = vpow.pop %v7470
        %v7472 = vmul.f32 %v5924, 1.442695
        %v7473 = vpow.pop %v7472
        %v7474 = vmul.f32 %v5925, 1.442695
        %v7475 = vpow.pop %v7474
        %v7476 = vmul.f32 %v5926, 1.442695
        %v7477 = vpow.pop %v7476
        %v7478 = vmul.f32 %v5927, 1.442695
        %v7479 = vpow.pop %v7478
        %v7480 = vmul.f32 %v5928, 1.442695
        %v7481 = vpow.pop %v7480
        %v7482 = vmul.f32 %v5929, 1.442695
        %v7483 = vpow.pop %v7482
        %v7484 = vmul.f32 %v5930, 1.442695
        %v7485 = vpow.pop %v7484
        %v7486 = vmul.f32 %v5931, 1.442695
        %v7487 = vpow.pop %v7486
        %v7488 = vmul.f32 %v5932, 1.442695
        %v7489 = vpow.pop %v7488
        %v7490 = vmul.f32 %v5933, 1.442695
        %v7491 = vpow.pop %v7490
        %v7492 = vmul.f32 %v5934, 1.442695
        %v7493 = vpow.pop %v7492
        %v7494 = vmul.f32 %v5935, 1.442695
        %v7495 = vpow.pop %v7494
        %v7496 = vmul.f32 %v5936, 1.442695
        %v7497 = vpow.pop %v7496
        %v7498 = vmul.f32 %v5937, 1.442695
        %v7499 = vpow.pop %v7498
        %v7500 = vmul.f32 %v5938, 1.442695
        %v7501 = vpow.pop %v7500
        %v7502 = vmul.f32 %v5939, 1.442695
        %v7503 = vpow.pop %v7502
        %v7504 = vmul.f32 %v5940, 1.442695
        %v7505 = vpow.pop %v7504
        %v7506 = vmul.f32 %v5941, 1.442695
        %v7507 = vpow.pop %v7506
        %v7508 = vmul.f32 %v5942, 1.442695
        %v7509 = vpow.pop %v7508
        %v7510 = vmul.f32 %v5943, 1.442695
        %v7511 = vpow.pop %v7510
        %v7512 = vmul.f32 %v5944, 1.442695
        %v7513 = vpow.pop %v7512
        %v7514 = vmul.f32 %v5945, 1.442695
        %v7515 = vpow.pop %v7514
        %v7516 = vmul.f32 %v5946, 1.442695
        %v7517 = vpow.pop %v7516
        %v7518 = vmul.f32 %v5947, 1.442695
        %v7519 = vpow.pop %v7518
        %v7520 = vmul.f32 %v5948, 1.442695
        %v7521 = vpow.pop %v7520
        %v7522 = vmul.f32 %v5949, 1.442695
        %v7523 = vpow.pop %v7522
        %v7524 = vmul.f32 %v5950, 1.442695
        %v7525 = vpow.pop %v7524
        %v7526 = vmul.f32 %v5951, 1.442695
        %v7527 = vpow.pop %v7526
        %v7528 = vmul.f32 %v5952, 1.442695
        %v7529 = vpow.pop %v7528
        %v7530 = vmul.f32 %v5953, 1.442695
        %v7531 = vpow.pop %v7530
        %v7532 = vmul.f32 %v5954, 1.442695
        %v7533 = vpow.pop %v7532
        %v7534 = vmul.f32 %v5955, 1.442695
        %v7535 = vpow.pop %v7534
        %v7536 = vmul.f32 %v5956, 1.442695
        %v7537 = vpow.pop %v7536
        %v7538 = vmul.f32 %v5957, 1.442695
        %v7539 = vpow.pop %v7538
        %v7540 = vmul.f32 %v5958, 1.442695
        %v7541 = vpow.pop %v7540
        %v7542 = vmul.f32 %v5959, 1.442695
        %v7543 = vpow.pop %v7542
        %v7544 = vmul.f32 %v5960, 1.442695
        %v7545 = vpow.pop %v7544
        %v7546 = vmul.f32 %v5961, 1.442695
        %v7547 = vpow.pop %v7546
        %v7548 = vmul.f32 %v5962, 1.442695
        %v7549 = vpow.pop %v7548
        %v7550 = vmul.f32 %v5963, 1.442695
        %v7551 = vpow.pop %v7550
        %v7552 = vmul.f32 %v5964, 1.442695
        %v7553 = vpow.pop %v7552
        %v7554 = vmul.f32 %v5965, 1.442695
        %v7555 = vpow.pop %v7554
        %v7556 = vmul.f32 %v5966, 1.442695
        %v7557 = vpow.pop %v7556
        %v7558 = vmul.f32 %v5967, 1.442695
        %v7559 = vpow.pop %v7558
        %v7560 = vmul.f32 %v5968, 1.442695
        %v7561 = vpow.pop %v7560
        %v7562 = vmul.f32 %v5969, 1.442695
        %v7563 = vpow.pop %v7562
        %v7564 = vmul.f32 %v5970, 1.442695
        %v7565 = vpow.pop %v7564
        %v7566 = vmul.f32 %v5971, 1.442695
        %v7567 = vpow.pop %v7566
        %v7568 = vmul.f32 %v5972, 1.442695
        %v7569 = vpow.pop %v7568
        %v7570 = vmul.f32 %v5973, 1.442695
        %v7571 = vpow.pop %v7570
        %v7572 = vmul.f32 %v5974, 1.442695
        %v7573 = vpow.pop %v7572
        %v7574 = vmul.f32 %v5975, 1.442695
        %v7575 = vpow.pop %v7574
        %v7576 = vmul.f32 %v5976, 1.442695
        %v7577 = vpow.pop %v7576
        %v7578 = vmul.f32 %v5977, 1.442695
        %v7579 = vpow.pop %v7578
        %v7580 = vmul.f32 %v5978, 1.442695
        %v7581 = vpow.pop %v7580
        %v7582 = vmul.f32 %v5979, 1.442695
        %v7583 = vpow.pop %v7582
        %v7584 = vmul.f32 %v5980, 1.442695
        %v7585 = vpow.pop %v7584
        %v7586 = vmul.f32 %v5981, 1.442695
        %v7587 = vpow.pop %v7586
        %v7588 = vmul.f32 %v5982, 1.442695
        %v7589 = vpow.pop %v7588
        %v7590 = vmul.f32 %v5983, 1.442695
        %v7591 = vpow.pop %v7590
        %v7592 = vmul.f32 %v5984, 1.442695
        %v7593 = vpow.pop %v7592
        %v7594 = vmul.f32 %v5985, 1.442695
        %v7595 = vpow.pop %v7594
        %v7596 = vmul.f32 %v5986, 1.442695
        %v7597 = vpow.pop %v7596
        %v7598 = vmul.f32 %v5987, 1.442695
        %v7599 = vpow.pop %v7598
        %v7600 = vmul.f32 %v5988, 1.442695
        %v7601 = vpow.pop %v7600
        %v7602 = vmul.f32 %v5989, 1.442695
        %v7603 = vpow.pop %v7602
        %v7604 = vmul.f32 %v5990, 1.442695
        %v7605 = vpow.pop %v7604
        %v7606 = vmul.f32 %v5991, 1.442695
        %v7607 = vpow.pop %v7606
        %v7608 = vmul.f32 %v5992, 1.442695
        %v7609 = vpow.pop %v7608
        %v7610 = vmul.f32 %v5993, 1.442695
        %v7611 = vpow.pop %v7610
        %v7612 = vmul.f32 %v5994, 1.442695
        %v7613 = vpow.pop %v7612
        %v7614 = vmul.f32 %v5995, 1.442695
        %v7615 = vpow.pop %v7614
        %v7616 = vmul.f32 %v5996, 1.442695
        %v7617 = vpow.pop %v7616
        %v7618 = vmul.f32 %v5997, 1.442695
        %v7619 = vpow.pop %v7618
        %v7620 = vmul.f32 %v5998, 1.442695
        %v7621 = vpow.pop %v7620
        %v7622 = vmul.f32 %v5999, 1.442695
        %v7623 = vpow.pop %v7622
        %v7624 = vmul.f32 %v6000, 1.442695
        %v7625 = vpow.pop %v7624
        %v7626 = vmul.f32 %v6001, 1.442695
        %v7627 = vpow.pop %v7626
        %v7628 = vmul.f32 %v6002, 1.442695
        %v7629 = vpow.pop %v7628
        %v7630 = vmul.f32 %v6003, 1.442695
        %v7631 = vpow.pop %v7630
        %v7632 = vmul.f32 %v6004, 1.442695
        %v7633 = vpow.pop %v7632
        %v7634 = vmul.f32 %v6005, 1.442695
        %v7635 = vpow.pop %v7634
        %v7636 = vmul.f32 %v6006, 1.442695
        %v7637 = vpow.pop %v7636
        %v7638 = vmul.f32 %v6007, 1.442695
        %v7639 = vpow.pop %v7638
        %v7640 = vmul.f32 %v6008, 1.442695
        %v7641 = vpow.pop %v7640
        %v7642 = vmul.f32 %v6009, 1.442695
        %v7643 = vpow.pop %v7642
        %v7644 = vmul.f32 %v6010, 1.442695
        %v7645 = vpow.pop %v7644
        %v7646 = vmul.f32 %v6011, 1.442695
        %v7647 = vpow.pop %v7646
        %v7648 = vmul.f32 %v6012, 1.442695
        %v7649 = vpow.pop %v7648
        %v7650 = vmul.f32 %v6013, 1.442695
        %v7651 = vpow.pop %v7650
        %v7652 = vmul.f32 %v6014, 1.442695
        %v7653 = vpow.pop %v7652
        %v7654 = vmul.f32 %v6015, 1.442695
        %v7655 = vpow.pop %v7654
        %v7656 = vmul.f32 %v6016, 1.442695
        %v7657 = vpow.pop %v7656
        %v7658 = vmul.f32 %v6017, 1.442695
        %v7659 = vpow.pop %v7658
        %v7660 = vmul.f32 %v6018, 1.442695
        %v7661 = vpow.pop %v7660
        %v7662 = vmul.f32 %v6019, 1.442695
        %v7663 = vpow.pop %v7662
        %v7664 = vmul.f32 %v6020, 1.442695
        %v7665 = vpow.pop %v7664
        %v7666 = vmul.f32 %v6021, 1.442695
        %v7667 = vpow.pop %v7666
        %v7668 = vmul.f32 %v6022, 1.442695
        %v7669 = vpow.pop %v7668
        %v7670 = vmul.f32 %v6023, 1.442695
        %v7671 = vpow.pop %v7670
        %v7672 = vmul.f32 %v6024, 1.442695
        %v7673 = vpow.pop %v7672
        %v7674 = vmul.f32 %v6025, 1.442695
        %v7675 = vpow.pop %v7674
        %v7676 = vmul.f32 %v6026, 1.442695
        %v7677 = vpow.pop %v7676
        %v7678 = vmul.f32 %v6027, 1.442695
        %v7679 = vpow.pop %v7678
        %v7680 = vmul.f32 %v6028, 1.442695
        %v7681 = vpow.pop %v7680
        %v7682 = vmul.f32 %v6029, 1.442695
        %v7683 = vpow.pop %v7682
        %v7684 = vmul.f32 %v6030, 1.442695
        %v7685 = vpow.pop %v7684
        %v7686 = vmul.f32 %v6031, 1.442695
        %v7687 = vpow.pop %v7686
        %v7688 = vmul.f32 %v6032, 1.442695
        %v7689 = vpow.pop %v7688
        %v7690 = vmul.f32 %v6033, 1.442695
        %v7691 = vpow.pop %v7690
        %v7692 = vmul.f32 %v6034, 1.442695
        %v7693 = vpow.pop %v7692
        %v7694 = vmul.f32 %v6035, 1.442695
        %v7695 = vpow.pop %v7694
        %v7696 = vmul.f32 %v6036, 1.442695
        %v7697 = vpow.pop %v7696
        %v7698 = vmul.f32 %v6037, 1.442695
        %v7699 = vpow.pop %v7698
        %v7700 = vmul.f32 %v6038, 1.442695
        %v7701 = vpow.pop %v7700
        %v7702 = vmul.f32 %v6039, 1.442695
        %v7703 = vpow.pop %v7702
        %v7704 = vmul.f32 %v6040, 1.442695
        %v7705 = vpow.pop %v7704
        %v7706 = vmul.f32 %v6041, 1.442695
        %v7707 = vpow.pop %v7706
        %v7708 = vmul.f32 %v6042, 1.442695
        %v7709 = vpow.pop %v7708
        %v7710 = vmul.f32 %v6043, 1.442695
        %v7711 = vpow.pop %v7710
        %v7712 = vmul.f32 %v6044, 1.442695
        %v7713 = vpow.pop %v7712
        %v7714 = vmul.f32 %v6045, 1.442695
        %v7715 = vpow.pop %v7714
        %v7716 = vmul.f32 %v6046, 1.442695
        %v7717 = vpow.pop %v7716
        %v7718 = vmul.f32 %v6047, 1.442695
        %v7719 = vpow.pop %v7718
        %v7720 = vmul.f32 %v6048, 1.442695
        %v7721 = vpow.pop %v7720
        %v7722 = vmul.f32 %v6049, 1.442695
        %v7723 = vpow.pop %v7722
        %v7724 = vmul.f32 %v6050, 1.442695
        %v7725 = vpow.pop %v7724
        %v7726 = vmul.f32 %v6051, 1.442695
        %v7727 = vpow.pop %v7726
        %v7728 = vmul.f32 %v6052, 1.442695
        %v7729 = vpow.pop %v7728
        %v7730 = vmul.f32 %v6053, 1.442695
        %v7731 = vpow.pop %v7730
        %v7732 = vmul.f32 %v6054, 1.442695
        %v7733 = vpow.pop %v7732
        %v7734 = vmul.f32 %v6055, 1.442695
        %v7735 = vpow.pop %v7734
        %v7736 = vmul.f32 %v6056, 1.442695
        %v7737 = vpow.pop %v7736
        %v7738 = vmul.f32 %v6057, 1.442695
        %v7739 = vpow.pop %v7738
        %v7740 = vmul.f32 %v6058, 1.442695
        %v7741 = vpow.pop %v7740
        %v7742 = vmul.f32 %v6059, 1.442695
        %v7743 = vpow.pop %v7742
        %v7744 = vmul.f32 %v6060, 1.442695
        %v7745 = vpow.pop %v7744
        %v7746 = vmul.f32 %v6061, 1.442695
        %v7747 = vpow.pop %v7746
        %v7748 = vmul.f32 %v6062, 1.442695
        %v7749 = vpow.pop %v7748
        %v7750 = vmul.f32 %v6063, 1.442695
        %v7751 = vpow.pop %v7750
        %v7752 = vmul.f32 %v6064, 1.442695
        %v7753 = vpow.pop %v7752
        %v7754 = vmul.f32 %v6065, 1.442695
        %v7755 = vpow.pop %v7754
        %v7756 = vmul.f32 %v6066, 1.442695
        %v7757 = vpow.pop %v7756
        %v7758 = vmul.f32 %v6067, 1.442695
        %v7759 = vpow.pop %v7758
        %v7760 = vmul.f32 %v6068, 1.442695
        %v7761 = vpow.pop %v7760
        %v7762 = vmul.f32 %v6069, 1.442695
        %v7763 = vpow.pop %v7762
        %v7764 = vmul.f32 %v6070, 1.442695
        %v7765 = vpow.pop %v7764
        %v7766 = vmul.f32 %v6071, 1.442695
        %v7767 = vpow.pop %v7766
        %v7768 = vmul.f32 %v6072, 1.442695
        %v7769 = vpow.pop %v7768
        %v7770 = vmul.f32 %v6073, 1.442695
        %v7771 = vpow.pop %v7770
        %v7772 = vmul.f32 %v6074, 1.442695
        %v7773 = vpow.pop %v7772
        %v7774 = vmul.f32 %v6075, 1.442695
        %v7775 = vpow.pop %v7774
        %v7776 = vmul.f32 %v6076, 1.442695
        %v7777 = vpow.pop %v7776
        %v7778 = vmul.f32 %v6077, 1.442695
        %v7779 = vpow.pop %v7778
        %v7780 = vmul.f32 %v6078, 1.442695
        %v7781 = vpow.pop %v7780
        %v7782 = vmul.f32 %v6079, 1.442695
        %v7783 = vpow.pop %v7782
        %v7784 = vmul.f32 %v6080, 1.442695
        %v7785 = vpow.pop %v7784
        %v7786 = vmul.f32 %v6081, 1.442695
        %v7787 = vpow.pop %v7786
        %v7788 = vmul.f32 %v6082, 1.442695
        %v7789 = vpow.pop %v7788
        %v7790 = vmul.f32 %v6083, 1.442695
        %v7791 = vpow.pop %v7790
        %v7792 = vmul.f32 %v6084, 1.442695
        %v7793 = vpow.pop %v7792
        %v7794 = vmul.f32 %v6085, 1.442695
        %v7795 = vpow.pop %v7794
        %v7796 = vmul.f32 %v6086, 1.442695
        %v7797 = vpow.pop %v7796
        %v7798 = vmul.f32 %v6087, 1.442695
        %v7799 = vpow.pop %v7798
        %v7800 = vmul.f32 %v6088, 1.442695
        %v7801 = vpow.pop %v7800
        %v7802 = vmul.f32 %v6089, 1.442695
        %v7803 = vpow.pop %v7802
        %v7804 = vmul.f32 %v6090, 1.442695
        %v7805 = vpow.pop %v7804
        %v7806 = vmul.f32 %v6091, 1.442695
        %v7807 = vpow.pop %v7806
        %v7808 = vmul.f32 %v6092, 1.442695
        %v7809 = vpow.pop %v7808
        %v7810 = vmul.f32 %v6093, 1.442695
        %v7811 = vpow.pop %v7810
        %v7812 = vmul.f32 %v6094, 1.442695
        %v7813 = vpow.pop %v7812
        %v7814 = vmul.f32 %v6095, 1.442695
        %v7815 = vpow.pop %v7814
        %v7816 = vmul.f32 %v6096, 1.442695
        %v7817 = vpow.pop %v7816
        %v7818 = vmul.f32 %v6097, 1.442695
        %v7819 = vpow.pop %v7818
        %v7820 = vmul.f32 %v6098, 1.442695
        %v7821 = vpow.pop %v7820
        %v7822 = vmul.f32 %v6099, 1.442695
        %v7823 = vpow.pop %v7822
        %v7824 = vmul.f32 %v6100, 1.442695
        %v7825 = vpow.pop %v7824
        %v7826 = vmul.f32 %v6101, 1.442695
        %v7827 = vpow.pop %v7826
        %v7828 = vmul.f32 %v6102, 1.442695
        %v7829 = vpow.pop %v7828
        %v7830 = vmul.f32 %v6103, 1.442695
        %v7831 = vpow.pop %v7830
        %v7832 = vmul.f32 %v6104, 1.442695
        %v7833 = vpow.pop %v7832
        %v7834 = vmul.f32 %v6105, 1.442695
        %v7835 = vpow.pop %v7834
        %v7836 = vmul.f32 %v6106, 1.442695
        %v7837 = vpow.pop %v7836
        %v7838 = vmul.f32 %v6107, 1.442695
        %v7839 = vpow.pop %v7838
        %v7840 = vmul.f32 %v6108, 1.442695
        %v7841 = vpow.pop %v7840
        %v7842 = vmul.f32 %v6109, 1.442695
        %v7843 = vpow.pop %v7842
        %v7844 = vmul.f32 %v6110, 1.442695
        %v7845 = vpow.pop %v7844
        %v7846 = vmul.f32 %v6111, 1.442695
        %v7847 = vpow.pop %v7846
        %v7848 = vmul.f32 %v6112, 1.442695
        %v7849 = vpow.pop %v7848
        %v7850 = vmul.f32 %v6113, 1.442695
        %v7851 = vpow.pop %v7850
        %v7852 = vmul.f32 %v6114, 1.442695
        %v7853 = vpow.pop %v7852
        %v7854 = vmul.f32 %v6115, 1.442695
        %v7855 = vpow.pop %v7854
        %v7856 = vmul.f32 %v6116, 1.442695
        %v7857 = vpow.pop %v7856
        %v7858 = vmul.f32 %v6117, 1.442695
        %v7859 = vpow.pop %v7858
        %v7860 = vmul.f32 %v6118, 1.442695
        %v7861 = vpow.pop %v7860
        %v7862 = vmul.f32 %v6119, 1.442695
        %v7863 = vpow.pop %v7862
        %v7864 = vmul.f32 %v6120, 1.442695
        %v7865 = vpow.pop %v7864
        %v7866 = vmul.f32 %v6121, 1.442695
        %v7867 = vpow.pop %v7866
        %v7868 = vmul.f32 %v6122, 1.442695
        %v7869 = vpow.pop %v7868
        %v7870 = vmul.f32 %v6123, 1.442695
        %v7871 = vpow.pop %v7870
        %v7872 = vmul.f32 %v6124, 1.442695
        %v7873 = vpow.pop %v7872
        %v7874 = vmul.f32 %v6125, 1.442695
        %v7875 = vpow.pop %v7874
        %v7876 = vmul.f32 %v6126, 1.442695
        %v7877 = vpow.pop %v7876
        %v7878 = vmul.f32 %v6127, 1.442695
        %v7879 = vpow.pop %v7878
        %v7880 = vmul.f32 %v6128, 1.442695
        %v7881 = vpow.pop %v7880
        %v7882 = vmul.f32 %v6129, 1.442695
        %v7883 = vpow.pop %v7882
        %v7884 = vmul.f32 %v6130, 1.442695
        %v7885 = vpow.pop %v7884
        %v7886 = vmul.f32 %v6131, 1.442695
        %v7887 = vpow.pop %v7886
        %v7888 = vmul.f32 %v6132, 1.442695
        %v7889 = vpow.pop %v7888
        %v7890 = vmul.f32 %v6133, 1.442695
        %v7891 = vpow.pop %v7890
        %v7892 = vmul.f32 %v6134, 1.442695
        %v7893 = vpow.pop %v7892
        %v7894 = vmul.f32 %v6135, 1.442695
        %v7895 = vpow.pop %v7894
        %v7896 = vmul.f32 %v6136, 1.442695
        %v7897 = vpow.pop %v7896
        %v7898 = vmul.f32 %v6137, 1.442695
        %v7899 = vpow.pop %v7898
        %v7900 = vmul.f32 %v6138, 1.442695
        %v7901 = vpow.pop %v7900
        %v7902 = vmul.f32 %v6139, 1.442695
        %v7903 = vpow.pop %v7902
        %v7904 = vmul.f32 %v6140, 1.442695
        %v7905 = vpow.pop %v7904
        %v7906 = vmul.f32 %v6141, 1.442695
        %v7907 = vpow.pop %v7906
        %v7908 = vmul.f32 %v6142, 1.442695
        %v7909 = vpow.pop %v7908
        %v7910 = vmul.f32 %v6143, 1.442695
        %v7911 = vpow.pop %v7910
        %v7912 = vmul.f32 %v6144, 1.442695
        %v7913 = vpow.pop %v7912
        %v7914 = vmul.f32 %v6145, 1.442695
        %v7915 = vpow.pop %v7914
        %v7916 = vmul.f32 %v6146, 1.442695
        %v7917 = vpow.pop %v7916
        %v7918 = vmul.f32 %v6147, 1.442695
        %v7919 = vpow.pop %v7918
        %v7920 = vmul.f32 %v6148, 1.442695
        %v7921 = vpow.pop %v7920
        %v7922 = vmul.f32 %v6149, 1.442695
        %v7923 = vpow.pop %v7922
        %v7924 = vmul.f32 %v6150, 1.442695
        %v7925 = vpow.pop %v7924
        %v7926 = vmul.f32 %v6151, 1.442695
        %v7927 = vpow.pop %v7926
        %v7928 = vmul.f32 %v6152, 1.442695
        %v7929 = vpow.pop %v7928
        %v7930 = vmul.f32 %v6153, 1.442695
        %v7931 = vpow.pop %v7930
        %v7932 = vmul.f32 %v6154, 1.442695
        %v7933 = vpow.pop %v7932
        %v7934 = vmul.f32 %v6155, 1.442695
        %v7935 = vpow.pop %v7934
        %v7936 = vmul.f32 %v6156, 1.442695
        %v7937 = vpow.pop %v7936
        %v7938 = vmul.f32 %v6157, 1.442695
        %v7939 = vpow.pop %v7938
        %v7940 = vmul.f32 %v6158, 1.442695
        %v7941 = vpow.pop %v7940
        %v7942 = vmul.f32 %v6159, 1.442695
        %v7943 = vpow.pop %v7942
        %v7944 = vmul.f32 %v6160, 1.442695
        %v7945 = vpow.pop %v7944
        %v7946 = vmul.f32 %v6161, 1.442695
        %v7947 = vpow.pop %v7946
        %v7948 = vmul.f32 %v6162, 1.442695
        %v7949 = vpow.pop %v7948
        %v7950 = vmul.f32 %v6163, 1.442695
        %v7951 = vpow.pop %v7950
        %v7952 = vmul.f32 %v6164, 1.442695
        %v7953 = vpow.pop %v7952
        %v7954 = vmul.f32 %v6165, 1.442695
        %v7955 = vpow.pop %v7954
        %v7956 = vmul.f32 %v6166, 1.442695
        %v7957 = vpow.pop %v7956
        %v7958 = vmul.f32 %v6167, 1.442695
        %v7959 = vpow.pop %v7958
        %v7960 = vmul.f32 %v6168, 1.442695
        %v7961 = vpow.pop %v7960
        %v7962 = vmul.f32 %v6169, 1.442695
        %v7963 = vpow.pop %v7962
        %v7964 = vmul.f32 %v6170, 1.442695
        %v7965 = vpow.pop %v7964
        %v7966 = vmul.f32 %v6171, 1.442695
        %v7967 = vpow.pop %v7966
        %v7968 = vmul.f32 %v6172, 1.442695
        %v7969 = vpow.pop %v7968
        %v7970 = vmul.f32 %v6173, 1.442695
        %v7971 = vpow.pop %v7970
        %v7972 = vmul.f32 %v6174, 1.442695
        %v7973 = vpow.pop %v7972
        %v7974 = vmul.f32 %v6175, 1.442695
        %v7975 = vpow.pop %v7974
        %v7976 = vmul.f32 %v6176, 1.442695
        %v7977 = vpow.pop %v7976
        %v7978 = vmul.f32 %v6177, 1.442695
        %v7979 = vpow.pop %v7978
        %v7980 = vmul.f32 %v6178, 1.442695
        %v7981 = vpow.pop %v7980
        %v7982 = vmul.f32 %v6179, 1.442695
        %v7983 = vpow.pop %v7982
        %v7984 = vmul.f32 %v6180, 1.442695
        %v7985 = vpow.pop %v7984
        %v7986 = vmul.f32 %v6181, 1.442695
        %v7987 = vpow.pop %v7986
        %v7988 = vmul.f32 %v6182, 1.442695
        %v7989 = vpow.pop %v7988
        %v7990 = vmul.f32 %v6183, 1.442695
        %v7991 = vpow.pop %v7990
        %v7992 = vmul.f32 %v6184, 1.442695
        %v7993 = vpow.pop %v7992
        %v7994 = vmul.f32 %v6185, 1.442695
        %v7995 = vpow.pop %v7994
        %v7996 = vmul.f32 %v6186, 1.442695
        %v7997 = vpow.pop %v7996
        %v7998 = vmul.f32 %v6187, 1.442695
        %v7999 = vpow.pop %v7998
        %v8000 = vmul.f32 %v6188, 1.442695
        %v8001 = vpow.pop %v8000
        %v8002 = vmul.f32 %v6189, 1.442695
        %v8003 = vpow.pop %v8002
        %v8004 = vmul.f32 %v6190, 1.442695
        %v8005 = vpow.pop %v8004
        %v8006 = vmul.f32 %v6191, 1.442695
        %v8007 = vpow.pop %v8006
        %v8008 = vmul.f32 %v6192, 1.442695
        %v8009 = vpow.pop %v8008
        %v8010 = vmul.f32 %v6193, 1.442695
        %v8011 = vpow.pop %v8010
        %v8012 = vmul.f32 %v6194, 1.442695
        %v8013 = vpow.pop %v8012
        %v8014 = vmul.f32 %v6195, 1.442695
        %v8015 = vpow.pop %v8014
        %v8016 = vmul.f32 %v6196, 1.442695
        %v8017 = vpow.pop %v8016
        %v8018 = vmul.f32 %v6197, 1.442695
        %v8019 = vpow.pop %v8018
        %v8020 = vmul.f32 %v6198, 1.442695
        %v8021 = vpow.pop %v8020
        %v8022 = vmul.f32 %v6199, 1.442695
        %v8023 = vpow.pop %v8022
        %v8024 = vmul.f32 %v6200, 1.442695
        %v8025 = vpow.pop %v8024
        %v8026 = vmul.f32 %v6201, 1.442695
        %v8027 = vpow.pop %v8026
        %v8028 = vmul.f32 %v6202, 1.442695
        %v8029 = vpow.pop %v8028
        %v8030 = vmul.f32 %v6203, 1.442695
        %v8031 = vpow.pop %v8030
        %v8032 = vmul.f32 %v6204, 1.442695
        %v8033 = vpow.pop %v8032
        %v8034 = vmul.f32 %v6205, 1.442695
        %v8035 = vpow.pop %v8034
        %v8036 = vmul.f32 %v6206, 1.442695
        %v8037 = vpow.pop %v8036
        %v8038 = vmul.f32 %v6207, 1.442695
        %v8039 = vpow.pop %v8038
        %v8040 = vmul.f32 %v6208, 1.442695
        %v8041 = vpow.pop %v8040
        %v8042 = vmul.f32 %v6209, 1.442695
        %v8043 = vpow.pop %v8042
        %v8044 = vmul.f32 %v6210, 1.442695
        %v8045 = vpow.pop %v8044
        %v8046 = vmul.f32 %v6211, 1.442695
        %v8047 = vpow.pop %v8046
        %v8048 = vmul.f32 %v6212, 1.442695
        %v8049 = vpow.pop %v8048
        %v8050 = vmul.f32 %v6213, 1.442695
        %v8051 = vpow.pop %v8050
        %v8052 = vmul.f32 %v6214, 1.442695
        %v8053 = vpow.pop %v8052
        %v8054 = vmul.f32 %v6215, 1.442695
        %v8055 = vpow.pop %v8054
        %v8056 = vmul.f32 %v6216, 1.442695
        %v8057 = vpow.pop %v8056
        %v8058 = vmul.f32 %v6217, 1.442695
        %v8059 = vpow.pop %v8058
        %v8060 = vmul.f32 %v6218, 1.442695
        %v8061 = vpow.pop %v8060
        %v8062 = vmul.f32 %v6219, 1.442695
        %v8063 = vpow.pop %v8062
        %v8064 = vmul.f32 %v6220, 1.442695
        %v8065 = vpow.pop %v8064
        %v8066 = vmul.f32 %v6221, 1.442695
        %v8067 = vpow.pop %v8066
        %v8068 = vmul.f32 %v6222, 1.442695
        %v8069 = vpow.pop %v8068
        %v8070 = vmul.f32 %v6223, 1.442695
        %v8071 = vpow.pop %v8070
        %v8072 = vmul.f32 %v6224, 1.442695
        %v8073 = vpow.pop %v8072
        %v8074 = vmul.f32 %v6225, 1.442695
        %v8075 = vpow.pop %v8074
        %v8076 = vmul.f32 %v6226, 1.442695
        %v8077 = vpow.pop %v8076
        %v8078 = vmul.f32 %v6227, 1.442695
        %v8079 = vpow.pop %v8078
        %v8080 = vmul.f32 %v6228, 1.442695
        %v8081 = vpow.pop %v8080
        %v8082 = vmul.f32 %v6229, 1.442695
        %v8083 = vpow.pop %v8082
        %v8084 = vmul.f32 %v6230, 1.442695
        %v8085 = vpow.pop %v8084
        %v8086 = vmul.f32 %v6231, 1.442695
        %v8087 = vpow.pop %v8086
        %v8088 = vmul.f32 %v6232, 1.442695
        %v8089 = vpow.pop %v8088
        %v8090 = vmul.f32 %v6233, 1.442695
        %v8091 = vpow.pop %v8090
        %v8092 = vmul.f32 %v6234, 1.442695
        %v8093 = vpow.pop %v8092
        %v8094 = vmul.f32 %v6235, 1.442695
        %v8095 = vpow.pop %v8094
        %v8096 = vmul.f32 %v6236, 1.442695
        %v8097 = vpow.pop %v8096
        %v8098 = vmul.f32 %v6237, 1.442695
        %v8099 = vpow.pop %v8098
        %v8100 = vmul.f32 %v6238, 1.442695
        %v8101 = vpow.pop %v8100
        %v8102 = vmul.f32 %v6239, 1.442695
        %v8103 = vpow.pop %v8102
        %v8104 = vmul.f32 %v6240, 1.442695
        %v8105 = vpow.pop %v8104
        %v8106 = vmul.f32 %v6241, 1.442695
        %v8107 = vpow.pop %v8106
        %v8108 = vmul.f32 %v6242, 1.442695
        %v8109 = vpow.pop %v8108
        %v8110 = vmul.f32 %v6243, 1.442695
        %v8111 = vpow.pop %v8110
        %v8112 = vmul.f32 %v6244, 1.442695
        %v8113 = vpow.pop %v8112
        %v8114 = vmul.f32 %v6245, 1.442695
        %v8115 = vpow.pop %v8114
        %v8116 = vmul.f32 %v6246, 1.442695
        %v8117 = vpow.pop %v8116
        %v8118 = vmul.f32 %v6247, 1.442695
        %v8119 = vpow.pop %v8118
        %v8120 = vmul.f32 %v6248, 1.442695
        %v8121 = vpow.pop %v8120
        %v8122 = vmul.f32 %v6249, 1.442695
        %v8123 = vpow.pop %v8122
        %v8124 = vmul.f32 %v6250, 1.442695
        %v8125 = vpow.pop %v8124
        %v8126 = vmul.f32 %v6251, 1.442695
        %v8127 = vpow.pop %v8126
        %v8128 = vmul.f32 %v6252, 1.442695
        %v8129 = vpow.pop %v8128
        %v8130 = vmul.f32 %v6253, 1.442695
        %v8131 = vpow.pop %v8130
        %v8132 = vmul.f32 %v6254, 1.442695
        %v8133 = vpow.pop %v8132
        %v8134 = vmul.f32 %v6255, 1.442695
        %v8135 = vpow.pop %v8134
        %v8136 = vmul.f32 %v6256, 1.442695
        %v8137 = vpow.pop %v8136
        %v8138 = vmul.f32 %v6257, 1.442695
        %v8139 = vpow.pop %v8138
        %v8140 = vmul.f32 %v6258, 1.442695
        %v8141 = vpow.pop %v8140
        %v8142 = vmul.f32 %v6259, 1.442695
        %v8143 = vpow.pop %v8142
        %v8144 = vmul.f32 %v6260, 1.442695
        %v8145 = vpow.pop %v8144
        %v8146 = vmul.f32 %v6261, 1.442695
        %v8147 = vpow.pop %v8146
        %v8148 = vmul.f32 %v6262, 1.442695
        %v8149 = vpow.pop %v8148
        %v8150 = vmul.f32 %v6263, 1.442695
        %v8151 = vpow.pop %v8150
        %v8152 = vmul.f32 %v6264, 1.442695
        %v8153 = vpow.pop %v8152
        %v8154 = vmul.f32 %v6265, 1.442695
        %v8155 = vpow.pop %v8154
        %v8156 = vmul.f32 %v6266, 1.442695
        %v8157 = vpow.pop %v8156
        %v8158 = vmul.f32 %v6267, 1.442695
        %v8159 = vpow.pop %v8158
        %v8160 = vmul.f32 %v6268, 1.442695
        %v8161 = vpow.pop %v8160
        %v8162 = vmul.f32 %v6269, 1.442695
        %v8163 = vpow.pop %v8162
        %v8164 = vmul.f32 %v6270, 1.442695
        %v8165 = vpow.pop %v8164
        %v8166 = vmul.f32 %v6271, 1.442695
        %v8167 = vpow.pop %v8166
        %v8168 = vmul.f32 %v6272, 1.442695
        %v8169 = vpow.pop %v8168
        %v8170 = vmul.f32 %v6273, 1.442695
        %v8171 = vpow.pop %v8170
        %v8172 = vmul.f32 %v6274, 1.442695
        %v8173 = vpow.pop %v8172
        %v8174 = vmul.f32 %v6275, 1.442695
        %v8175 = vpow.pop %v8174
        %v8176 = vmul.f32 %v6276, 1.442695
        %v8177 = vpow.pop %v8176
        %v8178 = vmul.f32 %v6277, 1.442695
        %v8179 = vpow.pop %v8178
        %v8180 = vmul.f32 %v6278, 1.442695
        %v8181 = vpow.pop %v8180
        %v8182 = vmul.f32 %v6279, 1.442695
        %v8183 = vpow.pop %v8182
        %v8184 = vmul.f32 %v6280, 1.442695
        %v8185 = vpow.pop %v8184
        %v8186 = vmul.f32 %v6281, 1.442695
        %v8187 = vpow.pop %v8186
        %v8188 = vmul.f32 %v6282, 1.442695
        %v8189 = vpow.pop %v8188
        %v8190 = vmul.f32 %v6283, 1.442695
        %v8191 = vpow.pop %v8190
        %v8192 = vmul.f32 %v6284, 1.442695
        %v8193 = vpow.pop %v8192
        %v8194 = vmul.f32 %v6285, 1.442695
        %v8195 = vpow.pop %v8194
        %v8196 = vmul.f32 %v6286, 1.442695
        %v8197 = vpow.pop %v8196
        %v8198 = vmul.f32 %v6287, 1.442695
        %v8199 = vpow.pop %v8198
        %v8200 = vmul.f32 %v6288, 1.442695
        %v8201 = vpow.pop %v8200
        %v8202 = vmul.f32 %v6289, 1.442695
        %v8203 = vpow.pop %v8202
        %v8204 = vmul.f32 %v6290, 1.442695
        %v8205 = vpow.pop %v8204
        %v8206 = vmul.f32 %v6291, 1.442695
        %v8207 = vpow.pop %v8206
        %v8208 = vmul.f32 %v6292, 1.442695
        %v8209 = vpow.pop %v8208
        %v8210 = vmul.f32 %v6293, 1.442695
        %v8211 = vpow.pop %v8210
        %v8212 = vmul.f32 %v6294, 1.442695
        %v8213 = vpow.pop %v8212
        %v8214 = vmul.f32 %v6295, 1.442695
        %v8215 = vpow.pop %v8214
        %v8216 = vmul.f32 %v6296, 1.442695
        %v8217 = vpow.pop %v8216
        %v8218 = vmul.f32 %v6297, 1.442695
        %v8219 = vpow.pop %v8218
        %v8220 = vmul.f32 %v6298, 1.442695
        %v8221 = vpow.pop %v8220
        %v8222 = vmul.f32 %v6299, 1.442695
        %v8223 = vpow.pop %v8222
        %v8224 = vmul.f32 %v6300, 1.442695
        %v8225 = vpow.pop %v8224
        %v8226 = vmul.f32 %v6301, 1.442695
        %v8227 = vpow.pop %v8226
        %v8228 = vmul.f32 %v6302, 1.442695
        %v8229 = vpow.pop %v8228
        %v8230 = vmul.f32 %v6303, 1.442695
        %v8231 = vpow.pop %v8230
        %v8232 = vmul.f32 %v6304, 1.442695
        %v8233 = vpow.pop %v8232
        %v8234 = vmul.f32 %v6305, 1.442695
        %v8235 = vpow.pop %v8234
        %v8236 = vmul.f32 %v6306, 1.442695
        %v8237 = vpow.pop %v8236
        %v8238 = vmul.f32 %v6307, 1.442695
        %v8239 = vpow.pop %v8238
        %v8240 = vmul.f32 %v6308, 1.442695
        %v8241 = vpow.pop %v8240
        %v8242 = vmul.f32 %v6309, 1.442695
        %v8243 = vpow.pop %v8242
        %v8244 = vmul.f32 %v6310, 1.442695
        %v8245 = vpow.pop %v8244
        %v8246 = vmul.f32 %v6311, 1.442695
        %v8247 = vpow.pop %v8246
        %v8248 = vmul.f32 %v6312, 1.442695
        %v8249 = vpow.pop %v8248
        %v8250 = vmul.f32 %v6313, 1.442695
        %v8251 = vpow.pop %v8250
        %v8252 = vmul.f32 %v6314, 1.442695
        %v8253 = vpow.pop %v8252
        %v8254 = vmul.f32 %v6315, 1.442695
        %v8255 = vpow.pop %v8254
        %v8256 = vmul.f32 %v6316, 1.442695
        %v8257 = vpow.pop %v8256
        %v8258 = vmul.f32 %v6317, 1.442695
        %v8259 = vpow.pop %v8258
        %v8260 = vmul.f32 %v6318, 1.442695
        %v8261 = vpow.pop %v8260
        %v8262 = vmul.f32 %v6319, 1.442695
        %v8263 = vpow.pop %v8262
        %v8264 = vmul.f32 %v6320, 1.442695
        %v8265 = vpow.pop %v8264
        %v8266 = vmul.f32 %v6321, 1.442695
        %v8267 = vpow.pop %v8266
        %v8268 = vmul.f32 %v6322, 1.442695
        %v8269 = vpow.pop %v8268
        %v8270 = vmul.f32 %v6323, 1.442695
        %v8271 = vpow.pop %v8270
        %v8272 = vmul.f32 %v6324, 1.442695
        %v8273 = vpow.pop %v8272
        %v8274 = vmul.f32 %v6325, 1.442695
        %v8275 = vpow.pop %v8274
        %v8276 = vmul.f32 %v6326, 1.442695
        %v8277 = vpow.pop %v8276
        %v8278 = vmul.f32 %v6327, 1.442695
        %v8279 = vpow.pop %v8278
        %v8280 = vmul.f32 %v6328, 1.442695
        %v8281 = vpow.pop %v8280
        %v8282 = vmul.f32 %v6329, 1.442695
        %v8283 = vpow.pop %v8282
        %v8284 = vmul.f32 %v6330, 1.442695
        %v8285 = vpow.pop %v8284
        %v8286 = vmul.f32 %v6331, 1.442695
        %v8287 = vpow.pop %v8286
        %v8288 = vmul.f32 %v6332, 1.442695
        %v8289 = vpow.pop %v8288
        %v8290 = vmul.f32 %v6333, 1.442695
        %v8291 = vpow.pop %v8290
        %v8292 = vmul.f32 %v6334, 1.442695
        %v8293 = vpow.pop %v8292
        %v8294 = vmul.f32 %v6335, 1.442695
        %v8295 = vpow.pop %v8294
        %v8296 = vmul.f32 %v6336, 1.442695
        %v8297 = vpow.pop %v8296
        %v8298 = vmul.f32 %v6337, 1.442695
        %v8299 = vpow.pop %v8298
        %v8300 = vmul.f32 %v6338, 1.442695
        %v8301 = vpow.pop %v8300
        %v8302 = vmul.f32 %v6339, 1.442695
        %v8303 = vpow.pop %v8302
        %v8304 = vmul.f32 %v6340, 1.442695
        %v8305 = vpow.pop %v8304
        %v8306 = vmul.f32 %v6341, 1.442695
        %v8307 = vpow.pop %v8306
        %v8308 = vmul.f32 %v6342, 1.442695
        %v8309 = vpow.pop %v8308
        %v8310 = vmul.f32 %v6343, 1.442695
        %v8311 = vpow.pop %v8310
        %v8312 = vmul.f32 %v6344, 1.442695
        %v8313 = vpow.pop %v8312
        %v8314 = vmul.f32 %v6345, 1.442695
        %v8315 = vpow.pop %v8314
        %v8316 = vmul.f32 %v6346, 1.442695
        %v8317 = vpow.pop %v8316
        %v8318 = vmul.f32 %v6347, 1.442695
        %v8319 = vpow.pop %v8318
        %v8320 = vmul.f32 %v6348, 1.442695
        %v8321 = vpow.pop %v8320
        %v8322 = vmul.f32 %v6349, 1.442695
        %v8323 = vpow.pop %v8322
        %v8324 = vmul.f32 %v6350, 1.442695
        %v8325 = vpow.pop %v8324
        %v8326 = vmul.f32 %v6351, 1.442695
        %v8327 = vpow.pop %v8326
        %v8328 = vmul.f32 %v6352, 1.442695
        %v8329 = vpow.pop %v8328
        %v8330 = vmul.f32 %v6353, 1.442695
        %v8331 = vpow.pop %v8330
        %v8332 = vmul.f32 %v6354, 1.442695
        %v8333 = vpow.pop %v8332
        %v8334 = vmul.f32 %v6355, 1.442695
        %v8335 = vpow.pop %v8334
        %v8336 = vmul.f32 %v6356, 1.442695
        %v8337 = vpow.pop %v8336
        %v8338 = vmul.f32 %v6357, 1.442695
        %v8339 = vpow.pop %v8338
        %v8340 = vmul.f32 %v6358, 1.442695
        %v8341 = vpow.pop %v8340
        %v8342 = vmul.f32 %v6359, 1.442695
        %v8343 = vpow.pop %v8342
        %v8344 = vmul.f32 %v6360, 1.442695
        %v8345 = vpow.pop %v8344
        %v8346 = vmul.f32 %v6361, 1.442695
        %v8347 = vpow.pop %v8346
        %v8348 = vmul.f32 %v6362, 1.442695
        %v8349 = vpow.pop %v8348
        %v8350 = vmul.f32 %v6363, 1.442695
        %v8351 = vpow.pop %v8350
        %v8352 = vmul.f32 %v6364, 1.442695
        %v8353 = vpow.pop %v8352
        %v8354 = vmul.f32 %v6365, 1.442695
        %v8355 = vpow.pop %v8354
        %v8356 = vmul.f32 %v6366, 1.442695
        %v8357 = vpow.pop %v8356
        %v8358 = vmul.f32 %v6367, 1.442695
        %v8359 = vpow.pop %v8358
        %v8360 = vmul.f32 %v6368, 1.442695
        %v8361 = vpow.pop %v8360
        %v8362 = vmul.f32 %v6369, 1.442695
        %v8363 = vpow.pop %v8362
        %v8364 = vmul.f32 %v6370, 1.442695
        %v8365 = vpow.pop %v8364
        %v8366 = vmul.f32 %v6371, 1.442695
        %v8367 = vpow.pop %v8366
        %v8368 = vmul.f32 %v6372, 1.442695
        %v8369 = vpow.pop %v8368
        %v8370 = vmul.f32 %v6373, 1.442695
        %v8371 = vpow.pop %v8370
        %v8372 = vmul.f32 %v6374, 1.442695
        %v8373 = vpow.pop %v8372
        %v8374 = vmul.f32 %v6375, 1.442695
        %v8375 = vpow.pop %v8374
        %v8376 = vmul.f32 %v6376, 1.442695
        %v8377 = vpow.pop %v8376
        %v8378 = vmul.f32 %v6377, 1.442695
        %v8379 = vpow.pop %v8378
        %v8380 = vmul.f32 %v6378, 1.442695
        %v8381 = vpow.pop %v8380
        %v8382 = vmul.f32 %v6379, 1.442695
        %v8383 = vpow.pop %v8382
        %v8384 = vmul.f32 %v6380, 1.442695
        %v8385 = vpow.pop %v8384
        %v8386 = vmul.f32 %v6381, 1.442695
        %v8387 = vpow.pop %v8386
        %v8388 = vmul.f32 %v6382, 1.442695
        %v8389 = vpow.pop %v8388
        %v8390 = vmul.f32 %v6383, 1.442695
        %v8391 = vpow.pop %v8390
        %v8392 = vmul.f32 %v6384, 1.442695
        %v8393 = vpow.pop %v8392
        %v8394 = vmul.f32 %v6385, 1.442695
        %v8395 = vpow.pop %v8394
        %v8396 = vmul.f32 %v6386, 1.442695
        %v8397 = vpow.pop %v8396
        %v8398 = vmul.f32 %v6387, 1.442695
        %v8399 = vpow.pop %v8398
        %v8400 = vmul.f32 %v6388, 1.442695
        %v8401 = vpow.pop %v8400
        %v8402 = vmul.f32 %v6389, 1.442695
        %v8403 = vpow.pop %v8402
        %v8404 = vmul.f32 %v6390, 1.442695
        %v8405 = vpow.pop %v8404
        %v8406 = vmul.f32 %v6391, 1.442695
        %v8407 = vpow.pop %v8406
        %v8408 = vmul.f32 %v6392, 1.442695
        %v8409 = vpow.pop %v8408
        %v8410 = vmul.f32 %v6393, 1.442695
        %v8411 = vpow.pop %v8410
        %v8412 = vmul.f32 %v6394, 1.442695
        %v8413 = vpow.pop %v8412
        %v8414 = vmul.f32 %v6395, 1.442695
        %v8415 = vpow.pop %v8414
        %v8416 = vmul.f32 %v6396, 1.442695
        %v8417 = vpow.pop %v8416
        %v8418 = vmul.f32 %v6397, 1.442695
        %v8419 = vpow.pop %v8418
        %v8420 = vmul.f32 %v6398, 1.442695
        %v8421 = vpow.pop %v8420
        %v8422 = vmul.f32 %v6399, 1.442695
        %v8423 = vpow.pop %v8422
        %v8424 = vmul.f32 %v6400, 1.442695
        %v8425 = vpow.pop %v8424
        %v8426 = vmul.f32 %v6401, 1.442695
        %v8427 = vpow.pop %v8426
        %v8428 = vmul.f32 %v6402, 1.442695
        %v8429 = vpow.pop %v8428
        %v8430 = vmul.f32 %v6403, 1.442695
        %v8431 = vpow.pop %v8430
        %v8432 = vmul.f32 %v6404, 1.442695
        %v8433 = vpow.pop %v8432
        %v8434 = vmul.f32 %v6405, 1.442695
        %v8435 = vpow.pop %v8434
        %v8436 = vmul.f32 %v6406, 1.442695
        %v8437 = vpow.pop %v8436
        %v8438 = vmul.f32 %v6407, 1.442695
        %v8439 = vpow.pop %v8438
        %v8440 = vmul.f32 %v6408, 1.442695
        %v8441 = vpow.pop %v8440
        %v8442 = vmul.f32 %v6409, 1.442695
        %v8443 = vpow.pop %v8442
        %v8444 = vmul.f32 %v6410, 1.442695
        %v8445 = vpow.pop %v8444
        %v8446 = vmul.f32 %v6411, 1.442695
        %v8447 = vpow.pop %v8446
        %v8448 = vmul.f32 %v6412, 1.442695
        %v8449 = vpow.pop %v8448
        %v8450 = vmul.f32 %v6413, 1.442695
        %v8451 = vpow.pop %v8450
        %v8452 = vmul.f32 %v6414, 1.442695
        %v8453 = vpow.pop %v8452
        %v8454 = vmul.f32 %v6415, 1.442695
        %v8455 = vpow.pop %v8454
        %v8456 = vmul.f32 %v6416, 1.442695
        %v8457 = vpow.pop %v8456
        %v8458 = vmul.f32 %v6417, 1.442695
        %v8459 = vpow.pop %v8458
        %v8460 = vmul.f32 %v6418, 1.442695
        %v8461 = vpow.pop %v8460
        %v8462 = vmul.f32 %v6419, 1.442695
        %v8463 = vpow.pop %v8462
        %v8464 = vmul.f32 %v6420, 1.442695
        %v8465 = vpow.pop %v8464
        %v8466 = vmul.f32 %v6421, 1.442695
        %v8467 = vpow.pop %v8466
        %v8468 = vmul.f32 %v6422, 1.442695
        %v8469 = vpow.pop %v8468
        %v8470 = vmul.f32 %v6423, 1.442695
        %v8471 = vpow.pop %v8470
        %v8472 = vpack.c.bf16 %v6441, %v6425
        %v8473 = vpack.c.bf16 %v6443, %v6427
        %v8474 = vpack.c.bf16 %v6445, %v6429
        %v8475 = vpack.c.bf16 %v6447, %v6431
        %v8476 = vpack.c.bf16 %v6449, %v6433
        %v8477 = vpack.c.bf16 %v6451, %v6435
        %v8478 = vpack.c.bf16 %v6453, %v6437
        %v8479 = vpack.c.bf16 %v6455, %v6439
        %v8480 = vpack.c.bf16 %v6473, %v6457
        %v8481 = vpack.c.bf16 %v6475, %v6459
        %v8482 = vpack.c.bf16 %v6477, %v6461
        %v8483 = vpack.c.bf16 %v6479, %v6463
        %v8484 = vpack.c.bf16 %v6481, %v6465
        %v8485 = vpack.c.bf16 %v6483, %v6467
        %v8486 = vpack.c.bf16 %v6485, %v6469
        %v8487 = vpack.c.bf16 %v6487, %v6471
        %v8488 = vpack.c.bf16 %v6505, %v6489
        %v8489 = vpack.c.bf16 %v6507, %v6491
        %v8490 = vpack.c.bf16 %v6509, %v6493
        %v8491 = vpack.c.bf16 %v6511, %v6495
        %v8492 = vpack.c.bf16 %v6513, %v6497
        %v8493 = vpack.c.bf16 %v6515, %v6499
        %v8494 = vpack.c.bf16 %v6517, %v6501
        %v8495 = vpack.c.bf16 %v6519, %v6503
        %v8496 = vpack.c.bf16 %v6537, %v6521
        %v8497 = vpack.c.bf16 %v6539, %v6523
        %v8498 = vpack.c.bf16 %v6541, %v6525
        %v8499 = vpack.c.bf16 %v6543, %v6527
        %v8500 = vpack.c.bf16 %v6545, %v6529
        %v8501 = vpack.c.bf16 %v6547, %v6531
        %v8502 = vpack.c.bf16 %v6549, %v6533
        %v8503 = vpack.c.bf16 %v6551, %v6535
        %v8504 = vpack.c.bf16 %v6569, %v6553
        %v8505 = vpack.c.bf16 %v6571, %v6555
        %v8506 = vpack.c.bf16 %v6573, %v6557
        %v8507 = vpack.c.bf16 %v6575, %v6559
        %v8508 = vpack.c.bf16 %v6577, %v6561
        %v8509 = vpack.c.bf16 %v6579, %v6563
        %v8510 = vpack.c.bf16 %v6581, %v6565
        %v8511 = vpack.c.bf16 %v6583, %v6567
        %v8512 = vpack.c.bf16 %v6601, %v6585
        %v8513 = vpack.c.bf16 %v6603, %v6587
        %v8514 = vpack.c.bf16 %v6605, %v6589
        %v8515 = vpack.c.bf16 %v6607, %v6591
        %v8516 = vpack.c.bf16 %v6609, %v6593
        %v8517 = vpack.c.bf16 %v6611, %v6595
        %v8518 = vpack.c.bf16 %v6613, %v6597
        %v8519 = vpack.c.bf16 %v6615, %v6599
        %v8520 = vpack.c.bf16 %v6633, %v6617
        %v8521 = vpack.c.bf16 %v6635, %v6619
        %v8522 = vpack.c.bf16 %v6637, %v6621
        %v8523 = vpack.c.bf16 %v6639, %v6623
        %v8524 = vpack.c.bf16 %v6641, %v6625
        %v8525 = vpack.c.bf16 %v6643, %v6627
        %v8526 = vpack.c.bf16 %v6645, %v6629
        %v8527 = vpack.c.bf16 %v6647, %v6631
        %v8528 = vpack.c.bf16 %v6665, %v6649
        %v8529 = vpack.c.bf16 %v6667, %v6651
        %v8530 = vpack.c.bf16 %v6669, %v6653
        %v8531 = vpack.c.bf16 %v6671, %v6655
        %v8532 = vpack.c.bf16 %v6673, %v6657
        %v8533 = vpack.c.bf16 %v6675, %v6659
        %v8534 = vpack.c.bf16 %v6677, %v6661
        %v8535 = vpack.c.bf16 %v6679, %v6663
        %v8536 = vpack.c.bf16 %v6697, %v6681
        %v8537 = vpack.c.bf16 %v6699, %v6683
        %v8538 = vpack.c.bf16 %v6701, %v6685
        %v8539 = vpack.c.bf16 %v6703, %v6687
        %v8540 = vpack.c.bf16 %v6705, %v6689
        %v8541 = vpack.c.bf16 %v6707, %v6691
        %v8542 = vpack.c.bf16 %v6709, %v6693
        %v8543 = vpack.c.bf16 %v6711, %v6695
        %v8544 = vpack.c.bf16 %v6729, %v6713
        %v8545 = vpack.c.bf16 %v6731, %v6715
        %v8546 = vpack.c.bf16 %v6733, %v6717
        %v8547 = vpack.c.bf16 %v6735, %v6719
        %v8548 = vpack.c.bf16 %v6737, %v6721
        %v8549 = vpack.c.bf16 %v6739, %v6723
        %v8550 = vpack.c.bf16 %v6741, %v6725
        %v8551 = vpack.c.bf16 %v6743, %v6727
        %v8552 = vpack.c.bf16 %v6761, %v6745
        %v8553 = vpack.c.bf16 %v6763, %v6747
        %v8554 = vpack.c.bf16 %v6765, %v6749
        %v8555 = vpack.c.bf16 %v6767, %v6751
        %v8556 = vpack.c.bf16 %v6769, %v6753
        %v8557 = vpack.c.bf16 %v6771, %v6755
        %v8558 = vpack.c.bf16 %v6773, %v6757
        %v8559 = vpack.c.bf16 %v6775, %v6759
        %v8560 = vpack.c.bf16 %v6793, %v6777
        %v8561 = vpack.c.bf16 %v6795, %v6779
        %v8562 = vpack.c.bf16 %v6797, %v6781
        %v8563 = vpack.c.bf16 %v6799, %v6783
        %v8564 = vpack.c.bf16 %v6801, %v6785
        %v8565 = vpack.c.bf16 %v6803, %v6787
        %v8566 = vpack.c.bf16 %v6805, %v6789
        %v8567 = vpack.c.bf16 %v6807, %v6791
        %v8568 = vpack.c.bf16 %v6825, %v6809
        %v8569 = vpack.c.bf16 %v6827, %v6811
        %v8570 = vpack.c.bf16 %v6829, %v6813
        %v8571 = vpack.c.bf16 %v6831, %v6815
        %v8572 = vpack.c.bf16 %v6833, %v6817
        %v8573 = vpack.c.bf16 %v6835, %v6819
        %v8574 = vpack.c.bf16 %v6837, %v6821
        %v8575 = vpack.c.bf16 %v6839, %v6823
        %v8576 = vpack.c.bf16 %v6857, %v6841
        %v8577 = vpack.c.bf16 %v6859, %v6843
        %v8578 = vpack.c.bf16 %v6861, %v6845
        %v8579 = vpack.c.bf16 %v6863, %v6847
        %v8580 = vpack.c.bf16 %v6865, %v6849
        %v8581 = vpack.c.bf16 %v6867, %v6851
        %v8582 = vpack.c.bf16 %v6869, %v6853
        %v8583 = vpack.c.bf16 %v6871, %v6855
        %v8584 = vpack.c.bf16 %v6889, %v6873
        %v8585 = vpack.c.bf16 %v6891, %v6875
        %v8586 = vpack.c.bf16 %v6893, %v6877
        %v8587 = vpack.c.bf16 %v6895, %v6879
        %v8588 = vpack.c.bf16 %v6897, %v6881
        %v8589 = vpack.c.bf16 %v6899, %v6883
        %v8590 = vpack.c.bf16 %v6901, %v6885
        %v8591 = vpack.c.bf16 %v6903, %v6887
        %v8592 = vpack.c.bf16 %v6921, %v6905
        %v8593 = vpack.c.bf16 %v6923, %v6907
        %v8594 = vpack.c.bf16 %v6925, %v6909
        %v8595 = vpack.c.bf16 %v6927, %v6911
        %v8596 = vpack.c.bf16 %v6929, %v6913
        %v8597 = vpack.c.bf16 %v6931, %v6915
        %v8598 = vpack.c.bf16 %v6933, %v6917
        %v8599 = vpack.c.bf16 %v6935, %v6919
        %v8600 = vpack.c.bf16 %v6953, %v6937
        %v8601 = vpack.c.bf16 %v6955, %v6939
        %v8602 = vpack.c.bf16 %v6957, %v6941
        %v8603 = vpack.c.bf16 %v6959, %v6943
        %v8604 = vpack.c.bf16 %v6961, %v6945
        %v8605 = vpack.c.bf16 %v6963, %v6947
        %v8606 = vpack.c.bf16 %v6965, %v6949
        %v8607 = vpack.c.bf16 %v6967, %v6951
        %v8608 = vpack.c.bf16 %v6985, %v6969
        %v8609 = vpack.c.bf16 %v6987, %v6971
        %v8610 = vpack.c.bf16 %v6989, %v6973
        %v8611 = vpack.c.bf16 %v6991, %v6975
        %v8612 = vpack.c.bf16 %v6993, %v6977
        %v8613 = vpack.c.bf16 %v6995, %v6979
        %v8614 = vpack.c.bf16 %v6997, %v6981
        %v8615 = vpack.c.bf16 %v6999, %v6983
        %v8616 = vpack.c.bf16 %v7017, %v7001
        %v8617 = vpack.c.bf16 %v7019, %v7003
        %v8618 = vpack.c.bf16 %v7021, %v7005
        %v8619 = vpack.c.bf16 %v7023, %v7007
        %v8620 = vpack.c.bf16 %v7025, %v7009
        %v8621 = vpack.c.bf16 %v7027, %v7011
        %v8622 = vpack.c.bf16 %v7029, %v7013
        %v8623 = vpack.c.bf16 %v7031, %v7015
        %v8624 = vpack.c.bf16 %v7049, %v7033
        %v8625 = vpack.c.bf16 %v7051, %v7035
        %v8626 = vpack.c.bf16 %v7053, %v7037
        %v8627 = vpack.c.bf16 %v7055, %v7039
        %v8628 = vpack.c.bf16 %v7057, %v7041
        %v8629 = vpack.c.bf16 %v7059, %v7043
        %v8630 = vpack.c.bf16 %v7061, %v7045
        %v8631 = vpack.c.bf16 %v7063, %v7047
        %v8632 = vpack.c.bf16 %v7081, %v7065
        %v8633 = vpack.c.bf16 %v7083, %v7067
        %v8634 = vpack.c.bf16 %v7085, %v7069
        %v8635 = vpack.c.bf16 %v7087, %v7071
        %v8636 = vpack.c.bf16 %v7089, %v7073
        %v8637 = vpack.c.bf16 %v7091, %v7075
        %v8638 = vpack.c.bf16 %v7093, %v7077
        %v8639 = vpack.c.bf16 %v7095, %v7079
        %v8640 = vpack.c.bf16 %v7113, %v7097
        %v8641 = vpack.c.bf16 %v7115, %v7099
        %v8642 = vpack.c.bf16 %v7117, %v7101
        %v8643 = vpack.c.bf16 %v7119, %v7103
        %v8644 = vpack.c.bf16 %v7121, %v7105
        %v8645 = vpack.c.bf16 %v7123, %v7107
        %v8646 = vpack.c.bf16 %v7125, %v7109
        %v8647 = vpack.c.bf16 %v7127, %v7111
        %v8648 = vpack.c.bf16 %v7145, %v7129
        %v8649 = vpack.c.bf16 %v7147, %v7131
        %v8650 = vpack.c.bf16 %v7149, %v7133
        %v8651 = vpack.c.bf16 %v7151, %v7135
        %v8652 = vpack.c.bf16 %v7153, %v7137
        %v8653 = vpack.c.bf16 %v7155, %v7139
        %v8654 = vpack.c.bf16 %v7157, %v7141
        %v8655 = vpack.c.bf16 %v7159, %v7143
        %v8656 = vpack.c.bf16 %v7177, %v7161
        %v8657 = vpack.c.bf16 %v7179, %v7163
        %v8658 = vpack.c.bf16 %v7181, %v7165
        %v8659 = vpack.c.bf16 %v7183, %v7167
        %v8660 = vpack.c.bf16 %v7185, %v7169
        %v8661 = vpack.c.bf16 %v7187, %v7171
        %v8662 = vpack.c.bf16 %v7189, %v7173
        %v8663 = vpack.c.bf16 %v7191, %v7175
        %v8664 = vpack.c.bf16 %v7209, %v7193
        %v8665 = vpack.c.bf16 %v7211, %v7195
        %v8666 = vpack.c.bf16 %v7213, %v7197
        %v8667 = vpack.c.bf16 %v7215, %v7199
        %v8668 = vpack.c.bf16 %v7217, %v7201
        %v8669 = vpack.c.bf16 %v7219, %v7203
        %v8670 = vpack.c.bf16 %v7221, %v7205
        %v8671 = vpack.c.bf16 %v7223, %v7207
        %v8672 = vpack.c.bf16 %v7241, %v7225
        %v8673 = vpack.c.bf16 %v7243, %v7227
        %v8674 = vpack.c.bf16 %v7245, %v7229
        %v8675 = vpack.c.bf16 %v7247, %v7231
        %v8676 = vpack.c.bf16 %v7249, %v7233
        %v8677 = vpack.c.bf16 %v7251, %v7235
        %v8678 = vpack.c.bf16 %v7253, %v7237
        %v8679 = vpack.c.bf16 %v7255, %v7239
        %v8680 = vpack.c.bf16 %v7273, %v7257
        %v8681 = vpack.c.bf16 %v7275, %v7259
        %v8682 = vpack.c.bf16 %v7277, %v7261
        %v8683 = vpack.c.bf16 %v7279, %v7263
        %v8684 = vpack.c.bf16 %v7281, %v7265
        %v8685 = vpack.c.bf16 %v7283, %v7267
        %v8686 = vpack.c.bf16 %v7285, %v7269
        %v8687 = vpack.c.bf16 %v7287, %v7271
        %v8688 = vpack.c.bf16 %v7305, %v7289
        %v8689 = vpack.c.bf16 %v7307, %v7291
        %v8690 = vpack.c.bf16 %v7309, %v7293
        %v8691 = vpack.c.bf16 %v7311, %v7295
        %v8692 = vpack.c.bf16 %v7313, %v7297
        %v8693 = vpack.c.bf16 %v7315, %v7299
        %v8694 = vpack.c.bf16 %v7317, %v7301
        %v8695 = vpack.c.bf16 %v7319, %v7303
        %v8696 = vpack.c.bf16 %v7337, %v7321
        %v8697 = vpack.c.bf16 %v7339, %v7323
        %v8698 = vpack.c.bf16 %v7341, %v7325
        %v8699 = vpack.c.bf16 %v7343, %v7327
        %v8700 = vpack.c.bf16 %v7345, %v7329
        %v8701 = vpack.c.bf16 %v7347, %v7331
        %v8702 = vpack.c.bf16 %v7349, %v7333
        %v8703 = vpack.c.bf16 %v7351, %v7335
        %v8704 = vpack.c.bf16 %v7369, %v7353
        %v8705 = vpack.c.bf16 %v7371, %v7355
        %v8706 = vpack.c.bf16 %v7373, %v7357
        %v8707 = vpack.c.bf16 %v7375, %v7359
        %v8708 = vpack.c.bf16 %v7377, %v7361
        %v8709 = vpack.c.bf16 %v7379, %v7363
        %v8710 = vpack.c.bf16 %v7381, %v7365
        %v8711 = vpack.c.bf16 %v7383, %v7367
        %v8712 = vpack.c.bf16 %v7401, %v7385
        %v8713 = vpack.c.bf16 %v7403, %v7387
        %v8714 = vpack.c.bf16 %v7405, %v7389
        %v8715 = vpack.c.bf16 %v7407, %v7391
        %v8716 = vpack.c.bf16 %v7409, %v7393
        %v8717 = vpack.c.bf16 %v7411, %v7395
        %v8718 = vpack.c.bf16 %v7413, %v7397
        %v8719 = vpack.c.bf16 %v7415, %v7399
        %v8720 = vpack.c.bf16 %v7433, %v7417
        %v8721 = vpack.c.bf16 %v7435, %v7419
        %v8722 = vpack.c.bf16 %v7437, %v7421
        %v8723 = vpack.c.bf16 %v7439, %v7423
        %v8724 = vpack.c.bf16 %v7441, %v7425
        %v8725 = vpack.c.bf16 %v7443, %v7427
        %v8726 = vpack.c.bf16 %v7445, %v7429
        %v8727 = vpack.c.bf16 %v7447, %v7431
        %v8728 = vpack.c.bf16 %v7465, %v7449
        %v8729 = vpack.c.bf16 %v7467, %v7451
        %v8730 = vpack.c.bf16 %v7469, %v7453
        %v8731 = vpack.c.bf16 %v7471, %v7455
        %v8732 = vpack.c.bf16 %v7473, %v7457
        %v8733 = vpack.c.bf16 %v7475, %v7459
        %v8734 = vpack.c.bf16 %v7477, %v7461
        %v8735 = vpack.c.bf16 %v7479, %v7463
        %v8736 = vpack.c.bf16 %v7497, %v7481
        %v8737 = vpack.c.bf16 %v7499, %v7483
        %v8738 = vpack.c.bf16 %v7501, %v7485
        %v8739 = vpack.c.bf16 %v7503, %v7487
        %v8740 = vpack.c.bf16 %v7505, %v7489
        %v8741 = vpack.c.bf16 %v7507, %v7491
        %v8742 = vpack.c.bf16 %v7509, %v7493
        %v8743 = vpack.c.bf16 %v7511, %v7495
        %v8744 = vpack.c.bf16 %v7529, %v7513
        %v8745 = vpack.c.bf16 %v7531, %v7515
        %v8746 = vpack.c.bf16 %v7533, %v7517
        %v8747 = vpack.c.bf16 %v7535, %v7519
        %v8748 = vpack.c.bf16 %v7537, %v7521
        %v8749 = vpack.c.bf16 %v7539, %v7523
        %v8750 = vpack.c.bf16 %v7541, %v7525
        %v8751 = vpack.c.bf16 %v7543, %v7527
        %v8752 = vpack.c.bf16 %v7561, %v7545
        %v8753 = vpack.c.bf16 %v7563, %v7547
        %v8754 = vpack.c.bf16 %v7565, %v7549
        %v8755 = vpack.c.bf16 %v7567, %v7551
        %v8756 = vpack.c.bf16 %v7569, %v7553
        %v8757 = vpack.c.bf16 %v7571, %v7555
        %v8758 = vpack.c.bf16 %v7573, %v7557
        %v8759 = vpack.c.bf16 %v7575, %v7559
        %v8760 = vpack.c.bf16 %v7593, %v7577
        %v8761 = vpack.c.bf16 %v7595, %v7579
        %v8762 = vpack.c.bf16 %v7597, %v7581
        %v8763 = vpack.c.bf16 %v7599, %v7583
        %v8764 = vpack.c.bf16 %v7601, %v7585
        %v8765 = vpack.c.bf16 %v7603, %v7587
        %v8766 = vpack.c.bf16 %v7605, %v7589
        %v8767 = vpack.c.bf16 %v7607, %v7591
        %v8768 = vpack.c.bf16 %v7625, %v7609
        %v8769 = vpack.c.bf16 %v7627, %v7611
        %v8770 = vpack.c.bf16 %v7629, %v7613
        %v8771 = vpack.c.bf16 %v7631, %v7615
        %v8772 = vpack.c.bf16 %v7633, %v7617
        %v8773 = vpack.c.bf16 %v7635, %v7619
        %v8774 = vpack.c.bf16 %v7637, %v7621
        %v8775 = vpack.c.bf16 %v7639, %v7623
        %v8776 = vpack.c.bf16 %v7657, %v7641
        %v8777 = vpack.c.bf16 %v7659, %v7643
        %v8778 = vpack.c.bf16 %v7661, %v7645
        %v8779 = vpack.c.bf16 %v7663, %v7647
        %v8780 = vpack.c.bf16 %v7665, %v7649
        %v8781 = vpack.c.bf16 %v7667, %v7651
        %v8782 = vpack.c.bf16 %v7669, %v7653
        %v8783 = vpack.c.bf16 %v7671, %v7655
        %v8784 = vpack.c.bf16 %v7689, %v7673
        %v8785 = vpack.c.bf16 %v7691, %v7675
        %v8786 = vpack.c.bf16 %v7693, %v7677
        %v8787 = vpack.c.bf16 %v7695, %v7679
        %v8788 = vpack.c.bf16 %v7697, %v7681
        %v8789 = vpack.c.bf16 %v7699, %v7683
        %v8790 = vpack.c.bf16 %v7701, %v7685
        %v8791 = vpack.c.bf16 %v7703, %v7687
        %v8792 = vpack.c.bf16 %v7721, %v7705
        %v8793 = vpack.c.bf16 %v7723, %v7707
        %v8794 = vpack.c.bf16 %v7725, %v7709
        %v8795 = vpack.c.bf16 %v7727, %v7711
        %v8796 = vpack.c.bf16 %v7729, %v7713
        %v8797 = vpack.c.bf16 %v7731, %v7715
        %v8798 = vpack.c.bf16 %v7733, %v7717
        %v8799 = vpack.c.bf16 %v7735, %v7719
        %v8800 = vpack.c.bf16 %v7753, %v7737
        %v8801 = vpack.c.bf16 %v7755, %v7739
        %v8802 = vpack.c.bf16 %v7757, %v7741
        %v8803 = vpack.c.bf16 %v7759, %v7743
        %v8804 = vpack.c.bf16 %v7761, %v7745
        %v8805 = vpack.c.bf16 %v7763, %v7747
        %v8806 = vpack.c.bf16 %v7765, %v7749
        %v8807 = vpack.c.bf16 %v7767, %v7751
        %v8808 = vpack.c.bf16 %v7785, %v7769
        %v8809 = vpack.c.bf16 %v7787, %v7771
        %v8810 = vpack.c.bf16 %v7789, %v7773
        %v8811 = vpack.c.bf16 %v7791, %v7775
        %v8812 = vpack.c.bf16 %v7793, %v7777
        %v8813 = vpack.c.bf16 %v7795, %v7779
        %v8814 = vpack.c.bf16 %v7797, %v7781
        %v8815 = vpack.c.bf16 %v7799, %v7783
        %v8816 = vpack.c.bf16 %v7817, %v7801
        %v8817 = vpack.c.bf16 %v7819, %v7803
        %v8818 = vpack.c.bf16 %v7821, %v7805
        %v8819 = vpack.c.bf16 %v7823, %v7807
        %v8820 = vpack.c.bf16 %v7825, %v7809
        %v8821 = vpack.c.bf16 %v7827, %v7811
        %v8822 = vpack.c.bf16 %v7829, %v7813
        %v8823 = vpack.c.bf16 %v7831, %v7815
        %v8824 = vpack.c.bf16 %v7849, %v7833
        %v8825 = vpack.c.bf16 %v7851, %v7835
        %v8826 = vpack.c.bf16 %v7853, %v7837
        %v8827 = vpack.c.bf16 %v7855, %v7839
        %v8828 = vpack.c.bf16 %v7857, %v7841
        %v8829 = vpack.c.bf16 %v7859, %v7843
        %v8830 = vpack.c.bf16 %v7861, %v7845
        %v8831 = vpack.c.bf16 %v7863, %v7847
        %v8832 = vpack.c.bf16 %v7881, %v7865
        %v8833 = vpack.c.bf16 %v7883, %v7867
        %v8834 = vpack.c.bf16 %v7885, %v7869
        %v8835 = vpack.c.bf16 %v7887, %v7871
        %v8836 = vpack.c.bf16 %v7889, %v7873
        %v8837 = vpack.c.bf16 %v7891, %v7875
        %v8838 = vpack.c.bf16 %v7893, %v7877
        %v8839 = vpack.c.bf16 %v7895, %v7879
        %v8840 = vpack.c.bf16 %v7913, %v7897
        %v8841 = vpack.c.bf16 %v7915, %v7899
        %v8842 = vpack.c.bf16 %v7917, %v7901
        %v8843 = vpack.c.bf16 %v7919, %v7903
        %v8844 = vpack.c.bf16 %v7921, %v7905
        %v8845 = vpack.c.bf16 %v7923, %v7907
        %v8846 = vpack.c.bf16 %v7925, %v7909
        %v8847 = vpack.c.bf16 %v7927, %v7911
        %v8848 = vpack.c.bf16 %v7945, %v7929
        %v8849 = vpack.c.bf16 %v7947, %v7931
        %v8850 = vpack.c.bf16 %v7949, %v7933
        %v8851 = vpack.c.bf16 %v7951, %v7935
        %v8852 = vpack.c.bf16 %v7953, %v7937
        %v8853 = vpack.c.bf16 %v7955, %v7939
        %v8854 = vpack.c.bf16 %v7957, %v7941
        %v8855 = vpack.c.bf16 %v7959, %v7943
        %v8856 = vpack.c.bf16 %v7977, %v7961
        %v8857 = vpack.c.bf16 %v7979, %v7963
        %v8858 = vpack.c.bf16 %v7981, %v7965
        %v8859 = vpack.c.bf16 %v7983, %v7967
        %v8860 = vpack.c.bf16 %v7985, %v7969
        %v8861 = vpack.c.bf16 %v7987, %v7971
        %v8862 = vpack.c.bf16 %v7989, %v7973
        %v8863 = vpack.c.bf16 %v7991, %v7975
        %v8864 = vpack.c.bf16 %v8009, %v7993
        %v8865 = vpack.c.bf16 %v8011, %v7995
        %v8866 = vpack.c.bf16 %v8013, %v7997
        %v8867 = vpack.c.bf16 %v8015, %v7999
        %v8868 = vpack.c.bf16 %v8017, %v8001
        %v8869 = vpack.c.bf16 %v8019, %v8003
        %v8870 = vpack.c.bf16 %v8021, %v8005
        %v8871 = vpack.c.bf16 %v8023, %v8007
        %v8872 = vpack.c.bf16 %v8041, %v8025
        %v8873 = vpack.c.bf16 %v8043, %v8027
        %v8874 = vpack.c.bf16 %v8045, %v8029
        %v8875 = vpack.c.bf16 %v8047, %v8031
        %v8876 = vpack.c.bf16 %v8049, %v8033
        %v8877 = vpack.c.bf16 %v8051, %v8035
        %v8878 = vpack.c.bf16 %v8053, %v8037
        %v8879 = vpack.c.bf16 %v8055, %v8039
        %v8880 = vpack.c.bf16 %v8073, %v8057
        %v8881 = vpack.c.bf16 %v8075, %v8059
        %v8882 = vpack.c.bf16 %v8077, %v8061
        %v8883 = vpack.c.bf16 %v8079, %v8063
        %v8884 = vpack.c.bf16 %v8081, %v8065
        %v8885 = vpack.c.bf16 %v8083, %v8067
        %v8886 = vpack.c.bf16 %v8085, %v8069
        %v8887 = vpack.c.bf16 %v8087, %v8071
        %v8888 = vpack.c.bf16 %v8105, %v8089
        %v8889 = vpack.c.bf16 %v8107, %v8091
        %v8890 = vpack.c.bf16 %v8109, %v8093
        %v8891 = vpack.c.bf16 %v8111, %v8095
        %v8892 = vpack.c.bf16 %v8113, %v8097
        %v8893 = vpack.c.bf16 %v8115, %v8099
        %v8894 = vpack.c.bf16 %v8117, %v8101
        %v8895 = vpack.c.bf16 %v8119, %v8103
        %v8896 = vpack.c.bf16 %v8137, %v8121
        %v8897 = vpack.c.bf16 %v8139, %v8123
        %v8898 = vpack.c.bf16 %v8141, %v8125
        %v8899 = vpack.c.bf16 %v8143, %v8127
        %v8900 = vpack.c.bf16 %v8145, %v8129
        %v8901 = vpack.c.bf16 %v8147, %v8131
        %v8902 = vpack.c.bf16 %v8149, %v8133
        %v8903 = vpack.c.bf16 %v8151, %v8135
        %v8904 = vpack.c.bf16 %v8169, %v8153
        %v8905 = vpack.c.bf16 %v8171, %v8155
        %v8906 = vpack.c.bf16 %v8173, %v8157
        %v8907 = vpack.c.bf16 %v8175, %v8159
        %v8908 = vpack.c.bf16 %v8177, %v8161
        %v8909 = vpack.c.bf16 %v8179, %v8163
        %v8910 = vpack.c.bf16 %v8181, %v8165
        %v8911 = vpack.c.bf16 %v8183, %v8167
        %v8912 = vpack.c.bf16 %v8201, %v8185
        %v8913 = vpack.c.bf16 %v8203, %v8187
        %v8914 = vpack.c.bf16 %v8205, %v8189
        %v8915 = vpack.c.bf16 %v8207, %v8191
        %v8916 = vpack.c.bf16 %v8209, %v8193
        %v8917 = vpack.c.bf16 %v8211, %v8195
        %v8918 = vpack.c.bf16 %v8213, %v8197
        %v8919 = vpack.c.bf16 %v8215, %v8199
        %v8920 = vpack.c.bf16 %v8233, %v8217
        %v8921 = vpack.c.bf16 %v8235, %v8219
        %v8922 = vpack.c.bf16 %v8237, %v8221
        %v8923 = vpack.c.bf16 %v8239, %v8223
        %v8924 = vpack.c.bf16 %v8241, %v8225
        %v8925 = vpack.c.bf16 %v8243, %v8227
        %v8926 = vpack.c.bf16 %v8245, %v8229
        %v8927 = vpack.c.bf16 %v8247, %v8231
        %v8928 = vpack.c.bf16 %v8265, %v8249
        %v8929 = vpack.c.bf16 %v8267, %v8251
        %v8930 = vpack.c.bf16 %v8269, %v8253
        %v8931 = vpack.c.bf16 %v8271, %v8255
        %v8932 = vpack.c.bf16 %v8273, %v8257
        %v8933 = vpack.c.bf16 %v8275, %v8259
        %v8934 = vpack.c.bf16 %v8277, %v8261
        %v8935 = vpack.c.bf16 %v8279, %v8263
        %v8936 = vpack.c.bf16 %v8297, %v8281
        %v8937 = vpack.c.bf16 %v8299, %v8283
        %v8938 = vpack.c.bf16 %v8301, %v8285
        %v8939 = vpack.c.bf16 %v8303, %v8287
        %v8940 = vpack.c.bf16 %v8305, %v8289
        %v8941 = vpack.c.bf16 %v8307, %v8291
        %v8942 = vpack.c.bf16 %v8309, %v8293
        %v8943 = vpack.c.bf16 %v8311, %v8295
        %v8944 = vpack.c.bf16 %v8329, %v8313
        %v8945 = vpack.c.bf16 %v8331, %v8315
        %v8946 = vpack.c.bf16 %v8333, %v8317
        %v8947 = vpack.c.bf16 %v8335, %v8319
        %v8948 = vpack.c.bf16 %v8337, %v8321
        %v8949 = vpack.c.bf16 %v8339, %v8323
        %v8950 = vpack.c.bf16 %v8341, %v8325
        %v8951 = vpack.c.bf16 %v8343, %v8327
        %v8952 = vpack.c.bf16 %v8361, %v8345
        %v8953 = vpack.c.bf16 %v8363, %v8347
        %v8954 = vpack.c.bf16 %v8365, %v8349
        %v8955 = vpack.c.bf16 %v8367, %v8351
        %v8956 = vpack.c.bf16 %v8369, %v8353
        %v8957 = vpack.c.bf16 %v8371, %v8355
        %v8958 = vpack.c.bf16 %v8373, %v8357
        %v8959 = vpack.c.bf16 %v8375, %v8359
        %v8960 = vpack.c.bf16 %v8393, %v8377
        %v8961 = vpack.c.bf16 %v8395, %v8379
        %v8962 = vpack.c.bf16 %v8397, %v8381
        %v8963 = vpack.c.bf16 %v8399, %v8383
        %v8964 = vpack.c.bf16 %v8401, %v8385
        %v8965 = vpack.c.bf16 %v8403, %v8387
        %v8966 = vpack.c.bf16 %v8405, %v8389
        %v8967 = vpack.c.bf16 %v8407, %v8391
        %v8968 = vpack.c.bf16 %v8425, %v8409
        %v8969 = vpack.c.bf16 %v8427, %v8411
        %v8970 = vpack.c.bf16 %v8429, %v8413
        %v8971 = vpack.c.bf16 %v8431, %v8415
        %v8972 = vpack.c.bf16 %v8433, %v8417
        %v8973 = vpack.c.bf16 %v8435, %v8419
        %v8974 = vpack.c.bf16 %v8437, %v8421
        %v8975 = vpack.c.bf16 %v8439, %v8423
        %v8976 = vpack.c.bf16 %v8457, %v8441
        %v8977 = vpack.c.bf16 %v8459, %v8443
        %v8978 = vpack.c.bf16 %v8461, %v8445
        %v8979 = vpack.c.bf16 %v8463, %v8447
        %v8980 = vpack.c.bf16 %v8465, %v8449
        %v8981 = vpack.c.bf16 %v8467, %v8451
        %v8982 = vpack.c.bf16 %v8469, %v8453
        %v8983 = vpack.c.bf16 %v8471, %v8455
        %8984 = vmatpush.bf16.xpose.msra.mxu0 %v8528
        %8985 = vmatpush.bf16.xpose.msra.mxu0 %v8520
        %8986 = vmatpush.bf16.xpose.msra.mxu0 %v8512
        %8987 = vmatpush.bf16.xpose.msra.mxu0 %v8504
        %8988 = vmatpush.bf16.xpose.msra.mxu0 %v8496
        %8989 = vmatpush.bf16.xpose.msra.mxu0 %v8488
        %8990 = vmatpush.bf16.xpose.msra.mxu0 %v8480
        %8991 = vmatpush.bf16.xpose.msra.mxu0 %v8472
        %8992 = vmatmul.bf16.gmra.mxu0 1065369472
        %v8993 = vpop.f32.mrf.mxu0
        %v8994 = vadd.f32 0.0, %v8993
        %v8995 = vpop.f32.mrf.mxu0
        %8996 = vdwg.mxu0
        %8997 = vmatpush.bf16.xpose.msra.mxu0 %v8529
        %8998 = vmatpush.bf16.xpose.msra.mxu0 %v8521
        %8999 = vmatpush.bf16.xpose.msra.mxu0 %v8513
        %9000 = vmatpush.bf16.xpose.msra.mxu0 %v8505
        %9001 = vmatpush.bf16.xpose.msra.mxu0 %v8497
        %9002 = vmatpush.bf16.xpose.msra.mxu0 %v8489
        %9003 = vmatpush.bf16.xpose.msra.mxu0 %v8481
        %9004 = vmatpush.bf16.xpose.msra.mxu0 %v8473
        %9005 = vmatmul.bf16.gmra.mxu0 1065369472
        %v9006 = vpop.f32.mrf.mxu0
        %v9007 = vadd.f32 %v8994, %v9006
        %v9008 = vpop.f32.mrf.mxu0
        %9009 = vdwg.mxu0
        %9010 = vmatpush.bf16.xpose.msra.mxu0 %v8530
        %9011 = vmatpush.bf16.xpose.msra.mxu0 %v8522
        %9012 = vmatpush.bf16.xpose.msra.mxu0 %v8514
        %9013 = vmatpush.bf16.xpose.msra.mxu0 %v8506
        %9014 = vmatpush.bf16.xpose.msra.mxu0 %v8498
        %9015 = vmatpush.bf16.xpose.msra.mxu0 %v8490
        %9016 = vmatpush.bf16.xpose.msra.mxu0 %v8482
        %9017 = vmatpush.bf16.xpose.msra.mxu0 %v8474
        %9018 = vmatmul.bf16.gmra.mxu0 1065369472
        %v9019 = vpop.f32.mrf.mxu0
        %v9020 = vadd.f32 %v9007, %v9019
        %v9021 = vpop.f32.mrf.mxu0
        %9022 = vdwg.mxu0
        %9023 = vmatpush.bf16.xpose.msra.mxu0 %v8531
        %9024 = vmatpush.bf16.xpose.msra.mxu0 %v8523
        %9025 = vmatpush.bf16.xpose.msra.mxu0 %v8515
        %9026 = vmatpush.bf16.xpose.msra.mxu0 %v8507
        %9027 = vmatpush.bf16.xpose.msra.mxu0 %v8499
        %9028 = vmatpush.bf16.xpose.msra.mxu0 %v8491
        %9029 = vmatpush.bf16.xpose.msra.mxu0 %v8483
        %9030 = vmatpush.bf16.xpose.msra.mxu0 %v8475
        %9031 = vmatmul.bf16.gmra.mxu0 1065369472
        %v9032 = vpop.f32.mrf.mxu0
        %v9033 = vadd.f32 %v9020, %v9032
        %v9034 = vpop.f32.mrf.mxu0
        %9035 = vdwg.mxu0
        %9036 = vmatpush.bf16.xpose.msra.mxu0 %v8532
        %9037 = vmatpush.bf16.xpose.msra.mxu0 %v8524
        %9038 = vmatpush.bf16.xpose.msra.mxu0 %v8516
        %9039 = vmatpush.bf16.xpose.msra.mxu0 %v8508
        %9040 = vmatpush.bf16.xpose.msra.mxu0 %v8500
        %9041 = vmatpush.bf16.xpose.msra.mxu0 %v8492
        %9042 = vmatpush.bf16.xpose.msra.mxu0 %v8484
        %9043 = vmatpush.bf16.xpose.msra.mxu0 %v8476
        %9044 = vmatmul.bf16.gmra.mxu0 1065369472
        %v9045 = vpop.f32.mrf.mxu0
        %v9046 = vadd.f32 %v9033, %v9045
        %v9047 = vpop.f32.mrf.mxu0
        %9048 = vdwg.mxu0
        %9049 = vmatpush.bf16.xpose.msra.mxu0 %v8533
        %9050 = vmatpush.bf16.xpose.msra.mxu0 %v8525
        %9051 = vmatpush.bf16.xpose.msra.mxu0 %v8517
        %9052 = vmatpush.bf16.xpose.msra.mxu0 %v8509
        %9053 = vmatpush.bf16.xpose.msra.mxu0 %v8501
        %9054 = vmatpush.bf16.xpose.msra.mxu0 %v8493
        %9055 = vmatpush.bf16.xpose.msra.mxu0 %v8485
        %9056 = vmatpush.bf16.xpose.msra.mxu0 %v8477
        %9057 = vmatmul.bf16.gmra.mxu0 1065369472
        %v9058 = vpop.f32.mrf.mxu0
        %v9059 = vadd.f32 %v9046, %v9058
        %v9060 = vpop.f32.mrf.mxu0
        %9061 = vdwg.mxu0
        %9062 = vmatpush.bf16.xpose.msra.mxu0 %v8534
        %9063 = vmatpush.bf16.xpose.msra.mxu0 %v8526
        %9064 = vmatpush.bf16.xpose.msra.mxu0 %v8518
        %9065 = vmatpush.bf16.xpose.msra.mxu0 %v8510
        %9066 = vmatpush.bf16.xpose.msra.mxu0 %v8502
        %9067 = vmatpush.bf16.xpose.msra.mxu0 %v8494
        %9068 = vmatpush.bf16.xpose.msra.mxu0 %v8486
        %9069 = vmatpush.bf16.xpose.msra.mxu0 %v8478
        %9070 = vmatmul.bf16.gmra.mxu0 1065369472
        %v9071 = vpop.f32.mrf.mxu0
        %v9072 = vadd.f32 %v9059, %v9071
        %v9073 = vpop.f32.mrf.mxu0
        %9074 = vdwg.mxu0
        %9075 = vmatpush.bf16.xpose.msra.mxu0 %v8535
        %9076 = vmatpush.bf16.xpose.msra.mxu0 %v8527
        %9077 = vmatpush.bf16.xpose.msra.mxu0 %v8519
        %9078 = vmatpush.bf16.xpose.msra.mxu0 %v8511
        %9079 = vmatpush.bf16.xpose.msra.mxu0 %v8503
        %9080 = vmatpush.bf16.xpose.msra.mxu0 %v8495
        %9081 = vmatpush.bf16.xpose.msra.mxu0 %v8487
        %9082 = vmatpush.bf16.xpose.msra.mxu0 %v8479
        %9083 = vmatmul.bf16.gmra.mxu0 1065369472
        %v9084 = vpop.f32.mrf.mxu0
        %v9085 = vadd.f32 %v9072, %v9084
        %v9086 = vpop.f32.mrf.mxu0
        %9087 = vdwg.mxu0
        %9088 = vmatpush.bf16.xpose.msra.mxu0 %v8592
        %9089 = vmatpush.bf16.xpose.msra.mxu0 %v8584
        %9090 = vmatpush.bf16.xpose.msra.mxu0 %v8576
        %9091 = vmatpush.bf16.xpose.msra.mxu0 %v8568
        %9092 = vmatpush.bf16.xpose.msra.mxu0 %v8560
        %9093 = vmatpush.bf16.xpose.msra.mxu0 %v8552
        %9094 = vmatpush.bf16.xpose.msra.mxu0 %v8544
        %9095 = vmatpush.bf16.xpose.msra.mxu0 %v8536
        %9096 = vmatmul.bf16.gmra.mxu0 1065369472
        %v9097 = vpop.f32.mrf.mxu0
        %v9098 = vadd.f32 0.0, %v9097
        %v9099 = vpop.f32.mrf.mxu0
        %9100 = vdwg.mxu0
        %9101 = vmatpush.bf16.xpose.msra.mxu0 %v8593
        %9102 = vmatpush.bf16.xpose.msra.mxu0 %v8585
        %9103 = vmatpush.bf16.xpose.msra.mxu0 %v8577
        %9104 = vmatpush.bf16.xpose.msra.mxu0 %v8569
        %9105 = vmatpush.bf16.xpose.msra.mxu0 %v8561
        %9106 = vmatpush.bf16.xpose.msra.mxu0 %v8553
        %9107 = vmatpush.bf16.xpose.msra.mxu0 %v8545
        %9108 = vmatpush.bf16.xpose.msra.mxu0 %v8537
        %9109 = vmatmul.bf16.gmra.mxu0 1065369472
        %v9110 = vpop.f32.mrf.mxu0
        %v9111 = vadd.f32 %v9098, %v9110
        %v9112 = vpop.f32.mrf.mxu0
        %9113 = vdwg.mxu0
        %9114 = vmatpush.bf16.xpose.msra.mxu0 %v8594
        %9115 = vmatpush.bf16.xpose.msra.mxu0 %v8586
        %9116 = vmatpush.bf16.xpose.msra.mxu0 %v8578
        %9117 = vmatpush.bf16.xpose.msra.mxu0 %v8570
        %9118 = vmatpush.bf16.xpose.msra.mxu0 %v8562
        %9119 = vmatpush.bf16.xpose.msra.mxu0 %v8554
        %9120 = vmatpush.bf16.xpose.msra.mxu0 %v8546
        %9121 = vmatpush.bf16.xpose.msra.mxu0 %v8538
        %9122 = vmatmul.bf16.gmra.mxu0 1065369472
        %v9123 = vpop.f32.mrf.mxu0
        %v9124 = vadd.f32 %v9111, %v9123
        %v9125 = vpop.f32.mrf.mxu0
        %9126 = vdwg.mxu0
        %9127 = vmatpush.bf16.xpose.msra.mxu0 %v8595
        %9128 = vmatpush.bf16.xpose.msra.mxu0 %v8587
        %9129 = vmatpush.bf16.xpose.msra.mxu0 %v8579
        %9130 = vmatpush.bf16.xpose.msra.mxu0 %v8571
        %9131 = vmatpush.bf16.xpose.msra.mxu0 %v8563
        %9132 = vmatpush.bf16.xpose.msra.mxu0 %v8555
        %9133 = vmatpush.bf16.xpose.msra.mxu0 %v8547
        %9134 = vmatpush.bf16.xpose.msra.mxu0 %v8539
        %9135 = vmatmul.bf16.gmra.mxu0 1065369472
        %v9136 = vpop.f32.mrf.mxu0
        %v9137 = vadd.f32 %v9124, %v9136
        %v9138 = vpop.f32.mrf.mxu0
        %9139 = vdwg.mxu0
        %9140 = vmatpush.bf16.xpose.msra.mxu0 %v8596
        %9141 = vmatpush.bf16.xpose.msra.mxu0 %v8588
        %9142 = vmatpush.bf16.xpose.msra.mxu0 %v8580
        %9143 = vmatpush.bf16.xpose.msra.mxu0 %v8572
        %9144 = vmatpush.bf16.xpose.msra.mxu0 %v8564
        %9145 = vmatpush.bf16.xpose.msra.mxu0 %v8556
        %9146 = vmatpush.bf16.xpose.msra.mxu0 %v8548
        %9147 = vmatpush.bf16.xpose.msra.mxu0 %v8540
        %9148 = vmatmul.bf16.gmra.mxu0 1065369472
        %v9149 = vpop.f32.mrf.mxu0
        %v9150 = vadd.f32 %v9137, %v9149
        %v9151 = vpop.f32.mrf.mxu0
        %9152 = vdwg.mxu0
        %9153 = vmatpush.bf16.xpose.msra.mxu0 %v8597
        %9154 = vmatpush.bf16.xpose.msra.mxu0 %v8589
        %9155 = vmatpush.bf16.xpose.msra.mxu0 %v8581
        %9156 = vmatpush.bf16.xpose.msra.mxu0 %v8573
        %9157 = vmatpush.bf16.xpose.msra.mxu0 %v8565
        %9158 = vmatpush.bf16.xpose.msra.mxu0 %v8557
        %9159 = vmatpush.bf16.xpose.msra.mxu0 %v8549
        %9160 = vmatpush.bf16.xpose.msra.mxu0 %v8541
        %9161 = vmatmul.bf16.gmra.mxu0 1065369472
        %v9162 = vpop.f32.mrf.mxu0
        %v9163 = vadd.f32 %v9150, %v9162
        %v9164 = vpop.f32.mrf.mxu0
        %9165 = vdwg.mxu0
        %9166 = vmatpush.bf16.xpose.msra.mxu0 %v8598
        %9167 = vmatpush.bf16.xpose.msra.mxu0 %v8590
        %9168 = vmatpush.bf16.xpose.msra.mxu0 %v8582
        %9169 = vmatpush.bf16.xpose.msra.mxu0 %v8574
        %9170 = vmatpush.bf16.xpose.msra.mxu0 %v8566
        %9171 = vmatpush.bf16.xpose.msra.mxu0 %v8558
        %9172 = vmatpush.bf16.xpose.msra.mxu0 %v8550
        %9173 = vmatpush.bf16.xpose.msra.mxu0 %v8542
        %9174 = vmatmul.bf16.gmra.mxu0 1065369472
        %v9175 = vpop.f32.mrf.mxu0
        %v9176 = vadd.f32 %v9163, %v9175
        %v9177 = vpop.f32.mrf.mxu0
        %9178 = vdwg.mxu0
        %9179 = vmatpush.bf16.xpose.msra.mxu0 %v8599
        %9180 = vmatpush.bf16.xpose.msra.mxu0 %v8591
        %9181 = vmatpush.bf16.xpose.msra.mxu0 %v8583
        %9182 = vmatpush.bf16.xpose.msra.mxu0 %v8575
        %9183 = vmatpush.bf16.xpose.msra.mxu0 %v8567
        %9184 = vmatpush.bf16.xpose.msra.mxu0 %v8559
        %9185 = vmatpush.bf16.xpose.msra.mxu0 %v8551
        %9186 = vmatpush.bf16.xpose.msra.mxu0 %v8543
        %9187 = vmatmul.bf16.gmra.mxu0 1065369472
        %v9188 = vpop.f32.mrf.mxu0
        %v9189 = vadd.f32 %v9176, %v9188
        %v9190 = vpop.f32.mrf.mxu0
        %9191 = vdwg.mxu0
        %9192 = vmatpush.bf16.xpose.msra.mxu0 %v8656
        %9193 = vmatpush.bf16.xpose.msra.mxu0 %v8648
        %9194 = vmatpush.bf16.xpose.msra.mxu0 %v8640
        %9195 = vmatpush.bf16.xpose.msra.mxu0 %v8632
        %9196 = vmatpush.bf16.xpose.msra.mxu0 %v8624
        %9197 = vmatpush.bf16.xpose.msra.mxu0 %v8616
        %9198 = vmatpush.bf16.xpose.msra.mxu0 %v8608
        %9199 = vmatpush.bf16.xpose.msra.mxu0 %v8600
        %9200 = vmatmul.bf16.gmra.mxu0 1065369472
        %v9201 = vpop.f32.mrf.mxu0
        %v9202 = vadd.f32 0.0, %v9201
        %v9203 = vpop.f32.mrf.mxu0
        %9204 = vdwg.mxu0
        %9205 = vmatpush.bf16.xpose.msra.mxu0 %v8657
        %9206 = vmatpush.bf16.xpose.msra.mxu0 %v8649
        %9207 = vmatpush.bf16.xpose.msra.mxu0 %v8641
        %9208 = vmatpush.bf16.xpose.msra.mxu0 %v8633
        %9209 = vmatpush.bf16.xpose.msra.mxu0 %v8625
        %9210 = vmatpush.bf16.xpose.msra.mxu0 %v8617
        %9211 = vmatpush.bf16.xpose.msra.mxu0 %v8609
        %9212 = vmatpush.bf16.xpose.msra.mxu0 %v8601
        %9213 = vmatmul.bf16.gmra.mxu0 1065369472
        %v9214 = vpop.f32.mrf.mxu0
        %v9215 = vadd.f32 %v9202, %v9214
        %v9216 = vpop.f32.mrf.mxu0
        %9217 = vdwg.mxu0
        %9218 = vmatpush.bf16.xpose.msra.mxu0 %v8658
        %9219 = vmatpush.bf16.xpose.msra.mxu0 %v8650
        %9220 = vmatpush.bf16.xpose.msra.mxu0 %v8642
        %9221 = vmatpush.bf16.xpose.msra.mxu0 %v8634
        %9222 = vmatpush.bf16.xpose.msra.mxu0 %v8626
        %9223 = vmatpush.bf16.xpose.msra.mxu0 %v8618
        %9224 = vmatpush.bf16.xpose.msra.mxu0 %v8610
        %9225 = vmatpush.bf16.xpose.msra.mxu0 %v8602
        %9226 = vmatmul.bf16.gmra.mxu0 1065369472
        %v9227 = vpop.f32.mrf.mxu0
        %v9228 = vadd.f32 %v9215, %v9227
        %v9229 = vpop.f32.mrf.mxu0
        %9230 = vdwg.mxu0
        %9231 = vmatpush.bf16.xpose.msra.mxu0 %v8659
        %9232 = vmatpush.bf16.xpose.msra.mxu0 %v8651
        %9233 = vmatpush.bf16.xpose.msra.mxu0 %v8643
        %9234 = vmatpush.bf16.xpose.msra.mxu0 %v8635
        %9235 = vmatpush.bf16.xpose.msra.mxu0 %v8627
        %9236 = vmatpush.bf16.xpose.msra.mxu0 %v8619
        %9237 = vmatpush.bf16.xpose.msra.mxu0 %v8611
        %9238 = vmatpush.bf16.xpose.msra.mxu0 %v8603
        %9239 = vmatmul.bf16.gmra.mxu0 1065369472
        %v9240 = vpop.f32.mrf.mxu0
        %v9241 = vadd.f32 %v9228, %v9240
        %v9242 = vpop.f32.mrf.mxu0
        %9243 = vdwg.mxu0
        %9244 = vmatpush.bf16.xpose.msra.mxu0 %v8660
        %9245 = vmatpush.bf16.xpose.msra.mxu0 %v8652
        %9246 = vmatpush.bf16.xpose.msra.mxu0 %v8644
        %9247 = vmatpush.bf16.xpose.msra.mxu0 %v8636
        %9248 = vmatpush.bf16.xpose.msra.mxu0 %v8628
        %9249 = vmatpush.bf16.xpose.msra.mxu0 %v8620
        %9250 = vmatpush.bf16.xpose.msra.mxu0 %v8612
        %9251 = vmatpush.bf16.xpose.msra.mxu0 %v8604
        %9252 = vmatmul.bf16.gmra.mxu0 1065369472
        %v9253 = vpop.f32.mrf.mxu0
        %v9254 = vadd.f32 %v9241, %v9253
        %v9255 = vpop.f32.mrf.mxu0
        %9256 = vdwg.mxu0
        %9257 = vmatpush.bf16.xpose.msra.mxu0 %v8661
        %9258 = vmatpush.bf16.xpose.msra.mxu0 %v8653
        %9259 = vmatpush.bf16.xpose.msra.mxu0 %v8645
        %9260 = vmatpush.bf16.xpose.msra.mxu0 %v8637
        %9261 = vmatpush.bf16.xpose.msra.mxu0 %v8629
        %9262 = vmatpush.bf16.xpose.msra.mxu0 %v8621
        %9263 = vmatpush.bf16.xpose.msra.mxu0 %v8613
        %9264 = vmatpush.bf16.xpose.msra.mxu0 %v8605
        %9265 = vmatmul.bf16.gmra.mxu0 1065369472
        %v9266 = vpop.f32.mrf.mxu0
        %v9267 = vadd.f32 %v9254, %v9266
        %v9268 = vpop.f32.mrf.mxu0
        %9269 = vdwg.mxu0
        %9270 = vmatpush.bf16.xpose.msra.mxu0 %v8662
        %9271 = vmatpush.bf16.xpose.msra.mxu0 %v8654
        %9272 = vmatpush.bf16.xpose.msra.mxu0 %v8646
        %9273 = vmatpush.bf16.xpose.msra.mxu0 %v8638
        %9274 = vmatpush.bf16.xpose.msra.mxu0 %v8630
        %9275 = vmatpush.bf16.xpose.msra.mxu0 %v8622
        %9276 = vmatpush.bf16.xpose.msra.mxu0 %v8614
        %9277 = vmatpush.bf16.xpose.msra.mxu0 %v8606
        %9278 = vmatmul.bf16.gmra.mxu0 1065369472
        %v9279 = vpop.f32.mrf.mxu0
        %v9280 = vadd.f32 %v9267, %v9279
        %v9281 = vpop.f32.mrf.mxu0
        %9282 = vdwg.mxu0
        %9283 = vmatpush.bf16.xpose.msra.mxu0 %v8663
        %9284 = vmatpush.bf16.xpose.msra.mxu0 %v8655
        %9285 = vmatpush.bf16.xpose.msra.mxu0 %v8647
        %9286 = vmatpush.bf16.xpose.msra.mxu0 %v8639
        %9287 = vmatpush.bf16.xpose.msra.mxu0 %v8631
        %9288 = vmatpush.bf16.xpose.msra.mxu0 %v8623
        %9289 = vmatpush.bf16.xpose.msra.mxu0 %v8615
        %9290 = vmatpush.bf16.xpose.msra.mxu0 %v8607
        %9291 = vmatmul.bf16.gmra.mxu0 1065369472
        %v9292 = vpop.f32.mrf.mxu0
        %v9293 = vadd.f32 %v9280, %v9292
        %v9294 = vpop.f32.mrf.mxu0
        %9295 = vdwg.mxu0
        %9296 = vmatpush.bf16.xpose.msra.mxu0 %v8720
        %9297 = vmatpush.bf16.xpose.msra.mxu0 %v8712
        %9298 = vmatpush.bf16.xpose.msra.mxu0 %v8704
        %9299 = vmatpush.bf16.xpose.msra.mxu0 %v8696
        %9300 = vmatpush.bf16.xpose.msra.mxu0 %v8688
        %9301 = vmatpush.bf16.xpose.msra.mxu0 %v8680
        %9302 = vmatpush.bf16.xpose.msra.mxu0 %v8672
        %9303 = vmatpush.bf16.xpose.msra.mxu0 %v8664
        %9304 = vmatmul.bf16.gmra.mxu0 1065369472
        %v9305 = vpop.f32.mrf.mxu0
        %v9306 = vadd.f32 0.0, %v9305
        %v9307 = vpop.f32.mrf.mxu0
        %9308 = vdwg.mxu0
        %9309 = vmatpush.bf16.xpose.msra.mxu0 %v8721
        %9310 = vmatpush.bf16.xpose.msra.mxu0 %v8713
        %9311 = vmatpush.bf16.xpose.msra.mxu0 %v8705
        %9312 = vmatpush.bf16.xpose.msra.mxu0 %v8697
        %9313 = vmatpush.bf16.xpose.msra.mxu0 %v8689
        %9314 = vmatpush.bf16.xpose.msra.mxu0 %v8681
        %9315 = vmatpush.bf16.xpose.msra.mxu0 %v8673
        %9316 = vmatpush.bf16.xpose.msra.mxu0 %v8665
        %9317 = vmatmul.bf16.gmra.mxu0 1065369472
        %v9318 = vpop.f32.mrf.mxu0
        %v9319 = vadd.f32 %v9306, %v9318
        %v9320 = vpop.f32.mrf.mxu0
        %9321 = vdwg.mxu0
        %9322 = vmatpush.bf16.xpose.msra.mxu0 %v8722
        %9323 = vmatpush.bf16.xpose.msra.mxu0 %v8714
        %9324 = vmatpush.bf16.xpose.msra.mxu0 %v8706
        %9325 = vmatpush.bf16.xpose.msra.mxu0 %v8698
        %9326 = vmatpush.bf16.xpose.msra.mxu0 %v8690
        %9327 = vmatpush.bf16.xpose.msra.mxu0 %v8682
        %9328 = vmatpush.bf16.xpose.msra.mxu0 %v8674
        %9329 = vmatpush.bf16.xpose.msra.mxu0 %v8666
        %9330 = vmatmul.bf16.gmra.mxu0 1065369472
        %v9331 = vpop.f32.mrf.mxu0
        %v9332 = vadd.f32 %v9319, %v9331
        %v9333 = vpop.f32.mrf.mxu0
        %9334 = vdwg.mxu0
        %9335 = vmatpush.bf16.xpose.msra.mxu0 %v8723
        %9336 = vmatpush.bf16.xpose.msra.mxu0 %v8715
        %9337 = vmatpush.bf16.xpose.msra.mxu0 %v8707
        %9338 = vmatpush.bf16.xpose.msra.mxu0 %v8699
        %9339 = vmatpush.bf16.xpose.msra.mxu0 %v8691
        %9340 = vmatpush.bf16.xpose.msra.mxu0 %v8683
        %9341 = vmatpush.bf16.xpose.msra.mxu0 %v8675
        %9342 = vmatpush.bf16.xpose.msra.mxu0 %v8667
        %9343 = vmatmul.bf16.gmra.mxu0 1065369472
        %v9344 = vpop.f32.mrf.mxu0
        %v9345 = vadd.f32 %v9332, %v9344
        %v9346 = vpop.f32.mrf.mxu0
        %9347 = vdwg.mxu0
        %9348 = vmatpush.bf16.xpose.msra.mxu0 %v8724
        %9349 = vmatpush.bf16.xpose.msra.mxu0 %v8716
        %9350 = vmatpush.bf16.xpose.msra.mxu0 %v8708
        %9351 = vmatpush.bf16.xpose.msra.mxu0 %v8700
        %9352 = vmatpush.bf16.xpose.msra.mxu0 %v8692
        %9353 = vmatpush.bf16.xpose.msra.mxu0 %v8684
        %9354 = vmatpush.bf16.xpose.msra.mxu0 %v8676
        %9355 = vmatpush.bf16.xpose.msra.mxu0 %v8668
        %9356 = vmatmul.bf16.gmra.mxu0 1065369472
        %v9357 = vpop.f32.mrf.mxu0
        %v9358 = vadd.f32 %v9345, %v9357
        %v9359 = vpop.f32.mrf.mxu0
        %9360 = vdwg.mxu0
        %9361 = vmatpush.bf16.xpose.msra.mxu0 %v8725
        %9362 = vmatpush.bf16.xpose.msra.mxu0 %v8717
        %9363 = vmatpush.bf16.xpose.msra.mxu0 %v8709
        %9364 = vmatpush.bf16.xpose.msra.mxu0 %v8701
        %9365 = vmatpush.bf16.xpose.msra.mxu0 %v8693
        %9366 = vmatpush.bf16.xpose.msra.mxu0 %v8685
        %9367 = vmatpush.bf16.xpose.msra.mxu0 %v8677
        %9368 = vmatpush.bf16.xpose.msra.mxu0 %v8669
        %9369 = vmatmul.bf16.gmra.mxu0 1065369472
        %v9370 = vpop.f32.mrf.mxu0
        %v9371 = vadd.f32 %v9358, %v9370
        %v9372 = vpop.f32.mrf.mxu0
        %9373 = vdwg.mxu0
        %9374 = vmatpush.bf16.xpose.msra.mxu0 %v8726
        %9375 = vmatpush.bf16.xpose.msra.mxu0 %v8718
        %9376 = vmatpush.bf16.xpose.msra.mxu0 %v8710
        %9377 = vmatpush.bf16.xpose.msra.mxu0 %v8702
        %9378 = vmatpush.bf16.xpose.msra.mxu0 %v8694
        %9379 = vmatpush.bf16.xpose.msra.mxu0 %v8686
        %9380 = vmatpush.bf16.xpose.msra.mxu0 %v8678
        %9381 = vmatpush.bf16.xpose.msra.mxu0 %v8670
        %9382 = vmatmul.bf16.gmra.mxu0 1065369472
        %v9383 = vpop.f32.mrf.mxu0
        %v9384 = vadd.f32 %v9371, %v9383
        %v9385 = vpop.f32.mrf.mxu0
        %9386 = vdwg.mxu0
        %9387 = vmatpush.bf16.xpose.msra.mxu0 %v8727
        %9388 = vmatpush.bf16.xpose.msra.mxu0 %v8719
        %9389 = vmatpush.bf16.xpose.msra.mxu0 %v8711
        %9390 = vmatpush.bf16.xpose.msra.mxu0 %v8703
        %9391 = vmatpush.bf16.xpose.msra.mxu0 %v8695
        %9392 = vmatpush.bf16.xpose.msra.mxu0 %v8687
        %9393 = vmatpush.bf16.xpose.msra.mxu0 %v8679
        %9394 = vmatpush.bf16.xpose.msra.mxu0 %v8671
        %9395 = vmatmul.bf16.gmra.mxu0 1065369472
        %v9396 = vpop.f32.mrf.mxu0
        %v9397 = vadd.f32 %v9384, %v9396
        %v9398 = vpop.f32.mrf.mxu0
        %9399 = vdwg.mxu0
        %9400 = vmatpush.bf16.xpose.msra.mxu0 %v8784
        %9401 = vmatpush.bf16.xpose.msra.mxu0 %v8776
        %9402 = vmatpush.bf16.xpose.msra.mxu0 %v8768
        %9403 = vmatpush.bf16.xpose.msra.mxu0 %v8760
        %9404 = vmatpush.bf16.xpose.msra.mxu0 %v8752
        %9405 = vmatpush.bf16.xpose.msra.mxu0 %v8744
        %9406 = vmatpush.bf16.xpose.msra.mxu0 %v8736
        %9407 = vmatpush.bf16.xpose.msra.mxu0 %v8728
        %9408 = vmatmul.bf16.gmra.mxu0 1065369472
        %v9409 = vpop.f32.mrf.mxu0
        %v9410 = vadd.f32 0.0, %v9409
        %v9411 = vpop.f32.mrf.mxu0
        %9412 = vdwg.mxu0
        %9413 = vmatpush.bf16.xpose.msra.mxu0 %v8785
        %9414 = vmatpush.bf16.xpose.msra.mxu0 %v8777
        %9415 = vmatpush.bf16.xpose.msra.mxu0 %v8769
        %9416 = vmatpush.bf16.xpose.msra.mxu0 %v8761
        %9417 = vmatpush.bf16.xpose.msra.mxu0 %v8753
        %9418 = vmatpush.bf16.xpose.msra.mxu0 %v8745
        %9419 = vmatpush.bf16.xpose.msra.mxu0 %v8737
        %9420 = vmatpush.bf16.xpose.msra.mxu0 %v8729
        %9421 = vmatmul.bf16.gmra.mxu0 1065369472
        %v9422 = vpop.f32.mrf.mxu0
        %v9423 = vadd.f32 %v9410, %v9422
        %v9424 = vpop.f32.mrf.mxu0
        %9425 = vdwg.mxu0
        %9426 = vmatpush.bf16.xpose.msra.mxu0 %v8786
        %9427 = vmatpush.bf16.xpose.msra.mxu0 %v8778
        %9428 = vmatpush.bf16.xpose.msra.mxu0 %v8770
        %9429 = vmatpush.bf16.xpose.msra.mxu0 %v8762
        %9430 = vmatpush.bf16.xpose.msra.mxu0 %v8754
        %9431 = vmatpush.bf16.xpose.msra.mxu0 %v8746
        %9432 = vmatpush.bf16.xpose.msra.mxu0 %v8738
        %9433 = vmatpush.bf16.xpose.msra.mxu0 %v8730
        %9434 = vmatmul.bf16.gmra.mxu0 1065369472
        %v9435 = vpop.f32.mrf.mxu0
        %v9436 = vadd.f32 %v9423, %v9435
        %v9437 = vpop.f32.mrf.mxu0
        %9438 = vdwg.mxu0
        %9439 = vmatpush.bf16.xpose.msra.mxu0 %v8787
        %9440 = vmatpush.bf16.xpose.msra.mxu0 %v8779
        %9441 = vmatpush.bf16.xpose.msra.mxu0 %v8771
        %9442 = vmatpush.bf16.xpose.msra.mxu0 %v8763
        %9443 = vmatpush.bf16.xpose.msra.mxu0 %v8755
        %9444 = vmatpush.bf16.xpose.msra.mxu0 %v8747
        %9445 = vmatpush.bf16.xpose.msra.mxu0 %v8739
        %9446 = vmatpush.bf16.xpose.msra.mxu0 %v8731
        %9447 = vmatmul.bf16.gmra.mxu0 1065369472
        %v9448 = vpop.f32.mrf.mxu0
        %v9449 = vadd.f32 %v9436, %v9448
        %v9450 = vpop.f32.mrf.mxu0
        %9451 = vdwg.mxu0
        %9452 = vmatpush.bf16.xpose.msra.mxu0 %v8788
        %9453 = vmatpush.bf16.xpose.msra.mxu0 %v8780
        %9454 = vmatpush.bf16.xpose.msra.mxu0 %v8772
        %9455 = vmatpush.bf16.xpose.msra.mxu0 %v8764
        %9456 = vmatpush.bf16.xpose.msra.mxu0 %v8756
        %9457 = vmatpush.bf16.xpose.msra.mxu0 %v8748
        %9458 = vmatpush.bf16.xpose.msra.mxu0 %v8740
        %9459 = vmatpush.bf16.xpose.msra.mxu0 %v8732
        %9460 = vmatmul.bf16.gmra.mxu0 1065369472
        %v9461 = vpop.f32.mrf.mxu0
        %v9462 = vadd.f32 %v9449, %v9461
        %v9463 = vpop.f32.mrf.mxu0
        %9464 = vdwg.mxu0
        %9465 = vmatpush.bf16.xpose.msra.mxu0 %v8789
        %9466 = vmatpush.bf16.xpose.msra.mxu0 %v8781
        %9467 = vmatpush.bf16.xpose.msra.mxu0 %v8773
        %9468 = vmatpush.bf16.xpose.msra.mxu0 %v8765
        %9469 = vmatpush.bf16.xpose.msra.mxu0 %v8757
        %9470 = vmatpush.bf16.xpose.msra.mxu0 %v8749
        %9471 = vmatpush.bf16.xpose.msra.mxu0 %v8741
        %9472 = vmatpush.bf16.xpose.msra.mxu0 %v8733
        %9473 = vmatmul.bf16.gmra.mxu0 1065369472
        %v9474 = vpop.f32.mrf.mxu0
        %v9475 = vadd.f32 %v9462, %v9474
        %v9476 = vpop.f32.mrf.mxu0
        %9477 = vdwg.mxu0
        %9478 = vmatpush.bf16.xpose.msra.mxu0 %v8790
        %9479 = vmatpush.bf16.xpose.msra.mxu0 %v8782
        %9480 = vmatpush.bf16.xpose.msra.mxu0 %v8774
        %9481 = vmatpush.bf16.xpose.msra.mxu0 %v8766
        %9482 = vmatpush.bf16.xpose.msra.mxu0 %v8758
        %9483 = vmatpush.bf16.xpose.msra.mxu0 %v8750
        %9484 = vmatpush.bf16.xpose.msra.mxu0 %v8742
        %9485 = vmatpush.bf16.xpose.msra.mxu0 %v8734
        %9486 = vmatmul.bf16.gmra.mxu0 1065369472
        %v9487 = vpop.f32.mrf.mxu0
        %v9488 = vadd.f32 %v9475, %v9487
        %v9489 = vpop.f32.mrf.mxu0
        %9490 = vdwg.mxu0
        %9491 = vmatpush.bf16.xpose.msra.mxu0 %v8791
        %9492 = vmatpush.bf16.xpose.msra.mxu0 %v8783
        %9493 = vmatpush.bf16.xpose.msra.mxu0 %v8775
        %9494 = vmatpush.bf16.xpose.msra.mxu0 %v8767
        %9495 = vmatpush.bf16.xpose.msra.mxu0 %v8759
        %9496 = vmatpush.bf16.xpose.msra.mxu0 %v8751
        %9497 = vmatpush.bf16.xpose.msra.mxu0 %v8743
        %9498 = vmatpush.bf16.xpose.msra.mxu0 %v8735
        %9499 = vmatmul.bf16.gmra.mxu0 1065369472
        %v9500 = vpop.f32.mrf.mxu0
        %v9501 = vadd.f32 %v9488, %v9500
        %v9502 = vpop.f32.mrf.mxu0
        %9503 = vdwg.mxu0
        %9504 = vmatpush.bf16.xpose.msra.mxu0 %v8848
        %9505 = vmatpush.bf16.xpose.msra.mxu0 %v8840
        %9506 = vmatpush.bf16.xpose.msra.mxu0 %v8832
        %9507 = vmatpush.bf16.xpose.msra.mxu0 %v8824
        %9508 = vmatpush.bf16.xpose.msra.mxu0 %v8816
        %9509 = vmatpush.bf16.xpose.msra.mxu0 %v8808
        %9510 = vmatpush.bf16.xpose.msra.mxu0 %v8800
        %9511 = vmatpush.bf16.xpose.msra.mxu0 %v8792
        %9512 = vmatmul.bf16.gmra.mxu0 1065369472
        %v9513 = vpop.f32.mrf.mxu0
        %v9514 = vadd.f32 0.0, %v9513
        %v9515 = vpop.f32.mrf.mxu0
        %9516 = vdwg.mxu0
        %9517 = vmatpush.bf16.xpose.msra.mxu0 %v8849
        %9518 = vmatpush.bf16.xpose.msra.mxu0 %v8841
        %9519 = vmatpush.bf16.xpose.msra.mxu0 %v8833
        %9520 = vmatpush.bf16.xpose.msra.mxu0 %v8825
        %9521 = vmatpush.bf16.xpose.msra.mxu0 %v8817
        %9522 = vmatpush.bf16.xpose.msra.mxu0 %v8809
        %9523 = vmatpush.bf16.xpose.msra.mxu0 %v8801
        %9524 = vmatpush.bf16.xpose.msra.mxu0 %v8793
        %9525 = vmatmul.bf16.gmra.mxu0 1065369472
        %v9526 = vpop.f32.mrf.mxu0
        %v9527 = vadd.f32 %v9514, %v9526
        %v9528 = vpop.f32.mrf.mxu0
        %9529 = vdwg.mxu0
        %9530 = vmatpush.bf16.xpose.msra.mxu0 %v8850
        %9531 = vmatpush.bf16.xpose.msra.mxu0 %v8842
        %9532 = vmatpush.bf16.xpose.msra.mxu0 %v8834
        %9533 = vmatpush.bf16.xpose.msra.mxu0 %v8826
        %9534 = vmatpush.bf16.xpose.msra.mxu0 %v8818
        %9535 = vmatpush.bf16.xpose.msra.mxu0 %v8810
        %9536 = vmatpush.bf16.xpose.msra.mxu0 %v8802
        %9537 = vmatpush.bf16.xpose.msra.mxu0 %v8794
        %9538 = vmatmul.bf16.gmra.mxu0 1065369472
        %v9539 = vpop.f32.mrf.mxu0
        %v9540 = vadd.f32 %v9527, %v9539
        %v9541 = vpop.f32.mrf.mxu0
        %9542 = vdwg.mxu0
        %9543 = vmatpush.bf16.xpose.msra.mxu0 %v8851
        %9544 = vmatpush.bf16.xpose.msra.mxu0 %v8843
        %9545 = vmatpush.bf16.xpose.msra.mxu0 %v8835
        %9546 = vmatpush.bf16.xpose.msra.mxu0 %v8827
        %9547 = vmatpush.bf16.xpose.msra.mxu0 %v8819
        %9548 = vmatpush.bf16.xpose.msra.mxu0 %v8811
        %9549 = vmatpush.bf16.xpose.msra.mxu0 %v8803
        %9550 = vmatpush.bf16.xpose.msra.mxu0 %v8795
        %9551 = vmatmul.bf16.gmra.mxu0 1065369472
        %v9552 = vpop.f32.mrf.mxu0
        %v9553 = vadd.f32 %v9540, %v9552
        %v9554 = vpop.f32.mrf.mxu0
        %9555 = vdwg.mxu0
        %9556 = vmatpush.bf16.xpose.msra.mxu0 %v8852
        %9557 = vmatpush.bf16.xpose.msra.mxu0 %v8844
        %9558 = vmatpush.bf16.xpose.msra.mxu0 %v8836
        %9559 = vmatpush.bf16.xpose.msra.mxu0 %v8828
        %9560 = vmatpush.bf16.xpose.msra.mxu0 %v8820
        %9561 = vmatpush.bf16.xpose.msra.mxu0 %v8812
        %9562 = vmatpush.bf16.xpose.msra.mxu0 %v8804
        %9563 = vmatpush.bf16.xpose.msra.mxu0 %v8796
        %9564 = vmatmul.bf16.gmra.mxu0 1065369472
        %v9565 = vpop.f32.mrf.mxu0
        %v9566 = vadd.f32 %v9553, %v9565
        %v9567 = vpop.f32.mrf.mxu0
        %9568 = vdwg.mxu0
        %9569 = vmatpush.bf16.xpose.msra.mxu0 %v8853
        %9570 = vmatpush.bf16.xpose.msra.mxu0 %v8845
        %9571 = vmatpush.bf16.xpose.msra.mxu0 %v8837
        %9572 = vmatpush.bf16.xpose.msra.mxu0 %v8829
        %9573 = vmatpush.bf16.xpose.msra.mxu0 %v8821
        %9574 = vmatpush.bf16.xpose.msra.mxu0 %v8813
        %9575 = vmatpush.bf16.xpose.msra.mxu0 %v8805
        %9576 = vmatpush.bf16.xpose.msra.mxu0 %v8797
        %9577 = vmatmul.bf16.gmra.mxu0 1065369472
        %v9578 = vpop.f32.mrf.mxu0
        %v9579 = vadd.f32 %v9566, %v9578
        %v9580 = vpop.f32.mrf.mxu0
        %9581 = vdwg.mxu0
        %9582 = vmatpush.bf16.xpose.msra.mxu0 %v8854
        %9583 = vmatpush.bf16.xpose.msra.mxu0 %v8846
        %9584 = vmatpush.bf16.xpose.msra.mxu0 %v8838
        %9585 = vmatpush.bf16.xpose.msra.mxu0 %v8830
        %9586 = vmatpush.bf16.xpose.msra.mxu0 %v8822
        %9587 = vmatpush.bf16.xpose.msra.mxu0 %v8814
        %9588 = vmatpush.bf16.xpose.msra.mxu0 %v8806
        %9589 = vmatpush.bf16.xpose.msra.mxu0 %v8798
        %9590 = vmatmul.bf16.gmra.mxu0 1065369472
        %v9591 = vpop.f32.mrf.mxu0
        %v9592 = vadd.f32 %v9579, %v9591
        %v9593 = vpop.f32.mrf.mxu0
        %9594 = vdwg.mxu0
        %9595 = vmatpush.bf16.xpose.msra.mxu0 %v8855
        %9596 = vmatpush.bf16.xpose.msra.mxu0 %v8847
        %9597 = vmatpush.bf16.xpose.msra.mxu0 %v8839
        %9598 = vmatpush.bf16.xpose.msra.mxu0 %v8831
        %9599 = vmatpush.bf16.xpose.msra.mxu0 %v8823
        %9600 = vmatpush.bf16.xpose.msra.mxu0 %v8815
        %9601 = vmatpush.bf16.xpose.msra.mxu0 %v8807
        %9602 = vmatpush.bf16.xpose.msra.mxu0 %v8799
        %9603 = vmatmul.bf16.gmra.mxu0 1065369472
        %v9604 = vpop.f32.mrf.mxu0
        %v9605 = vadd.f32 %v9592, %v9604
        %v9606 = vpop.f32.mrf.mxu0
        %9607 = vdwg.mxu0
        %9608 = vmatpush.bf16.xpose.msra.mxu0 %v8912
        %9609 = vmatpush.bf16.xpose.msra.mxu0 %v8904
        %9610 = vmatpush.bf16.xpose.msra.mxu0 %v8896
        %9611 = vmatpush.bf16.xpose.msra.mxu0 %v8888
        %9612 = vmatpush.bf16.xpose.msra.mxu0 %v8880
        %9613 = vmatpush.bf16.xpose.msra.mxu0 %v8872
        %9614 = vmatpush.bf16.xpose.msra.mxu0 %v8864
        %9615 = vmatpush.bf16.xpose.msra.mxu0 %v8856
        %9616 = vmatmul.bf16.gmra.mxu0 1065369472
        %v9617 = vpop.f32.mrf.mxu0
        %v9618 = vadd.f32 0.0, %v9617
        %v9619 = vpop.f32.mrf.mxu0
        %9620 = vdwg.mxu0
        %9621 = vmatpush.bf16.xpose.msra.mxu0 %v8913
        %9622 = vmatpush.bf16.xpose.msra.mxu0 %v8905
        %9623 = vmatpush.bf16.xpose.msra.mxu0 %v8897
        %9624 = vmatpush.bf16.xpose.msra.mxu0 %v8889
        %9625 = vmatpush.bf16.xpose.msra.mxu0 %v8881
        %9626 = vmatpush.bf16.xpose.msra.mxu0 %v8873
        %9627 = vmatpush.bf16.xpose.msra.mxu0 %v8865
        %9628 = vmatpush.bf16.xpose.msra.mxu0 %v8857
        %9629 = vmatmul.bf16.gmra.mxu0 1065369472
        %v9630 = vpop.f32.mrf.mxu0
        %v9631 = vadd.f32 %v9618, %v9630
        %v9632 = vpop.f32.mrf.mxu0
        %9633 = vdwg.mxu0
        %9634 = vmatpush.bf16.xpose.msra.mxu0 %v8914
        %9635 = vmatpush.bf16.xpose.msra.mxu0 %v8906
        %9636 = vmatpush.bf16.xpose.msra.mxu0 %v8898
        %9637 = vmatpush.bf16.xpose.msra.mxu0 %v8890
        %9638 = vmatpush.bf16.xpose.msra.mxu0 %v8882
        %9639 = vmatpush.bf16.xpose.msra.mxu0 %v8874
        %9640 = vmatpush.bf16.xpose.msra.mxu0 %v8866
        %9641 = vmatpush.bf16.xpose.msra.mxu0 %v8858
        %9642 = vmatmul.bf16.gmra.mxu0 1065369472
        %v9643 = vpop.f32.mrf.mxu0
        %v9644 = vadd.f32 %v9631, %v9643
        %v9645 = vpop.f32.mrf.mxu0
        %9646 = vdwg.mxu0
        %9647 = vmatpush.bf16.xpose.msra.mxu0 %v8915
        %9648 = vmatpush.bf16.xpose.msra.mxu0 %v8907
        %9649 = vmatpush.bf16.xpose.msra.mxu0 %v8899
        %9650 = vmatpush.bf16.xpose.msra.mxu0 %v8891
        %9651 = vmatpush.bf16.xpose.msra.mxu0 %v8883
        %9652 = vmatpush.bf16.xpose.msra.mxu0 %v8875
        %9653 = vmatpush.bf16.xpose.msra.mxu0 %v8867
        %9654 = vmatpush.bf16.xpose.msra.mxu0 %v8859
        %9655 = vmatmul.bf16.gmra.mxu0 1065369472
        %v9656 = vpop.f32.mrf.mxu0
        %v9657 = vadd.f32 %v9644, %v9656
        %v9658 = vpop.f32.mrf.mxu0
        %9659 = vdwg.mxu0
        %9660 = vmatpush.bf16.xpose.msra.mxu0 %v8916
        %9661 = vmatpush.bf16.xpose.msra.mxu0 %v8908
        %9662 = vmatpush.bf16.xpose.msra.mxu0 %v8900
        %9663 = vmatpush.bf16.xpose.msra.mxu0 %v8892
        %9664 = vmatpush.bf16.xpose.msra.mxu0 %v8884
        %9665 = vmatpush.bf16.xpose.msra.mxu0 %v8876
        %9666 = vmatpush.bf16.xpose.msra.mxu0 %v8868
        %9667 = vmatpush.bf16.xpose.msra.mxu0 %v8860
        %9668 = vmatmul.bf16.gmra.mxu0 1065369472
        %v9669 = vpop.f32.mrf.mxu0
        %v9670 = vadd.f32 %v9657, %v9669
        %v9671 = vpop.f32.mrf.mxu0
        %9672 = vdwg.mxu0
        %9673 = vmatpush.bf16.xpose.msra.mxu0 %v8917
        %9674 = vmatpush.bf16.xpose.msra.mxu0 %v8909
        %9675 = vmatpush.bf16.xpose.msra.mxu0 %v8901
        %9676 = vmatpush.bf16.xpose.msra.mxu0 %v8893
        %9677 = vmatpush.bf16.xpose.msra.mxu0 %v8885
        %9678 = vmatpush.bf16.xpose.msra.mxu0 %v8877
        %9679 = vmatpush.bf16.xpose.msra.mxu0 %v8869
        %9680 = vmatpush.bf16.xpose.msra.mxu0 %v8861
        %9681 = vmatmul.bf16.gmra.mxu0 1065369472
        %v9682 = vpop.f32.mrf.mxu0
        %v9683 = vadd.f32 %v9670, %v9682
        %v9684 = vpop.f32.mrf.mxu0
        %9685 = vdwg.mxu0
        %9686 = vmatpush.bf16.xpose.msra.mxu0 %v8918
        %9687 = vmatpush.bf16.xpose.msra.mxu0 %v8910
        %9688 = vmatpush.bf16.xpose.msra.mxu0 %v8902
        %9689 = vmatpush.bf16.xpose.msra.mxu0 %v8894
        %9690 = vmatpush.bf16.xpose.msra.mxu0 %v8886
        %9691 = vmatpush.bf16.xpose.msra.mxu0 %v8878
        %9692 = vmatpush.bf16.xpose.msra.mxu0 %v8870
        %9693 = vmatpush.bf16.xpose.msra.mxu0 %v8862
        %9694 = vmatmul.bf16.gmra.mxu0 1065369472
        %v9695 = vpop.f32.mrf.mxu0
        %v9696 = vadd.f32 %v9683, %v9695
        %v9697 = vpop.f32.mrf.mxu0
        %9698 = vdwg.mxu0
        %9699 = vmatpush.bf16.xpose.msra.mxu0 %v8919
        %9700 = vmatpush.bf16.xpose.msra.mxu0 %v8911
        %9701 = vmatpush.bf16.xpose.msra.mxu0 %v8903
        %9702 = vmatpush.bf16.xpose.msra.mxu0 %v8895
        %9703 = vmatpush.bf16.xpose.msra.mxu0 %v8887
        %9704 = vmatpush.bf16.xpose.msra.mxu0 %v8879
        %9705 = vmatpush.bf16.xpose.msra.mxu0 %v8871
        %9706 = vmatpush.bf16.xpose.msra.mxu0 %v8863
        %9707 = vmatmul.bf16.gmra.mxu0 1065369472
        %v9708 = vpop.f32.mrf.mxu0
        %v9709 = vadd.f32 %v9696, %v9708
        %v9710 = vpop.f32.mrf.mxu0
        %9711 = vdwg.mxu0
        %9712 = vmatpush.bf16.xpose.msra.mxu0 %v8976
        %9713 = vmatpush.bf16.xpose.msra.mxu0 %v8968
        %9714 = vmatpush.bf16.xpose.msra.mxu0 %v8960
        %9715 = vmatpush.bf16.xpose.msra.mxu0 %v8952
        %9716 = vmatpush.bf16.xpose.msra.mxu0 %v8944
        %9717 = vmatpush.bf16.xpose.msra.mxu0 %v8936
        %9718 = vmatpush.bf16.xpose.msra.mxu0 %v8928
        %9719 = vmatpush.bf16.xpose.msra.mxu0 %v8920
        %9720 = vmatmul.bf16.gmra.mxu0 1065369472
        %v9721 = vpop.f32.mrf.mxu0
        %v9722 = vadd.f32 0.0, %v9721
        %v9723 = vpop.f32.mrf.mxu0
        %9724 = vdwg.mxu0
        %9725 = vmatpush.bf16.xpose.msra.mxu0 %v8977
        %9726 = vmatpush.bf16.xpose.msra.mxu0 %v8969
        %9727 = vmatpush.bf16.xpose.msra.mxu0 %v8961
        %9728 = vmatpush.bf16.xpose.msra.mxu0 %v8953
        %9729 = vmatpush.bf16.xpose.msra.mxu0 %v8945
        %9730 = vmatpush.bf16.xpose.msra.mxu0 %v8937
        %9731 = vmatpush.bf16.xpose.msra.mxu0 %v8929
        %9732 = vmatpush.bf16.xpose.msra.mxu0 %v8921
        %9733 = vmatmul.bf16.gmra.mxu0 1065369472
        %v9734 = vpop.f32.mrf.mxu0
        %v9735 = vadd.f32 %v9722, %v9734
        %v9736 = vpop.f32.mrf.mxu0
        %9737 = vdwg.mxu0
        %9738 = vmatpush.bf16.xpose.msra.mxu0 %v8978
        %9739 = vmatpush.bf16.xpose.msra.mxu0 %v8970
        %9740 = vmatpush.bf16.xpose.msra.mxu0 %v8962
        %9741 = vmatpush.bf16.xpose.msra.mxu0 %v8954
        %9742 = vmatpush.bf16.xpose.msra.mxu0 %v8946
        %9743 = vmatpush.bf16.xpose.msra.mxu0 %v8938
        %9744 = vmatpush.bf16.xpose.msra.mxu0 %v8930
        %9745 = vmatpush.bf16.xpose.msra.mxu0 %v8922
        %9746 = vmatmul.bf16.gmra.mxu0 1065369472
        %v9747 = vpop.f32.mrf.mxu0
        %v9748 = vadd.f32 %v9735, %v9747
        %v9749 = vpop.f32.mrf.mxu0
        %9750 = vdwg.mxu0
        %9751 = vmatpush.bf16.xpose.msra.mxu0 %v8979
        %9752 = vmatpush.bf16.xpose.msra.mxu0 %v8971
        %9753 = vmatpush.bf16.xpose.msra.mxu0 %v8963
        %9754 = vmatpush.bf16.xpose.msra.mxu0 %v8955
        %9755 = vmatpush.bf16.xpose.msra.mxu0 %v8947
        %9756 = vmatpush.bf16.xpose.msra.mxu0 %v8939
        %9757 = vmatpush.bf16.xpose.msra.mxu0 %v8931
        %9758 = vmatpush.bf16.xpose.msra.mxu0 %v8923
        %9759 = vmatmul.bf16.gmra.mxu0 1065369472
        %v9760 = vpop.f32.mrf.mxu0
        %v9761 = vadd.f32 %v9748, %v9760
        %v9762 = vpop.f32.mrf.mxu0
        %9763 = vdwg.mxu0
        %9764 = vmatpush.bf16.xpose.msra.mxu0 %v8980
        %9765 = vmatpush.bf16.xpose.msra.mxu0 %v8972
        %9766 = vmatpush.bf16.xpose.msra.mxu0 %v8964
        %9767 = vmatpush.bf16.xpose.msra.mxu0 %v8956
        %9768 = vmatpush.bf16.xpose.msra.mxu0 %v8948
        %9769 = vmatpush.bf16.xpose.msra.mxu0 %v8940
        %9770 = vmatpush.bf16.xpose.msra.mxu0 %v8932
        %9771 = vmatpush.bf16.xpose.msra.mxu0 %v8924
        %9772 = vmatmul.bf16.gmra.mxu0 1065369472
        %v9773 = vpop.f32.mrf.mxu0
        %v9774 = vadd.f32 %v9761, %v9773
        %v9775 = vpop.f32.mrf.mxu0
        %9776 = vdwg.mxu0
        %9777 = vmatpush.bf16.xpose.msra.mxu0 %v8981
        %9778 = vmatpush.bf16.xpose.msra.mxu0 %v8973
        %9779 = vmatpush.bf16.xpose.msra.mxu0 %v8965
        %9780 = vmatpush.bf16.xpose.msra.mxu0 %v8957
        %9781 = vmatpush.bf16.xpose.msra.mxu0 %v8949
        %9782 = vmatpush.bf16.xpose.msra.mxu0 %v8941
        %9783 = vmatpush.bf16.xpose.msra.mxu0 %v8933
        %9784 = vmatpush.bf16.xpose.msra.mxu0 %v8925
        %9785 = vmatmul.bf16.gmra.mxu0 1065369472
        %v9786 = vpop.f32.mrf.mxu0
        %v9787 = vadd.f32 %v9774, %v9786
        %v9788 = vpop.f32.mrf.mxu0
        %9789 = vdwg.mxu0
        %9790 = vmatpush.bf16.xpose.msra.mxu0 %v8982
        %9791 = vmatpush.bf16.xpose.msra.mxu0 %v8974
        %9792 = vmatpush.bf16.xpose.msra.mxu0 %v8966
        %9793 = vmatpush.bf16.xpose.msra.mxu0 %v8958
        %9794 = vmatpush.bf16.xpose.msra.mxu0 %v8950
        %9795 = vmatpush.bf16.xpose.msra.mxu0 %v8942
        %9796 = vmatpush.bf16.xpose.msra.mxu0 %v8934
        %9797 = vmatpush.bf16.xpose.msra.mxu0 %v8926
        %9798 = vmatmul.bf16.gmra.mxu0 1065369472
        %v9799 = vpop.f32.mrf.mxu0
        %v9800 = vadd.f32 %v9787, %v9799
        %v9801 = vpop.f32.mrf.mxu0
        %9802 = vdwg.mxu0
        %9803 = vmatpush.bf16.xpose.msra.mxu0 %v8983
        %9804 = vmatpush.bf16.xpose.msra.mxu0 %v8975
        %9805 = vmatpush.bf16.xpose.msra.mxu0 %v8967
        %9806 = vmatpush.bf16.xpose.msra.mxu0 %v8959
        %9807 = vmatpush.bf16.xpose.msra.mxu0 %v8951
        %9808 = vmatpush.bf16.xpose.msra.mxu0 %v8943
        %9809 = vmatpush.bf16.xpose.msra.mxu0 %v8935
        %9810 = vmatpush.bf16.xpose.msra.mxu0 %v8927
        %9811 = vmatmul.bf16.gmra.mxu0 1065369472
        %v9812 = vpop.f32.mrf.mxu0
        %v9813 = vadd.f32 %v9800, %v9812
        %v9814 = vpop.f32.mrf.mxu0
        %9815 = vdwg.mxu0
        %v9816 = vld [vmem:[%s378] sm:$0xff]
        %v9817 = vld [vmem:[%s378 + $0x8] sm:$0xff]
        %v9818 = vld [vmem:[%s378 + $0x10] sm:$0xff]
        %v9819 = vld [vmem:[%s378 + $0x18] sm:$0xff]
        %v9820 = vld [vmem:[%s378 + $0x20] sm:$0xff]
        %v9821 = vld [vmem:[%s378 + $0x28] sm:$0xff]
        %v9822 = vld [vmem:[%s378 + $0x30] sm:$0xff]
        %v9823 = vld [vmem:[%s378 + $0x38] sm:$0xff]
        %v9832 = vunpack.c.l.b16 %v9816
        %v9833 = vunpack.c.h.b16 %v9816
        %v9834 = vunpack.c.l.b16 %v9817
        %v9835 = vunpack.c.h.b16 %v9817
        %v9836 = vunpack.c.l.b16 %v9818
        %v9837 = vunpack.c.h.b16 %v9818
        %v9838 = vunpack.c.l.b16 %v9819
        %v9839 = vunpack.c.h.b16 %v9819
        %v9840 = vunpack.c.l.b16 %v9820
        %v9841 = vunpack.c.h.b16 %v9820
        %v9842 = vunpack.c.l.b16 %v9821
        %v9843 = vunpack.c.h.b16 %v9821
        %v9844 = vunpack.c.l.b16 %v9822
        %v9845 = vunpack.c.h.b16 %v9822
        %v9846 = vunpack.c.l.b16 %v9823
        %v9847 = vunpack.c.h.b16 %v9823
        %v9848 = vpack.c.b16 %v9840, %v9832
        %v9849 = vpack.c.b16 %v9841, %v9833
        %v9850 = vpack.c.b16 %v9842, %v9834
        %v9851 = vpack.c.b16 %v9843, %v9835
        %v9852 = vpack.c.b16 %v9844, %v9836
        %v9853 = vpack.c.b16 %v9845, %v9837
        %v9854 = vpack.c.b16 %v9846, %v9838
        %v9855 = vpack.c.b16 %v9847, %v9839
        %9864 = vmatpush.bf16.xpose.msra.mxu0 %v8528
        %9865 = vmatpush.bf16.xpose.msra.mxu0 %v8520
        %9866 = vmatpush.bf16.xpose.msra.mxu0 %v8512
        %9867 = vmatpush.bf16.xpose.msra.mxu0 %v8504
        %9868 = vmatpush.bf16.xpose.msra.mxu0 %v8496
        %9869 = vmatpush.bf16.xpose.msra.mxu0 %v8488
        %9870 = vmatpush.bf16.xpose.msra.mxu0 %v8480
        %9871 = vmatpush.bf16.xpose.msra.mxu0 %v8472
        %9872 = vmatmul.bf16.gmra.mxu0 %v9848
        %v9873 = vpop.f32.mrf.mxu0
        %v9874 = vadd.f32 0.0, %v9873
        %v9875 = vpop.f32.mrf.mxu0
        %v9876 = vadd.f32 0.0, %v9875
        %9877 = vdwg.mxu0
        %9878 = vmatpush.bf16.xpose.msra.mxu0 %v8529
        %9879 = vmatpush.bf16.xpose.msra.mxu0 %v8521
        %9880 = vmatpush.bf16.xpose.msra.mxu0 %v8513
        %9881 = vmatpush.bf16.xpose.msra.mxu0 %v8505
        %9882 = vmatpush.bf16.xpose.msra.mxu0 %v8497
        %9883 = vmatpush.bf16.xpose.msra.mxu0 %v8489
        %9884 = vmatpush.bf16.xpose.msra.mxu0 %v8481
        %9885 = vmatpush.bf16.xpose.msra.mxu0 %v8473
        %9886 = vmatmul.bf16.gmra.mxu0 %v9849
        %v9887 = vpop.f32.mrf.mxu0
        %v9888 = vadd.f32 %v9874, %v9887
        %v9889 = vpop.f32.mrf.mxu0
        %v9890 = vadd.f32 %v9876, %v9889
        %9891 = vdwg.mxu0
        %9892 = vmatpush.bf16.xpose.msra.mxu0 %v8530
        %9893 = vmatpush.bf16.xpose.msra.mxu0 %v8522
        %9894 = vmatpush.bf16.xpose.msra.mxu0 %v8514
        %9895 = vmatpush.bf16.xpose.msra.mxu0 %v8506
        %9896 = vmatpush.bf16.xpose.msra.mxu0 %v8498
        %9897 = vmatpush.bf16.xpose.msra.mxu0 %v8490
        %9898 = vmatpush.bf16.xpose.msra.mxu0 %v8482
        %9899 = vmatpush.bf16.xpose.msra.mxu0 %v8474
        %9900 = vmatmul.bf16.gmra.mxu0 %v9850
        %v9901 = vpop.f32.mrf.mxu0
        %v9902 = vadd.f32 %v9888, %v9901
        %v9903 = vpop.f32.mrf.mxu0
        %v9904 = vadd.f32 %v9890, %v9903
        %9905 = vdwg.mxu0
        %9906 = vmatpush.bf16.xpose.msra.mxu0 %v8531
        %9907 = vmatpush.bf16.xpose.msra.mxu0 %v8523
        %9908 = vmatpush.bf16.xpose.msra.mxu0 %v8515
        %9909 = vmatpush.bf16.xpose.msra.mxu0 %v8507
        %9910 = vmatpush.bf16.xpose.msra.mxu0 %v8499
        %9911 = vmatpush.bf16.xpose.msra.mxu0 %v8491
        %9912 = vmatpush.bf16.xpose.msra.mxu0 %v8483
        %9913 = vmatpush.bf16.xpose.msra.mxu0 %v8475
        %9914 = vmatmul.bf16.gmra.mxu0 %v9851
        %v9915 = vpop.f32.mrf.mxu0
        %v9916 = vadd.f32 %v9902, %v9915
        %v9917 = vpop.f32.mrf.mxu0
        %v9918 = vadd.f32 %v9904, %v9917
        %9919 = vdwg.mxu0
        %9920 = vmatpush.bf16.xpose.msra.mxu0 %v8532
        %9921 = vmatpush.bf16.xpose.msra.mxu0 %v8524
        %9922 = vmatpush.bf16.xpose.msra.mxu0 %v8516
        %9923 = vmatpush.bf16.xpose.msra.mxu0 %v8508
        %9924 = vmatpush.bf16.xpose.msra.mxu0 %v8500
        %9925 = vmatpush.bf16.xpose.msra.mxu0 %v8492
        %9926 = vmatpush.bf16.xpose.msra.mxu0 %v8484
        %9927 = vmatpush.bf16.xpose.msra.mxu0 %v8476
        %9928 = vmatmul.bf16.gmra.mxu0 %v9852
        %v9929 = vpop.f32.mrf.mxu0
        %v9930 = vadd.f32 %v9916, %v9929
        %v9931 = vpop.f32.mrf.mxu0
        %v9932 = vadd.f32 %v9918, %v9931
        %9933 = vdwg.mxu0
        %9934 = vmatpush.bf16.xpose.msra.mxu0 %v8533
        %9935 = vmatpush.bf16.xpose.msra.mxu0 %v8525
        %9936 = vmatpush.bf16.xpose.msra.mxu0 %v8517
        %9937 = vmatpush.bf16.xpose.msra.mxu0 %v8509
        %9938 = vmatpush.bf16.xpose.msra.mxu0 %v8501
        %9939 = vmatpush.bf16.xpose.msra.mxu0 %v8493
        %9940 = vmatpush.bf16.xpose.msra.mxu0 %v8485
        %9941 = vmatpush.bf16.xpose.msra.mxu0 %v8477
        %9942 = vmatmul.bf16.gmra.mxu0 %v9853
        %v9943 = vpop.f32.mrf.mxu0
        %v9944 = vadd.f32 %v9930, %v9943
        %v9945 = vpop.f32.mrf.mxu0
        %v9946 = vadd.f32 %v9932, %v9945
        %9947 = vdwg.mxu0
        %9948 = vmatpush.bf16.xpose.msra.mxu0 %v8534
        %9949 = vmatpush.bf16.xpose.msra.mxu0 %v8526
        %9950 = vmatpush.bf16.xpose.msra.mxu0 %v8518
        %9951 = vmatpush.bf16.xpose.msra.mxu0 %v8510
        %9952 = vmatpush.bf16.xpose.msra.mxu0 %v8502
        %9953 = vmatpush.bf16.xpose.msra.mxu0 %v8494
        %9954 = vmatpush.bf16.xpose.msra.mxu0 %v8486
        %9955 = vmatpush.bf16.xpose.msra.mxu0 %v8478
        %9956 = vmatmul.bf16.gmra.mxu0 %v9854
        %v9957 = vpop.f32.mrf.mxu0
        %v9958 = vadd.f32 %v9944, %v9957
        %v9959 = vpop.f32.mrf.mxu0
        %v9960 = vadd.f32 %v9946, %v9959
        %9961 = vdwg.mxu0
        %9962 = vmatpush.bf16.xpose.msra.mxu0 %v8535
        %9963 = vmatpush.bf16.xpose.msra.mxu0 %v8527
        %9964 = vmatpush.bf16.xpose.msra.mxu0 %v8519
        %9965 = vmatpush.bf16.xpose.msra.mxu0 %v8511
        %9966 = vmatpush.bf16.xpose.msra.mxu0 %v8503
        %9967 = vmatpush.bf16.xpose.msra.mxu0 %v8495
        %9968 = vmatpush.bf16.xpose.msra.mxu0 %v8487
        %9969 = vmatpush.bf16.xpose.msra.mxu0 %v8479
        %9970 = vmatmul.bf16.gmra.mxu0 %v9855
        %v9971 = vpop.f32.mrf.mxu0
        %v9972 = vadd.f32 %v9958, %v9971
        %v9973 = vpop.f32.mrf.mxu0
        %v9974 = vadd.f32 %v9960, %v9973
        %9975 = vdwg.mxu0
        %9976 = vmatpush.bf16.xpose.msra.mxu0 %v8592
        %9977 = vmatpush.bf16.xpose.msra.mxu0 %v8584
        %9978 = vmatpush.bf16.xpose.msra.mxu0 %v8576
        %9979 = vmatpush.bf16.xpose.msra.mxu0 %v8568
        %9980 = vmatpush.bf16.xpose.msra.mxu0 %v8560
        %9981 = vmatpush.bf16.xpose.msra.mxu0 %v8552
        %9982 = vmatpush.bf16.xpose.msra.mxu0 %v8544
        %9983 = vmatpush.bf16.xpose.msra.mxu0 %v8536
        %9984 = vmatmul.bf16.gmra.mxu0 %v9848
        %v9985 = vpop.f32.mrf.mxu0
        %v9986 = vadd.f32 0.0, %v9985
        %v9987 = vpop.f32.mrf.mxu0
        %v9988 = vadd.f32 0.0, %v9987
        %9989 = vdwg.mxu0
        %9990 = vmatpush.bf16.xpose.msra.mxu0 %v8593
        %9991 = vmatpush.bf16.xpose.msra.mxu0 %v8585
        %9992 = vmatpush.bf16.xpose.msra.mxu0 %v8577
        %9993 = vmatpush.bf16.xpose.msra.mxu0 %v8569
        %9994 = vmatpush.bf16.xpose.msra.mxu0 %v8561
        %9995 = vmatpush.bf16.xpose.msra.mxu0 %v8553
        %9996 = vmatpush.bf16.xpose.msra.mxu0 %v8545
        %9997 = vmatpush.bf16.xpose.msra.mxu0 %v8537
        %9998 = vmatmul.bf16.gmra.mxu0 %v9849
        %v9999 = vpop.f32.mrf.mxu0
        %v10000 = vadd.f32 %v9986, %v9999
        %v10001 = vpop.f32.mrf.mxu0
        %v10002 = vadd.f32 %v9988, %v10001
        %10003 = vdwg.mxu0
        %10004 = vmatpush.bf16.xpose.msra.mxu0 %v8594
        %10005 = vmatpush.bf16.xpose.msra.mxu0 %v8586
        %10006 = vmatpush.bf16.xpose.msra.mxu0 %v8578
        %10007 = vmatpush.bf16.xpose.msra.mxu0 %v8570
        %10008 = vmatpush.bf16.xpose.msra.mxu0 %v8562
        %10009 = vmatpush.bf16.xpose.msra.mxu0 %v8554
        %10010 = vmatpush.bf16.xpose.msra.mxu0 %v8546
        %10011 = vmatpush.bf16.xpose.msra.mxu0 %v8538
        %10012 = vmatmul.bf16.gmra.mxu0 %v9850
        %v10013 = vpop.f32.mrf.mxu0
        %v10014 = vadd.f32 %v10000, %v10013
        %v10015 = vpop.f32.mrf.mxu0
        %v10016 = vadd.f32 %v10002, %v10015
        %10017 = vdwg.mxu0
        %10018 = vmatpush.bf16.xpose.msra.mxu0 %v8595
        %10019 = vmatpush.bf16.xpose.msra.mxu0 %v8587
        %10020 = vmatpush.bf16.xpose.msra.mxu0 %v8579
        %10021 = vmatpush.bf16.xpose.msra.mxu0 %v8571
        %10022 = vmatpush.bf16.xpose.msra.mxu0 %v8563
        %10023 = vmatpush.bf16.xpose.msra.mxu0 %v8555
        %10024 = vmatpush.bf16.xpose.msra.mxu0 %v8547
        %10025 = vmatpush.bf16.xpose.msra.mxu0 %v8539
        %10026 = vmatmul.bf16.gmra.mxu0 %v9851
        %v10027 = vpop.f32.mrf.mxu0
        %v10028 = vadd.f32 %v10014, %v10027
        %v10029 = vpop.f32.mrf.mxu0
        %v10030 = vadd.f32 %v10016, %v10029
        %10031 = vdwg.mxu0
        %10032 = vmatpush.bf16.xpose.msra.mxu0 %v8596
        %10033 = vmatpush.bf16.xpose.msra.mxu0 %v8588
        %10034 = vmatpush.bf16.xpose.msra.mxu0 %v8580
        %10035 = vmatpush.bf16.xpose.msra.mxu0 %v8572
        %10036 = vmatpush.bf16.xpose.msra.mxu0 %v8564
        %10037 = vmatpush.bf16.xpose.msra.mxu0 %v8556
        %10038 = vmatpush.bf16.xpose.msra.mxu0 %v8548
        %10039 = vmatpush.bf16.xpose.msra.mxu0 %v8540
        %10040 = vmatmul.bf16.gmra.mxu0 %v9852
        %v10041 = vpop.f32.mrf.mxu0
        %v10042 = vadd.f32 %v10028, %v10041
        %v10043 = vpop.f32.mrf.mxu0
        %v10044 = vadd.f32 %v10030, %v10043
        %10045 = vdwg.mxu0
        %10046 = vmatpush.bf16.xpose.msra.mxu0 %v8597
        %10047 = vmatpush.bf16.xpose.msra.mxu0 %v8589
        %10048 = vmatpush.bf16.xpose.msra.mxu0 %v8581
        %10049 = vmatpush.bf16.xpose.msra.mxu0 %v8573
        %10050 = vmatpush.bf16.xpose.msra.mxu0 %v8565
        %10051 = vmatpush.bf16.xpose.msra.mxu0 %v8557
        %10052 = vmatpush.bf16.xpose.msra.mxu0 %v8549
        %10053 = vmatpush.bf16.xpose.msra.mxu0 %v8541
        %10054 = vmatmul.bf16.gmra.mxu0 %v9853
        %v10055 = vpop.f32.mrf.mxu0
        %v10056 = vadd.f32 %v10042, %v10055
        %v10057 = vpop.f32.mrf.mxu0
        %v10058 = vadd.f32 %v10044, %v10057
        %10059 = vdwg.mxu0
        %10060 = vmatpush.bf16.xpose.msra.mxu0 %v8598
        %10061 = vmatpush.bf16.xpose.msra.mxu0 %v8590
        %10062 = vmatpush.bf16.xpose.msra.mxu0 %v8582
        %10063 = vmatpush.bf16.xpose.msra.mxu0 %v8574
        %10064 = vmatpush.bf16.xpose.msra.mxu0 %v8566
        %10065 = vmatpush.bf16.xpose.msra.mxu0 %v8558
        %10066 = vmatpush.bf16.xpose.msra.mxu0 %v8550
        %10067 = vmatpush.bf16.xpose.msra.mxu0 %v8542
        %10068 = vmatmul.bf16.gmra.mxu0 %v9854
        %v10069 = vpop.f32.mrf.mxu0
        %v10070 = vadd.f32 %v10056, %v10069
        %v10071 = vpop.f32.mrf.mxu0
        %v10072 = vadd.f32 %v10058, %v10071
        %10073 = vdwg.mxu0
        %10074 = vmatpush.bf16.xpose.msra.mxu0 %v8599
        %10075 = vmatpush.bf16.xpose.msra.mxu0 %v8591
        %10076 = vmatpush.bf16.xpose.msra.mxu0 %v8583
        %10077 = vmatpush.bf16.xpose.msra.mxu0 %v8575
        %10078 = vmatpush.bf16.xpose.msra.mxu0 %v8567
        %10079 = vmatpush.bf16.xpose.msra.mxu0 %v8559
        %10080 = vmatpush.bf16.xpose.msra.mxu0 %v8551
        %10081 = vmatpush.bf16.xpose.msra.mxu0 %v8543
        %10082 = vmatmul.bf16.gmra.mxu0 %v9855
        %v10083 = vpop.f32.mrf.mxu0
        %v10084 = vadd.f32 %v10070, %v10083
        %v10085 = vpop.f32.mrf.mxu0
        %v10086 = vadd.f32 %v10072, %v10085
        %10087 = vdwg.mxu0
        %10088 = vmatpush.bf16.xpose.msra.mxu0 %v8656
        %10089 = vmatpush.bf16.xpose.msra.mxu0 %v8648
        %10090 = vmatpush.bf16.xpose.msra.mxu0 %v8640
        %10091 = vmatpush.bf16.xpose.msra.mxu0 %v8632
        %10092 = vmatpush.bf16.xpose.msra.mxu0 %v8624
        %10093 = vmatpush.bf16.xpose.msra.mxu0 %v8616
        %10094 = vmatpush.bf16.xpose.msra.mxu0 %v8608
        %10095 = vmatpush.bf16.xpose.msra.mxu0 %v8600
        %10096 = vmatmul.bf16.gmra.mxu0 %v9848
        %v10097 = vpop.f32.mrf.mxu0
        %v10098 = vadd.f32 0.0, %v10097
        %v10099 = vpop.f32.mrf.mxu0
        %v10100 = vadd.f32 0.0, %v10099
        %10101 = vdwg.mxu0
        %10102 = vmatpush.bf16.xpose.msra.mxu0 %v8657
        %10103 = vmatpush.bf16.xpose.msra.mxu0 %v8649
        %10104 = vmatpush.bf16.xpose.msra.mxu0 %v8641
        %10105 = vmatpush.bf16.xpose.msra.mxu0 %v8633
        %10106 = vmatpush.bf16.xpose.msra.mxu0 %v8625
        %10107 = vmatpush.bf16.xpose.msra.mxu0 %v8617
        %10108 = vmatpush.bf16.xpose.msra.mxu0 %v8609
        %10109 = vmatpush.bf16.xpose.msra.mxu0 %v8601
        %10110 = vmatmul.bf16.gmra.mxu0 %v9849
        %v10111 = vpop.f32.mrf.mxu0
        %v10112 = vadd.f32 %v10098, %v10111
        %v10113 = vpop.f32.mrf.mxu0
        %v10114 = vadd.f32 %v10100, %v10113
        %10115 = vdwg.mxu0
        %10116 = vmatpush.bf16.xpose.msra.mxu0 %v8658
        %10117 = vmatpush.bf16.xpose.msra.mxu0 %v8650
        %10118 = vmatpush.bf16.xpose.msra.mxu0 %v8642
        %10119 = vmatpush.bf16.xpose.msra.mxu0 %v8634
        %10120 = vmatpush.bf16.xpose.msra.mxu0 %v8626
        %10121 = vmatpush.bf16.xpose.msra.mxu0 %v8618
        %10122 = vmatpush.bf16.xpose.msra.mxu0 %v8610
        %10123 = vmatpush.bf16.xpose.msra.mxu0 %v8602
        %10124 = vmatmul.bf16.gmra.mxu0 %v9850
        %v10125 = vpop.f32.mrf.mxu0
        %v10126 = vadd.f32 %v10112, %v10125
        %v10127 = vpop.f32.mrf.mxu0
        %v10128 = vadd.f32 %v10114, %v10127
        %10129 = vdwg.mxu0
        %10130 = vmatpush.bf16.xpose.msra.mxu0 %v8659
        %10131 = vmatpush.bf16.xpose.msra.mxu0 %v8651
        %10132 = vmatpush.bf16.xpose.msra.mxu0 %v8643
        %10133 = vmatpush.bf16.xpose.msra.mxu0 %v8635
        %10134 = vmatpush.bf16.xpose.msra.mxu0 %v8627
        %10135 = vmatpush.bf16.xpose.msra.mxu0 %v8619
        %10136 = vmatpush.bf16.xpose.msra.mxu0 %v8611
        %10137 = vmatpush.bf16.xpose.msra.mxu0 %v8603
        %10138 = vmatmul.bf16.gmra.mxu0 %v9851
        %v10139 = vpop.f32.mrf.mxu0
        %v10140 = vadd.f32 %v10126, %v10139
        %v10141 = vpop.f32.mrf.mxu0
        %v10142 = vadd.f32 %v10128, %v10141
        %10143 = vdwg.mxu0
        %10144 = vmatpush.bf16.xpose.msra.mxu0 %v8660
        %10145 = vmatpush.bf16.xpose.msra.mxu0 %v8652
        %10146 = vmatpush.bf16.xpose.msra.mxu0 %v8644
        %10147 = vmatpush.bf16.xpose.msra.mxu0 %v8636
        %10148 = vmatpush.bf16.xpose.msra.mxu0 %v8628
        %10149 = vmatpush.bf16.xpose.msra.mxu0 %v8620
        %10150 = vmatpush.bf16.xpose.msra.mxu0 %v8612
        %10151 = vmatpush.bf16.xpose.msra.mxu0 %v8604
        %10152 = vmatmul.bf16.gmra.mxu0 %v9852
        %v10153 = vpop.f32.mrf.mxu0
        %v10154 = vadd.f32 %v10140, %v10153
        %v10155 = vpop.f32.mrf.mxu0
        %v10156 = vadd.f32 %v10142, %v10155
        %10157 = vdwg.mxu0
        %10158 = vmatpush.bf16.xpose.msra.mxu0 %v8661
        %10159 = vmatpush.bf16.xpose.msra.mxu0 %v8653
        %10160 = vmatpush.bf16.xpose.msra.mxu0 %v8645
        %10161 = vmatpush.bf16.xpose.msra.mxu0 %v8637
        %10162 = vmatpush.bf16.xpose.msra.mxu0 %v8629
        %10163 = vmatpush.bf16.xpose.msra.mxu0 %v8621
        %10164 = vmatpush.bf16.xpose.msra.mxu0 %v8613
        %10165 = vmatpush.bf16.xpose.msra.mxu0 %v8605
        %10166 = vmatmul.bf16.gmra.mxu0 %v9853
        %v10167 = vpop.f32.mrf.mxu0
        %v10168 = vadd.f32 %v10154, %v10167
        %v10169 = vpop.f32.mrf.mxu0
        %v10170 = vadd.f32 %v10156, %v10169
        %10171 = vdwg.mxu0
        %10172 = vmatpush.bf16.xpose.msra.mxu0 %v8662
        %10173 = vmatpush.bf16.xpose.msra.mxu0 %v8654
        %10174 = vmatpush.bf16.xpose.msra.mxu0 %v8646
        %10175 = vmatpush.bf16.xpose.msra.mxu0 %v8638
        %10176 = vmatpush.bf16.xpose.msra.mxu0 %v8630
        %10177 = vmatpush.bf16.xpose.msra.mxu0 %v8622
        %10178 = vmatpush.bf16.xpose.msra.mxu0 %v8614
        %10179 = vmatpush.bf16.xpose.msra.mxu0 %v8606
        %10180 = vmatmul.bf16.gmra.mxu0 %v9854
        %v10181 = vpop.f32.mrf.mxu0
        %v10182 = vadd.f32 %v10168, %v10181
        %v10183 = vpop.f32.mrf.mxu0
        %v10184 = vadd.f32 %v10170, %v10183
        %10185 = vdwg.mxu0
        %10186 = vmatpush.bf16.xpose.msra.mxu0 %v8663
        %10187 = vmatpush.bf16.xpose.msra.mxu0 %v8655
        %10188 = vmatpush.bf16.xpose.msra.mxu0 %v8647
        %10189 = vmatpush.bf16.xpose.msra.mxu0 %v8639
        %10190 = vmatpush.bf16.xpose.msra.mxu0 %v8631
        %10191 = vmatpush.bf16.xpose.msra.mxu0 %v8623
        %10192 = vmatpush.bf16.xpose.msra.mxu0 %v8615
        %10193 = vmatpush.bf16.xpose.msra.mxu0 %v8607
        %10194 = vmatmul.bf16.gmra.mxu0 %v9855
        %v10195 = vpop.f32.mrf.mxu0
        %v10196 = vadd.f32 %v10182, %v10195
        %v10197 = vpop.f32.mrf.mxu0
        %v10198 = vadd.f32 %v10184, %v10197
        %10199 = vdwg.mxu0
        %10200 = vmatpush.bf16.xpose.msra.mxu0 %v8720
        %10201 = vmatpush.bf16.xpose.msra.mxu0 %v8712
        %10202 = vmatpush.bf16.xpose.msra.mxu0 %v8704
        %10203 = vmatpush.bf16.xpose.msra.mxu0 %v8696
        %10204 = vmatpush.bf16.xpose.msra.mxu0 %v8688
        %10205 = vmatpush.bf16.xpose.msra.mxu0 %v8680
        %10206 = vmatpush.bf16.xpose.msra.mxu0 %v8672
        %10207 = vmatpush.bf16.xpose.msra.mxu0 %v8664
        %10208 = vmatmul.bf16.gmra.mxu0 %v9848
        %v10209 = vpop.f32.mrf.mxu0
        %v10210 = vadd.f32 0.0, %v10209
        %v10211 = vpop.f32.mrf.mxu0
        %v10212 = vadd.f32 0.0, %v10211
        %10213 = vdwg.mxu0
        %10214 = vmatpush.bf16.xpose.msra.mxu0 %v8721
        %10215 = vmatpush.bf16.xpose.msra.mxu0 %v8713
        %10216 = vmatpush.bf16.xpose.msra.mxu0 %v8705
        %10217 = vmatpush.bf16.xpose.msra.mxu0 %v8697
        %10218 = vmatpush.bf16.xpose.msra.mxu0 %v8689
        %10219 = vmatpush.bf16.xpose.msra.mxu0 %v8681
        %10220 = vmatpush.bf16.xpose.msra.mxu0 %v8673
        %10221 = vmatpush.bf16.xpose.msra.mxu0 %v8665
        %10222 = vmatmul.bf16.gmra.mxu0 %v9849
        %v10223 = vpop.f32.mrf.mxu0
        %v10224 = vadd.f32 %v10210, %v10223
        %v10225 = vpop.f32.mrf.mxu0
        %v10226 = vadd.f32 %v10212, %v10225
        %10227 = vdwg.mxu0
        %10228 = vmatpush.bf16.xpose.msra.mxu0 %v8722
        %10229 = vmatpush.bf16.xpose.msra.mxu0 %v8714
        %10230 = vmatpush.bf16.xpose.msra.mxu0 %v8706
        %10231 = vmatpush.bf16.xpose.msra.mxu0 %v8698
        %10232 = vmatpush.bf16.xpose.msra.mxu0 %v8690
        %10233 = vmatpush.bf16.xpose.msra.mxu0 %v8682
        %10234 = vmatpush.bf16.xpose.msra.mxu0 %v8674
        %10235 = vmatpush.bf16.xpose.msra.mxu0 %v8666
        %10236 = vmatmul.bf16.gmra.mxu0 %v9850
        %v10237 = vpop.f32.mrf.mxu0
        %v10238 = vadd.f32 %v10224, %v10237
        %v10239 = vpop.f32.mrf.mxu0
        %v10240 = vadd.f32 %v10226, %v10239
        %10241 = vdwg.mxu0
        %10242 = vmatpush.bf16.xpose.msra.mxu0 %v8723
        %10243 = vmatpush.bf16.xpose.msra.mxu0 %v8715
        %10244 = vmatpush.bf16.xpose.msra.mxu0 %v8707
        %10245 = vmatpush.bf16.xpose.msra.mxu0 %v8699
        %10246 = vmatpush.bf16.xpose.msra.mxu0 %v8691
        %10247 = vmatpush.bf16.xpose.msra.mxu0 %v8683
        %10248 = vmatpush.bf16.xpose.msra.mxu0 %v8675
        %10249 = vmatpush.bf16.xpose.msra.mxu0 %v8667
        %10250 = vmatmul.bf16.gmra.mxu0 %v9851
        %v10251 = vpop.f32.mrf.mxu0
        %v10252 = vadd.f32 %v10238, %v10251
        %v10253 = vpop.f32.mrf.mxu0
        %v10254 = vadd.f32 %v10240, %v10253
        %10255 = vdwg.mxu0
        %10256 = vmatpush.bf16.xpose.msra.mxu0 %v8724
        %10257 = vmatpush.bf16.xpose.msra.mxu0 %v8716
        %10258 = vmatpush.bf16.xpose.msra.mxu0 %v8708
        %10259 = vmatpush.bf16.xpose.msra.mxu0 %v8700
        %10260 = vmatpush.bf16.xpose.msra.mxu0 %v8692
        %10261 = vmatpush.bf16.xpose.msra.mxu0 %v8684
        %10262 = vmatpush.bf16.xpose.msra.mxu0 %v8676
        %10263 = vmatpush.bf16.xpose.msra.mxu0 %v8668
        %10264 = vmatmul.bf16.gmra.mxu0 %v9852
        %v10265 = vpop.f32.mrf.mxu0
        %v10266 = vadd.f32 %v10252, %v10265
        %v10267 = vpop.f32.mrf.mxu0
        %v10268 = vadd.f32 %v10254, %v10267
        %10269 = vdwg.mxu0
        %10270 = vmatpush.bf16.xpose.msra.mxu0 %v8725
        %10271 = vmatpush.bf16.xpose.msra.mxu0 %v8717
        %10272 = vmatpush.bf16.xpose.msra.mxu0 %v8709
        %10273 = vmatpush.bf16.xpose.msra.mxu0 %v8701
        %10274 = vmatpush.bf16.xpose.msra.mxu0 %v8693
        %10275 = vmatpush.bf16.xpose.msra.mxu0 %v8685
        %10276 = vmatpush.bf16.xpose.msra.mxu0 %v8677
        %10277 = vmatpush.bf16.xpose.msra.mxu0 %v8669
        %10278 = vmatmul.bf16.gmra.mxu0 %v9853
        %v10279 = vpop.f32.mrf.mxu0
        %v10280 = vadd.f32 %v10266, %v10279
        %v10281 = vpop.f32.mrf.mxu0
        %v10282 = vadd.f32 %v10268, %v10281
        %10283 = vdwg.mxu0
        %10284 = vmatpush.bf16.xpose.msra.mxu0 %v8726
        %10285 = vmatpush.bf16.xpose.msra.mxu0 %v8718
        %10286 = vmatpush.bf16.xpose.msra.mxu0 %v8710
        %10287 = vmatpush.bf16.xpose.msra.mxu0 %v8702
        %10288 = vmatpush.bf16.xpose.msra.mxu0 %v8694
        %10289 = vmatpush.bf16.xpose.msra.mxu0 %v8686
        %10290 = vmatpush.bf16.xpose.msra.mxu0 %v8678
        %10291 = vmatpush.bf16.xpose.msra.mxu0 %v8670
        %10292 = vmatmul.bf16.gmra.mxu0 %v9854
        %v10293 = vpop.f32.mrf.mxu0
        %v10294 = vadd.f32 %v10280, %v10293
        %v10295 = vpop.f32.mrf.mxu0
        %v10296 = vadd.f32 %v10282, %v10295
        %10297 = vdwg.mxu0
        %10298 = vmatpush.bf16.xpose.msra.mxu0 %v8727
        %10299 = vmatpush.bf16.xpose.msra.mxu0 %v8719
        %10300 = vmatpush.bf16.xpose.msra.mxu0 %v8711
        %10301 = vmatpush.bf16.xpose.msra.mxu0 %v8703
        %10302 = vmatpush.bf16.xpose.msra.mxu0 %v8695
        %10303 = vmatpush.bf16.xpose.msra.mxu0 %v8687
        %10304 = vmatpush.bf16.xpose.msra.mxu0 %v8679
        %10305 = vmatpush.bf16.xpose.msra.mxu0 %v8671
        %10306 = vmatmul.bf16.gmra.mxu0 %v9855
        %v10307 = vpop.f32.mrf.mxu0
        %v10308 = vadd.f32 %v10294, %v10307
        %v10309 = vpop.f32.mrf.mxu0
        %v10310 = vadd.f32 %v10296, %v10309
        %10311 = vdwg.mxu0
        %10312 = vmatpush.bf16.xpose.msra.mxu0 %v8784
        %10313 = vmatpush.bf16.xpose.msra.mxu0 %v8776
        %10314 = vmatpush.bf16.xpose.msra.mxu0 %v8768
        %10315 = vmatpush.bf16.xpose.msra.mxu0 %v8760
        %10316 = vmatpush.bf16.xpose.msra.mxu0 %v8752
        %10317 = vmatpush.bf16.xpose.msra.mxu0 %v8744
        %10318 = vmatpush.bf16.xpose.msra.mxu0 %v8736
        %10319 = vmatpush.bf16.xpose.msra.mxu0 %v8728
        %10320 = vmatmul.bf16.gmra.mxu0 %v9848
        %v10321 = vpop.f32.mrf.mxu0
        %v10322 = vadd.f32 0.0, %v10321
        %v10323 = vpop.f32.mrf.mxu0
        %v10324 = vadd.f32 0.0, %v10323
        %10325 = vdwg.mxu0
        %10326 = vmatpush.bf16.xpose.msra.mxu0 %v8785
        %10327 = vmatpush.bf16.xpose.msra.mxu0 %v8777
        %10328 = vmatpush.bf16.xpose.msra.mxu0 %v8769
        %10329 = vmatpush.bf16.xpose.msra.mxu0 %v8761
        %10330 = vmatpush.bf16.xpose.msra.mxu0 %v8753
        %10331 = vmatpush.bf16.xpose.msra.mxu0 %v8745
        %10332 = vmatpush.bf16.xpose.msra.mxu0 %v8737
        %10333 = vmatpush.bf16.xpose.msra.mxu0 %v8729
        %10334 = vmatmul.bf16.gmra.mxu0 %v9849
        %v10335 = vpop.f32.mrf.mxu0
        %v10336 = vadd.f32 %v10322, %v10335
        %v10337 = vpop.f32.mrf.mxu0
        %v10338 = vadd.f32 %v10324, %v10337
        %10339 = vdwg.mxu0
        %10340 = vmatpush.bf16.xpose.msra.mxu0 %v8786
        %10341 = vmatpush.bf16.xpose.msra.mxu0 %v8778
        %10342 = vmatpush.bf16.xpose.msra.mxu0 %v8770
        %10343 = vmatpush.bf16.xpose.msra.mxu0 %v8762
        %10344 = vmatpush.bf16.xpose.msra.mxu0 %v8754
        %10345 = vmatpush.bf16.xpose.msra.mxu0 %v8746
        %10346 = vmatpush.bf16.xpose.msra.mxu0 %v8738
        %10347 = vmatpush.bf16.xpose.msra.mxu0 %v8730
        %10348 = vmatmul.bf16.gmra.mxu0 %v9850
        %v10349 = vpop.f32.mrf.mxu0
        %v10350 = vadd.f32 %v10336, %v10349
        %v10351 = vpop.f32.mrf.mxu0
        %v10352 = vadd.f32 %v10338, %v10351
        %10353 = vdwg.mxu0
        %10354 = vmatpush.bf16.xpose.msra.mxu0 %v8787
        %10355 = vmatpush.bf16.xpose.msra.mxu0 %v8779
        %10356 = vmatpush.bf16.xpose.msra.mxu0 %v8771
        %10357 = vmatpush.bf16.xpose.msra.mxu0 %v8763
        %10358 = vmatpush.bf16.xpose.msra.mxu0 %v8755
        %10359 = vmatpush.bf16.xpose.msra.mxu0 %v8747
        %10360 = vmatpush.bf16.xpose.msra.mxu0 %v8739
        %10361 = vmatpush.bf16.xpose.msra.mxu0 %v8731
        %10362 = vmatmul.bf16.gmra.mxu0 %v9851
        %v10363 = vpop.f32.mrf.mxu0
        %v10364 = vadd.f32 %v10350, %v10363
        %v10365 = vpop.f32.mrf.mxu0
        %v10366 = vadd.f32 %v10352, %v10365
        %10367 = vdwg.mxu0
        %10368 = vmatpush.bf16.xpose.msra.mxu0 %v8788
        %10369 = vmatpush.bf16.xpose.msra.mxu0 %v8780
        %10370 = vmatpush.bf16.xpose.msra.mxu0 %v8772
        %10371 = vmatpush.bf16.xpose.msra.mxu0 %v8764
        %10372 = vmatpush.bf16.xpose.msra.mxu0 %v8756
        %10373 = vmatpush.bf16.xpose.msra.mxu0 %v8748
        %10374 = vmatpush.bf16.xpose.msra.mxu0 %v8740
        %10375 = vmatpush.bf16.xpose.msra.mxu0 %v8732
        %10376 = vmatmul.bf16.gmra.mxu0 %v9852
        %v10377 = vpop.f32.mrf.mxu0
        %v10378 = vadd.f32 %v10364, %v10377
        %v10379 = vpop.f32.mrf.mxu0
        %v10380 = vadd.f32 %v10366, %v10379
        %10381 = vdwg.mxu0
        %10382 = vmatpush.bf16.xpose.msra.mxu0 %v8789
        %10383 = vmatpush.bf16.xpose.msra.mxu0 %v8781
        %10384 = vmatpush.bf16.xpose.msra.mxu0 %v8773
        %10385 = vmatpush.bf16.xpose.msra.mxu0 %v8765
        %10386 = vmatpush.bf16.xpose.msra.mxu0 %v8757
        %10387 = vmatpush.bf16.xpose.msra.mxu0 %v8749
        %10388 = vmatpush.bf16.xpose.msra.mxu0 %v8741
        %10389 = vmatpush.bf16.xpose.msra.mxu0 %v8733
        %10390 = vmatmul.bf16.gmra.mxu0 %v9853
        %v10391 = vpop.f32.mrf.mxu0
        %v10392 = vadd.f32 %v10378, %v10391
        %v10393 = vpop.f32.mrf.mxu0
        %v10394 = vadd.f32 %v10380, %v10393
        %10395 = vdwg.mxu0
        %10396 = vmatpush.bf16.xpose.msra.mxu0 %v8790
        %10397 = vmatpush.bf16.xpose.msra.mxu0 %v8782
        %10398 = vmatpush.bf16.xpose.msra.mxu0 %v8774
        %10399 = vmatpush.bf16.xpose.msra.mxu0 %v8766
        %10400 = vmatpush.bf16.xpose.msra.mxu0 %v8758
        %10401 = vmatpush.bf16.xpose.msra.mxu0 %v8750
        %10402 = vmatpush.bf16.xpose.msra.mxu0 %v8742
        %10403 = vmatpush.bf16.xpose.msra.mxu0 %v8734
        %10404 = vmatmul.bf16.gmra.mxu0 %v9854
        %v10405 = vpop.f32.mrf.mxu0
        %v10406 = vadd.f32 %v10392, %v10405
        %v10407 = vpop.f32.mrf.mxu0
        %v10408 = vadd.f32 %v10394, %v10407
        %10409 = vdwg.mxu0
        %10410 = vmatpush.bf16.xpose.msra.mxu0 %v8791
        %10411 = vmatpush.bf16.xpose.msra.mxu0 %v8783
        %10412 = vmatpush.bf16.xpose.msra.mxu0 %v8775
        %10413 = vmatpush.bf16.xpose.msra.mxu0 %v8767
        %10414 = vmatpush.bf16.xpose.msra.mxu0 %v8759
        %10415 = vmatpush.bf16.xpose.msra.mxu0 %v8751
        %10416 = vmatpush.bf16.xpose.msra.mxu0 %v8743
        %10417 = vmatpush.bf16.xpose.msra.mxu0 %v8735
        %10418 = vmatmul.bf16.gmra.mxu0 %v9855
        %v10419 = vpop.f32.mrf.mxu0
        %v10420 = vadd.f32 %v10406, %v10419
        %v10421 = vpop.f32.mrf.mxu0
        %v10422 = vadd.f32 %v10408, %v10421
        %10423 = vdwg.mxu0
        %10424 = vmatpush.bf16.xpose.msra.mxu0 %v8848
        %10425 = vmatpush.bf16.xpose.msra.mxu0 %v8840
        %10426 = vmatpush.bf16.xpose.msra.mxu0 %v8832
        %10427 = vmatpush.bf16.xpose.msra.mxu0 %v8824
        %10428 = vmatpush.bf16.xpose.msra.mxu0 %v8816
        %10429 = vmatpush.bf16.xpose.msra.mxu0 %v8808
        %10430 = vmatpush.bf16.xpose.msra.mxu0 %v8800
        %10431 = vmatpush.bf16.xpose.msra.mxu0 %v8792
        %10432 = vmatmul.bf16.gmra.mxu0 %v9848
        %v10433 = vpop.f32.mrf.mxu0
        %v10434 = vadd.f32 0.0, %v10433
        %v10435 = vpop.f32.mrf.mxu0
        %v10436 = vadd.f32 0.0, %v10435
        %10437 = vdwg.mxu0
        %10438 = vmatpush.bf16.xpose.msra.mxu0 %v8849
        %10439 = vmatpush.bf16.xpose.msra.mxu0 %v8841
        %10440 = vmatpush.bf16.xpose.msra.mxu0 %v8833
        %10441 = vmatpush.bf16.xpose.msra.mxu0 %v8825
        %10442 = vmatpush.bf16.xpose.msra.mxu0 %v8817
        %10443 = vmatpush.bf16.xpose.msra.mxu0 %v8809
        %10444 = vmatpush.bf16.xpose.msra.mxu0 %v8801
        %10445 = vmatpush.bf16.xpose.msra.mxu0 %v8793
        %10446 = vmatmul.bf16.gmra.mxu0 %v9849
        %v10447 = vpop.f32.mrf.mxu0
        %v10448 = vadd.f32 %v10434, %v10447
        %v10449 = vpop.f32.mrf.mxu0
        %v10450 = vadd.f32 %v10436, %v10449
        %10451 = vdwg.mxu0
        %10452 = vmatpush.bf16.xpose.msra.mxu0 %v8850
        %10453 = vmatpush.bf16.xpose.msra.mxu0 %v8842
        %10454 = vmatpush.bf16.xpose.msra.mxu0 %v8834
        %10455 = vmatpush.bf16.xpose.msra.mxu0 %v8826
        %10456 = vmatpush.bf16.xpose.msra.mxu0 %v8818
        %10457 = vmatpush.bf16.xpose.msra.mxu0 %v8810
        %10458 = vmatpush.bf16.xpose.msra.mxu0 %v8802
        %10459 = vmatpush.bf16.xpose.msra.mxu0 %v8794
        %10460 = vmatmul.bf16.gmra.mxu0 %v9850
        %v10461 = vpop.f32.mrf.mxu0
        %v10462 = vadd.f32 %v10448, %v10461
        %v10463 = vpop.f32.mrf.mxu0
        %v10464 = vadd.f32 %v10450, %v10463
        %10465 = vdwg.mxu0
        %10466 = vmatpush.bf16.xpose.msra.mxu0 %v8851
        %10467 = vmatpush.bf16.xpose.msra.mxu0 %v8843
        %10468 = vmatpush.bf16.xpose.msra.mxu0 %v8835
        %10469 = vmatpush.bf16.xpose.msra.mxu0 %v8827
        %10470 = vmatpush.bf16.xpose.msra.mxu0 %v8819
        %10471 = vmatpush.bf16.xpose.msra.mxu0 %v8811
        %10472 = vmatpush.bf16.xpose.msra.mxu0 %v8803
        %10473 = vmatpush.bf16.xpose.msra.mxu0 %v8795
        %10474 = vmatmul.bf16.gmra.mxu0 %v9851
        %v10475 = vpop.f32.mrf.mxu0
        %v10476 = vadd.f32 %v10462, %v10475
        %v10477 = vpop.f32.mrf.mxu0
        %v10478 = vadd.f32 %v10464, %v10477
        %10479 = vdwg.mxu0
        %10480 = vmatpush.bf16.xpose.msra.mxu0 %v8852
        %10481 = vmatpush.bf16.xpose.msra.mxu0 %v8844
        %10482 = vmatpush.bf16.xpose.msra.mxu0 %v8836
        %10483 = vmatpush.bf16.xpose.msra.mxu0 %v8828
        %10484 = vmatpush.bf16.xpose.msra.mxu0 %v8820
        %10485 = vmatpush.bf16.xpose.msra.mxu0 %v8812
        %10486 = vmatpush.bf16.xpose.msra.mxu0 %v8804
        %10487 = vmatpush.bf16.xpose.msra.mxu0 %v8796
        %10488 = vmatmul.bf16.gmra.mxu0 %v9852
        %v10489 = vpop.f32.mrf.mxu0
        %v10490 = vadd.f32 %v10476, %v10489
        %v10491 = vpop.f32.mrf.mxu0
        %v10492 = vadd.f32 %v10478, %v10491
        %10493 = vdwg.mxu0
        %10494 = vmatpush.bf16.xpose.msra.mxu0 %v8853
        %10495 = vmatpush.bf16.xpose.msra.mxu0 %v8845
        %10496 = vmatpush.bf16.xpose.msra.mxu0 %v8837
        %10497 = vmatpush.bf16.xpose.msra.mxu0 %v8829
        %10498 = vmatpush.bf16.xpose.msra.mxu0 %v8821
        %10499 = vmatpush.bf16.xpose.msra.mxu0 %v8813
        %10500 = vmatpush.bf16.xpose.msra.mxu0 %v8805
        %10501 = vmatpush.bf16.xpose.msra.mxu0 %v8797
        %10502 = vmatmul.bf16.gmra.mxu0 %v9853
        %v10503 = vpop.f32.mrf.mxu0
        %v10504 = vadd.f32 %v10490, %v10503
        %v10505 = vpop.f32.mrf.mxu0
        %v10506 = vadd.f32 %v10492, %v10505
        %10507 = vdwg.mxu0
        %10508 = vmatpush.bf16.xpose.msra.mxu0 %v8854
        %10509 = vmatpush.bf16.xpose.msra.mxu0 %v8846
        %10510 = vmatpush.bf16.xpose.msra.mxu0 %v8838
        %10511 = vmatpush.bf16.xpose.msra.mxu0 %v8830
        %10512 = vmatpush.bf16.xpose.msra.mxu0 %v8822
        %10513 = vmatpush.bf16.xpose.msra.mxu0 %v8814
        %10514 = vmatpush.bf16.xpose.msra.mxu0 %v8806
        %10515 = vmatpush.bf16.xpose.msra.mxu0 %v8798
        %10516 = vmatmul.bf16.gmra.mxu0 %v9854
        %v10517 = vpop.f32.mrf.mxu0
        %v10518 = vadd.f32 %v10504, %v10517
        %v10519 = vpop.f32.mrf.mxu0
        %v10520 = vadd.f32 %v10506, %v10519
        %10521 = vdwg.mxu0
        %10522 = vmatpush.bf16.xpose.msra.mxu0 %v8855
        %10523 = vmatpush.bf16.xpose.msra.mxu0 %v8847
        %10524 = vmatpush.bf16.xpose.msra.mxu0 %v8839
        %10525 = vmatpush.bf16.xpose.msra.mxu0 %v8831
        %10526 = vmatpush.bf16.xpose.msra.mxu0 %v8823
        %10527 = vmatpush.bf16.xpose.msra.mxu0 %v8815
        %10528 = vmatpush.bf16.xpose.msra.mxu0 %v8807
        %10529 = vmatpush.bf16.xpose.msra.mxu0 %v8799
        %10530 = vmatmul.bf16.gmra.mxu0 %v9855
        %v10531 = vpop.f32.mrf.mxu0
        %v10532 = vadd.f32 %v10518, %v10531
        %v10533 = vpop.f32.mrf.mxu0
        %v10534 = vadd.f32 %v10520, %v10533
        %10535 = vdwg.mxu0
        %10536 = vmatpush.bf16.xpose.msra.mxu0 %v8912
        %10537 = vmatpush.bf16.xpose.msra.mxu0 %v8904
        %10538 = vmatpush.bf16.xpose.msra.mxu0 %v8896
        %10539 = vmatpush.bf16.xpose.msra.mxu0 %v8888
        %10540 = vmatpush.bf16.xpose.msra.mxu0 %v8880
        %10541 = vmatpush.bf16.xpose.msra.mxu0 %v8872
        %10542 = vmatpush.bf16.xpose.msra.mxu0 %v8864
        %10543 = vmatpush.bf16.xpose.msra.mxu0 %v8856
        %10544 = vmatmul.bf16.gmra.mxu0 %v9848
        %v10545 = vpop.f32.mrf.mxu0
        %v10546 = vadd.f32 0.0, %v10545
        %v10547 = vpop.f32.mrf.mxu0
        %v10548 = vadd.f32 0.0, %v10547
        %10549 = vdwg.mxu0
        %10550 = vmatpush.bf16.xpose.msra.mxu0 %v8913
        %10551 = vmatpush.bf16.xpose.msra.mxu0 %v8905
        %10552 = vmatpush.bf16.xpose.msra.mxu0 %v8897
        %10553 = vmatpush.bf16.xpose.msra.mxu0 %v8889
        %10554 = vmatpush.bf16.xpose.msra.mxu0 %v8881
        %10555 = vmatpush.bf16.xpose.msra.mxu0 %v8873
        %10556 = vmatpush.bf16.xpose.msra.mxu0 %v8865
        %10557 = vmatpush.bf16.xpose.msra.mxu0 %v8857
        %10558 = vmatmul.bf16.gmra.mxu0 %v9849
        %v10559 = vpop.f32.mrf.mxu0
        %v10560 = vadd.f32 %v10546, %v10559
        %v10561 = vpop.f32.mrf.mxu0
        %v10562 = vadd.f32 %v10548, %v10561
        %10563 = vdwg.mxu0
        %10564 = vmatpush.bf16.xpose.msra.mxu0 %v8914
        %10565 = vmatpush.bf16.xpose.msra.mxu0 %v8906
        %10566 = vmatpush.bf16.xpose.msra.mxu0 %v8898
        %10567 = vmatpush.bf16.xpose.msra.mxu0 %v8890
        %10568 = vmatpush.bf16.xpose.msra.mxu0 %v8882
        %10569 = vmatpush.bf16.xpose.msra.mxu0 %v8874
        %10570 = vmatpush.bf16.xpose.msra.mxu0 %v8866
        %10571 = vmatpush.bf16.xpose.msra.mxu0 %v8858
        %10572 = vmatmul.bf16.gmra.mxu0 %v9850
        %v10573 = vpop.f32.mrf.mxu0
        %v10574 = vadd.f32 %v10560, %v10573
        %v10575 = vpop.f32.mrf.mxu0
        %v10576 = vadd.f32 %v10562, %v10575
        %10577 = vdwg.mxu0
        %10578 = vmatpush.bf16.xpose.msra.mxu0 %v8915
        %10579 = vmatpush.bf16.xpose.msra.mxu0 %v8907
        %10580 = vmatpush.bf16.xpose.msra.mxu0 %v8899
        %10581 = vmatpush.bf16.xpose.msra.mxu0 %v8891
        %10582 = vmatpush.bf16.xpose.msra.mxu0 %v8883
        %10583 = vmatpush.bf16.xpose.msra.mxu0 %v8875
        %10584 = vmatpush.bf16.xpose.msra.mxu0 %v8867
        %10585 = vmatpush.bf16.xpose.msra.mxu0 %v8859
        %10586 = vmatmul.bf16.gmra.mxu0 %v9851
        %v10587 = vpop.f32.mrf.mxu0
        %v10588 = vadd.f32 %v10574, %v10587
        %v10589 = vpop.f32.mrf.mxu0
        %v10590 = vadd.f32 %v10576, %v10589
        %10591 = vdwg.mxu0
        %10592 = vmatpush.bf16.xpose.msra.mxu0 %v8916
        %10593 = vmatpush.bf16.xpose.msra.mxu0 %v8908
        %10594 = vmatpush.bf16.xpose.msra.mxu0 %v8900
        %10595 = vmatpush.bf16.xpose.msra.mxu0 %v8892
        %10596 = vmatpush.bf16.xpose.msra.mxu0 %v8884
        %10597 = vmatpush.bf16.xpose.msra.mxu0 %v8876
        %10598 = vmatpush.bf16.xpose.msra.mxu0 %v8868
        %10599 = vmatpush.bf16.xpose.msra.mxu0 %v8860
        %10600 = vmatmul.bf16.gmra.mxu0 %v9852
        %v10601 = vpop.f32.mrf.mxu0
        %v10602 = vadd.f32 %v10588, %v10601
        %v10603 = vpop.f32.mrf.mxu0
        %v10604 = vadd.f32 %v10590, %v10603
        %10605 = vdwg.mxu0
        %10606 = vmatpush.bf16.xpose.msra.mxu0 %v8917
        %10607 = vmatpush.bf16.xpose.msra.mxu0 %v8909
        %10608 = vmatpush.bf16.xpose.msra.mxu0 %v8901
        %10609 = vmatpush.bf16.xpose.msra.mxu0 %v8893
        %10610 = vmatpush.bf16.xpose.msra.mxu0 %v8885
        %10611 = vmatpush.bf16.xpose.msra.mxu0 %v8877
        %10612 = vmatpush.bf16.xpose.msra.mxu0 %v8869
        %10613 = vmatpush.bf16.xpose.msra.mxu0 %v8861
        %10614 = vmatmul.bf16.gmra.mxu0 %v9853
        %v10615 = vpop.f32.mrf.mxu0
        %v10616 = vadd.f32 %v10602, %v10615
        %v10617 = vpop.f32.mrf.mxu0
        %v10618 = vadd.f32 %v10604, %v10617
        %10619 = vdwg.mxu0
        %10620 = vmatpush.bf16.xpose.msra.mxu0 %v8918
        %10621 = vmatpush.bf16.xpose.msra.mxu0 %v8910
        %10622 = vmatpush.bf16.xpose.msra.mxu0 %v8902
        %10623 = vmatpush.bf16.xpose.msra.mxu0 %v8894
        %10624 = vmatpush.bf16.xpose.msra.mxu0 %v8886
        %10625 = vmatpush.bf16.xpose.msra.mxu0 %v8878
        %10626 = vmatpush.bf16.xpose.msra.mxu0 %v8870
        %10627 = vmatpush.bf16.xpose.msra.mxu0 %v8862
        %10628 = vmatmul.bf16.gmra.mxu0 %v9854
        %v10629 = vpop.f32.mrf.mxu0
        %v10630 = vadd.f32 %v10616, %v10629
        %v10631 = vpop.f32.mrf.mxu0
        %v10632 = vadd.f32 %v10618, %v10631
        %10633 = vdwg.mxu0
        %10634 = vmatpush.bf16.xpose.msra.mxu0 %v8919
        %10635 = vmatpush.bf16.xpose.msra.mxu0 %v8911
        %10636 = vmatpush.bf16.xpose.msra.mxu0 %v8903
        %10637 = vmatpush.bf16.xpose.msra.mxu0 %v8895
        %10638 = vmatpush.bf16.xpose.msra.mxu0 %v8887
        %10639 = vmatpush.bf16.xpose.msra.mxu0 %v8879
        %10640 = vmatpush.bf16.xpose.msra.mxu0 %v8871
        %10641 = vmatpush.bf16.xpose.msra.mxu0 %v8863
        %10642 = vmatmul.bf16.gmra.mxu0 %v9855
        %v10643 = vpop.f32.mrf.mxu0
        %v10644 = vadd.f32 %v10630, %v10643
        %v10645 = vpop.f32.mrf.mxu0
        %v10646 = vadd.f32 %v10632, %v10645
        %10647 = vdwg.mxu0
        %10648 = vmatpush.bf16.xpose.msra.mxu0 %v8976
        %10649 = vmatpush.bf16.xpose.msra.mxu0 %v8968
        %10650 = vmatpush.bf16.xpose.msra.mxu0 %v8960
        %10651 = vmatpush.bf16.xpose.msra.mxu0 %v8952
        %10652 = vmatpush.bf16.xpose.msra.mxu0 %v8944
        %10653 = vmatpush.bf16.xpose.msra.mxu0 %v8936
        %10654 = vmatpush.bf16.xpose.msra.mxu0 %v8928
        %10655 = vmatpush.bf16.xpose.msra.mxu0 %v8920
        %10656 = vmatmul.bf16.gmra.mxu0 %v9848
        %v10657 = vpop.f32.mrf.mxu0
        %v10658 = vadd.f32 0.0, %v10657
        %v10659 = vpop.f32.mrf.mxu0
        %v10660 = vadd.f32 0.0, %v10659
        %10661 = vdwg.mxu0
        %10662 = vmatpush.bf16.xpose.msra.mxu0 %v8977
        %10663 = vmatpush.bf16.xpose.msra.mxu0 %v8969
        %10664 = vmatpush.bf16.xpose.msra.mxu0 %v8961
        %10665 = vmatpush.bf16.xpose.msra.mxu0 %v8953
        %10666 = vmatpush.bf16.xpose.msra.mxu0 %v8945
        %10667 = vmatpush.bf16.xpose.msra.mxu0 %v8937
        %10668 = vmatpush.bf16.xpose.msra.mxu0 %v8929
        %10669 = vmatpush.bf16.xpose.msra.mxu0 %v8921
        %10670 = vmatmul.bf16.gmra.mxu0 %v9849
        %v10671 = vpop.f32.mrf.mxu0
        %v10672 = vadd.f32 %v10658, %v10671
        %v10673 = vpop.f32.mrf.mxu0
        %v10674 = vadd.f32 %v10660, %v10673
        %10675 = vdwg.mxu0
        %10676 = vmatpush.bf16.xpose.msra.mxu0 %v8978
        %10677 = vmatpush.bf16.xpose.msra.mxu0 %v8970
        %10678 = vmatpush.bf16.xpose.msra.mxu0 %v8962
        %10679 = vmatpush.bf16.xpose.msra.mxu0 %v8954
        %10680 = vmatpush.bf16.xpose.msra.mxu0 %v8946
        %10681 = vmatpush.bf16.xpose.msra.mxu0 %v8938
        %10682 = vmatpush.bf16.xpose.msra.mxu0 %v8930
        %10683 = vmatpush.bf16.xpose.msra.mxu0 %v8922
        %10684 = vmatmul.bf16.gmra.mxu0 %v9850
        %v10685 = vpop.f32.mrf.mxu0
        %v10686 = vadd.f32 %v10672, %v10685
        %v10687 = vpop.f32.mrf.mxu0
        %v10688 = vadd.f32 %v10674, %v10687
        %10689 = vdwg.mxu0
        %10690 = vmatpush.bf16.xpose.msra.mxu0 %v8979
        %10691 = vmatpush.bf16.xpose.msra.mxu0 %v8971
        %10692 = vmatpush.bf16.xpose.msra.mxu0 %v8963
        %10693 = vmatpush.bf16.xpose.msra.mxu0 %v8955
        %10694 = vmatpush.bf16.xpose.msra.mxu0 %v8947
        %10695 = vmatpush.bf16.xpose.msra.mxu0 %v8939
        %10696 = vmatpush.bf16.xpose.msra.mxu0 %v8931
        %10697 = vmatpush.bf16.xpose.msra.mxu0 %v8923
        %10698 = vmatmul.bf16.gmra.mxu0 %v9851
        %v10699 = vpop.f32.mrf.mxu0
        %v10700 = vadd.f32 %v10686, %v10699
        %v10701 = vpop.f32.mrf.mxu0
        %v10702 = vadd.f32 %v10688, %v10701
        %10703 = vdwg.mxu0
        %10704 = vmatpush.bf16.xpose.msra.mxu0 %v8980
        %10705 = vmatpush.bf16.xpose.msra.mxu0 %v8972
        %10706 = vmatpush.bf16.xpose.msra.mxu0 %v8964
        %10707 = vmatpush.bf16.xpose.msra.mxu0 %v8956
        %10708 = vmatpush.bf16.xpose.msra.mxu0 %v8948
        %10709 = vmatpush.bf16.xpose.msra.mxu0 %v8940
        %10710 = vmatpush.bf16.xpose.msra.mxu0 %v8932
        %10711 = vmatpush.bf16.xpose.msra.mxu0 %v8924
        %10712 = vmatmul.bf16.gmra.mxu0 %v9852
        %v10713 = vpop.f32.mrf.mxu0
        %v10714 = vadd.f32 %v10700, %v10713
        %v10715 = vpop.f32.mrf.mxu0
        %v10716 = vadd.f32 %v10702, %v10715
        %10717 = vdwg.mxu0
        %10718 = vmatpush.bf16.xpose.msra.mxu0 %v8981
        %10719 = vmatpush.bf16.xpose.msra.mxu0 %v8973
        %10720 = vmatpush.bf16.xpose.msra.mxu0 %v8965
        %10721 = vmatpush.bf16.xpose.msra.mxu0 %v8957
        %10722 = vmatpush.bf16.xpose.msra.mxu0 %v8949
        %10723 = vmatpush.bf16.xpose.msra.mxu0 %v8941
        %10724 = vmatpush.bf16.xpose.msra.mxu0 %v8933
        %10725 = vmatpush.bf16.xpose.msra.mxu0 %v8925
        %10726 = vmatmul.bf16.gmra.mxu0 %v9853
        %v10727 = vpop.f32.mrf.mxu0
        %v10728 = vadd.f32 %v10714, %v10727
        %v10729 = vpop.f32.mrf.mxu0
        %v10730 = vadd.f32 %v10716, %v10729
        %10731 = vdwg.mxu0
        %10732 = vmatpush.bf16.xpose.msra.mxu0 %v8982
        %10733 = vmatpush.bf16.xpose.msra.mxu0 %v8974
        %10734 = vmatpush.bf16.xpose.msra.mxu0 %v8966
        %10735 = vmatpush.bf16.xpose.msra.mxu0 %v8958
        %10736 = vmatpush.bf16.xpose.msra.mxu0 %v8950
        %10737 = vmatpush.bf16.xpose.msra.mxu0 %v8942
        %10738 = vmatpush.bf16.xpose.msra.mxu0 %v8934
        %10739 = vmatpush.bf16.xpose.msra.mxu0 %v8926
        %10740 = vmatmul.bf16.gmra.mxu0 %v9854
        %v10741 = vpop.f32.mrf.mxu0
        %v10742 = vadd.f32 %v10728, %v10741
        %v10743 = vpop.f32.mrf.mxu0
        %v10744 = vadd.f32 %v10730, %v10743
        %10745 = vdwg.mxu0
        %10746 = vmatpush.bf16.xpose.msra.mxu0 %v8983
        %10747 = vmatpush.bf16.xpose.msra.mxu0 %v8975
        %10748 = vmatpush.bf16.xpose.msra.mxu0 %v8967
        %10749 = vmatpush.bf16.xpose.msra.mxu0 %v8959
        %10750 = vmatpush.bf16.xpose.msra.mxu0 %v8951
        %10751 = vmatpush.bf16.xpose.msra.mxu0 %v8943
        %10752 = vmatpush.bf16.xpose.msra.mxu0 %v8935
        %10753 = vmatpush.bf16.xpose.msra.mxu0 %v8927
        %10754 = vmatmul.bf16.gmra.mxu0 %v9855
        %v10755 = vpop.f32.mrf.mxu0
        %v10756 = vadd.f32 %v10742, %v10755
        %v10757 = vpop.f32.mrf.mxu0
        %v10758 = vadd.f32 %v10744, %v10757
        %10759 = vdwg.mxu0
        %s10760 = sld [smem:[#allocation2]]
        %v10761 = vrcp.pop %v9085
        %v10762 = vrcp.pop %v9189
        %v10763 = vrcp.pop %v9293
        %v10764 = vrcp.pop %v9397
        %v10765 = vrcp.pop %v9501
        %v10766 = vrcp.pop %v9605
        %v10767 = vrcp.pop %v9709
        %v10768 = vrcp.pop %v9813
        %v10769 = vstv %s10760
        %v10770 = vmul.f32 %v10769, %v10761
        %v10771 = vmul.f32 %v10769, %v10762
        %v10772 = vmul.f32 %v10769, %v10763
        %v10773 = vmul.f32 %v10769, %v10764
        %v10774 = vmul.f32 %v10769, %v10765
        %v10775 = vmul.f32 %v10769, %v10766
        %v10776 = vmul.f32 %v10769, %v10767
        %v10777 = vmul.f32 %v10769, %v10768
        %v10778 = vperm.slane %v10770, 0
        %v10779 = vperm.slane %v10771, 0
        %v10780 = vperm.slane %v10772, 0
        %v10781 = vperm.slane %v10773, 0
        %v10782 = vperm.slane %v10774, 0
        %v10783 = vperm.slane %v10775, 0
        %v10784 = vperm.slane %v10776, 0
        %v10785 = vperm.slane %v10777, 0
        %v10786 = vmul.f32 %v9972, %v10778
        %v10787 = vmul.f32 %v10084, %v10779
        %v10788 = vmul.f32 %v10196, %v10780
        %v10789 = vmul.f32 %v10308, %v10781
        %v10790 = vmul.f32 %v10420, %v10782
        %v10791 = vmul.f32 %v10532, %v10783
        %v10792 = vmul.f32 %v10644, %v10784
        %v10793 = vmul.f32 %v10756, %v10785
        %v10794 = vmul.f32 %v9974, %v10778
        %v10795 = vmul.f32 %v10086, %v10779
        %v10796 = vmul.f32 %v10198, %v10780
        %v10797 = vmul.f32 %v10310, %v10781
        %v10798 = vmul.f32 %v10422, %v10782
        %v10799 = vmul.f32 %v10534, %v10783
        %v10800 = vmul.f32 %v10646, %v10784
        %v10801 = vmul.f32 %v10758, %v10785
        %v10802 = vadd.f32 %v10786, %v450
        %v10803 = vadd.f32 %v10787, %v451
        %v10804 = vadd.f32 %v10788, %v452
        %v10805 = vadd.f32 %v10789, %v453
        %v10806 = vadd.f32 %v10790, %v454
        %v10807 = vadd.f32 %v10791, %v455
        %v10808 = vadd.f32 %v10792, %v456
        %v10809 = vadd.f32 %v10793, %v457
        %v10810 = vadd.f32 %v10794, %v458
        %v10811 = vadd.f32 %v10795, %v459
        %v10812 = vadd.f32 %v10796, %v460
        %v10813 = vadd.f32 %v10797, %v461
        %v10814 = vadd.f32 %v10798, %v462
        %v10815 = vadd.f32 %v10799, %v463
        %v10816 = vadd.f32 %v10800, %v464
        %v10817 = vadd.f32 %v10801, %v465
        %10818 = vst [vmem:[%s429] sm:$0xff] %v10802
        %10819 = vst [vmem:[%s429 + $0x8] sm:$0xff] %v10803
        %10820 = vst [vmem:[%s429 + $0x10] sm:$0xff] %v10804
        %10821 = vst [vmem:[%s429 + $0x18] sm:$0xff] %v10805
        %10822 = vst [vmem:[%s429 + $0x20] sm:$0xff] %v10806
        %10823 = vst [vmem:[%s429 + $0x28] sm:$0xff] %v10807
        %10824 = vst [vmem:[%s429 + $0x30] sm:$0xff] %v10808
        %10825 = vst [vmem:[%s429 + $0x38] sm:$0xff] %v10809
        %10826 = vst [vmem:[%s429 + $0x40] sm:$0xff] %v10810
        %10827 = vst [vmem:[%s429 + $0x48] sm:$0xff] %v10811
        %10828 = vst [vmem:[%s429 + $0x50] sm:$0xff] %v10812
        %10829 = vst [vmem:[%s429 + $0x58] sm:$0xff] %v10813
        %10830 = vst [vmem:[%s429 + $0x60] sm:$0xff] %v10814
        %10831 = vst [vmem:[%s429 + $0x68] sm:$0xff] %v10815
        %10832 = vst [vmem:[%s429 + $0x70] sm:$0xff] %v10816
        %10833 = vst [vmem:[%s429 + $0x78] sm:$0xff] %v10817
        %s10834 = sand.u32 %s215, 1
        %s10835 = scalar_lea.sflag [#allocation5], %s10834
        %s10836 = sand.u32 %s215, 1
        %s10837 = smul.addr %s10836, 128
        %s10838 = scalar_lea.vmem [#allocation12], %s10837
        // Predicated region
        $region69: #{tpu_custom_call.1} parent=47 // pred_check
          %p10839 = pneg %p225
        $region70: #{tpu_custom_call.1} parent=47 // pred_check_branch
          %10841 = sbr.rel (%p10839) target = $region72
        $region71: #{tpu_custom_call.1} parent=47 // pred_region
          %s10842 = smul.u32 8, %s34
          %10844 = vsyncadd %s10835, 0
          %s10845 = smul.addr %s33, 16
          %s10846 = sadd.s32 %s10842, %s10845
          %s10847 = smul.addr %s10846, 8
          %s10848 = scalar_lea.hbm %s7, %s10847
          %s10849 = sshll.u32 %s10838, 4
          %s10850 = int_to_ptr.vmem [resolvable:$true] %s10849
          %s10851 = sshll.u32 %s10848, 4
          %s10852 = int_to_ptr.hbm [resolvable:$true] %s10851
          %10857 = dma.vmem_to_hbm [thread:$0]  %s10850, 2048, %s10852, %s10835, 1024, 1024, 64
        $region72: #{tpu_custom_call.1} parent=47 // pred_fallthru
          _
      $region48: #{tpu_custom_call.1} parent=5 // pred_fallthru
        _
      %p10858 = scmp.le.s32.totalorder 2, %s24
      // Predicated region
      $region73: #{tpu_custom_call.1} parent=5 // pred_check
        %p10859 = pneg %p10858
      $region74: #{tpu_custom_call.1} parent=5 // pred_check_branch
        %10861 = sbr.rel (%p10859) target = $region76
      $region75: #{tpu_custom_call.1} parent=5 // pred_region
        %s10862 = ssub.s32 %s24, 2
        // Predicated region
        $region77: #{tpu_custom_call.1} parent=75 // pred_check
          %p10863 = pneg %p231
        $region78: #{tpu_custom_call.1} parent=75 // pred_check_branch
          %10865 = sbr.rel (%p10863) target = $region80
        $region79: #{tpu_custom_call.1} parent=75 // pred_region
          %s10866 = sand.u32 %s216, 1
          %s10867 = scalar_lea.sflag [#allocation5], %s10866
          %s10868 = sand.u32 %s216, 1
          %s10869 = smul.addr %s10868, 128
          %s10870 = scalar_lea.vmem [#allocation12], %s10869
          %10872 = dma.done %s10867, 2048
        $region80: #{tpu_custom_call.1} parent=75 // pred_fallthru
          _
      $region76: #{tpu_custom_call.1} parent=5 // pred_fallthru
        _
    $region6: #{tpu_custom_call.1} parent=1 // loop_footer
      %s28 = sadd.s32 1, %s24
    $region7: #{tpu_custom_call.1} parent=1 // loop_footer_branch
      %23 = sbr.rel target = $region3
    $region8: #{tpu_custom_call.1} parent=1 // loop_exit
      _
    %10873 = vsyncpa [#allocation4], 1
    %s10874 = scalar_lea.sflag [#allocation4], 1
    %10875 = vsyncpa %s10874, 1
    %10876 = vsyncpa [#allocation7], 1
    %s10877 = scalar_lea.sflag [#allocation7], 1
    %10878 = vsyncpa %s10877, 1
    %10879 = vsyncpa [#allocation10], 1
    %10880 = vsyncpa [#allocation5], 1
    %s10881 = scalar_lea.sflag [#allocation5], 1
    %10882 = vsyncpa %s10881, 1

</llo_original>
